<compile_context>
chip_gen: v7x
topology: tpu7x:2x2x1
jax: 0.10.0
libtpu: 0.0.40
codegen_flags: <defaults>
</compile_context>

<pallas_src>
import functools

import numpy as np
import jax
import jax.numpy as jnp
from jax import lax
from jax.experimental import pallas as pl
from jax.experimental.pallas import tpu as pltpu


# ----------------------------------------------------------------------------------------
# Fused kernel
# ----------------------------------------------------------------------------------------
def _disc_kernel(x_ref, ma_ref, mb_ref,
                 w0_hbm, b0_ref,
                 w1_hbm, g1_ref, be1_ref, pool1_ref,
                 w2_hbm, g2_ref, be2_ref,
                 w3_hbm, g3_ref, be3_ref,
                 w4_ref, b4_ref,
                 o_ref,
                 p0_ref, p1_ref, p2_ref, p3_ref,
                 w0_vm, w1_vm, w2_vm, w3_vm, sem,
                 *, N, L, n_class):
    f32 = jnp.float32
    wp = L + 2                       # padded lattice width (uniform for all buffers)
    S = wp * wp                      # per-sample flat stride
    Ma = (N - 1) * S + L * wp        # stacked slab length for the three 3x3 lattice convs
    Mb = (N - 1) * S + (L - 1) * wp  # slab length for the 4x4 conv (layer 3)
    Mc = (N - 1) * S + (L - 2) * wp  # slab length for the final 4x4 conv (layer 4)
    Mz = 3 * wp + 3 + Mc             # rows of p3 needed for the tap-packed layer-4 matmul

    # ---- kick off weight HBM->VMEM DMAs; w1/w2/w3 overlap layer-0/1/2 compute -----------
    copies = []
    for i, (hbm, vm) in enumerate(((w0_hbm, w0_vm), (w1_hbm, w1_vm),
                                   (w2_hbm, w2_vm), (w3_hbm, w3_vm))):
        cp = pltpu.make_async_copy(hbm, vm, sem.at[i])
        cp.start()
        copies.append(cp)

    # ---- zero ONLY the head / tail border rows of each activation buffer ----------------
    # (interior padding positions are written as zeros by the masked slab stores below)
    for dst_ref, M in ((p0_ref, Ma), (p1_ref, Ma), (p2_ref, Ma), (p3_ref, Mb)):
        c = dst_ref.shape[1]
        dst_ref[pl.ds(0, wp + 1), :] = jnp.zeros((wp + 1, c), dst_ref.dtype)
        tail = dst_ref.shape[0] - (wp + 1 + M)
        dst_ref[pl.ds(wp + 1 + M, tail), :] = jnp.zeros((tail, c), dst_ref.dtype)

    valid_a = ma_ref[...] != 0.0      # (Ma, 1) valid-output mask for the 3x3 convs
    valid_b = mb_ref[...] != 0.0      # (Mb, 1) valid-output mask for layer 3

    def lrelu(v):
        return jnp.where(v >= 0.0, v, 0.2 * v)

    def conv(src_ref, w_ref, k, M):
        """Stride-1 KxK conv: K*K contiguous tap slices, one batch-folded matmul per tap."""
        cout = w_ref.shape[-1]
        acc = jnp.zeros((M, cout), f32)
        for kh in range(k):
            for kw in range(k):
                xt = src_ref[pl.ds(kh * wp + kw, M), :]            # bf16 (M, cin)
                acc = acc + jnp.dot(xt, w_ref[kh * k + kw],
                                    preferred_element_type=f32)
        return acc

    def bn_scale_shift(y, cnt, gamma, beta, pool=None):
        """One-pass training-mode BN stats (biased var, eps=1e-5) on a masked slab."""
        s = jnp.sum(y, axis=0, keepdims=True)                      # (1, ce)
        sq = jnp.sum(y * y, axis=0, keepdims=True)
        if pool is not None:                                       # pool the 4 spatial phases
            s = jnp.dot(s, pool, preferred_element_type=f32)       # tiny (1,ce)x(ce,ce) dots
            sq = jnp.dot(sq, pool, preferred_element_type=f32)
        inv = 1.0 / cnt
        mean = s * inv
        var = sq * inv - mean * mean
        scale = gamma * lax.rsqrt(var + 1e-5)
        shift = beta - mean * scale
        return scale, shift

    def store(dst_ref, vals, M):
        """Single contiguous bf16 store of the masked slab at constant offset wp+1."""
        dst_ref[pl.ds(wp + 1, M), :] = vals.astype(dst_ref.dtype)

    # ---- layer 0: Conv(input_nc -> ndf, k4 s2 p1, bias) + LeakyReLU(0.2) ----------------
    copies[0].wait()
    y = conv(x_ref, w0_vm, 3, Ma)
    y = jnp.where(valid_a, lrelu(y + b0_ref[...]), 0.0)
    store(p0_ref, y, Ma)

    # ---- layer 1: Conv(ndf -> 2ndf, k4 s2 p1) + BatchNorm(phase-pooled) + LeakyReLU -----
    copies[1].wait()
    y = conv(p0_ref, w1_vm, 3, Ma)
    y = jnp.where(valid_a, y, 0.0)
    scale, shift = bn_scale_shift(y, float(N * L * L * 4),
                                  g1_ref[...], be1_ref[...], pool=pool1_ref[...])
    y = jnp.where(valid_a, lrelu(y * scale + shift), 0.0)
    store(p1_ref, y, Ma)

    # ---- layer 2: Conv(2ndf -> 4ndf, k4 s2 p1) + BatchNorm + LeakyReLU ------------------
    copies[2].wait()
    y = conv(p1_ref, w2_vm, 3, Ma)
    y = jnp.where(valid_a, y, 0.0)
    scale, shift = bn_scale_shift(y, float(N * L * L), g2_ref[...], be2_ref[...])
    y = jnp.where(valid_a, lrelu(y * scale + shift), 0.0)
    store(p2_ref, y, Ma)

    # ---- layer 3: Conv(4ndf -> 8ndf, k4 s1 p1) + BatchNorm + LeakyReLU ------------------
    copies[3].wait()
    y = conv(p2_ref, w3_vm, 4, Mb)
    y = jnp.where(valid_b, y, 0.0)
    scale, shift = bn_scale_shift(y, float(N * (L - 1) * (L - 1)), g3_ref[...], be3_ref[...])
    y = jnp.where(valid_b, lrelu(y * scale + shift), 0.0)
    store(p3_ref, y, Mb)

    # ---- layer 4: Conv(8ndf -> n_class, k4 s1 p1, bias) ---------------------------------
    # ONE matmul against the tap-packed weight (c3, 16*n_class), then 16 shifted column adds.
    z = jnp.dot(p3_ref[pl.ds(0, Mz), :], w4_ref[...], preferred_element_type=f32)
    acc4 = jnp.zeros((Mc, n_class), f32)
    for kh in range(4):
        for kw in range(4):
            j = kh * 4 + kw
            acc4 = acc4 + z[kh * wp + kw:kh * wp + kw + Mc,
                            j * n_class:(j + 1) * n_class]
    out = acc4 + b4_ref[...]
    o_ref[pl.ds(0, Mc), :] = out
    o_ref[pl.ds(Mc, N * S - Mc), :] = jnp.zeros((N * S - Mc, n_class), f32)


# ----------------------------------------------------------------------------------------
# Host-side parameter preparation (lattice expansion of the stride-2 convs)
# ----------------------------------------------------------------------------------------
def _expand_stride2_conv(w, p_in):
    """Fold a k=4, stride=2, pad=1 conv into a 3x3 stride-1 conv on the /p_in lattice."""
    K = 4
    p_out = p_in // 2
    cin, cout = w.shape[2], w.shape[3]
    w_exp = np.zeros((3, 3, p_in * p_in * cin, p_out * p_out * cout), np.float32)
    for py in range(p_out):
        for px in range(p_out):
            for kh in range(K):
                for kw in range(K):
                    ty, tx = 2 * py + kh - 1, 2 * px + kw - 1
                    dy, qy = divmod(ty, p_in)
                    dx, qx = divmod(tx, p_in)
                    ib = (qy * p_in + qx) * cin
                    ob = (py * p_out + px) * cout
                    w_exp[dy + 1, dx + 1, ib:ib + cin, ob:ob + cout] = w[kh, kw]
    return w_exp.reshape(9, p_in * p_in * cin, p_out * p_out * cout)


def init_params(key, input_nc=3, ndf=8, n_class=1):
    """Synthetic parameters matching NLayerDiscriminator(input_nc, n_class, ndf, n_layers=3)."""
    ks = jax.random.split(key, 16)

    def w(k, cin, cout):
        return jax.random.normal(k, (4, 4, cin, cout), jnp.float32) / np.sqrt(16.0 * cin)

    p = {}
    p['w0'] = w(ks[0], input_nc, ndf)
    p['b0'] = 0.05 * jax.random.normal(ks[1], (ndf,), jnp.float32)
    p['w1'] = w(ks[2], ndf, 2 * ndf)
    p['g1'] = 1.0 + 0.1 * jax.random.normal(ks[3], (2 * ndf,), jnp.float32)
    p['be1'] = 0.05 * jax.random.normal(ks[4], (2 * ndf,), jnp.float32)
    p['w2'] = w(ks[5], 2 * ndf, 4 * ndf)
    p['g2'] = 1.0 + 0.1 * jax.random.normal(ks[6], (4 * ndf,), jnp.float32)
    p['be2'] = 0.05 * jax.random.normal(ks[7], (4 * ndf,), jnp.float32)
    p['w3'] = w(ks[8], 4 * ndf, 8 * ndf)
    p['g3'] = 1.0 + 0.1 * jax.random.normal(ks[9], (8 * ndf,), jnp.float32)
    p['be3'] = 0.05 * jax.random.normal(ks[10], (8 * ndf,), jnp.float32)
    p['w4'] = w(ks[11], 8 * ndf, n_class)
    p['b4'] = 0.05 * jax.random.normal(ks[12], (n_class,), jnp.float32)
    return p


def prepare_kernel_params(base, input_nc, ndf, n_class):
    """Expand / flatten the base parameters into the lattice layout used by the kernel."""
    npf = lambda a: np.asarray(a, np.float32)
    f32 = lambda a: jnp.asarray(a, jnp.float32)
    bf16 = lambda a: jnp.asarray(a, jnp.bfloat16)

    c2 = 2 * ndf
    c3 = 8 * ndf
    w4 = npf(base['w4']).reshape(16, c3, n_class)                           # (taps, cin, co)
    w4p = np.transpose(w4, (1, 0, 2)).reshape(c3, 16 * n_class)             # tap-packed cols

    kp = {
        'w0': bf16(_expand_stride2_conv(npf(base['w0']), 8)),               # (9, 64*in, 16*ndf)
        'b0': f32(np.tile(npf(base['b0']), 16)[None, :]),
        'w1': bf16(_expand_stride2_conv(npf(base['w1']), 4)),               # (9, 16*ndf, 8*ndf)
        'g1': f32(np.tile(npf(base['g1']), 4)[None, :]),                    # phase-replicated
        'be1': f32(np.tile(npf(base['be1']), 4)[None, :]),
        'bn1_pool': f32(np.tile(np.eye(c2, dtype=np.float32), (4, 4))),     # (8*ndf, 8*ndf)
        'w2': bf16(_expand_stride2_conv(npf(base['w2']), 2)),               # (9, 8*ndf, 4*ndf)
        'g2': f32(npf(base['g2'])[None, :]),
        'be2': f32(npf(base['be2'])[None, :]),
        'w3': bf16(npf(base['w3']).reshape(16, 4 * ndf, 8 * ndf)),          # (16, 4*ndf, 8*ndf)
        'g3': f32(npf(base['g3'])[None, :]),
        'be3': f32(npf(base['be3'])[None, :]),
        'w4p': bf16(w4p),                                                   # (8*ndf, 16*nc)
        'b4': f32(npf(base['b4'])[None, :]),
    }
    return kp


def _slab_mask(M, S, wp, valid_h, valid_w):
    """0/1 mask over the stacked pseudo-row slab: 1 on valid conv-output positions."""
    m = np.arange(M, dtype=np.int64)
    q = m % S
    ry = q // wp
    rx = q % wp
    return ((ry < valid_h) & (rx < valid_w)).astype(np.float32)[:, None]


def _vmem_limit():
    try:
        cap = pltpu.get_tpu_info().vmem_capacity_bytes
        return min(int(cap * 0.85), 128 * 1024 * 1024)
    except Exception:
        return 64 * 1024 * 1024


# ----------------------------------------------------------------------------------------
# Forward wrapper (crop + space-to-depth + padded-flat layout + single fused pallas_call)
# ----------------------------------------------------------------------------------------
def nlayer_discriminator_forward(x_nchw, kparams, crop_key, *, crop_size=224):
    assert crop_size % 8 == 0 and crop_size >= 24
    N, cin, hin, win = x_nchw.shape
    L = crop_size // 8
    wp = L + 2
    S = wp * wp
    R = N * S + 8                                  # +8 slack rows for tap-slice overrun
    Ma = (N - 1) * S + L * wp
    Mb = (N - 1) * S + (L - 1) * wp

    # TODO(synk): the PyTorch forward uses Python random.randint for the crop offsets; here
    # they are drawn deterministically from a jax.random key (same crop semantics).
    ky, kx = jax.random.split(crop_key)
    oy = jax.random.randint(ky, (), 0, hin - crop_size)
    ox = jax.random.randint(kx, (), 0, win - crop_size)
    xc = lax.dynamic_slice(x_nchw, (0, 0, oy, ox), (N, cin, crop_size, crop_size))

    # NCHW -> NHWC -> space-to-depth by 8 -> zero-pad -> flattened padded-row layout, bf16
    x = jnp.transpose(xc, (0, 2, 3, 1))
    x = x.reshape(N, L, 8, L, 8, cin).transpose(0, 1, 3, 2, 4, 5).reshape(N, L, L, 64 * cin)
    xp = jnp.pad(x, ((0, 0), (1, 1), (1, 1), (0, 0)))
    x_flat = xp.reshape(N * S, 64 * cin)
    x_flat = jnp.pad(x_flat, ((0, R - N * S), (0, 0))).astype(jnp.bfloat16)

    mask_a = jnp.asarray(_slab_mask(Ma, S, wp, L, L))
    mask_b = jnp.asarray(_slab_mask(Mb, S, wp, L - 1, L - 1))

    c_lat = 64 * cin
    c0 = kparams['w0'].shape[-1]
    c1 = kparams['w1'].shape[-1]
    c2c = kparams['w2'].shape[-1]
    c3 = kparams['w3'].shape[-1]
    n_class = kparams['b4'].shape[-1]

    args = (x_flat, mask_a, mask_b,
            kparams['w0'], kparams['b0'],
            kparams['w1'], kparams['g1'], kparams['be1'], kparams['bn1_pool'],
            kparams['w2'], kparams['g2'], kparams['be2'],
            kparams['w3'], kparams['g3'], kparams['be3'],
            kparams['w4p'], kparams['b4'])
    any_idx = {3, 5, 9, 12}                         # large conv weights: raw HBM, manual DMA

    def vspec(shape):
        nd = len(shape)
        return pl.BlockSpec(tuple(shape), lambda i, _nd=nd: (0,) * _nd)

    in_specs = [pl.BlockSpec(memory_space=pl.ANY) if idx in any_idx else vspec(a.shape)
                for idx, a in enumerate(args)]

    kern = functools.partial(_disc_kernel, N=N, L=L, n_class=n_class)

    out_flat = pl.pallas_call(
        kern,
        out_shape=jax.ShapeDtypeStruct((N * S, n_class), jnp.float32),
        grid=(1,),
        in_specs=in_specs,
        out_specs=vspec((N * S, n_class)),
        scratch_shapes=[
            pltpu.VMEM((R, c0), jnp.bfloat16),       # padded act0
            pltpu.VMEM((R, c1), jnp.bfloat16),       # padded act1
            pltpu.VMEM((R, c2c), jnp.bfloat16),      # padded act2
            pltpu.VMEM((R, c3), jnp.bfloat16),       # padded act3
            pltpu.VMEM(tuple(kparams['w0'].shape), jnp.bfloat16),
            pltpu.VMEM(tuple(kparams['w1'].shape), jnp.bfloat16),
            pltpu.VMEM(tuple(kparams['w2'].shape), jnp.bfloat16),
            pltpu.VMEM(tuple(kparams['w3'].shape), jnp.bfloat16),
            pltpu.SemaphoreType.DMA((4,)),
        ],
        compiler_params=pltpu.CompilerParams(
            dimension_semantics=("arbitrary",),
            vmem_limit_bytes=_vmem_limit()),
    )(*args)

    out = out_flat.reshape(N, wp, wp, n_class)[:, :L - 2, :L - 2, :]
    return jnp.transpose(out, (0, 3, 1, 2))                       # back to NCHW


# ----------------------------------------------------------------------------------------
# Plain-JAX reference (same semantics, used only for the correctness check)
# ----------------------------------------------------------------------------------------
def _reference_forward(x_nchw, base, crop_key, *, crop_size=224):
    N, cin, hin, win = x_nchw.shape
    ky, kx = jax.random.split(crop_key)
    oy = jax.random.randint(ky, (), 0, hin - crop_size)
    ox = jax.random.randint(kx, (), 0, win - crop_size)
    xc = lax.dynamic_slice(x_nchw, (0, 0, oy, ox), (N, cin, crop_size, crop_size))
    x = jnp.transpose(xc, (0, 2, 3, 1)).astype(jnp.float32)

    def conv(v, w, b, stride):
        w = w.astype(jnp.bfloat16).astype(jnp.float32)   # match the kernel's bf16 weights
        y = lax.conv_general_dilated(v, w, (stride, stride), [(1, 1), (1, 1)],
                                     dimension_numbers=('NHWC', 'HWIO', 'NHWC'))
        return y if b is None else y + b

    def bn(v, g, b):
        mean = jnp.mean(v, axis=(0, 1, 2), keepdims=True)
        var = jnp.mean((v - mean) ** 2, axis=(0, 1, 2), keepdims=True)
        return (v - mean) * lax.rsqrt(var + 1e-5) * g + b

    lrelu = lambda v: jnp.where(v >= 0.0, v, 0.2 * v)

    x = lrelu(conv(x, base['w0'], base['b0'], 2))
    x = lrelu(bn(conv(x, base['w1'], None, 2), base['g1'], base['be1']))
    x = lrelu(bn(conv(x, base['w2'], None, 2), base['g2'], base['be2']))
    x = lrelu(bn(conv(x, base['w3'], None, 1), base['g3'], base['be3']))
    x = conv(x, base['w4'], base['b4'], 1)
    return jnp.transpose(x, (0, 3, 1, 2))


# ----------------------------------------------------------------------------------------
if __name__ == "__main__":
    INPUT_NC, NDF, N_CLASS = 3, 8, 1      # small synthetic config (PyTorch default ndf=64)
    N, HIN, WIN = 2, 40, 40
    CROP = 32                             # stand-in for the fixed 224x224 crop (multiple of 8)

    root = jax.random.PRNGKey(0)
    k_x, k_p, k_crop = jax.random.split(root, 3)
    x = jax.random.normal(k_x, (N, INPUT_NC, HIN, WIN), jnp.float32)   # NCHW like PyTorch

    base = init_params(k_p, input_nc=INPUT_NC, ndf=NDF, n_class=N_CLASS)
    kparams = prepare_kernel_params(base, INPUT_NC, NDF, N_CLASS)

    fwd = jax.jit(functools.partial(nlayer_discriminator_forward, crop_size=CROP))
    out = jax.block_until_ready(fwd(x, kparams, k_crop))

    assert out.shape == (N, N_CLASS, CROP // 8 - 2, CROP // 8 - 2), out.shape
    assert bool(jnp.all(jnp.isfinite(out)))

    ref = jax.jit(functools.partial(_reference_forward, crop_size=CROP))(x, base, k_crop)
    np.testing.assert_allclose(np.asarray(out), np.asarray(ref), rtol=5e-2, atol=5e-2)

    print("KERNEL_OK")
</pallas_src>

<mosaic_0001>
module attributes {stable_mosaic.version = 11 : i64} {
  func.func @_disc_kernel(%arg0: i32, %arg1: memref<80x192xbf16, #tpu.memory_space<vmem>>, %arg2: memref<60x1xf32, #tpu.memory_space<vmem>>, %arg3: memref<54x1xf32, #tpu.memory_space<vmem>>, %arg4: memref<9x192x128xbf16, #tpu.memory_space<any>>, %arg5: memref<1x128xf32, #tpu.memory_space<vmem>>, %arg6: memref<9x128x64xbf16, #tpu.memory_space<any>>, %arg7: memref<1x64xf32, #tpu.memory_space<vmem>>, %arg8: memref<1x64xf32, #tpu.memory_space<vmem>>, %arg9: memref<64x64xf32, #tpu.memory_space<vmem>>, %arg10: memref<9x64x32xbf16, #tpu.memory_space<any>>, %arg11: memref<1x32xf32, #tpu.memory_space<vmem>>, %arg12: memref<1x32xf32, #tpu.memory_space<vmem>>, %arg13: memref<16x32x64xbf16, #tpu.memory_space<any>>, %arg14: memref<1x64xf32, #tpu.memory_space<vmem>>, %arg15: memref<1x64xf32, #tpu.memory_space<vmem>>, %arg16: memref<64x16xbf16, #tpu.memory_space<vmem>>, %arg17: memref<1x1xf32, #tpu.memory_space<vmem>>, %arg18: memref<72x1xf32, #tpu.memory_space<vmem>>, %arg19: memref<80x128xbf16, #tpu.memory_space<vmem>>, %arg20: memref<80x64xbf16, #tpu.memory_space<vmem>>, %arg21: memref<80x32xbf16, #tpu.memory_space<vmem>>, %arg22: memref<80x64xbf16, #tpu.memory_space<vmem>>, %arg23: memref<9x192x128xbf16, #tpu.memory_space<vmem>>, %arg24: memref<9x128x64xbf16, #tpu.memory_space<vmem>>, %arg25: memref<9x64x32xbf16, #tpu.memory_space<vmem>>, %arg26: memref<16x32x64xbf16, #tpu.memory_space<vmem>>, %arg27: memref<4x!tpu.dma_semaphore, #tpu.memory_space<semaphore_mem>>) attributes {dimension_semantics = [#tpu.dimension_semantics<arbitrary>], iteration_bounds = array<i64: 1>, scalar_prefetch = 0 : i64, scratch_operands = 9 : i64, tpu.core_type = #tpu.core_type<tc>, window_params = [{pipeline_mode = #tpu.pipeline_mode<synchronous>, transform_indices = @transform_0, window_bounds = array<i64: 80, 192>}, {pipeline_mode = #tpu.pipeline_mode<synchronous>, transform_indices = @transform_1, window_bounds = array<i64: 60, 1>}, {pipeline_mode = #tpu.pipeline_mode<synchronous>, transform_indices = @transform_2, window_bounds = array<i64: 54, 1>}, {}, {pipeline_mode = #tpu.pipeline_mode<synchronous>, transform_indices = @transform_4, window_bounds = array<i64: 1, 128>}, {}, {pipeline_mode = #tpu.pipeline_mode<synchronous>, transform_indices = @transform_6, window_bounds = array<i64: 1, 64>}, {pipeline_mode = #tpu.pipeline_mode<synchronous>, transform_indices = @transform_7, window_bounds = array<i64: 1, 64>}, {pipeline_mode = #tpu.pipeline_mode<synchronous>, transform_indices = @transform_8, window_bounds = array<i64: 64, 64>}, {}, {pipeline_mode = #tpu.pipeline_mode<synchronous>, transform_indices = @transform_10, window_bounds = array<i64: 1, 32>}, {pipeline_mode = #tpu.pipeline_mode<synchronous>, transform_indices = @transform_11, window_bounds = array<i64: 1, 32>}, {}, {pipeline_mode = #tpu.pipeline_mode<synchronous>, transform_indices = @transform_13, window_bounds = array<i64: 1, 64>}, {pipeline_mode = #tpu.pipeline_mode<synchronous>, transform_indices = @transform_14, window_bounds = array<i64: 1, 64>}, {pipeline_mode = #tpu.pipeline_mode<synchronous>, transform_indices = @transform_15, window_bounds = array<i64: 64, 16>}, {pipeline_mode = #tpu.pipeline_mode<synchronous>, transform_indices = @transform_16, window_bounds = array<i64: 1, 1>}, {pipeline_mode = #tpu.pipeline_mode<synchronous>, transform_indices = @transform_17, window_bounds = array<i64: 72, 1>}]} {
    %c0_i32 = arith.constant 0 : i32
    %0 = tpu.memref_slice %arg27[%c0_i32] : memref<4x!tpu.dma_semaphore, #tpu.memory_space<semaphore_mem>> -> memref<1x!tpu.dma_semaphore, #tpu.memory_space<semaphore_mem>>
    %1 = tpu.memref_squeeze %0 : memref<1x!tpu.dma_semaphore, #tpu.memory_space<semaphore_mem>> -> memref<!tpu.dma_semaphore, #tpu.memory_space<semaphore_mem>>
    tpu.enqueue_dma source(%arg4 : memref<9x192x128xbf16, #tpu.memory_space<any>>) target(%arg23 : memref<9x192x128xbf16, #tpu.memory_space<vmem>>) target_semaphore(%1 : memref<!tpu.dma_semaphore, #tpu.memory_space<semaphore_mem>>)
    %c1_i32 = arith.constant 1 : i32
    %2 = tpu.memref_slice %arg27[%c1_i32] : memref<4x!tpu.dma_semaphore, #tpu.memory_space<semaphore_mem>> -> memref<1x!tpu.dma_semaphore, #tpu.memory_space<semaphore_mem>>
    %3 = tpu.memref_squeeze %2 : memref<1x!tpu.dma_semaphore, #tpu.memory_space<semaphore_mem>> -> memref<!tpu.dma_semaphore, #tpu.memory_space<semaphore_mem>>
    tpu.enqueue_dma source(%arg6 : memref<9x128x64xbf16, #tpu.memory_space<any>>) target(%arg24 : memref<9x128x64xbf16, #tpu.memory_space<vmem>>) target_semaphore(%3 : memref<!tpu.dma_semaphore, #tpu.memory_space<semaphore_mem>>)
    %c2_i32 = arith.constant 2 : i32
    %4 = tpu.memref_slice %arg27[%c2_i32] : memref<4x!tpu.dma_semaphore, #tpu.memory_space<semaphore_mem>> -> memref<1x!tpu.dma_semaphore, #tpu.memory_space<semaphore_mem>>
    %5 = tpu.memref_squeeze %4 : memref<1x!tpu.dma_semaphore, #tpu.memory_space<semaphore_mem>> -> memref<!tpu.dma_semaphore, #tpu.memory_space<semaphore_mem>>
    tpu.enqueue_dma source(%arg10 : memref<9x64x32xbf16, #tpu.memory_space<any>>) target(%arg25 : memref<9x64x32xbf16, #tpu.memory_space<vmem>>) target_semaphore(%5 : memref<!tpu.dma_semaphore, #tpu.memory_space<semaphore_mem>>)
    %c3_i32 = arith.constant 3 : i32
    %6 = tpu.memref_slice %arg27[%c3_i32] : memref<4x!tpu.dma_semaphore, #tpu.memory_space<semaphore_mem>> -> memref<1x!tpu.dma_semaphore, #tpu.memory_space<semaphore_mem>>
    %7 = tpu.memref_squeeze %6 : memref<1x!tpu.dma_semaphore, #tpu.memory_space<semaphore_mem>> -> memref<!tpu.dma_semaphore, #tpu.memory_space<semaphore_mem>>
    tpu.enqueue_dma source(%arg13 : memref<16x32x64xbf16, #tpu.memory_space<any>>) target(%arg26 : memref<16x32x64xbf16, #tpu.memory_space<vmem>>) target_semaphore(%7 : memref<!tpu.dma_semaphore, #tpu.memory_space<semaphore_mem>>)
    %cst = arith.constant 0.000000e+00 : bf16
    %8 = vector.broadcast %cst : bf16 to vector<7x128xbf16>
    %c0 = arith.constant 0 : index
    %c0_0 = arith.constant 0 : index
    %9 = vector.load %arg19[%c0, %c0_0] : memref<80x128xbf16, #tpu.memory_space<vmem>>, vector<7x128xbf16>
    tpu.vector_store %arg19[%c0, %c0_0], %8 {strides = array<i32>} : memref<80x128xbf16, #tpu.memory_space<vmem>>, vector<7x128xbf16>,
    %cst_1 = arith.constant 0.000000e+00 : bf16
    %10 = vector.broadcast %cst_1 : bf16 to vector<13x128xbf16>
    %c67 = arith.constant 67 : index
    %c0_2 = arith.constant 0 : index
    %11 = vector.load %arg19[%c67, %c0_2] : memref<80x128xbf16, #tpu.memory_space<vmem>>, vector<13x128xbf16>
    tpu.vector_store %arg19[%c67, %c0_2], %10 {strides = array<i32>} : memref<80x128xbf16, #tpu.memory_space<vmem>>, vector<13x128xbf16>,
    %cst_3 = arith.constant 0.000000e+00 : bf16
    %12 = vector.broadcast %cst_3 : bf16 to vector<7x64xbf16>
    %c0_4 = arith.constant 0 : index
    %c0_5 = arith.constant 0 : index
    %13 = vector.load %arg20[%c0_4, %c0_5] : memref<80x64xbf16, #tpu.memory_space<vmem>>, vector<7x64xbf16>
    tpu.vector_store %arg20[%c0_4, %c0_5], %12 {strides = array<i32>} : memref<80x64xbf16, #tpu.memory_space<vmem>>, vector<7x64xbf16>,
    %cst_6 = arith.constant 0.000000e+00 : bf16
    %14 = vector.broadcast %cst_6 : bf16 to vector<13x64xbf16>
    %c67_7 = arith.constant 67 : index
    %c0_8 = arith.constant 0 : index
    %15 = vector.load %arg20[%c67_7, %c0_8] : memref<80x64xbf16, #tpu.memory_space<vmem>>, vector<13x64xbf16>
    tpu.vector_store %arg20[%c67_7, %c0_8], %14 {strides = array<i32>} : memref<80x64xbf16, #tpu.memory_space<vmem>>, vector<13x64xbf16>,
    %cst_9 = arith.constant 0.000000e+00 : bf16
    %16 = vector.broadcast %cst_9 : bf16 to vector<7x32xbf16>
    %c0_10 = arith.constant 0 : index
    %c0_11 = arith.constant 0 : index
    %17 = vector.load %arg21[%c0_10, %c0_11] : memref<80x32xbf16, #tpu.memory_space<vmem>>, vector<7x32xbf16>
    tpu.vector_store %arg21[%c0_10, %c0_11], %16 {strides = array<i32>} : memref<80x32xbf16, #tpu.memory_space<vmem>>, vector<7x32xbf16>,
    %cst_12 = arith.constant 0.000000e+00 : bf16
    %18 = vector.broadcast %cst_12 : bf16 to vector<13x32xbf16>
    %c67_13 = arith.constant 67 : index
    %c0_14 = arith.constant 0 : index
    %19 = vector.load %arg21[%c67_13, %c0_14] : memref<80x32xbf16, #tpu.memory_space<vmem>>, vector<13x32xbf16>
    tpu.vector_store %arg21[%c67_13, %c0_14], %18 {strides = array<i32>} : memref<80x32xbf16, #tpu.memory_space<vmem>>, vector<13x32xbf16>,
    %cst_15 = arith.constant 0.000000e+00 : bf16
    %20 = vector.broadcast %cst_15 : bf16 to vector<7x64xbf16>
    %c0_16 = arith.constant 0 : index
    %c0_17 = arith.constant 0 : index
    %21 = vector.load %arg22[%c0_16, %c0_17] : memref<80x64xbf16, #tpu.memory_space<vmem>>, vector<7x64xbf16>
    tpu.vector_store %arg22[%c0_16, %c0_17], %20 {strides = array<i32>} : memref<80x64xbf16, #tpu.memory_space<vmem>>, vector<7x64xbf16>,
    %cst_18 = arith.constant 0.000000e+00 : bf16
    %22 = vector.broadcast %cst_18 : bf16 to vector<19x64xbf16>
    %c61 = arith.constant 61 : index
    %c0_19 = arith.constant 0 : index
    %23 = vector.load %arg22[%c61, %c0_19] : memref<80x64xbf16, #tpu.memory_space<vmem>>, vector<19x64xbf16>
    tpu.vector_store %arg22[%c61, %c0_19], %22 {strides = array<i32>} : memref<80x64xbf16, #tpu.memory_space<vmem>>, vector<19x64xbf16>,
    %c0_20 = arith.constant 0 : index
    %c0_21 = arith.constant 0 : index
    %24 = vector.load %arg2[%c0_20, %c0_21] : memref<60x1xf32, #tpu.memory_space<vmem>>, vector<60x1xf32>
    %cst_22 = arith.constant 0.000000e+00 : f32
    %25 = vector.broadcast %cst_22 : f32 to vector<60x1xf32>
    %26 = arith.cmpf one, %24, %25 : vector<60x1xf32>
    %c0_23 = arith.constant 0 : index
    %c0_24 = arith.constant 0 : index
    %27 = vector.load %arg3[%c0_23, %c0_24] : memref<54x1xf32, #tpu.memory_space<vmem>>, vector<54x1xf32>
    %cst_25 = arith.constant 0.000000e+00 : f32
    %28 = vector.broadcast %cst_25 : f32 to vector<54x1xf32>
    %29 = arith.cmpf one, %27, %28 : vector<54x1xf32>
    %c0_i32_26 = arith.constant 0 : i32
    %30 = tpu.memref_slice %arg27[%c0_i32_26] : memref<4x!tpu.dma_semaphore, #tpu.memory_space<semaphore_mem>> -> memref<1x!tpu.dma_semaphore, #tpu.memory_space<semaphore_mem>>
    %31 = tpu.memref_squeeze %30 : memref<1x!tpu.dma_semaphore, #tpu.memory_space<semaphore_mem>> -> memref<!tpu.dma_semaphore, #tpu.memory_space<semaphore_mem>>
    tpu.wait_dma2 semaphore(%31 : memref<!tpu.dma_semaphore, #tpu.memory_space<semaphore_mem>>) src(%arg4 : memref<9x192x128xbf16, #tpu.memory_space<any>>) dst(%arg23 : memref<9x192x128xbf16, #tpu.memory_space<vmem>>)
    %cst_27 = arith.constant 0.000000e+00 : f32
    %32 = vector.broadcast %cst_27 : f32 to vector<60x128xf32>
    %c0_28 = arith.constant 0 : index
    %c0_29 = arith.constant 0 : index
    %33 = vector.load %arg1[%c0_28, %c0_29] : memref<80x192xbf16, #tpu.memory_space<vmem>>, vector<60x192xbf16>
    %c0_30 = arith.constant 0 : index
    %c0_31 = arith.constant 0 : index
    %c0_32 = arith.constant 0 : index
    %34 = vector.load %arg23[%c0_30, %c0_31, %c0_32] : memref<9x192x128xbf16, #tpu.memory_space<vmem>>, vector<1x192x128xbf16>
    %35 = vector.shape_cast %34 : vector<1x192x128xbf16> to vector<192x128xbf16>
    %cst_33 = arith.constant dense<0.000000e+00> : vector<60x128xf32>
    %36 = tpu.matmul %33, %35, %cst_33 {dimension_numbers = #tpu.dot_dimension_numbers<[1], [0], [0], [1], [0, 0, 1, 1], [], []>} : vector<60x192xbf16>, vector<192x128xbf16>, vector<60x128xf32> -> vector<60x128xf32>
    %37 = arith.addf %32, %36 : vector<60x128xf32>
    %c1 = arith.constant 1 : index
    %c0_34 = arith.constant 0 : index
    %38 = vector.load %arg1[%c1, %c0_34] : memref<80x192xbf16, #tpu.memory_space<vmem>>, vector<60x192xbf16>
    %c1_35 = arith.constant 1 : index
    %c0_36 = arith.constant 0 : index
    %c0_37 = arith.constant 0 : index
    %39 = vector.load %arg23[%c1_35, %c0_36, %c0_37] : memref<9x192x128xbf16, #tpu.memory_space<vmem>>, vector<1x192x128xbf16>
    %40 = vector.shape_cast %39 : vector<1x192x128xbf16> to vector<192x128xbf16>
    %cst_38 = arith.constant dense<0.000000e+00> : vector<60x128xf32>
    %41 = tpu.matmul %38, %40, %cst_38 {dimension_numbers = #tpu.dot_dimension_numbers<[1], [0], [0], [1], [0, 0, 1, 1], [], []>} : vector<60x192xbf16>, vector<192x128xbf16>, vector<60x128xf32> -> vector<60x128xf32>
    %42 = arith.addf %37, %41 : vector<60x128xf32>
    %c2 = arith.constant 2 : index
    %c0_39 = arith.constant 0 : index
    %43 = vector.load %arg1[%c2, %c0_39] : memref<80x192xbf16, #tpu.memory_space<vmem>>, vector<60x192xbf16>
    %c2_40 = arith.constant 2 : index
    %c0_41 = arith.constant 0 : index
    %c0_42 = arith.constant 0 : index
    %44 = vector.load %arg23[%c2_40, %c0_41, %c0_42] : memref<9x192x128xbf16, #tpu.memory_space<vmem>>, vector<1x192x128xbf16>
    %45 = vector.shape_cast %44 : vector<1x192x128xbf16> to vector<192x128xbf16>
    %cst_43 = arith.constant dense<0.000000e+00> : vector<60x128xf32>
    %46 = tpu.matmul %43, %45, %cst_43 {dimension_numbers = #tpu.dot_dimension_numbers<[1], [0], [0], [1], [0, 0, 1, 1], [], []>} : vector<60x192xbf16>, vector<192x128xbf16>, vector<60x128xf32> -> vector<60x128xf32>
    %47 = arith.addf %42, %46 : vector<60x128xf32>
    %c6 = arith.constant 6 : index
    %c0_44 = arith.constant 0 : index
    %48 = vector.load %arg1[%c6, %c0_44] : memref<80x192xbf16, #tpu.memory_space<vmem>>, vector<60x192xbf16>
    %c3 = arith.constant 3 : index
    %c0_45 = arith.constant 0 : index
    %c0_46 = arith.constant 0 : index
    %49 = vector.load %arg23[%c3, %c0_45, %c0_46] : memref<9x192x128xbf16, #tpu.memory_space<vmem>>, vector<1x192x128xbf16>
    %50 = vector.shape_cast %49 : vector<1x192x128xbf16> to vector<192x128xbf16>
    %cst_47 = arith.constant dense<0.000000e+00> : vector<60x128xf32>
    %51 = tpu.matmul %48, %50, %cst_47 {dimension_numbers = #tpu.dot_dimension_numbers<[1], [0], [0], [1], [0, 0, 1, 1], [], []>} : vector<60x192xbf16>, vector<192x128xbf16>, vector<60x128xf32> -> vector<60x128xf32>
    %52 = arith.addf %47, %51 : vector<60x128xf32>
    %c7 = arith.constant 7 : index
    %c0_48 = arith.constant 0 : index
    %53 = vector.load %arg1[%c7, %c0_48] : memref<80x192xbf16, #tpu.memory_space<vmem>>, vector<60x192xbf16>
    %c4 = arith.constant 4 : index
    %c0_49 = arith.constant 0 : index
    %c0_50 = arith.constant 0 : index
    %54 = vector.load %arg23[%c4, %c0_49, %c0_50] : memref<9x192x128xbf16, #tpu.memory_space<vmem>>, vector<1x192x128xbf16>
    %55 = vector.shape_cast %54 : vector<1x192x128xbf16> to vector<192x128xbf16>
    %cst_51 = arith.constant dense<0.000000e+00> : vector<60x128xf32>
    %56 = tpu.matmul %53, %55, %cst_51 {dimension_numbers = #tpu.dot_dimension_numbers<[1], [0], [0], [1], [0, 0, 1, 1], [], []>} : vector<60x192xbf16>, vector<192x128xbf16>, vector<60x128xf32> -> vector<60x128xf32>
    %57 = arith.addf %52, %56 : vector<60x128xf32>
    %c8 = arith.constant 8 : index
    %c0_52 = arith.constant 0 : index
    %58 = vector.load %arg1[%c8, %c0_52] : memref<80x192xbf16, #tpu.memory_space<vmem>>, vector<60x192xbf16>
    %c5 = arith.constant 5 : index
    %c0_53 = arith.constant 0 : index
    %c0_54 = arith.constant 0 : index
    %59 = vector.load %arg23[%c5, %c0_53, %c0_54] : memref<9x192x128xbf16, #tpu.memory_space<vmem>>, vector<1x192x128xbf16>
    %60 = vector.shape_cast %59 : vector<1x192x128xbf16> to vector<192x128xbf16>
    %cst_55 = arith.constant dense<0.000000e+00> : vector<60x128xf32>
    %61 = tpu.matmul %58, %60, %cst_55 {dimension_numbers = #tpu.dot_dimension_numbers<[1], [0], [0], [1], [0, 0, 1, 1], [], []>} : vector<60x192xbf16>, vector<192x128xbf16>, vector<60x128xf32> -> vector<60x128xf32>
    %62 = arith.addf %57, %61 : vector<60x128xf32>
    %c12 = arith.constant 12 : index
    %c0_56 = arith.constant 0 : index
    %63 = vector.load %arg1[%c12, %c0_56] : memref<80x192xbf16, #tpu.memory_space<vmem>>, vector<60x192xbf16>
    %c6_57 = arith.constant 6 : index
    %c0_58 = arith.constant 0 : index
    %c0_59 = arith.constant 0 : index
    %64 = vector.load %arg23[%c6_57, %c0_58, %c0_59] : memref<9x192x128xbf16, #tpu.memory_space<vmem>>, vector<1x192x128xbf16>
    %65 = vector.shape_cast %64 : vector<1x192x128xbf16> to vector<192x128xbf16>
    %cst_60 = arith.constant dense<0.000000e+00> : vector<60x128xf32>
    %66 = tpu.matmul %63, %65, %cst_60 {dimension_numbers = #tpu.dot_dimension_numbers<[1], [0], [0], [1], [0, 0, 1, 1], [], []>} : vector<60x192xbf16>, vector<192x128xbf16>, vector<60x128xf32> -> vector<60x128xf32>
    %67 = arith.addf %62, %66 : vector<60x128xf32>
    %c13 = arith.constant 13 : index
    %c0_61 = arith.constant 0 : index
    %68 = vector.load %arg1[%c13, %c0_61] : memref<80x192xbf16, #tpu.memory_space<vmem>>, vector<60x192xbf16>
    %c7_62 = arith.constant 7 : index
    %c0_63 = arith.constant 0 : index
    %c0_64 = arith.constant 0 : index
    %69 = vector.load %arg23[%c7_62, %c0_63, %c0_64] : memref<9x192x128xbf16, #tpu.memory_space<vmem>>, vector<1x192x128xbf16>
    %70 = vector.shape_cast %69 : vector<1x192x128xbf16> to vector<192x128xbf16>
    %cst_65 = arith.constant dense<0.000000e+00> : vector<60x128xf32>
    %71 = tpu.matmul %68, %70, %cst_65 {dimension_numbers = #tpu.dot_dimension_numbers<[1], [0], [0], [1], [0, 0, 1, 1], [], []>} : vector<60x192xbf16>, vector<192x128xbf16>, vector<60x128xf32> -> vector<60x128xf32>
    %72 = arith.addf %67, %71 : vector<60x128xf32>
    %c14 = arith.constant 14 : index
    %c0_66 = arith.constant 0 : index
    %73 = vector.load %arg1[%c14, %c0_66] : memref<80x192xbf16, #tpu.memory_space<vmem>>, vector<60x192xbf16>
    %c8_67 = arith.constant 8 : index
    %c0_68 = arith.constant 0 : index
    %c0_69 = arith.constant 0 : index
    %74 = vector.load %arg23[%c8_67, %c0_68, %c0_69] : memref<9x192x128xbf16, #tpu.memory_space<vmem>>, vector<1x192x128xbf16>
    %75 = vector.shape_cast %74 : vector<1x192x128xbf16> to vector<192x128xbf16>
    %cst_70 = arith.constant dense<0.000000e+00> : vector<60x128xf32>
    %76 = tpu.matmul %73, %75, %cst_70 {dimension_numbers = #tpu.dot_dimension_numbers<[1], [0], [0], [1], [0, 0, 1, 1], [], []>} : vector<60x192xbf16>, vector<192x128xbf16>, vector<60x128xf32> -> vector<60x128xf32>
    %77 = arith.addf %72, %76 : vector<60x128xf32>
    %c0_71 = arith.constant 0 : index
    %c0_72 = arith.constant 0 : index
    %78 = vector.load %arg5[%c0_71, %c0_72] : memref<1x128xf32, #tpu.memory_space<vmem>>, vector<1x128xf32>
    %79 = vector.broadcast %78 : vector<1x128xf32> to vector<60x128xf32>
    %80 = arith.addf %77, %79 : vector<60x128xf32>
    %cst_73 = arith.constant 0.000000e+00 : f32
    %81 = vector.broadcast %cst_73 : f32 to vector<60x128xf32>
    %82 = arith.cmpf oge, %80, %81 : vector<60x128xf32>
    %cst_74 = arith.constant 2.000000e-01 : f32
    %83 = vector.broadcast %cst_74 : f32 to vector<60x128xf32>
    %84 = arith.mulf %83, %80 : vector<60x128xf32>
    %85 = arith.select %82, %80, %84 : vector<60x128xi1>, vector<60x128xf32>
    %cst_75 = arith.constant 0.000000e+00 : f32
    %86 = vector.shape_cast %26 : vector<60x1xi1> to vector<60x1xi1>
    %87 = vector.broadcast %86 : vector<60x1xi1> to vector<60x128xi1>
    %88 = vector.broadcast %cst_75 : f32 to vector<60x128xf32>
    %89 = arith.select %87, %85, %88 : vector<60x128xi1>, vector<60x128xf32>
    %90 = arith.truncf %89 : vector<60x128xf32> to vector<60x128xbf16>
    %c7_76 = arith.constant 7 : index
    %c0_77 = arith.constant 0 : index
    %91 = vector.load %arg19[%c7_76, %c0_77] : memref<80x128xbf16, #tpu.memory_space<vmem>>, vector<60x128xbf16>
    tpu.vector_store %arg19[%c7_76, %c0_77], %90 {strides = array<i32>} : memref<80x128xbf16, #tpu.memory_space<vmem>>, vector<60x128xbf16>,
    %c1_i32_78 = arith.constant 1 : i32
    %92 = tpu.memref_slice %arg27[%c1_i32_78] : memref<4x!tpu.dma_semaphore, #tpu.memory_space<semaphore_mem>> -> memref<1x!tpu.dma_semaphore, #tpu.memory_space<semaphore_mem>>
    %93 = tpu.memref_squeeze %92 : memref<1x!tpu.dma_semaphore, #tpu.memory_space<semaphore_mem>> -> memref<!tpu.dma_semaphore, #tpu.memory_space<semaphore_mem>>
    tpu.wait_dma2 semaphore(%93 : memref<!tpu.dma_semaphore, #tpu.memory_space<semaphore_mem>>) src(%arg6 : memref<9x128x64xbf16, #tpu.memory_space<any>>) dst(%arg24 : memref<9x128x64xbf16, #tpu.memory_space<vmem>>)
    %cst_79 = arith.constant 0.000000e+00 : f32
    %94 = vector.broadcast %cst_79 : f32 to vector<60x64xf32>
    %c0_80 = arith.constant 0 : index
    %c0_81 = arith.constant 0 : index
    %95 = vector.load %arg19[%c0_80, %c0_81] : memref<80x128xbf16, #tpu.memory_space<vmem>>, vector<60x128xbf16>
    %c0_82 = arith.constant 0 : index
    %c0_83 = arith.constant 0 : index
    %c0_84 = arith.constant 0 : index
    %96 = vector.load %arg24[%c0_82, %c0_83, %c0_84] : memref<9x128x64xbf16, #tpu.memory_space<vmem>>, vector<1x128x64xbf16>
    %97 = vector.shape_cast %96 : vector<1x128x64xbf16> to vector<128x64xbf16>
    %cst_85 = arith.constant dense<0.000000e+00> : vector<60x64xf32>
    %98 = tpu.matmul %95, %97, %cst_85 {dimension_numbers = #tpu.dot_dimension_numbers<[1], [0], [0], [1], [0, 0, 1, 1], [], []>} : vector<60x128xbf16>, vector<128x64xbf16>, vector<60x64xf32> -> vector<60x64xf32>
    %99 = arith.addf %94, %98 : vector<60x64xf32>
    %c1_86 = arith.constant 1 : index
    %c0_87 = arith.constant 0 : index
    %100 = vector.load %arg19[%c1_86, %c0_87] : memref<80x128xbf16, #tpu.memory_space<vmem>>, vector<60x128xbf16>
    %c1_88 = arith.constant 1 : index
    %c0_89 = arith.constant 0 : index
    %c0_90 = arith.constant 0 : index
    %101 = vector.load %arg24[%c1_88, %c0_89, %c0_90] : memref<9x128x64xbf16, #tpu.memory_space<vmem>>, vector<1x128x64xbf16>
    %102 = vector.shape_cast %101 : vector<1x128x64xbf16> to vector<128x64xbf16>
    %cst_91 = arith.constant dense<0.000000e+00> : vector<60x64xf32>
    %103 = tpu.matmul %100, %102, %cst_91 {dimension_numbers = #tpu.dot_dimension_numbers<[1], [0], [0], [1], [0, 0, 1, 1], [], []>} : vector<60x128xbf16>, vector<128x64xbf16>, vector<60x64xf32> -> vector<60x64xf32>
    %104 = arith.addf %99, %103 : vector<60x64xf32>
    %c2_92 = arith.constant 2 : index
    %c0_93 = arith.constant 0 : index
    %105 = vector.load %arg19[%c2_92, %c0_93] : memref<80x128xbf16, #tpu.memory_space<vmem>>, vector<60x128xbf16>
    %c2_94 = arith.constant 2 : index
    %c0_95 = arith.constant 0 : index
    %c0_96 = arith.constant 0 : index
    %106 = vector.load %arg24[%c2_94, %c0_95, %c0_96] : memref<9x128x64xbf16, #tpu.memory_space<vmem>>, vector<1x128x64xbf16>
    %107 = vector.shape_cast %106 : vector<1x128x64xbf16> to vector<128x64xbf16>
    %cst_97 = arith.constant dense<0.000000e+00> : vector<60x64xf32>
    %108 = tpu.matmul %105, %107, %cst_97 {dimension_numbers = #tpu.dot_dimension_numbers<[1], [0], [0], [1], [0, 0, 1, 1], [], []>} : vector<60x128xbf16>, vector<128x64xbf16>, vector<60x64xf32> -> vector<60x64xf32>
    %109 = arith.addf %104, %108 : vector<60x64xf32>
    %c6_98 = arith.constant 6 : index
    %c0_99 = arith.constant 0 : index
    %110 = vector.load %arg19[%c6_98, %c0_99] : memref<80x128xbf16, #tpu.memory_space<vmem>>, vector<60x128xbf16>
    %c3_100 = arith.constant 3 : index
    %c0_101 = arith.constant 0 : index
    %c0_102 = arith.constant 0 : index
    %111 = vector.load %arg24[%c3_100, %c0_101, %c0_102] : memref<9x128x64xbf16, #tpu.memory_space<vmem>>, vector<1x128x64xbf16>
    %112 = vector.shape_cast %111 : vector<1x128x64xbf16> to vector<128x64xbf16>
    %cst_103 = arith.constant dense<0.000000e+00> : vector<60x64xf32>
    %113 = tpu.matmul %110, %112, %cst_103 {dimension_numbers = #tpu.dot_dimension_numbers<[1], [0], [0], [1], [0, 0, 1, 1], [], []>} : vector<60x128xbf16>, vector<128x64xbf16>, vector<60x64xf32> -> vector<60x64xf32>
    %114 = arith.addf %109, %113 : vector<60x64xf32>
    %c7_104 = arith.constant 7 : index
    %c0_105 = arith.constant 0 : index
    %115 = vector.load %arg19[%c7_104, %c0_105] : memref<80x128xbf16, #tpu.memory_space<vmem>>, vector<60x128xbf16>
    %c4_106 = arith.constant 4 : index
    %c0_107 = arith.constant 0 : index
    %c0_108 = arith.constant 0 : index
    %116 = vector.load %arg24[%c4_106, %c0_107, %c0_108] : memref<9x128x64xbf16, #tpu.memory_space<vmem>>, vector<1x128x64xbf16>
    %117 = vector.shape_cast %116 : vector<1x128x64xbf16> to vector<128x64xbf16>
    %cst_109 = arith.constant dense<0.000000e+00> : vector<60x64xf32>
    %118 = tpu.matmul %115, %117, %cst_109 {dimension_numbers = #tpu.dot_dimension_numbers<[1], [0], [0], [1], [0, 0, 1, 1], [], []>} : vector<60x128xbf16>, vector<128x64xbf16>, vector<60x64xf32> -> vector<60x64xf32>
    %119 = arith.addf %114, %118 : vector<60x64xf32>
    %c8_110 = arith.constant 8 : index
    %c0_111 = arith.constant 0 : index
    %120 = vector.load %arg19[%c8_110, %c0_111] : memref<80x128xbf16, #tpu.memory_space<vmem>>, vector<60x128xbf16>
    %c5_112 = arith.constant 5 : index
    %c0_113 = arith.constant 0 : index
    %c0_114 = arith.constant 0 : index
    %121 = vector.load %arg24[%c5_112, %c0_113, %c0_114] : memref<9x128x64xbf16, #tpu.memory_space<vmem>>, vector<1x128x64xbf16>
    %122 = vector.shape_cast %121 : vector<1x128x64xbf16> to vector<128x64xbf16>
    %cst_115 = arith.constant dense<0.000000e+00> : vector<60x64xf32>
    %123 = tpu.matmul %120, %122, %cst_115 {dimension_numbers = #tpu.dot_dimension_numbers<[1], [0], [0], [1], [0, 0, 1, 1], [], []>} : vector<60x128xbf16>, vector<128x64xbf16>, vector<60x64xf32> -> vector<60x64xf32>
    %124 = arith.addf %119, %123 : vector<60x64xf32>
    %c12_116 = arith.constant 12 : index
    %c0_117 = arith.constant 0 : index
    %125 = vector.load %arg19[%c12_116, %c0_117] : memref<80x128xbf16, #tpu.memory_space<vmem>>, vector<60x128xbf16>
    %c6_118 = arith.constant 6 : index
    %c0_119 = arith.constant 0 : index
    %c0_120 = arith.constant 0 : index
    %126 = vector.load %arg24[%c6_118, %c0_119, %c0_120] : memref<9x128x64xbf16, #tpu.memory_space<vmem>>, vector<1x128x64xbf16>
    %127 = vector.shape_cast %126 : vector<1x128x64xbf16> to vector<128x64xbf16>
    %cst_121 = arith.constant dense<0.000000e+00> : vector<60x64xf32>
    %128 = tpu.matmul %125, %127, %cst_121 {dimension_numbers = #tpu.dot_dimension_numbers<[1], [0], [0], [1], [0, 0, 1, 1], [], []>} : vector<60x128xbf16>, vector<128x64xbf16>, vector<60x64xf32> -> vector<60x64xf32>
    %129 = arith.addf %124, %128 : vector<60x64xf32>
    %c13_122 = arith.constant 13 : index
    %c0_123 = arith.constant 0 : index
    %130 = vector.load %arg19[%c13_122, %c0_123] : memref<80x128xbf16, #tpu.memory_space<vmem>>, vector<60x128xbf16>
    %c7_124 = arith.constant 7 : index
    %c0_125 = arith.constant 0 : index
    %c0_126 = arith.constant 0 : index
    %131 = vector.load %arg24[%c7_124, %c0_125, %c0_126] : memref<9x128x64xbf16, #tpu.memory_space<vmem>>, vector<1x128x64xbf16>
    %132 = vector.shape_cast %131 : vector<1x128x64xbf16> to vector<128x64xbf16>
    %cst_127 = arith.constant dense<0.000000e+00> : vector<60x64xf32>
    %133 = tpu.matmul %130, %132, %cst_127 {dimension_numbers = #tpu.dot_dimension_numbers<[1], [0], [0], [1], [0, 0, 1, 1], [], []>} : vector<60x128xbf16>, vector<128x64xbf16>, vector<60x64xf32> -> vector<60x64xf32>
    %134 = arith.addf %129, %133 : vector<60x64xf32>
    %c14_128 = arith.constant 14 : index
    %c0_129 = arith.constant 0 : index
    %135 = vector.load %arg19[%c14_128, %c0_129] : memref<80x128xbf16, #tpu.memory_space<vmem>>, vector<60x128xbf16>
    %c8_130 = arith.constant 8 : index
    %c0_131 = arith.constant 0 : index
    %c0_132 = arith.constant 0 : index
    %136 = vector.load %arg24[%c8_130, %c0_131, %c0_132] : memref<9x128x64xbf16, #tpu.memory_space<vmem>>, vector<1x128x64xbf16>
    %137 = vector.shape_cast %136 : vector<1x128x64xbf16> to vector<128x64xbf16>
    %cst_133 = arith.constant dense<0.000000e+00> : vector<60x64xf32>
    %138 = tpu.matmul %135, %137, %cst_133 {dimension_numbers = #tpu.dot_dimension_numbers<[1], [0], [0], [1], [0, 0, 1, 1], [], []>} : vector<60x128xbf16>, vector<128x64xbf16>, vector<60x64xf32> -> vector<60x64xf32>
    %139 = arith.addf %134, %138 : vector<60x64xf32>
    %cst_134 = arith.constant 0.000000e+00 : f32
    %140 = vector.shape_cast %26 : vector<60x1xi1> to vector<60x1xi1>
    %141 = vector.broadcast %140 : vector<60x1xi1> to vector<60x64xi1>
    %142 = vector.broadcast %cst_134 : f32 to vector<60x64xf32>
    %143 = arith.select %141, %139, %142 : vector<60x64xi1>, vector<60x64xf32>
    %c0_135 = arith.constant 0 : index
    %c0_136 = arith.constant 0 : index
    %144 = vector.load %arg7[%c0_135, %c0_136] : memref<1x64xf32, #tpu.memory_space<vmem>>, vector<1x64xf32>
    %c0_137 = arith.constant 0 : index
    %c0_138 = arith.constant 0 : index
    %145 = vector.load %arg8[%c0_137, %c0_138] : memref<1x64xf32, #tpu.memory_space<vmem>>, vector<1x64xf32>
    %c0_139 = arith.constant 0 : index
    %c0_140 = arith.constant 0 : index
    %146 = vector.load %arg9[%c0_139, %c0_140] : memref<64x64xf32, #tpu.memory_space<vmem>>, vector<64x64xf32>
    %cst_141 = arith.constant dense<0.000000e+00> : vector<64xf32>
    %147 = vector.multi_reduction <add>, %143, %cst_141 [0] : vector<60x64xf32> to vector<64xf32>
    %148 = vector.shape_cast %147 : vector<64xf32> to vector<1x64xf32>
    %149 = arith.mulf %143, %143 : vector<60x64xf32>
    %cst_142 = arith.constant dense<0.000000e+00> : vector<64xf32>
    %150 = vector.multi_reduction <add>, %149, %cst_142 [0] : vector<60x64xf32> to vector<64xf32>
    %151 = vector.shape_cast %150 : vector<64xf32> to vector<1x64xf32>
    %cst_143 = arith.constant dense<0.000000e+00> : vector<1x64xf32>
    %152 = tpu.matmul %148, %146, %cst_143 {dimension_numbers = #tpu.dot_dimension_numbers<[1], [0], [0], [1], [0, 0, 1, 1], [], []>} : vector<1x64xf32>, vector<64x64xf32>, vector<1x64xf32> -> vector<1x64xf32>
    %cst_144 = arith.constant dense<0.000000e+00> : vector<1x64xf32>
    %153 = tpu.matmul %151, %146, %cst_144 {dimension_numbers = #tpu.dot_dimension_numbers<[1], [0], [0], [1], [0, 0, 1, 1], [], []>} : vector<1x64xf32>, vector<64x64xf32>, vector<1x64xf32> -> vector<1x64xf32>
    %cst_145 = arith.constant 7.812500e-03 : f32
    %154 = vector.broadcast %cst_145 : f32 to vector<1x64xf32>
    %155 = arith.mulf %152, %154 : vector<1x64xf32>
    %cst_146 = arith.constant 7.812500e-03 : f32
    %156 = vector.broadcast %cst_146 : f32 to vector<1x64xf32>
    %157 = arith.mulf %153, %156 : vector<1x64xf32>
    %158 = arith.mulf %155, %155 : vector<1x64xf32>
    %159 = arith.subf %157, %158 : vector<1x64xf32>
    %cst_147 = arith.constant 9.99999974E-6 : f32
    %160 = vector.broadcast %cst_147 : f32 to vector<1x64xf32>
    %161 = arith.addf %159, %160 : vector<1x64xf32>
    %162 = math.rsqrt %161 : vector<1x64xf32>
    %163 = arith.mulf %144, %162 : vector<1x64xf32>
    %164 = arith.mulf %155, %163 : vector<1x64xf32>
    %165 = arith.subf %145, %164 : vector<1x64xf32>
    %166 = vector.broadcast %163 : vector<1x64xf32> to vector<60x64xf32>
    %167 = arith.mulf %143, %166 : vector<60x64xf32>
    %168 = vector.broadcast %165 : vector<1x64xf32> to vector<60x64xf32>
    %169 = arith.addf %167, %168 : vector<60x64xf32>
    %cst_148 = arith.constant 0.000000e+00 : f32
    %170 = vector.broadcast %cst_148 : f32 to vector<60x64xf32>
    %171 = arith.cmpf oge, %169, %170 : vector<60x64xf32>
    %cst_149 = arith.constant 2.000000e-01 : f32
    %172 = vector.broadcast %cst_149 : f32 to vector<60x64xf32>
    %173 = arith.mulf %172, %169 : vector<60x64xf32>
    %174 = arith.select %171, %169, %173 : vector<60x64xi1>, vector<60x64xf32>
    %cst_150 = arith.constant 0.000000e+00 : f32
    %175 = vector.shape_cast %26 : vector<60x1xi1> to vector<60x1xi1>
    %176 = vector.broadcast %175 : vector<60x1xi1> to vector<60x64xi1>
    %177 = vector.broadcast %cst_150 : f32 to vector<60x64xf32>
    %178 = arith.select %176, %174, %177 : vector<60x64xi1>, vector<60x64xf32>
    %179 = arith.truncf %178 : vector<60x64xf32> to vector<60x64xbf16>
    %c7_151 = arith.constant 7 : index
    %c0_152 = arith.constant 0 : index
    %180 = vector.load %arg20[%c7_151, %c0_152] : memref<80x64xbf16, #tpu.memory_space<vmem>>, vector<60x64xbf16>
    tpu.vector_store %arg20[%c7_151, %c0_152], %179 {strides = array<i32>} : memref<80x64xbf16, #tpu.memory_space<vmem>>, vector<60x64xbf16>,
    %c2_i32_153 = arith.constant 2 : i32
    %181 = tpu.memref_slice %arg27[%c2_i32_153] : memref<4x!tpu.dma_semaphore, #tpu.memory_space<semaphore_mem>> -> memref<1x!tpu.dma_semaphore, #tpu.memory_space<semaphore_mem>>
    %182 = tpu.memref_squeeze %181 : memref<1x!tpu.dma_semaphore, #tpu.memory_space<semaphore_mem>> -> memref<!tpu.dma_semaphore, #tpu.memory_space<semaphore_mem>>
    tpu.wait_dma2 semaphore(%182 : memref<!tpu.dma_semaphore, #tpu.memory_space<semaphore_mem>>) src(%arg10 : memref<9x64x32xbf16, #tpu.memory_space<any>>) dst(%arg25 : memref<9x64x32xbf16, #tpu.memory_space<vmem>>)
    %cst_154 = arith.constant 0.000000e+00 : f32
    %183 = vector.broadcast %cst_154 : f32 to vector<60x32xf32>
    %c0_155 = arith.constant 0 : index
    %c0_156 = arith.constant 0 : index
    %184 = vector.load %arg20[%c0_155, %c0_156] : memref<80x64xbf16, #tpu.memory_space<vmem>>, vector<60x64xbf16>
    %c0_157 = arith.constant 0 : index
    %c0_158 = arith.constant 0 : index
    %c0_159 = arith.constant 0 : index
    %185 = vector.load %arg25[%c0_157, %c0_158, %c0_159] : memref<9x64x32xbf16, #tpu.memory_space<vmem>>, vector<1x64x32xbf16>
    %186 = vector.shape_cast %185 : vector<1x64x32xbf16> to vector<64x32xbf16>
    %cst_160 = arith.constant dense<0.000000e+00> : vector<60x32xf32>
    %187 = tpu.matmul %184, %186, %cst_160 {dimension_numbers = #tpu.dot_dimension_numbers<[1], [0], [0], [1], [0, 0, 1, 1], [], []>} : vector<60x64xbf16>, vector<64x32xbf16>, vector<60x32xf32> -> vector<60x32xf32>
    %188 = arith.addf %183, %187 : vector<60x32xf32>
    %c1_161 = arith.constant 1 : index
    %c0_162 = arith.constant 0 : index
    %189 = vector.load %arg20[%c1_161, %c0_162] : memref<80x64xbf16, #tpu.memory_space<vmem>>, vector<60x64xbf16>
    %c1_163 = arith.constant 1 : index
    %c0_164 = arith.constant 0 : index
    %c0_165 = arith.constant 0 : index
    %190 = vector.load %arg25[%c1_163, %c0_164, %c0_165] : memref<9x64x32xbf16, #tpu.memory_space<vmem>>, vector<1x64x32xbf16>
    %191 = vector.shape_cast %190 : vector<1x64x32xbf16> to vector<64x32xbf16>
    %cst_166 = arith.constant dense<0.000000e+00> : vector<60x32xf32>
    %192 = tpu.matmul %189, %191, %cst_166 {dimension_numbers = #tpu.dot_dimension_numbers<[1], [0], [0], [1], [0, 0, 1, 1], [], []>} : vector<60x64xbf16>, vector<64x32xbf16>, vector<60x32xf32> -> vector<60x32xf32>
    %193 = arith.addf %188, %192 : vector<60x32xf32>
    %c2_167 = arith.constant 2 : index
    %c0_168 = arith.constant 0 : index
    %194 = vector.load %arg20[%c2_167, %c0_168] : memref<80x64xbf16, #tpu.memory_space<vmem>>, vector<60x64xbf16>
    %c2_169 = arith.constant 2 : index
    %c0_170 = arith.constant 0 : index
    %c0_171 = arith.constant 0 : index
    %195 = vector.load %arg25[%c2_169, %c0_170, %c0_171] : memref<9x64x32xbf16, #tpu.memory_space<vmem>>, vector<1x64x32xbf16>
    %196 = vector.shape_cast %195 : vector<1x64x32xbf16> to vector<64x32xbf16>
    %cst_172 = arith.constant dense<0.000000e+00> : vector<60x32xf32>
    %197 = tpu.matmul %194, %196, %cst_172 {dimension_numbers = #tpu.dot_dimension_numbers<[1], [0], [0], [1], [0, 0, 1, 1], [], []>} : vector<60x64xbf16>, vector<64x32xbf16>, vector<60x32xf32> -> vector<60x32xf32>
    %198 = arith.addf %193, %197 : vector<60x32xf32>
    %c6_173 = arith.constant 6 : index
    %c0_174 = arith.constant 0 : index
    %199 = vector.load %arg20[%c6_173, %c0_174] : memref<80x64xbf16, #tpu.memory_space<vmem>>, vector<60x64xbf16>
    %c3_175 = arith.constant 3 : index
    %c0_176 = arith.constant 0 : index
    %c0_177 = arith.constant 0 : index
    %200 = vector.load %arg25[%c3_175, %c0_176, %c0_177] : memref<9x64x32xbf16, #tpu.memory_space<vmem>>, vector<1x64x32xbf16>
    %201 = vector.shape_cast %200 : vector<1x64x32xbf16> to vector<64x32xbf16>
    %cst_178 = arith.constant dense<0.000000e+00> : vector<60x32xf32>
    %202 = tpu.matmul %199, %201, %cst_178 {dimension_numbers = #tpu.dot_dimension_numbers<[1], [0], [0], [1], [0, 0, 1, 1], [], []>} : vector<60x64xbf16>, vector<64x32xbf16>, vector<60x32xf32> -> vector<60x32xf32>
    %203 = arith.addf %198, %202 : vector<60x32xf32>
    %c7_179 = arith.constant 7 : index
    %c0_180 = arith.constant 0 : index
    %204 = vector.load %arg20[%c7_179, %c0_180] : memref<80x64xbf16, #tpu.memory_space<vmem>>, vector<60x64xbf16>
    %c4_181 = arith.constant 4 : index
    %c0_182 = arith.constant 0 : index
    %c0_183 = arith.constant 0 : index
    %205 = vector.load %arg25[%c4_181, %c0_182, %c0_183] : memref<9x64x32xbf16, #tpu.memory_space<vmem>>, vector<1x64x32xbf16>
    %206 = vector.shape_cast %205 : vector<1x64x32xbf16> to vector<64x32xbf16>
    %cst_184 = arith.constant dense<0.000000e+00> : vector<60x32xf32>
    %207 = tpu.matmul %204, %206, %cst_184 {dimension_numbers = #tpu.dot_dimension_numbers<[1], [0], [0], [1], [0, 0, 1, 1], [], []>} : vector<60x64xbf16>, vector<64x32xbf16>, vector<60x32xf32> -> vector<60x32xf32>
    %208 = arith.addf %203, %207 : vector<60x32xf32>
    %c8_185 = arith.constant 8 : index
    %c0_186 = arith.constant 0 : index
    %209 = vector.load %arg20[%c8_185, %c0_186] : memref<80x64xbf16, #tpu.memory_space<vmem>>, vector<60x64xbf16>
    %c5_187 = arith.constant 5 : index
    %c0_188 = arith.constant 0 : index
    %c0_189 = arith.constant 0 : index
    %210 = vector.load %arg25[%c5_187, %c0_188, %c0_189] : memref<9x64x32xbf16, #tpu.memory_space<vmem>>, vector<1x64x32xbf16>
    %211 = vector.shape_cast %210 : vector<1x64x32xbf16> to vector<64x32xbf16>
    %cst_190 = arith.constant dense<0.000000e+00> : vector<60x32xf32>
    %212 = tpu.matmul %209, %211, %cst_190 {dimension_numbers = #tpu.dot_dimension_numbers<[1], [0], [0], [1], [0, 0, 1, 1], [], []>} : vector<60x64xbf16>, vector<64x32xbf16>, vector<60x32xf32> -> vector<60x32xf32>
    %213 = arith.addf %208, %212 : vector<60x32xf32>
    %c12_191 = arith.constant 12 : index
    %c0_192 = arith.constant 0 : index
    %214 = vector.load %arg20[%c12_191, %c0_192] : memref<80x64xbf16, #tpu.memory_space<vmem>>, vector<60x64xbf16>
    %c6_193 = arith.constant 6 : index
    %c0_194 = arith.constant 0 : index
    %c0_195 = arith.constant 0 : index
    %215 = vector.load %arg25[%c6_193, %c0_194, %c0_195] : memref<9x64x32xbf16, #tpu.memory_space<vmem>>, vector<1x64x32xbf16>
    %216 = vector.shape_cast %215 : vector<1x64x32xbf16> to vector<64x32xbf16>
    %cst_196 = arith.constant dense<0.000000e+00> : vector<60x32xf32>
    %217 = tpu.matmul %214, %216, %cst_196 {dimension_numbers = #tpu.dot_dimension_numbers<[1], [0], [0], [1], [0, 0, 1, 1], [], []>} : vector<60x64xbf16>, vector<64x32xbf16>, vector<60x32xf32> -> vector<60x32xf32>
    %218 = arith.addf %213, %217 : vector<60x32xf32>
    %c13_197 = arith.constant 13 : index
    %c0_198 = arith.constant 0 : index
    %219 = vector.load %arg20[%c13_197, %c0_198] : memref<80x64xbf16, #tpu.memory_space<vmem>>, vector<60x64xbf16>
    %c7_199 = arith.constant 7 : index
    %c0_200 = arith.constant 0 : index
    %c0_201 = arith.constant 0 : index
    %220 = vector.load %arg25[%c7_199, %c0_200, %c0_201] : memref<9x64x32xbf16, #tpu.memory_space<vmem>>, vector<1x64x32xbf16>
    %221 = vector.shape_cast %220 : vector<1x64x32xbf16> to vector<64x32xbf16>
    %cst_202 = arith.constant dense<0.000000e+00> : vector<60x32xf32>
    %222 = tpu.matmul %219, %221, %cst_202 {dimension_numbers = #tpu.dot_dimension_numbers<[1], [0], [0], [1], [0, 0, 1, 1], [], []>} : vector<60x64xbf16>, vector<64x32xbf16>, vector<60x32xf32> -> vector<60x32xf32>
    %223 = arith.addf %218, %222 : vector<60x32xf32>
    %c14_203 = arith.constant 14 : index
    %c0_204 = arith.constant 0 : index
    %224 = vector.load %arg20[%c14_203, %c0_204] : memref<80x64xbf16, #tpu.memory_space<vmem>>, vector<60x64xbf16>
    %c8_205 = arith.constant 8 : index
    %c0_206 = arith.constant 0 : index
    %c0_207 = arith.constant 0 : index
    %225 = vector.load %arg25[%c8_205, %c0_206, %c0_207] : memref<9x64x32xbf16, #tpu.memory_space<vmem>>, vector<1x64x32xbf16>
    %226 = vector.shape_cast %225 : vector<1x64x32xbf16> to vector<64x32xbf16>
    %cst_208 = arith.constant dense<0.000000e+00> : vector<60x32xf32>
    %227 = tpu.matmul %224, %226, %cst_208 {dimension_numbers = #tpu.dot_dimension_numbers<[1], [0], [0], [1], [0, 0, 1, 1], [], []>} : vector<60x64xbf16>, vector<64x32xbf16>, vector<60x32xf32> -> vector<60x32xf32>
    %228 = arith.addf %223, %227 : vector<60x32xf32>
    %cst_209 = arith.constant 0.000000e+00 : f32
    %229 = vector.shape_cast %26 : vector<60x1xi1> to vector<60x1xi1>
    %230 = vector.broadcast %229 : vector<60x1xi1> to vector<60x32xi1>
    %231 = vector.broadcast %cst_209 : f32 to vector<60x32xf32>
    %232 = arith.select %230, %228, %231 : vector<60x32xi1>, vector<60x32xf32>
    %c0_210 = arith.constant 0 : index
    %c0_211 = arith.constant 0 : index
    %233 = vector.load %arg11[%c0_210, %c0_211] : memref<1x32xf32, #tpu.memory_space<vmem>>, vector<1x32xf32>
    %c0_212 = arith.constant 0 : index
    %c0_213 = arith.constant 0 : index
    %234 = vector.load %arg12[%c0_212, %c0_213] : memref<1x32xf32, #tpu.memory_space<vmem>>, vector<1x32xf32>
    %cst_214 = arith.constant dense<0.000000e+00> : vector<32xf32>
    %235 = vector.multi_reduction <add>, %232, %cst_214 [0] : vector<60x32xf32> to vector<32xf32>
    %236 = vector.shape_cast %235 : vector<32xf32> to vector<1x32xf32>
    %237 = arith.mulf %232, %232 : vector<60x32xf32>
    %cst_215 = arith.constant dense<0.000000e+00> : vector<32xf32>
    %238 = vector.multi_reduction <add>, %237, %cst_215 [0] : vector<60x32xf32> to vector<32xf32>
    %239 = vector.shape_cast %238 : vector<32xf32> to vector<1x32xf32>
    %cst_216 = arith.constant 3.125000e-02 : f32
    %240 = vector.broadcast %cst_216 : f32 to vector<1x32xf32>
    %241 = arith.mulf %236, %240 : vector<1x32xf32>
    %cst_217 = arith.constant 3.125000e-02 : f32
    %242 = vector.broadcast %cst_217 : f32 to vector<1x32xf32>
    %243 = arith.mulf %239, %242 : vector<1x32xf32>
    %244 = arith.mulf %241, %241 : vector<1x32xf32>
    %245 = arith.subf %243, %244 : vector<1x32xf32>
    %cst_218 = arith.constant 9.99999974E-6 : f32
    %246 = vector.broadcast %cst_218 : f32 to vector<1x32xf32>
    %247 = arith.addf %245, %246 : vector<1x32xf32>
    %248 = math.rsqrt %247 : vector<1x32xf32>
    %249 = arith.mulf %233, %248 : vector<1x32xf32>
    %250 = arith.mulf %241, %249 : vector<1x32xf32>
    %251 = arith.subf %234, %250 : vector<1x32xf32>
    %252 = vector.broadcast %249 : vector<1x32xf32> to vector<60x32xf32>
    %253 = arith.mulf %232, %252 : vector<60x32xf32>
    %254 = vector.broadcast %251 : vector<1x32xf32> to vector<60x32xf32>
    %255 = arith.addf %253, %254 : vector<60x32xf32>
    %cst_219 = arith.constant 0.000000e+00 : f32
    %256 = vector.broadcast %cst_219 : f32 to vector<60x32xf32>
    %257 = arith.cmpf oge, %255, %256 : vector<60x32xf32>
    %cst_220 = arith.constant 2.000000e-01 : f32
    %258 = vector.broadcast %cst_220 : f32 to vector<60x32xf32>
    %259 = arith.mulf %258, %255 : vector<60x32xf32>
    %260 = arith.select %257, %255, %259 : vector<60x32xi1>, vector<60x32xf32>
    %cst_221 = arith.constant 0.000000e+00 : f32
    %261 = vector.shape_cast %26 : vector<60x1xi1> to vector<60x1xi1>
    %262 = vector.broadcast %261 : vector<60x1xi1> to vector<60x32xi1>
    %263 = vector.broadcast %cst_221 : f32 to vector<60x32xf32>
    %264 = arith.select %262, %260, %263 : vector<60x32xi1>, vector<60x32xf32>
    %265 = arith.truncf %264 : vector<60x32xf32> to vector<60x32xbf16>
    %c7_222 = arith.constant 7 : index
    %c0_223 = arith.constant 0 : index
    %266 = vector.load %arg21[%c7_222, %c0_223] : memref<80x32xbf16, #tpu.memory_space<vmem>>, vector<60x32xbf16>
    tpu.vector_store %arg21[%c7_222, %c0_223], %265 {strides = array<i32>} : memref<80x32xbf16, #tpu.memory_space<vmem>>, vector<60x32xbf16>,
    %c3_i32_224 = arith.constant 3 : i32
    %267 = tpu.memref_slice %arg27[%c3_i32_224] : memref<4x!tpu.dma_semaphore, #tpu.memory_space<semaphore_mem>> -> memref<1x!tpu.dma_semaphore, #tpu.memory_space<semaphore_mem>>
    %268 = tpu.memref_squeeze %267 : memref<1x!tpu.dma_semaphore, #tpu.memory_space<semaphore_mem>> -> memref<!tpu.dma_semaphore, #tpu.memory_space<semaphore_mem>>
    tpu.wait_dma2 semaphore(%268 : memref<!tpu.dma_semaphore, #tpu.memory_space<semaphore_mem>>) src(%arg13 : memref<16x32x64xbf16, #tpu.memory_space<any>>) dst(%arg26 : memref<16x32x64xbf16, #tpu.memory_space<vmem>>)
    %cst_225 = arith.constant 0.000000e+00 : f32
    %269 = vector.broadcast %cst_225 : f32 to vector<54x64xf32>
    %c0_226 = arith.constant 0 : index
    %c0_227 = arith.constant 0 : index
    %270 = vector.load %arg21[%c0_226, %c0_227] : memref<80x32xbf16, #tpu.memory_space<vmem>>, vector<54x32xbf16>
    %c0_228 = arith.constant 0 : index
    %c0_229 = arith.constant 0 : index
    %c0_230 = arith.constant 0 : index
    %271 = vector.load %arg26[%c0_228, %c0_229, %c0_230] : memref<16x32x64xbf16, #tpu.memory_space<vmem>>, vector<1x32x64xbf16>
    %272 = vector.shape_cast %271 : vector<1x32x64xbf16> to vector<32x64xbf16>
    %cst_231 = arith.constant dense<0.000000e+00> : vector<54x64xf32>
    %273 = tpu.matmul %270, %272, %cst_231 {dimension_numbers = #tpu.dot_dimension_numbers<[1], [0], [0], [1], [0, 0, 1, 1], [], []>} : vector<54x32xbf16>, vector<32x64xbf16>, vector<54x64xf32> -> vector<54x64xf32>
    %274 = arith.addf %269, %273 : vector<54x64xf32>
    %c1_232 = arith.constant 1 : index
    %c0_233 = arith.constant 0 : index
    %275 = vector.load %arg21[%c1_232, %c0_233] : memref<80x32xbf16, #tpu.memory_space<vmem>>, vector<54x32xbf16>
    %c1_234 = arith.constant 1 : index
    %c0_235 = arith.constant 0 : index
    %c0_236 = arith.constant 0 : index
    %276 = vector.load %arg26[%c1_234, %c0_235, %c0_236] : memref<16x32x64xbf16, #tpu.memory_space<vmem>>, vector<1x32x64xbf16>
    %277 = vector.shape_cast %276 : vector<1x32x64xbf16> to vector<32x64xbf16>
    %cst_237 = arith.constant dense<0.000000e+00> : vector<54x64xf32>
    %278 = tpu.matmul %275, %277, %cst_237 {dimension_numbers = #tpu.dot_dimension_numbers<[1], [0], [0], [1], [0, 0, 1, 1], [], []>} : vector<54x32xbf16>, vector<32x64xbf16>, vector<54x64xf32> -> vector<54x64xf32>
    %279 = arith.addf %274, %278 : vector<54x64xf32>
    %c2_238 = arith.constant 2 : index
    %c0_239 = arith.constant 0 : index
    %280 = vector.load %arg21[%c2_238, %c0_239] : memref<80x32xbf16, #tpu.memory_space<vmem>>, vector<54x32xbf16>
    %c2_240 = arith.constant 2 : index
    %c0_241 = arith.constant 0 : index
    %c0_242 = arith.constant 0 : index
    %281 = vector.load %arg26[%c2_240, %c0_241, %c0_242] : memref<16x32x64xbf16, #tpu.memory_space<vmem>>, vector<1x32x64xbf16>
    %282 = vector.shape_cast %281 : vector<1x32x64xbf16> to vector<32x64xbf16>
    %cst_243 = arith.constant dense<0.000000e+00> : vector<54x64xf32>
    %283 = tpu.matmul %280, %282, %cst_243 {dimension_numbers = #tpu.dot_dimension_numbers<[1], [0], [0], [1], [0, 0, 1, 1], [], []>} : vector<54x32xbf16>, vector<32x64xbf16>, vector<54x64xf32> -> vector<54x64xf32>
    %284 = arith.addf %279, %283 : vector<54x64xf32>
    %c3_244 = arith.constant 3 : index
    %c0_245 = arith.constant 0 : index
    %285 = vector.load %arg21[%c3_244, %c0_245] : memref<80x32xbf16, #tpu.memory_space<vmem>>, vector<54x32xbf16>
    %c3_246 = arith.constant 3 : index
    %c0_247 = arith.constant 0 : index
    %c0_248 = arith.constant 0 : index
    %286 = vector.load %arg26[%c3_246, %c0_247, %c0_248] : memref<16x32x64xbf16, #tpu.memory_space<vmem>>, vector<1x32x64xbf16>
    %287 = vector.shape_cast %286 : vector<1x32x64xbf16> to vector<32x64xbf16>
    %cst_249 = arith.constant dense<0.000000e+00> : vector<54x64xf32>
    %288 = tpu.matmul %285, %287, %cst_249 {dimension_numbers = #tpu.dot_dimension_numbers<[1], [0], [0], [1], [0, 0, 1, 1], [], []>} : vector<54x32xbf16>, vector<32x64xbf16>, vector<54x64xf32> -> vector<54x64xf32>
    %289 = arith.addf %284, %288 : vector<54x64xf32>
    %c6_250 = arith.constant 6 : index
    %c0_251 = arith.constant 0 : index
    %290 = vector.load %arg21[%c6_250, %c0_251] : memref<80x32xbf16, #tpu.memory_space<vmem>>, vector<54x32xbf16>
    %c4_252 = arith.constant 4 : index
    %c0_253 = arith.constant 0 : index
    %c0_254 = arith.constant 0 : index
    %291 = vector.load %arg26[%c4_252, %c0_253, %c0_254] : memref<16x32x64xbf16, #tpu.memory_space<vmem>>, vector<1x32x64xbf16>
    %292 = vector.shape_cast %291 : vector<1x32x64xbf16> to vector<32x64xbf16>
    %cst_255 = arith.constant dense<0.000000e+00> : vector<54x64xf32>
    %293 = tpu.matmul %290, %292, %cst_255 {dimension_numbers = #tpu.dot_dimension_numbers<[1], [0], [0], [1], [0, 0, 1, 1], [], []>} : vector<54x32xbf16>, vector<32x64xbf16>, vector<54x64xf32> -> vector<54x64xf32>
    %294 = arith.addf %289, %293 : vector<54x64xf32>
    %c7_256 = arith.constant 7 : index
    %c0_257 = arith.constant 0 : index
    %295 = vector.load %arg21[%c7_256, %c0_257] : memref<80x32xbf16, #tpu.memory_space<vmem>>, vector<54x32xbf16>
    %c5_258 = arith.constant 5 : index
    %c0_259 = arith.constant 0 : index
    %c0_260 = arith.constant 0 : index
    %296 = vector.load %arg26[%c5_258, %c0_259, %c0_260] : memref<16x32x64xbf16, #tpu.memory_space<vmem>>, vector<1x32x64xbf16>
    %297 = vector.shape_cast %296 : vector<1x32x64xbf16> to vector<32x64xbf16>
    %cst_261 = arith.constant dense<0.000000e+00> : vector<54x64xf32>
    %298 = tpu.matmul %295, %297, %cst_261 {dimension_numbers = #tpu.dot_dimension_numbers<[1], [0], [0], [1], [0, 0, 1, 1], [], []>} : vector<54x32xbf16>, vector<32x64xbf16>, vector<54x64xf32> -> vector<54x64xf32>
    %299 = arith.addf %294, %298 : vector<54x64xf32>
    %c8_262 = arith.constant 8 : index
    %c0_263 = arith.constant 0 : index
    %300 = vector.load %arg21[%c8_262, %c0_263] : memref<80x32xbf16, #tpu.memory_space<vmem>>, vector<54x32xbf16>
    %c6_264 = arith.constant 6 : index
    %c0_265 = arith.constant 0 : index
    %c0_266 = arith.constant 0 : index
    %301 = vector.load %arg26[%c6_264, %c0_265, %c0_266] : memref<16x32x64xbf16, #tpu.memory_space<vmem>>, vector<1x32x64xbf16>
    %302 = vector.shape_cast %301 : vector<1x32x64xbf16> to vector<32x64xbf16>
    %cst_267 = arith.constant dense<0.000000e+00> : vector<54x64xf32>
    %303 = tpu.matmul %300, %302, %cst_267 {dimension_numbers = #tpu.dot_dimension_numbers<[1], [0], [0], [1], [0, 0, 1, 1], [], []>} : vector<54x32xbf16>, vector<32x64xbf16>, vector<54x64xf32> -> vector<54x64xf32>
    %304 = arith.addf %299, %303 : vector<54x64xf32>
    %c9 = arith.constant 9 : index
    %c0_268 = arith.constant 0 : index
    %305 = vector.load %arg21[%c9, %c0_268] : memref<80x32xbf16, #tpu.memory_space<vmem>>, vector<54x32xbf16>
    %c7_269 = arith.constant 7 : index
    %c0_270 = arith.constant 0 : index
    %c0_271 = arith.constant 0 : index
    %306 = vector.load %arg26[%c7_269, %c0_270, %c0_271] : memref<16x32x64xbf16, #tpu.memory_space<vmem>>, vector<1x32x64xbf16>
    %307 = vector.shape_cast %306 : vector<1x32x64xbf16> to vector<32x64xbf16>
    %cst_272 = arith.constant dense<0.000000e+00> : vector<54x64xf32>
    %308 = tpu.matmul %305, %307, %cst_272 {dimension_numbers = #tpu.dot_dimension_numbers<[1], [0], [0], [1], [0, 0, 1, 1], [], []>} : vector<54x32xbf16>, vector<32x64xbf16>, vector<54x64xf32> -> vector<54x64xf32>
    %309 = arith.addf %304, %308 : vector<54x64xf32>
    %c12_273 = arith.constant 12 : index
    %c0_274 = arith.constant 0 : index
    %310 = vector.load %arg21[%c12_273, %c0_274] : memref<80x32xbf16, #tpu.memory_space<vmem>>, vector<54x32xbf16>
    %c8_275 = arith.constant 8 : index
    %c0_276 = arith.constant 0 : index
    %c0_277 = arith.constant 0 : index
    %311 = vector.load %arg26[%c8_275, %c0_276, %c0_277] : memref<16x32x64xbf16, #tpu.memory_space<vmem>>, vector<1x32x64xbf16>
    %312 = vector.shape_cast %311 : vector<1x32x64xbf16> to vector<32x64xbf16>
    %cst_278 = arith.constant dense<0.000000e+00> : vector<54x64xf32>
    %313 = tpu.matmul %310, %312, %cst_278 {dimension_numbers = #tpu.dot_dimension_numbers<[1], [0], [0], [1], [0, 0, 1, 1], [], []>} : vector<54x32xbf16>, vector<32x64xbf16>, vector<54x64xf32> -> vector<54x64xf32>
    %314 = arith.addf %309, %313 : vector<54x64xf32>
    %c13_279 = arith.constant 13 : index
    %c0_280 = arith.constant 0 : index
    %315 = vector.load %arg21[%c13_279, %c0_280] : memref<80x32xbf16, #tpu.memory_space<vmem>>, vector<54x32xbf16>
    %c9_281 = arith.constant 9 : index
    %c0_282 = arith.constant 0 : index
    %c0_283 = arith.constant 0 : index
    %316 = vector.load %arg26[%c9_281, %c0_282, %c0_283] : memref<16x32x64xbf16, #tpu.memory_space<vmem>>, vector<1x32x64xbf16>
    %317 = vector.shape_cast %316 : vector<1x32x64xbf16> to vector<32x64xbf16>
    %cst_284 = arith.constant dense<0.000000e+00> : vector<54x64xf32>
    %318 = tpu.matmul %315, %317, %cst_284 {dimension_numbers = #tpu.dot_dimension_numbers<[1], [0], [0], [1], [0, 0, 1, 1], [], []>} : vector<54x32xbf16>, vector<32x64xbf16>, vector<54x64xf32> -> vector<54x64xf32>
    %319 = arith.addf %314, %318 : vector<54x64xf32>
    %c14_285 = arith.constant 14 : index
    %c0_286 = arith.constant 0 : index
    %320 = vector.load %arg21[%c14_285, %c0_286] : memref<80x32xbf16, #tpu.memory_space<vmem>>, vector<54x32xbf16>
    %c10 = arith.constant 10 : index
    %c0_287 = arith.constant 0 : index
    %c0_288 = arith.constant 0 : index
    %321 = vector.load %arg26[%c10, %c0_287, %c0_288] : memref<16x32x64xbf16, #tpu.memory_space<vmem>>, vector<1x32x64xbf16>
    %322 = vector.shape_cast %321 : vector<1x32x64xbf16> to vector<32x64xbf16>
    %cst_289 = arith.constant dense<0.000000e+00> : vector<54x64xf32>
    %323 = tpu.matmul %320, %322, %cst_289 {dimension_numbers = #tpu.dot_dimension_numbers<[1], [0], [0], [1], [0, 0, 1, 1], [], []>} : vector<54x32xbf16>, vector<32x64xbf16>, vector<54x64xf32> -> vector<54x64xf32>
    %324 = arith.addf %319, %323 : vector<54x64xf32>
    %c15 = arith.constant 15 : index
    %c0_290 = arith.constant 0 : index
    %325 = vector.load %arg21[%c15, %c0_290] : memref<80x32xbf16, #tpu.memory_space<vmem>>, vector<54x32xbf16>
    %c11 = arith.constant 11 : index
    %c0_291 = arith.constant 0 : index
    %c0_292 = arith.constant 0 : index
    %326 = vector.load %arg26[%c11, %c0_291, %c0_292] : memref<16x32x64xbf16, #tpu.memory_space<vmem>>, vector<1x32x64xbf16>
    %327 = vector.shape_cast %326 : vector<1x32x64xbf16> to vector<32x64xbf16>
    %cst_293 = arith.constant dense<0.000000e+00> : vector<54x64xf32>
    %328 = tpu.matmul %325, %327, %cst_293 {dimension_numbers = #tpu.dot_dimension_numbers<[1], [0], [0], [1], [0, 0, 1, 1], [], []>} : vector<54x32xbf16>, vector<32x64xbf16>, vector<54x64xf32> -> vector<54x64xf32>
    %329 = arith.addf %324, %328 : vector<54x64xf32>
    %c18 = arith.constant 18 : index
    %c0_294 = arith.constant 0 : index
    %330 = vector.load %arg21[%c18, %c0_294] : memref<80x32xbf16, #tpu.memory_space<vmem>>, vector<54x32xbf16>
    %c12_295 = arith.constant 12 : index
    %c0_296 = arith.constant 0 : index
    %c0_297 = arith.constant 0 : index
    %331 = vector.load %arg26[%c12_295, %c0_296, %c0_297] : memref<16x32x64xbf16, #tpu.memory_space<vmem>>, vector<1x32x64xbf16>
    %332 = vector.shape_cast %331 : vector<1x32x64xbf16> to vector<32x64xbf16>
    %cst_298 = arith.constant dense<0.000000e+00> : vector<54x64xf32>
    %333 = tpu.matmul %330, %332, %cst_298 {dimension_numbers = #tpu.dot_dimension_numbers<[1], [0], [0], [1], [0, 0, 1, 1], [], []>} : vector<54x32xbf16>, vector<32x64xbf16>, vector<54x64xf32> -> vector<54x64xf32>
    %334 = arith.addf %329, %333 : vector<54x64xf32>
    %c19 = arith.constant 19 : index
    %c0_299 = arith.constant 0 : index
    %335 = vector.load %arg21[%c19, %c0_299] : memref<80x32xbf16, #tpu.memory_space<vmem>>, vector<54x32xbf16>
    %c13_300 = arith.constant 13 : index
    %c0_301 = arith.constant 0 : index
    %c0_302 = arith.constant 0 : index
    %336 = vector.load %arg26[%c13_300, %c0_301, %c0_302] : memref<16x32x64xbf16, #tpu.memory_space<vmem>>, vector<1x32x64xbf16>
    %337 = vector.shape_cast %336 : vector<1x32x64xbf16> to vector<32x64xbf16>
    %cst_303 = arith.constant dense<0.000000e+00> : vector<54x64xf32>
    %338 = tpu.matmul %335, %337, %cst_303 {dimension_numbers = #tpu.dot_dimension_numbers<[1], [0], [0], [1], [0, 0, 1, 1], [], []>} : vector<54x32xbf16>, vector<32x64xbf16>, vector<54x64xf32> -> vector<54x64xf32>
    %339 = arith.addf %334, %338 : vector<54x64xf32>
    %c20 = arith.constant 20 : index
    %c0_304 = arith.constant 0 : index
    %340 = vector.load %arg21[%c20, %c0_304] : memref<80x32xbf16, #tpu.memory_space<vmem>>, vector<54x32xbf16>
    %c14_305 = arith.constant 14 : index
    %c0_306 = arith.constant 0 : index
    %c0_307 = arith.constant 0 : index
    %341 = vector.load %arg26[%c14_305, %c0_306, %c0_307] : memref<16x32x64xbf16, #tpu.memory_space<vmem>>, vector<1x32x64xbf16>
    %342 = vector.shape_cast %341 : vector<1x32x64xbf16> to vector<32x64xbf16>
    %cst_308 = arith.constant dense<0.000000e+00> : vector<54x64xf32>
    %343 = tpu.matmul %340, %342, %cst_308 {dimension_numbers = #tpu.dot_dimension_numbers<[1], [0], [0], [1], [0, 0, 1, 1], [], []>} : vector<54x32xbf16>, vector<32x64xbf16>, vector<54x64xf32> -> vector<54x64xf32>
    %344 = arith.addf %339, %343 : vector<54x64xf32>
    %c21 = arith.constant 21 : index
    %c0_309 = arith.constant 0 : index
    %345 = vector.load %arg21[%c21, %c0_309] : memref<80x32xbf16, #tpu.memory_space<vmem>>, vector<54x32xbf16>
    %c15_310 = arith.constant 15 : index
    %c0_311 = arith.constant 0 : index
    %c0_312 = arith.constant 0 : index
    %346 = vector.load %arg26[%c15_310, %c0_311, %c0_312] : memref<16x32x64xbf16, #tpu.memory_space<vmem>>, vector<1x32x64xbf16>
    %347 = vector.shape_cast %346 : vector<1x32x64xbf16> to vector<32x64xbf16>
    %cst_313 = arith.constant dense<0.000000e+00> : vector<54x64xf32>
    %348 = tpu.matmul %345, %347, %cst_313 {dimension_numbers = #tpu.dot_dimension_numbers<[1], [0], [0], [1], [0, 0, 1, 1], [], []>} : vector<54x32xbf16>, vector<32x64xbf16>, vector<54x64xf32> -> vector<54x64xf32>
    %349 = arith.addf %344, %348 : vector<54x64xf32>
    %cst_314 = arith.constant 0.000000e+00 : f32
    %350 = vector.shape_cast %29 : vector<54x1xi1> to vector<54x1xi1>
    %351 = vector.broadcast %350 : vector<54x1xi1> to vector<54x64xi1>
    %352 = vector.broadcast %cst_314 : f32 to vector<54x64xf32>
    %353 = arith.select %351, %349, %352 : vector<54x64xi1>, vector<54x64xf32>
    %c0_315 = arith.constant 0 : index
    %c0_316 = arith.constant 0 : index
    %354 = vector.load %arg14[%c0_315, %c0_316] : memref<1x64xf32, #tpu.memory_space<vmem>>, vector<1x64xf32>
    %c0_317 = arith.constant 0 : index
    %c0_318 = arith.constant 0 : index
    %355 = vector.load %arg15[%c0_317, %c0_318] : memref<1x64xf32, #tpu.memory_space<vmem>>, vector<1x64xf32>
    %cst_319 = arith.constant dense<0.000000e+00> : vector<64xf32>
    %356 = vector.multi_reduction <add>, %353, %cst_319 [0] : vector<54x64xf32> to vector<64xf32>
    %357 = vector.shape_cast %356 : vector<64xf32> to vector<1x64xf32>
    %358 = arith.mulf %353, %353 : vector<54x64xf32>
    %cst_320 = arith.constant dense<0.000000e+00> : vector<64xf32>
    %359 = vector.multi_reduction <add>, %358, %cst_320 [0] : vector<54x64xf32> to vector<64xf32>
    %360 = vector.shape_cast %359 : vector<64xf32> to vector<1x64xf32>
    %cst_321 = arith.constant 0.055555556 : f32
    %361 = vector.broadcast %cst_321 : f32 to vector<1x64xf32>
    %362 = arith.mulf %357, %361 : vector<1x64xf32>
    %cst_322 = arith.constant 0.055555556 : f32
    %363 = vector.broadcast %cst_322 : f32 to vector<1x64xf32>
    %364 = arith.mulf %360, %363 : vector<1x64xf32>
    %365 = arith.mulf %362, %362 : vector<1x64xf32>
    %366 = arith.subf %364, %365 : vector<1x64xf32>
    %cst_323 = arith.constant 9.99999974E-6 : f32
    %367 = vector.broadcast %cst_323 : f32 to vector<1x64xf32>
    %368 = arith.addf %366, %367 : vector<1x64xf32>
    %369 = math.rsqrt %368 : vector<1x64xf32>
    %370 = arith.mulf %354, %369 : vector<1x64xf32>
    %371 = arith.mulf %362, %370 : vector<1x64xf32>
    %372 = arith.subf %355, %371 : vector<1x64xf32>
    %373 = vector.broadcast %370 : vector<1x64xf32> to vector<54x64xf32>
    %374 = arith.mulf %353, %373 : vector<54x64xf32>
    %375 = vector.broadcast %372 : vector<1x64xf32> to vector<54x64xf32>
    %376 = arith.addf %374, %375 : vector<54x64xf32>
    %cst_324 = arith.constant 0.000000e+00 : f32
    %377 = vector.broadcast %cst_324 : f32 to vector<54x64xf32>
    %378 = arith.cmpf oge, %376, %377 : vector<54x64xf32>
    %cst_325 = arith.constant 2.000000e-01 : f32
    %379 = vector.broadcast %cst_325 : f32 to vector<54x64xf32>
    %380 = arith.mulf %379, %376 : vector<54x64xf32>
    %381 = arith.select %378, %376, %380 : vector<54x64xi1>, vector<54x64xf32>
    %cst_326 = arith.constant 0.000000e+00 : f32
    %382 = vector.shape_cast %29 : vector<54x1xi1> to vector<54x1xi1>
    %383 = vector.broadcast %382 : vector<54x1xi1> to vector<54x64xi1>
    %384 = vector.broadcast %cst_326 : f32 to vector<54x64xf32>
    %385 = arith.select %383, %381, %384 : vector<54x64xi1>, vector<54x64xf32>
    %386 = arith.truncf %385 : vector<54x64xf32> to vector<54x64xbf16>
    %c7_327 = arith.constant 7 : index
    %c0_328 = arith.constant 0 : index
    %387 = vector.load %arg22[%c7_327, %c0_328] : memref<80x64xbf16, #tpu.memory_space<vmem>>, vector<54x64xbf16>
    tpu.vector_store %arg22[%c7_327, %c0_328], %386 {strides = array<i32>} : memref<80x64xbf16, #tpu.memory_space<vmem>>, vector<54x64xbf16>,
    %c0_329 = arith.constant 0 : index
    %c0_330 = arith.constant 0 : index
    %388 = vector.load %arg22[%c0_329, %c0_330] : memref<80x64xbf16, #tpu.memory_space<vmem>>, vector<69x64xbf16>
    %c0_331 = arith.constant 0 : index
    %c0_332 = arith.constant 0 : index
    %389 = vector.load %arg16[%c0_331, %c0_332] : memref<64x16xbf16, #tpu.memory_space<vmem>>, vector<64x16xbf16>
    %cst_333 = arith.constant dense<0.000000e+00> : vector<69x16xf32>
    %390 = tpu.matmul %388, %389, %cst_333 {dimension_numbers = #tpu.dot_dimension_numbers<[1], [0], [0], [1], [0, 0, 1, 1], [], []>} : vector<69x64xbf16>, vector<64x16xbf16>, vector<69x16xf32> -> vector<69x16xf32>
    %cst_334 = arith.constant 0.000000e+00 : f32
    %391 = vector.broadcast %cst_334 : f32 to vector<48x1xf32>
    %392 = vector.extract_strided_slice %390 {offsets = [0, 0], sizes = [48, 1], strides = [1, 1]} : vector<69x16xf32> to vector<48x1xf32>
    %393 = arith.addf %391, %392 : vector<48x1xf32>
    %394 = vector.extract_strided_slice %390 {offsets = [1, 1], sizes = [48, 1], strides = [1, 1]} : vector<69x16xf32> to vector<48x1xf32>
    %395 = arith.addf %393, %394 : vector<48x1xf32>
    %396 = vector.extract_strided_slice %390 {offsets = [2, 2], sizes = [48, 1], strides = [1, 1]} : vector<69x16xf32> to vector<48x1xf32>
    %397 = arith.addf %395, %396 : vector<48x1xf32>
    %398 = vector.extract_strided_slice %390 {offsets = [3, 3], sizes = [48, 1], strides = [1, 1]} : vector<69x16xf32> to vector<48x1xf32>
    %399 = arith.addf %397, %398 : vector<48x1xf32>
    %400 = vector.extract_strided_slice %390 {offsets = [6, 4], sizes = [48, 1], strides = [1, 1]} : vector<69x16xf32> to vector<48x1xf32>
    %401 = arith.addf %399, %400 : vector<48x1xf32>
    %402 = vector.extract_strided_slice %390 {offsets = [7, 5], sizes = [48, 1], strides = [1, 1]} : vector<69x16xf32> to vector<48x1xf32>
    %403 = arith.addf %401, %402 : vector<48x1xf32>
    %404 = vector.extract_strided_slice %390 {offsets = [8, 6], sizes = [48, 1], strides = [1, 1]} : vector<69x16xf32> to vector<48x1xf32>
    %405 = arith.addf %403, %404 : vector<48x1xf32>
    %406 = vector.extract_strided_slice %390 {offsets = [9, 7], sizes = [48, 1], strides = [1, 1]} : vector<69x16xf32> to vector<48x1xf32>
    %407 = arith.addf %405, %406 : vector<48x1xf32>
    %408 = vector.extract_strided_slice %390 {offsets = [12, 8], sizes = [48, 1], strides = [1, 1]} : vector<69x16xf32> to vector<48x1xf32>
    %409 = arith.addf %407, %408 : vector<48x1xf32>
    %410 = vector.extract_strided_slice %390 {offsets = [13, 9], sizes = [48, 1], strides = [1, 1]} : vector<69x16xf32> to vector<48x1xf32>
    %411 = arith.addf %409, %410 : vector<48x1xf32>
    %412 = vector.extract_strided_slice %390 {offsets = [14, 10], sizes = [48, 1], strides = [1, 1]} : vector<69x16xf32> to vector<48x1xf32>
    %413 = arith.addf %411, %412 : vector<48x1xf32>
    %414 = vector.extract_strided_slice %390 {offsets = [15, 11], sizes = [48, 1], strides = [1, 1]} : vector<69x16xf32> to vector<48x1xf32>
    %415 = arith.addf %413, %414 : vector<48x1xf32>
    %416 = vector.extract_strided_slice %390 {offsets = [18, 12], sizes = [48, 1], strides = [1, 1]} : vector<69x16xf32> to vector<48x1xf32>
    %417 = arith.addf %415, %416 : vector<48x1xf32>
    %418 = vector.extract_strided_slice %390 {offsets = [19, 13], sizes = [48, 1], strides = [1, 1]} : vector<69x16xf32> to vector<48x1xf32>
    %419 = arith.addf %417, %418 : vector<48x1xf32>
    %420 = vector.extract_strided_slice %390 {offsets = [20, 14], sizes = [48, 1], strides = [1, 1]} : vector<69x16xf32> to vector<48x1xf32>
    %421 = arith.addf %419, %420 : vector<48x1xf32>
    %422 = vector.extract_strided_slice %390 {offsets = [21, 15], sizes = [48, 1], strides = [1, 1]} : vector<69x16xf32> to vector<48x1xf32>
    %423 = arith.addf %421, %422 : vector<48x1xf32>
    %c0_335 = arith.constant 0 : index
    %c0_336 = arith.constant 0 : index
    %424 = vector.load %arg17[%c0_335, %c0_336] : memref<1x1xf32, #tpu.memory_space<vmem>>, vector<1x1xf32>
    %425 = vector.broadcast %424 : vector<1x1xf32> to vector<48x1xf32>
    %426 = arith.addf %423, %425 : vector<48x1xf32>
    %c0_337 = arith.constant 0 : index
    %c0_338 = arith.constant 0 : index
    %427 = vector.load %arg18[%c0_337, %c0_338] : memref<72x1xf32, #tpu.memory_space<vmem>>, vector<48x1xf32>
    tpu.vector_store %arg18[%c0_337, %c0_338], %426 {strides = array<i32>} : memref<72x1xf32, #tpu.memory_space<vmem>>, vector<48x1xf32>,
    %cst_339 = arith.constant 0.000000e+00 : f32
    %428 = vector.broadcast %cst_339 : f32 to vector<24x1xf32>
    %c48 = arith.constant 48 : index
    %c0_340 = arith.constant 0 : index
    %429 = vector.load %arg18[%c48, %c0_340] : memref<72x1xf32, #tpu.memory_space<vmem>>, vector<24x1xf32>
    tpu.vector_store %arg18[%c48, %c0_340], %428 {strides = array<i32>} : memref<72x1xf32, #tpu.memory_space<vmem>>, vector<24x1xf32>,
    return
  }
  func.func @transform_0(%arg0: i32) -> (i32, i32) {
    %c0_i32 = arith.constant 0 : i32
    %c0_i32_0 = arith.constant 0 : i32
    %c0_i32_1 = arith.constant 0 : i32
    return %c0_i32, %c0_i32_0 : i32, i32
  }
  func.func @transform_1(%arg0: i32) -> (i32, i32) {
    %c0_i32 = arith.constant 0 : i32
    %c0_i32_0 = arith.constant 0 : i32
    %c0_i32_1 = arith.constant 0 : i32
    return %c0_i32, %c0_i32_0 : i32, i32
  }
  func.func @transform_2(%arg0: i32) -> (i32, i32) {
    %c0_i32 = arith.constant 0 : i32
    %c0_i32_0 = arith.constant 0 : i32
    %c0_i32_1 = arith.constant 0 : i32
    return %c0_i32, %c0_i32_0 : i32, i32
  }
  func.func @transform_4(%arg0: i32) -> (i32, i32) {
    %c0_i32 = arith.constant 0 : i32
    %c0_i32_0 = arith.constant 0 : i32
    %c0_i32_1 = arith.constant 0 : i32
    return %c0_i32, %c0_i32_0 : i32, i32
  }
  func.func @transform_6(%arg0: i32) -> (i32, i32) {
    %c0_i32 = arith.constant 0 : i32
    %c0_i32_0 = arith.constant 0 : i32
    %c0_i32_1 = arith.constant 0 : i32
    return %c0_i32, %c0_i32_0 : i32, i32
  }
  func.func @transform_7(%arg0: i32) -> (i32, i32) {
    %c0_i32 = arith.constant 0 : i32
    %c0_i32_0 = arith.constant 0 : i32
    %c0_i32_1 = arith.constant 0 : i32
    return %c0_i32, %c0_i32_0 : i32, i32
  }
  func.func @transform_8(%arg0: i32) -> (i32, i32) {
    %c0_i32 = arith.constant 0 : i32
    %c0_i32_0 = arith.constant 0 : i32
    %c0_i32_1 = arith.constant 0 : i32
    return %c0_i32, %c0_i32_0 : i32, i32
  }
  func.func @transform_10(%arg0: i32) -> (i32, i32) {
    %c0_i32 = arith.constant 0 : i32
    %c0_i32_0 = arith.constant 0 : i32
    %c0_i32_1 = arith.constant 0 : i32
    return %c0_i32, %c0_i32_0 : i32, i32
  }
  func.func @transform_11(%arg0: i32) -> (i32, i32) {
    %c0_i32 = arith.constant 0 : i32
    %c0_i32_0 = arith.constant 0 : i32
    %c0_i32_1 = arith.constant 0 : i32
    return %c0_i32, %c0_i32_0 : i32, i32
  }
  func.func @transform_13(%arg0: i32) -> (i32, i32) {
    %c0_i32 = arith.constant 0 : i32
    %c0_i32_0 = arith.constant 0 : i32
    %c0_i32_1 = arith.constant 0 : i32
    return %c0_i32, %c0_i32_0 : i32, i32
  }
  func.func @transform_14(%arg0: i32) -> (i32, i32) {
    %c0_i32 = arith.constant 0 : i32
    %c0_i32_0 = arith.constant 0 : i32
    %c0_i32_1 = arith.constant 0 : i32
    return %c0_i32, %c0_i32_0 : i32, i32
  }
  func.func @transform_15(%arg0: i32) -> (i32, i32) {
    %c0_i32 = arith.constant 0 : i32
    %c0_i32_0 = arith.constant 0 : i32
    %c0_i32_1 = arith.constant 0 : i32
    return %c0_i32, %c0_i32_0 : i32, i32
  }
  func.func @transform_16(%arg0: i32) -> (i32, i32) {
    %c0_i32 = arith.constant 0 : i32
    %c0_i32_0 = arith.constant 0 : i32
    %c0_i32_1 = arith.constant 0 : i32
    return %c0_i32, %c0_i32_0 : i32, i32
  }
  func.func @transform_17(%arg0: i32) -> (i32, i32) {
    %c0_i32 = arith.constant 0 : i32
    %c0_i32_0 = arith.constant 0 : i32
    %c0_i32_1 = arith.constant 0 : i32
    return %c0_i32, %c0_i32_0 : i32, i32
  }
}

</mosaic_0001>

<llo_original>
// kernel: nlayer_discriminator_forward.1
$region0: #{nlayer_discriminator_forward.1}
  #allocation0 [shape = 'u32[]', space=smem, size = 0x4, offset = 0x4, fixed_abs, tag = 'smem constant byte address 0x4 - core index']
  #allocation1 [shape = 'u32[144,128]{1,0:T(1,128)}', space=vmem, size = 0x12000, scoped, tag = 'internal scratch']
  #allocation2 [shape = 'bf16[80,128]{1,0:T(16,128)(2,1)}', space=vmem, size = 0x5000, scoped, tag = 'scratch operand']
  #allocation3 [shape = 'bf16[80,64]{1,0:T(16,128)(2,1)}', space=vmem, size = 0x5000, scoped, tag = 'scratch operand']
  #allocation4 [shape = 'bf16[80,32]{1,0:T(16,128)(2,1)}', space=vmem, size = 0x5000, scoped, tag = 'scratch operand']
  #allocation5 [shape = 'bf16[80,64]{1,0:T(16,128)(2,1)}', space=vmem, size = 0x5000, scoped, tag = 'scratch operand']
  #allocation6 [shape = 'bf16[9,192,128]{2,1,0:T(16,128)(2,1)}', space=vmem, size = 0x6c000, scoped, tag = 'scratch operand']
  #allocation7 [shape = 'bf16[9,128,64]{2,1,0:T(16,128)(2,1)}', space=vmem, size = 0x48000, scoped, tag = 'scratch operand']
  #allocation8 [shape = 'bf16[9,64,32]{2,1,0:T(16,128)(2,1)}', space=vmem, size = 0x24000, scoped, tag = 'scratch operand']
  #allocation9 [shape = 'bf16[16,32,64]{2,1,0:T(16,128)(2,1)}', space=vmem, size = 0x20000, scoped, tag = 'scratch operand']
  #allocation10 [shape = 's32[4]{0}', space=sflag, size = 0x10, scoped, tag = 'scratch operand']
  #allocation11 [shape = 'f32[1,1]{1,0:T(1,128)S(1)}', space=vmem, size = 0x200, scoped, tag = 'scoped memory for nlayer_discriminator_forward.1']
  #allocation33 [shape = 's32[]', space=sflag, size = 0x4, offset = 0, fixed_abs, tag = 'sflag constant byte address 0x0 - dummy sync flag']
  #allocation34 [shape = 's32[]', space=sflag, size = 0x4, offset = 0, fixed_abs, tag = 'sflag constant byte address 0x0 - dummy sync flag']
  #allocation35 [shape = 'u32[]', space=smem, size = 0x4, offset = 0x44, fixed_abs, tag = 'smem constant byte address 0x44 - assertion arg 0']
  #allocation36 [shape = 'u32[]', space=smem, size = 0x4, offset = 0x48, fixed_abs, tag = 'smem constant byte address 0x48 - assertion arg 1']
  #allocation37 [shape = 's32[]', space=sflag, size = 0x4, offset = 0, fixed_abs, tag = 'sflag constant byte address 0x0 - dummy sync flag']
  #allocation38 [shape = 's32[]', space=sflag, size = 0x4, offset = 0, fixed_abs, tag = 'sflag constant byte address 0x0 - dummy sync flag']
  #allocation39 [shape = 's32[]', space=sflag, size = 0x4, offset = 0, fixed_abs, tag = 'sflag constant byte address 0x0 - dummy sync flag']
  #allocation40 [shape = 's32[]', space=sflag, size = 0x4, offset = 0, fixed_abs, tag = 'sflag constant byte address 0x0 - dummy sync flag']
  #allocation41 [shape = 's32[]', space=sflag, size = 0x4, offset = 0, fixed_abs, tag = 'sflag constant byte address 0x0 - dummy sync flag']
  #allocation42 [shape = 's32[]', space=sflag, size = 0x4, offset = 0, fixed_abs, tag = 'sflag constant byte address 0x0 - dummy sync flag']
  %s0 = inlined_call_operand.hbm [shape: bf16[80,192], index: 0, kind: input, shape index: {}]
  %s1 = inlined_call_operand.hbm [shape: f32[60,1], index: 1, kind: input, shape index: {}]
  %s2 = inlined_call_operand.hbm [shape: f32[54,1], index: 2, kind: input, shape index: {}]
  %s3 = inlined_call_operand.hbm [shape: bf16[9,192,128], index: 3, kind: input, shape index: {}]
  %s4 = inlined_call_operand.hbm [shape: f32[1,128], index: 4, kind: input, shape index: {}]
  %s5 = inlined_call_operand.hbm [shape: bf16[9,128,64], index: 5, kind: input, shape index: {}]
  %s6 = inlined_call_operand.hbm [shape: f32[1,64], index: 6, kind: input, shape index: {}]
  %s7 = inlined_call_operand.hbm [shape: f32[1,64], index: 7, kind: input, shape index: {}]
  %s8 = inlined_call_operand.hbm [shape: f32[64,64], index: 8, kind: input, shape index: {}]
  %s9 = inlined_call_operand.hbm [shape: bf16[9,64,32], index: 9, kind: input, shape index: {}]
  %s10 = inlined_call_operand.hbm [shape: f32[1,32], index: 10, kind: input, shape index: {}]
  %s11 = inlined_call_operand.hbm [shape: f32[1,32], index: 11, kind: input, shape index: {}]
  %s12 = inlined_call_operand.hbm [shape: bf16[16,32,64], index: 12, kind: input, shape index: {}]
  %s13 = inlined_call_operand.hbm [shape: f32[1,64], index: 13, kind: input, shape index: {}]
  %s14 = inlined_call_operand.hbm [shape: f32[1,64], index: 14, kind: input, shape index: {}]
  %s15 = inlined_call_operand.hbm [shape: bf16[64,16], index: 15, kind: input, shape index: {}]
  %s16 = inlined_call_operand.<no memory space> [shape: f32[1,1], index: 16, kind: input, shape index: {}]
  %s17 = inlined_call_operand.hbm [shape: f32[72,1], index: 17, kind: output, shape index: {}]
  %s18 = sld [smem:[#allocation0]]
  $region126: #{nlayer_discriminator_forward.1} parent=0
    _
  %s20 = ssub.s32 1, %s18
  %s21 = scalar_select 0, %s20, %s18
  %v22 = vstv %s16
  %23 = vst [vmem:[#allocation11] sm:$0x1] %v22
  $region1: #{nlayer_discriminator_forward.1} parent=0
    #allocation12 [shape = 'u8[40960]{0}', space=vmem, size = 0xa000, scoped, tag = 'input window, operand 0, single buffered']
    #allocation13 [shape = 's32[1]{0}', space=sflag, size = 0x4, scoped, tag = 'scoped memory for nlayer_discriminator_forward.1']
    #allocation14 [shape = 's32[1]{0}', space=sflag, size = 0x4, scoped, tag = 'scoped memory for nlayer_discriminator_forward.1']
    #allocation15 [shape = 'u8[32768]{0}', space=vmem, size = 0x8000, scoped, tag = 'input window, operand 1, single buffered']
    #allocation16 [shape = 's32[1]{0}', space=sflag, size = 0x4, scoped, tag = 'scoped memory for nlayer_discriminator_forward.1']
    #allocation17 [shape = 'u8[28672]{0}', space=vmem, size = 0x7000, scoped, tag = 'input window, operand 2, single buffered']
    #allocation18 [shape = 'u8[512]{0}', space=vmem, size = 0x400, scoped, tag = 'input window, operand 4, single buffered']
    #allocation19 [shape = 's32[1]{0}', space=sflag, size = 0x4, scoped, tag = 'scoped memory for nlayer_discriminator_forward.1']
    #allocation20 [shape = 'u8[512]{0}', space=vmem, size = 0x400, scoped, tag = 'input window, operand 6, single buffered']
    #allocation21 [shape = 'u8[512]{0}', space=vmem, size = 0x400, scoped, tag = 'input window, operand 7, single buffered']
    #allocation22 [shape = 's32[1]{0}', space=sflag, size = 0x4, scoped, tag = 'scoped memory for nlayer_discriminator_forward.1']
    #allocation23 [shape = 'u8[32768]{0}', space=vmem, size = 0x8000, scoped, tag = 'input window, operand 8, single buffered']
    #allocation24 [shape = 'u8[512]{0}', space=vmem, size = 0x400, scoped, tag = 'input window, operand 10, single buffered']
    #allocation25 [shape = 's32[1]{0}', space=sflag, size = 0x4, scoped, tag = 'scoped memory for nlayer_discriminator_forward.1']
    #allocation26 [shape = 'u8[512]{0}', space=vmem, size = 0x400, scoped, tag = 'input window, operand 11, single buffered']
    #allocation27 [shape = 'u8[512]{0}', space=vmem, size = 0x400, scoped, tag = 'input window, operand 13, single buffered']
    #allocation28 [shape = 's32[1]{0}', space=sflag, size = 0x4, scoped, tag = 'scoped memory for nlayer_discriminator_forward.1']
    #allocation29 [shape = 'u8[512]{0}', space=vmem, size = 0x400, scoped, tag = 'input window, operand 14, single buffered']
    #allocation30 [shape = 'u8[16384]{0}', space=vmem, size = 0x4000, scoped, tag = 'input window, operand 15, single buffered']
    #allocation31 [shape = 's32[1]{0}', space=sflag, size = 0x4, scoped, tag = 'scoped memory for nlayer_discriminator_forward.1']
    #allocation32 [shape = 'u8[36864]{0}', space=vmem, size = 0x9000, scoped, tag = 'output window, operand 0, single buffered']
    %24 = vsyncpa [#allocation13], 0
    %25 = vsyncpa [#allocation16], 0
    %26 = vsyncpa [#allocation19], 0
    %27 = vsyncpa [#allocation22], 0
    %28 = vsyncpa [#allocation25], 0
    %29 = vsyncpa [#allocation28], 0
    %30 = vsyncpa [#allocation31], 0
    %31 = vsyncpa [#allocation14], 0
    // Predicated region
    $region2: #{nlayer_discriminator_forward.1} parent=1 // pred_check
      _
    $region3: #{nlayer_discriminator_forward.1} parent=1 // pred_check_branch
      %33 = sbr.rel (0) target = $region5
    $region4: #{nlayer_discriminator_forward.1} parent=1 // pred_region
      %s35 = ssub.s32 1280, 1280
      %36 = vsyncadd [#allocation13], %s35
      %s37 = sshll.u32 [#allocation12], 4
      %s38 = int_to_ptr.vmem [resolvable:$true] %s37
      %43 = dma.hbm_to_vmem [thread:$0]  %s0, 1280, %s38, [#allocation13], 128, 128, 8
    $region5: #{nlayer_discriminator_forward.1} parent=1 // pred_fallthru
      _
    // Predicated region
    $region6: #{nlayer_discriminator_forward.1} parent=1 // pred_check
      _
    $region7: #{nlayer_discriminator_forward.1} parent=1 // pred_check_branch
      %45 = sbr.rel (0) target = $region9
    $region8: #{nlayer_discriminator_forward.1} parent=1 // pred_region
      %s47 = ssub.s32 1024, 1024
      %48 = vsyncadd [#allocation16], %s47
      %s49 = sshll.u32 [#allocation15], 4
      %s50 = int_to_ptr.vmem [resolvable:$true] %s49
      %55 = dma.hbm_to_vmem [thread:$0]  %s1, 1024, %s50, [#allocation16], 128, 128, 8
    $region9: #{nlayer_discriminator_forward.1} parent=1 // pred_fallthru
      _
    // Predicated region
    $region10: #{nlayer_discriminator_forward.1} parent=1 // pred_check
      _
    $region11: #{nlayer_discriminator_forward.1} parent=1 // pred_check_branch
      %57 = sbr.rel (0) target = $region13
    $region12: #{nlayer_discriminator_forward.1} parent=1 // pred_region
      %s59 = ssub.s32 896, 896
      %60 = vsyncadd [#allocation16], %s59
      %s61 = sshll.u32 [#allocation17], 4
      %s62 = int_to_ptr.vmem [resolvable:$true] %s61
      %67 = dma.hbm_to_vmem [thread:$0]  %s2, 896, %s62, [#allocation16], 128, 128, 8
    $region13: #{nlayer_discriminator_forward.1} parent=1 // pred_fallthru
      _
    // Predicated region
    $region14: #{nlayer_discriminator_forward.1} parent=1 // pred_check
      _
    $region15: #{nlayer_discriminator_forward.1} parent=1 // pred_check_branch
      %69 = sbr.rel (0) target = $region17
    $region16: #{nlayer_discriminator_forward.1} parent=1 // pred_region
      %s71 = ssub.s32 16, 16
      %72 = vsyncadd [#allocation19], %s71
      %s74 = sshll.u32 [#allocation18], 4
      %s75 = int_to_ptr.vmem [resolvable:$true] %s74
      %77 = dma.hbm_to_vmem [thread:$0]  %s4, 16, %s75, [#allocation19]
    $region17: #{nlayer_discriminator_forward.1} parent=1 // pred_fallthru
      _
    // Predicated region
    $region18: #{nlayer_discriminator_forward.1} parent=1 // pred_check
      _
    $region19: #{nlayer_discriminator_forward.1} parent=1 // pred_check_branch
      %79 = sbr.rel (0) target = $region21
    $region20: #{nlayer_discriminator_forward.1} parent=1 // pred_region
      %s81 = ssub.s32 16, 16
      %82 = vsyncadd [#allocation19], %s81
      %s84 = sshll.u32 [#allocation20], 4
      %s85 = int_to_ptr.vmem [resolvable:$true] %s84
      %87 = dma.hbm_to_vmem [thread:$0]  %s6, 16, %s85, [#allocation19]
    $region21: #{nlayer_discriminator_forward.1} parent=1 // pred_fallthru
      _
    // Predicated region
    $region22: #{nlayer_discriminator_forward.1} parent=1 // pred_check
      _
    $region23: #{nlayer_discriminator_forward.1} parent=1 // pred_check_branch
      %89 = sbr.rel (0) target = $region25
    $region24: #{nlayer_discriminator_forward.1} parent=1 // pred_region
      %s91 = ssub.s32 16, 16
      %92 = vsyncadd [#allocation22], %s91
      %s94 = sshll.u32 [#allocation21], 4
      %s95 = int_to_ptr.vmem [resolvable:$true] %s94
      %97 = dma.hbm_to_vmem [thread:$0]  %s7, 16, %s95, [#allocation22]
    $region25: #{nlayer_discriminator_forward.1} parent=1 // pred_fallthru
      _
    // Predicated region
    $region26: #{nlayer_discriminator_forward.1} parent=1 // pred_check
      _
    $region27: #{nlayer_discriminator_forward.1} parent=1 // pred_check_branch
      %99 = sbr.rel (0) target = $region29
    $region28: #{nlayer_discriminator_forward.1} parent=1 // pred_region
      %s101 = ssub.s32 1024, 1024
      %102 = vsyncadd [#allocation22], %s101
      %s103 = sshll.u32 [#allocation23], 4
      %s104 = int_to_ptr.vmem [resolvable:$true] %s103
      %109 = dma.hbm_to_vmem [thread:$0]  %s8, 1024, %s104, [#allocation22], 128, 128, 8
    $region29: #{nlayer_discriminator_forward.1} parent=1 // pred_fallthru
      _
    // Predicated region
    $region30: #{nlayer_discriminator_forward.1} parent=1 // pred_check
      _
    $region31: #{nlayer_discriminator_forward.1} parent=1 // pred_check_branch
      %111 = sbr.rel (0) target = $region33
    $region32: #{nlayer_discriminator_forward.1} parent=1 // pred_region
      %s113 = ssub.s32 16, 16
      %114 = vsyncadd [#allocation25], %s113
      %s116 = sshll.u32 [#allocation24], 4
      %s117 = int_to_ptr.vmem [resolvable:$true] %s116
      %119 = dma.hbm_to_vmem [thread:$0]  %s10, 16, %s117, [#allocation25]
    $region33: #{nlayer_discriminator_forward.1} parent=1 // pred_fallthru
      _
    // Predicated region
    $region34: #{nlayer_discriminator_forward.1} parent=1 // pred_check
      _
    $region35: #{nlayer_discriminator_forward.1} parent=1 // pred_check_branch
      %121 = sbr.rel (0) target = $region37
    $region36: #{nlayer_discriminator_forward.1} parent=1 // pred_region
      %s123 = ssub.s32 16, 16
      %124 = vsyncadd [#allocation25], %s123
      %s126 = sshll.u32 [#allocation26], 4
      %s127 = int_to_ptr.vmem [resolvable:$true] %s126
      %129 = dma.hbm_to_vmem [thread:$0]  %s11, 16, %s127, [#allocation25]
    $region37: #{nlayer_discriminator_forward.1} parent=1 // pred_fallthru
      _
    // Predicated region
    $region38: #{nlayer_discriminator_forward.1} parent=1 // pred_check
      _
    $region39: #{nlayer_discriminator_forward.1} parent=1 // pred_check_branch
      %131 = sbr.rel (0) target = $region41
    $region40: #{nlayer_discriminator_forward.1} parent=1 // pred_region
      %s133 = ssub.s32 16, 16
      %134 = vsyncadd [#allocation28], %s133
      %s136 = sshll.u32 [#allocation27], 4
      %s137 = int_to_ptr.vmem [resolvable:$true] %s136
      %139 = dma.hbm_to_vmem [thread:$0]  %s13, 16, %s137, [#allocation28]
    $region41: #{nlayer_discriminator_forward.1} parent=1 // pred_fallthru
      _
    // Predicated region
    $region42: #{nlayer_discriminator_forward.1} parent=1 // pred_check
      _
    $region43: #{nlayer_discriminator_forward.1} parent=1 // pred_check_branch
      %141 = sbr.rel (0) target = $region45
    $region44: #{nlayer_discriminator_forward.1} parent=1 // pred_region
      %s143 = ssub.s32 16, 16
      %144 = vsyncadd [#allocation28], %s143
      %s146 = sshll.u32 [#allocation29], 4
      %s147 = int_to_ptr.vmem [resolvable:$true] %s146
      %149 = dma.hbm_to_vmem [thread:$0]  %s14, 16, %s147, [#allocation28]
    $region45: #{nlayer_discriminator_forward.1} parent=1 // pred_fallthru
      _
    // Predicated region
    $region46: #{nlayer_discriminator_forward.1} parent=1 // pred_check
      _
    $region47: #{nlayer_discriminator_forward.1} parent=1 // pred_check_branch
      %151 = sbr.rel (0) target = $region49
    $region48: #{nlayer_discriminator_forward.1} parent=1 // pred_region
      %s153 = ssub.s32 512, 512
      %154 = vsyncadd [#allocation31], %s153
      %s155 = sshll.u32 [#allocation30], 4
      %s156 = int_to_ptr.vmem [resolvable:$true] %s155
      %161 = dma.hbm_to_vmem [thread:$0]  %s15, 512, %s156, [#allocation31], 64, 64, 4
    $region49: #{nlayer_discriminator_forward.1} parent=1 // pred_fallthru
      _
    // Predicated region
    $region50: #{nlayer_discriminator_forward.1} parent=1 // pred_check
      _
    $region51: #{nlayer_discriminator_forward.1} parent=1 // pred_check_branch
      %163 = sbr.rel (0) target = $region53
    $region52: #{nlayer_discriminator_forward.1} parent=1 // pred_region
      _
    $region53: #{nlayer_discriminator_forward.1} parent=1 // pred_fallthru
      _
    // Predicated region
    $region54: #{nlayer_discriminator_forward.1} parent=1 // pred_check
      _
    $region55: #{nlayer_discriminator_forward.1} parent=1 // pred_check_branch
      %165 = sbr.rel (0) target = $region57
    $region56: #{nlayer_discriminator_forward.1} parent=1 // pred_region
      %166 = dma.done [#allocation13], 1280
    $region57: #{nlayer_discriminator_forward.1} parent=1 // pred_fallthru
      _
    // Predicated region
    $region58: #{nlayer_discriminator_forward.1} parent=1 // pred_check
      _
    $region59: #{nlayer_discriminator_forward.1} parent=1 // pred_check_branch
      %168 = sbr.rel (0) target = $region61
    $region60: #{nlayer_discriminator_forward.1} parent=1 // pred_region
      %169 = dma.done [#allocation16], 1024
    $region61: #{nlayer_discriminator_forward.1} parent=1 // pred_fallthru
      _
    // Predicated region
    $region62: #{nlayer_discriminator_forward.1} parent=1 // pred_check
      _
    $region63: #{nlayer_discriminator_forward.1} parent=1 // pred_check_branch
      %171 = sbr.rel (0) target = $region65
    $region64: #{nlayer_discriminator_forward.1} parent=1 // pred_region
      %172 = dma.done [#allocation16], 896
    $region65: #{nlayer_discriminator_forward.1} parent=1 // pred_fallthru
      _
    // Predicated region
    $region66: #{nlayer_discriminator_forward.1} parent=1 // pred_check
      _
    $region67: #{nlayer_discriminator_forward.1} parent=1 // pred_check_branch
      %174 = sbr.rel (0) target = $region69
    $region68: #{nlayer_discriminator_forward.1} parent=1 // pred_region
      %175 = dma.done [#allocation19], 16
    $region69: #{nlayer_discriminator_forward.1} parent=1 // pred_fallthru
      _
    // Predicated region
    $region70: #{nlayer_discriminator_forward.1} parent=1 // pred_check
      _
    $region71: #{nlayer_discriminator_forward.1} parent=1 // pred_check_branch
      %177 = sbr.rel (0) target = $region73
    $region72: #{nlayer_discriminator_forward.1} parent=1 // pred_region
      %178 = dma.done [#allocation19], 16
    $region73: #{nlayer_discriminator_forward.1} parent=1 // pred_fallthru
      _
    // Predicated region
    $region74: #{nlayer_discriminator_forward.1} parent=1 // pred_check
      _
    $region75: #{nlayer_discriminator_forward.1} parent=1 // pred_check_branch
      %180 = sbr.rel (0) target = $region77
    $region76: #{nlayer_discriminator_forward.1} parent=1 // pred_region
      %181 = dma.done [#allocation22], 16
    $region77: #{nlayer_discriminator_forward.1} parent=1 // pred_fallthru
      _
    // Predicated region
    $region78: #{nlayer_discriminator_forward.1} parent=1 // pred_check
      _
    $region79: #{nlayer_discriminator_forward.1} parent=1 // pred_check_branch
      %183 = sbr.rel (0) target = $region81
    $region80: #{nlayer_discriminator_forward.1} parent=1 // pred_region
      %184 = dma.done [#allocation22], 1024
    $region81: #{nlayer_discriminator_forward.1} parent=1 // pred_fallthru
      _
    // Predicated region
    $region82: #{nlayer_discriminator_forward.1} parent=1 // pred_check
      _
    $region83: #{nlayer_discriminator_forward.1} parent=1 // pred_check_branch
      %186 = sbr.rel (0) target = $region85
    $region84: #{nlayer_discriminator_forward.1} parent=1 // pred_region
      %187 = dma.done [#allocation25], 16
    $region85: #{nlayer_discriminator_forward.1} parent=1 // pred_fallthru
      _
    // Predicated region
    $region86: #{nlayer_discriminator_forward.1} parent=1 // pred_check
      _
    $region87: #{nlayer_discriminator_forward.1} parent=1 // pred_check_branch
      %189 = sbr.rel (0) target = $region89
    $region88: #{nlayer_discriminator_forward.1} parent=1 // pred_region
      %190 = dma.done [#allocation25], 16
    $region89: #{nlayer_discriminator_forward.1} parent=1 // pred_fallthru
      _
    // Predicated region
    $region90: #{nlayer_discriminator_forward.1} parent=1 // pred_check
      _
    $region91: #{nlayer_discriminator_forward.1} parent=1 // pred_check_branch
      %192 = sbr.rel (0) target = $region93
    $region92: #{nlayer_discriminator_forward.1} parent=1 // pred_region
      %193 = dma.done [#allocation28], 16
    $region93: #{nlayer_discriminator_forward.1} parent=1 // pred_fallthru
      _
    // Predicated region
    $region94: #{nlayer_discriminator_forward.1} parent=1 // pred_check
      _
    $region95: #{nlayer_discriminator_forward.1} parent=1 // pred_check_branch
      %195 = sbr.rel (0) target = $region97
    $region96: #{nlayer_discriminator_forward.1} parent=1 // pred_region
      %196 = dma.done [#allocation28], 16
    $region97: #{nlayer_discriminator_forward.1} parent=1 // pred_fallthru
      _
    // Predicated region
    $region98: #{nlayer_discriminator_forward.1} parent=1 // pred_check
      _
    $region99: #{nlayer_discriminator_forward.1} parent=1 // pred_check_branch
      %198 = sbr.rel (0) target = $region101
    $region100: #{nlayer_discriminator_forward.1} parent=1 // pred_region
      %199 = dma.done [#allocation31], 512
    $region101: #{nlayer_discriminator_forward.1} parent=1 // pred_fallthru
      _
    // Predicated region
    $region102: #{nlayer_discriminator_forward.1} parent=1 // pred_check
      _
    $region103: #{nlayer_discriminator_forward.1} parent=1 // pred_check_branch
      %202 = sbr.rel target = $region105
    $region104: #{nlayer_discriminator_forward.1} parent=1 // pred_region
      %203 = sst [smem:[#allocation35]] [#allocation34]
      %204 = sst [smem:[#allocation36]] [#allocation33]
    $region105: #{nlayer_discriminator_forward.1} parent=1 // pred_fallthru
      _
    %206 = shalt.err (0)
    %s208 = sshll.u32 [#allocation6], 4
    %s209 = int_to_ptr.vmem [resolvable:$true] %s208
    %211 = dma.hbm_to_vmem [thread:$0]  %s3, 13824, %s209, [#allocation10]
    %s212 = scalar_lea.sflag [#allocation10], 1
    // Predicated region
    $region106: #{nlayer_discriminator_forward.1} parent=1 // pred_check
      _
    $region107: #{nlayer_discriminator_forward.1} parent=1 // pred_check_branch
      %214 = sbr.rel target = $region109
    $region108: #{nlayer_discriminator_forward.1} parent=1 // pred_region
      %215 = sst [smem:[#allocation35]] [#allocation38]
      %216 = sst [smem:[#allocation36]] [#allocation37]
    $region109: #{nlayer_discriminator_forward.1} parent=1 // pred_fallthru
      _
    %218 = shalt.err (0)
    %s220 = sshll.u32 [#allocation7], 4
    %s221 = int_to_ptr.vmem [resolvable:$true] %s220
    %223 = dma.hbm_to_vmem [thread:$0]  %s5, 9216, %s221, %s212
    %s224 = scalar_lea.sflag [#allocation10], 2
    // Predicated region
    $region110: #{nlayer_discriminator_forward.1} parent=1 // pred_check
      _
    $region111: #{nlayer_discriminator_forward.1} parent=1 // pred_check_branch
      %226 = sbr.rel target = $region113
    $region112: #{nlayer_discriminator_forward.1} parent=1 // pred_region
      %227 = sst [smem:[#allocation35]] [#allocation40]
      %228 = sst [smem:[#allocation36]] [#allocation39]
    $region113: #{nlayer_discriminator_forward.1} parent=1 // pred_fallthru
      _
    %230 = shalt.err (0)
    %s232 = sshll.u32 [#allocation8], 4
    %s233 = int_to_ptr.vmem [resolvable:$true] %s232
    %235 = dma.hbm_to_vmem [thread:$0]  %s9, 4608, %s233, %s224
    %s236 = scalar_lea.sflag [#allocation10], 3
    // Predicated region
    $region114: #{nlayer_discriminator_forward.1} parent=1 // pred_check
      _
    $region115: #{nlayer_discriminator_forward.1} parent=1 // pred_check_branch
      %238 = sbr.rel target = $region117
    $region116: #{nlayer_discriminator_forward.1} parent=1 // pred_region
      %239 = sst [smem:[#allocation35]] [#allocation42]
      %240 = sst [smem:[#allocation36]] [#allocation41]
    $region117: #{nlayer_discriminator_forward.1} parent=1 // pred_fallthru
      _
    %242 = shalt.err (0)
    %s244 = sshll.u32 [#allocation9], 4
    %s245 = int_to_ptr.vmem [resolvable:$true] %s244
    %247 = dma.hbm_to_vmem [thread:$0]  %s12, 4096, %s245, %s236
    %vm248 = vcmask 1043456
    %vm249 = vsmask.f32 3328
    %vm250 = vmand %vm248, %vm249
    %v251 = vld [vmem:[#allocation2] sm:$0xf]
    %v252 = vsel %vm250, 0, %v251
    %253 = vst [vmem:[#allocation2] sm:$0xf] %v252
    %vm254 = vcmask 1047553
    %vm255 = vsmask.f32 7942
    %vm256 = vmand %vm254, %vm255
    %v257 = vld [vmem:[#allocation2 + $0x20] sm:$0xfe]
    %v258 = vsel %vm256, 0, %v257
    %259 = vst [vmem:[#allocation2 + $0x20] sm:$0xfe] %v258
    %vm260 = vcmask 519168
    %vm261 = vmand %vm260, %vm249
    %v262 = vld [vmem:[#allocation3] sm:$0xf]
    %v263 = vsel %vm261, 0, %v262
    %264 = vst [vmem:[#allocation3] sm:$0xf] %v263
    %vm265 = vcmask 523265
    %vm266 = vmand %vm265, %vm255
    %v267 = vld [vmem:[#allocation3 + $0x20] sm:$0xfe]
    %v268 = vsel %vm266, 0, %v267
    %269 = vst [vmem:[#allocation3 + $0x20] sm:$0xfe] %v268
    %vm270 = vcmask 257024
    %vm271 = vmand %vm270, %vm249
    %v272 = vld [vmem:[#allocation4] sm:$0xf]
    %v273 = vsel %vm271, 0, %v272
    %274 = vst [vmem:[#allocation4] sm:$0xf] %v273
    %vm275 = vcmask 261121
    %vm276 = vmand %vm275, %vm255
    %v277 = vld [vmem:[#allocation4 + $0x20] sm:$0xfe]
    %v278 = vsel %vm276, 0, %v277
    %279 = vst [vmem:[#allocation4 + $0x20] sm:$0xfe] %v278
    %v280 = vld [vmem:[#allocation5] sm:$0xf]
    %v281 = vsel %vm261, 0, %v280
    %282 = vst [vmem:[#allocation5] sm:$0xf] %v281
    %vm283 = vcmask 523270
    %vm284 = vsmask.f32 7962
    %vm285 = vmand %vm283, %vm284
    %v286 = vld [vmem:[#allocation5 + $0x18] sm:$0xc0]
    %v287 = vsel %vm285, 0, %v286
    %288 = vst [vmem:[#allocation5 + $0x18] sm:$0xc0] %v287
    %vm289 = vcmask 523264
    %290 = vst.msk [vmem:[#allocation5 + $0x20] sm:$0xff] %vm289, 0
    %v291 = vld [vmem:[#allocation15] sm:$0xff]
    %v292 = vld [vmem:[#allocation15 + $0x8] sm:$0xff]
    %v293 = vld [vmem:[#allocation15 + $0x10] sm:$0xff]
    %v294 = vld [vmem:[#allocation15 + $0x18] sm:$0xff]
    %v295 = vld [vmem:[#allocation15 + $0x20] sm:$0xff]
    %v296 = vld [vmem:[#allocation15 + $0x28] sm:$0xff]
    %v297 = vld [vmem:[#allocation15 + $0x30] sm:$0xff]
    %v298 = vld [vmem:[#allocation15 + $0x38] sm:$0xf]
    %vm299 = vcmp.ne.f32.partialorder %v291, 0.0
    %vm300 = vcmp.ne.f32.partialorder %v292, 0.0
    %vm301 = vcmp.ne.f32.partialorder %v293, 0.0
    %vm302 = vcmp.ne.f32.partialorder %v294, 0.0
    %vm303 = vcmp.ne.f32.partialorder %v295, 0.0
    %vm304 = vcmp.ne.f32.partialorder %v296, 0.0
    %vm305 = vcmp.ne.f32.partialorder %v297, 0.0
    %vm306 = vcmp.ne.f32.partialorder %v298, 0.0
    %v307 = vld [vmem:[#allocation17] sm:$0xff]
    %v308 = vld [vmem:[#allocation17 + $0x8] sm:$0xff]
    %v309 = vld [vmem:[#allocation17 + $0x10] sm:$0xff]
    %v310 = vld [vmem:[#allocation17 + $0x18] sm:$0xff]
    %v311 = vld [vmem:[#allocation17 + $0x20] sm:$0xff]
    %v312 = vld [vmem:[#allocation17 + $0x28] sm:$0xff]
    %v313 = vld [vmem:[#allocation17 + $0x30] sm:$0x3f]
    %vm314 = vcmp.ne.f32.partialorder %v307, 0.0
    %vm315 = vcmp.ne.f32.partialorder %v308, 0.0
    %vm316 = vcmp.ne.f32.partialorder %v309, 0.0
    %vm317 = vcmp.ne.f32.partialorder %v310, 0.0
    %vm318 = vcmp.ne.f32.partialorder %v311, 0.0
    %vm319 = vcmp.ne.f32.partialorder %v312, 0.0
    %vm320 = vcmp.ne.f32.partialorder %v313, 0.0
    %s321 = smul.u32 4, 9
    %s322 = smul.u32 %s321, 24
    %s323 = smul.u32 %s322, 1
    %s324 = sshll.u32 %s323, 4
    %325 = dma.done [#allocation10], %s324
    %v326 = vld [vmem:[#allocation12] sm:$0xff]
    %v327 = vld [vmem:[#allocation12 + $0x8] sm:$0xff]
    %v328 = vld [vmem:[#allocation12 + $0x10] sm:$0xff]
    %v329 = vld [vmem:[#allocation12 + $0x18] sm:$0xff]
    %v330 = vld [vmem:[#allocation12 + $0x20] sm:$0xff]
    %v331 = vld [vmem:[#allocation12 + $0x28] sm:$0xff]
    %v332 = vld [vmem:[#allocation12 + $0x30] sm:$0xff]
    %v333 = vld [vmem:[#allocation12 + $0x38] sm:$0x33]
    %v334 = vld [vmem:[#allocation6] sm:$0xff]
    %v335 = vld [vmem:[#allocation6 + $0x8] sm:$0xff]
    %v336 = vld [vmem:[#allocation6 + $0x10] sm:$0xff]
    %v337 = vld [vmem:[#allocation6 + $0x18] sm:$0xff]
    %v338 = vld [vmem:[#allocation6 + $0x20] sm:$0xff]
    %v339 = vld [vmem:[#allocation6 + $0x28] sm:$0xff]
    %v340 = vld [vmem:[#allocation6 + $0x30] sm:$0xff]
    %v341 = vld [vmem:[#allocation6 + $0x38] sm:$0xff]
    %v342 = vld [vmem:[#allocation6 + $0x40] sm:$0xff]
    %v343 = vld [vmem:[#allocation6 + $0x48] sm:$0xff]
    %v344 = vld [vmem:[#allocation6 + $0x50] sm:$0xff]
    %v345 = vld [vmem:[#allocation6 + $0x58] sm:$0xff]
    %v346 = vld [vmem:[#allocation12 + $0x38] sm:$0x77]
    %s347 = scalar_lea.vmem [#allocation6], 96
    %v348 = vld [vmem:[%s347] sm:$0xff]
    %v349 = vld [vmem:[%s347 + $0x8] sm:$0xff]
    %v350 = vld [vmem:[%s347 + $0x10] sm:$0xff]
    %v351 = vld [vmem:[%s347 + $0x18] sm:$0xff]
    %v352 = vld [vmem:[%s347 + $0x20] sm:$0xff]
    %v353 = vld [vmem:[%s347 + $0x28] sm:$0xff]
    %v354 = vld [vmem:[%s347 + $0x30] sm:$0xff]
    %v355 = vld [vmem:[%s347 + $0x38] sm:$0xff]
    %v356 = vld [vmem:[%s347 + $0x40] sm:$0xff]
    %v357 = vld [vmem:[%s347 + $0x48] sm:$0xff]
    %v358 = vld [vmem:[%s347 + $0x50] sm:$0xff]
    %v359 = vld [vmem:[%s347 + $0x58] sm:$0xff]
    %v368 = vunpack.c.l.b16 %v326
    %v369 = vunpack.c.h.b16 %v326
    %v370 = vunpack.c.l.b16 %v327
    %v371 = vunpack.c.h.b16 %v327
    %v372 = vunpack.c.l.b16 %v328
    %v373 = vunpack.c.h.b16 %v328
    %v374 = vunpack.c.l.b16 %v329
    %v375 = vunpack.c.h.b16 %v329
    %v376 = vunpack.c.l.b16 %v330
    %v377 = vunpack.c.h.b16 %v330
    %v378 = vunpack.c.l.b16 %v331
    %v379 = vunpack.c.h.b16 %v331
    %v380 = vunpack.c.l.b16 %v332
    %v381 = vunpack.c.h.b16 %v332
    %v382 = vunpack.c.l.b16 %v346
    %v383 = vunpack.c.h.b16 %v346
    %v384 = vpack.c.b16 %v370, %v368
    %v385 = vpack.c.b16 %v371, %v369
    %v386 = vpack.c.b16 %v374, %v372
    %v387 = vpack.c.b16 %v375, %v373
    %v388 = vpack.c.b16 %v378, %v376
    %v389 = vpack.c.b16 %v379, %v377
    %v390 = vpack.c.b16 %v382, %v380
    %v391 = vpack.c.b16 %v383, %v381
    %vm392 = vsmask.f32 7424
    %v394 = vshrl.u32 %v384, 16
    %v396 = vshll.u32 %v384, 16
    %v398 = vrot.slane %v396, 1
    %v399 = vor.u32 %v394, %v398
    %v401 = vshll.u32 %v386, 16
    %v403 = vrot.slane %v401, 1
    %v404 = vsel %vm392, %v399, %v403
    %v406 = vshrl.u32 %v385, 16
    %v408 = vshll.u32 %v385, 16
    %v410 = vrot.slane %v408, 1
    %v411 = vor.u32 %v406, %v410
    %v413 = vshll.u32 %v387, 16
    %v415 = vrot.slane %v413, 1
    %v416 = vsel %vm392, %v411, %v415
    %v417 = vshrl.u32 %v386, 16
    %v419 = vor.u32 %v417, %v403
    %v421 = vshll.u32 %v388, 16
    %v423 = vrot.slane %v421, 1
    %v424 = vsel %vm392, %v419, %v423
    %v425 = vshrl.u32 %v387, 16
    %v427 = vor.u32 %v425, %v415
    %v429 = vshll.u32 %v389, 16
    %v431 = vrot.slane %v429, 1
    %v432 = vsel %vm392, %v427, %v431
    %v433 = vshrl.u32 %v388, 16
    %v435 = vor.u32 %v433, %v423
    %v437 = vshll.u32 %v390, 16
    %v439 = vrot.slane %v437, 1
    %v440 = vsel %vm392, %v435, %v439
    %v441 = vshrl.u32 %v389, 16
    %v443 = vor.u32 %v441, %v431
    %v445 = vshll.u32 %v391, 16
    %v447 = vrot.slane %v445, 1
    %v448 = vsel %vm392, %v443, %v447
    %v449 = vshrl.u32 %v390, 16
    %v451 = vor.u32 %v449, %v439
    %v452 = vshrl.u32 %v391, 16
    %v454 = vor.u32 %v452, %v447
    %v460 = vsel %vm289, %v416, 0
    %v463 = vsel %vm289, %v432, 0
    %v466 = vsel %vm289, %v448, 0
    %v469 = vsel %vm289, %v454, 0
    %471 = vmatprep.subr.bf16.mxu0 0
    %472 = vmatpush1.bf16.msra.mxu0 %v348
    %473 = vmatprep.subr.bf16.mxu0 0
    %474 = vmatpush1.bf16.msra.mxu0 %v349
    %475 = vmatprep.subr.bf16.mxu0 0
    %476 = vmatpush1.bf16.msra.mxu0 %v350
    %477 = vmatprep.subr.bf16.mxu0 0
    %478 = vmatpush1.bf16.msra.mxu0 %v351
    %479 = vmatprep.subr.bf16.mxu0 0
    %480 = vmatpush1.bf16.msra.mxu0 %v352
    %481 = vmatprep.subr.bf16.mxu0 0
    %482 = vmatpush1.bf16.msra.mxu0 %v353
    %483 = vmatprep.subr.bf16.mxu0 0
    %484 = vmatpush1.bf16.msra.mxu0 %v354
    %485 = vmatprep.subr.bf16.mxu0 0
    %486 = vmatpush1.bf16.msra.mxu0 %v355
    %487 = vmatprep.subr.bf16.mxu0 0
    %488 = vmatpush1.bf16.msra.mxu0 %v356
    %489 = vmatprep.subr.bf16.mxu0 0
    %490 = vmatpush1.bf16.msra.mxu0 %v357
    %491 = vmatprep.subr.bf16.mxu0 0
    %492 = vmatpush1.bf16.msra.mxu0 %v358
    %493 = vmatprep.subr.bf16.mxu0 0
    %494 = vmatpush1.bf16.msra.mxu0 %v359
    %495 = vmatprep.subr.bf16.mxu0 0
    %496 = vmatpush1.bf16.msra.mxu0 0
    %497 = vmatprep.subr.bf16.mxu0 0
    %498 = vmatpush1.bf16.msra.mxu0 0
    %499 = vmatprep.subr.bf16.mxu0 0
    %500 = vmatpush1.bf16.msra.mxu0 0
    %501 = vmatprep.subr.bf16.mxu0 0
    %502 = vmatpush1.bf16.msra.mxu0 0
    %503 = vmatprep.mubr.bf16.mxu0 %v460
    %504 = vmatmul.mubr.bf16.gmra.mrb[0].mxu0 %v404
    %v505 = vpop.f32.mrb[0].mxu0
    %v506 = vadd.f32 0.0, %v505
    %v507 = vpop.f32.mrb[0].mxu0
    %v508 = vpop.f32.mrb[0].mxu0
    %v509 = vadd.f32 0.0, %v508
    %v510 = vpop.f32.mrb[0].mxu0
    %511 = vmatprep.mubr.bf16.mxu0 %v463
    %512 = vmatmul.mubr.bf16.gmra.mrb[0].mxu0 %v424
    %v513 = vpop.f32.mrb[0].mxu0
    %v514 = vadd.f32 0.0, %v513
    %v515 = vpop.f32.mrb[0].mxu0
    %v516 = vpop.f32.mrb[0].mxu0
    %v517 = vadd.f32 0.0, %v516
    %v518 = vpop.f32.mrb[0].mxu0
    %519 = vmatprep.mubr.bf16.mxu0 %v466
    %520 = vmatmul.mubr.bf16.gmra.mrb[0].mxu0 %v440
    %v521 = vpop.f32.mrb[0].mxu0
    %v522 = vadd.f32 0.0, %v521
    %v523 = vpop.f32.mrb[0].mxu0
    %v524 = vpop.f32.mrb[0].mxu0
    %v525 = vadd.f32 0.0, %v524
    %v526 = vpop.f32.mrb[0].mxu0
    %527 = vmatprep.mubr.bf16.mxu0 %v469
    %528 = vmatmul.mubr.bf16.gmra.mrb[0].mxu0 %v451
    %v529 = vpop.f32.mrb[0].mxu0
    %v530 = vadd.f32 0.0, %v529
    %v531 = vpop.f32.mrb[0].mxu0
    %v532 = vpop.f32.mrb[0].mxu0
    %v533 = vadd.f32 0.0, %v532
    %v534 = vpop.f32.mrb[0].mxu0
    %535 = vdwg.mxu0
    %v537 = vunpack.c.l.b16 %v333
    %v538 = vunpack.c.h.b16 %v333
    %v539 = vpack.c.b16 %v537, %v380
    %v540 = vpack.c.b16 %v538, %v381
    %v545 = vsel %vm289, %v385, 0
    %v547 = vsel %vm289, %v387, 0
    %v549 = vsel %vm289, %v389, 0
    %v552 = vsel %vm289, %v540, 0
    %554 = vmatprep.subr.bf16.mxu0 0
    %555 = vmatpush1.bf16.msra.mxu0 %v334
    %556 = vmatprep.subr.bf16.mxu0 0
    %557 = vmatpush1.bf16.msra.mxu0 %v335
    %558 = vmatprep.subr.bf16.mxu0 0
    %559 = vmatpush1.bf16.msra.mxu0 %v336
    %560 = vmatprep.subr.bf16.mxu0 0
    %561 = vmatpush1.bf16.msra.mxu0 %v337
    %562 = vmatprep.subr.bf16.mxu0 0
    %563 = vmatpush1.bf16.msra.mxu0 %v338
    %564 = vmatprep.subr.bf16.mxu0 0
    %565 = vmatpush1.bf16.msra.mxu0 %v339
    %566 = vmatprep.subr.bf16.mxu0 0
    %567 = vmatpush1.bf16.msra.mxu0 %v340
    %568 = vmatprep.subr.bf16.mxu0 0
    %569 = vmatpush1.bf16.msra.mxu0 %v341
    %570 = vmatprep.subr.bf16.mxu0 0
    %571 = vmatpush1.bf16.msra.mxu0 %v342
    %572 = vmatprep.subr.bf16.mxu0 0
    %573 = vmatpush1.bf16.msra.mxu0 %v343
    %574 = vmatprep.subr.bf16.mxu0 0
    %575 = vmatpush1.bf16.msra.mxu0 %v344
    %576 = vmatprep.subr.bf16.mxu0 0
    %577 = vmatpush1.bf16.msra.mxu0 %v345
    %578 = vmatprep.subr.bf16.mxu0 0
    %579 = vmatpush1.bf16.msra.mxu0 0
    %580 = vmatprep.subr.bf16.mxu0 0
    %581 = vmatpush1.bf16.msra.mxu0 0
    %582 = vmatprep.subr.bf16.mxu0 0
    %583 = vmatpush1.bf16.msra.mxu0 0
    %584 = vmatprep.subr.bf16.mxu0 0
    %585 = vmatpush1.bf16.msra.mxu0 0
    %586 = vmatprep.mubr.bf16.mxu0 %v545
    %587 = vmatmul.mubr.bf16.gmra.mrb[0].mxu0 %v384
    %v588 = vpop.f32.mrb[0].mxu0
    %v589 = vadd.f32 %v506, %v588
    %v590 = vpop.f32.mrb[0].mxu0
    %v591 = vpop.f32.mrb[0].mxu0
    %v592 = vadd.f32 %v509, %v591
    %v593 = vpop.f32.mrb[0].mxu0
    %594 = vmatprep.mubr.bf16.mxu0 %v547
    %595 = vmatmul.mubr.bf16.gmra.mrb[0].mxu0 %v386
    %v596 = vpop.f32.mrb[0].mxu0
    %v597 = vadd.f32 %v514, %v596
    %v598 = vpop.f32.mrb[0].mxu0
    %v599 = vpop.f32.mrb[0].mxu0
    %v600 = vadd.f32 %v517, %v599
    %v601 = vpop.f32.mrb[0].mxu0
    %602 = vmatprep.mubr.bf16.mxu0 %v549
    %603 = vmatmul.mubr.bf16.gmra.mrb[0].mxu0 %v388
    %v604 = vpop.f32.mrb[0].mxu0
    %v605 = vadd.f32 %v522, %v604
    %v606 = vpop.f32.mrb[0].mxu0
    %v607 = vpop.f32.mrb[0].mxu0
    %v608 = vadd.f32 %v525, %v607
    %v609 = vpop.f32.mrb[0].mxu0
    %610 = vmatprep.mubr.bf16.mxu0 %v552
    %611 = vmatmul.mubr.bf16.gmra.mrb[0].mxu0 %v539
    %v612 = vpop.f32.mrb[0].mxu0
    %v613 = vadd.f32 %v530, %v612
    %v614 = vpop.f32.mrb[0].mxu0
    %v615 = vpop.f32.mrb[0].mxu0
    %v616 = vadd.f32 %v533, %v615
    %v617 = vpop.f32.mrb[0].mxu0
    %618 = vdwg.mxu0
    %v619 = vld [vmem:[#allocation12] sm:$0xee]
    %s620 = scalar_lea.vmem [#allocation6], 192
    %v621 = vld [vmem:[%s620] sm:$0xff]
    %v622 = vld [vmem:[%s620 + $0x8] sm:$0xff]
    %v623 = vld [vmem:[%s620 + $0x10] sm:$0xff]
    %v624 = vld [vmem:[%s620 + $0x18] sm:$0xff]
    %v625 = vld [vmem:[%s620 + $0x20] sm:$0xff]
    %v626 = vld [vmem:[%s620 + $0x28] sm:$0xff]
    %v627 = vld [vmem:[%s620 + $0x30] sm:$0xff]
    %v628 = vld [vmem:[%s620 + $0x38] sm:$0xff]
    %v629 = vld [vmem:[%s620 + $0x40] sm:$0xff]
    %v630 = vld [vmem:[%s620 + $0x48] sm:$0xff]
    %v631 = vld [vmem:[%s620 + $0x50] sm:$0xff]
    %v632 = vld [vmem:[%s620 + $0x58] sm:$0xff]
    %v634 = vunpack.c.l.b16 %v619
    %v635 = vunpack.c.h.b16 %v619
    %v636 = vpack.c.b16 %v370, %v634
    %v637 = vpack.c.b16 %v371, %v635
    %vm638 = vcmask 1046528
    %v639 = vrot.slane %v636, 1
    %v640 = vrot.slane %v386, 1
    %v641 = vsel %vm638, %v639, %v640
    %v642 = vrot.slane %v637, 1
    %v643 = vrot.slane %v387, 1
    %v644 = vsel %vm638, %v642, %v643
    %v645 = vrot.slane %v388, 1
    %v646 = vsel %vm638, %v640, %v645
    %v647 = vrot.slane %v389, 1
    %v648 = vsel %vm638, %v643, %v647
    %v649 = vrot.slane %v390, 1
    %v650 = vsel %vm638, %v645, %v649
    %v651 = vrot.slane %v391, 1
    %v652 = vsel %vm638, %v647, %v651
    %v658 = vsel %vm289, %v644, 0
    %v661 = vsel %vm289, %v648, 0
    %v664 = vsel %vm289, %v652, 0
    %v667 = vsel %vm289, %v651, 0
    %669 = vmatprep.subr.bf16.mxu0 0
    %670 = vmatpush1.bf16.msra.mxu0 %v621
    %671 = vmatprep.subr.bf16.mxu0 0
    %672 = vmatpush1.bf16.msra.mxu0 %v622
    %673 = vmatprep.subr.bf16.mxu0 0
    %674 = vmatpush1.bf16.msra.mxu0 %v623
    %675 = vmatprep.subr.bf16.mxu0 0
    %676 = vmatpush1.bf16.msra.mxu0 %v624
    %677 = vmatprep.subr.bf16.mxu0 0
    %678 = vmatpush1.bf16.msra.mxu0 %v625
    %679 = vmatprep.subr.bf16.mxu0 0
    %680 = vmatpush1.bf16.msra.mxu0 %v626
    %681 = vmatprep.subr.bf16.mxu0 0
    %682 = vmatpush1.bf16.msra.mxu0 %v627
    %683 = vmatprep.subr.bf16.mxu0 0
    %684 = vmatpush1.bf16.msra.mxu0 %v628
    %685 = vmatprep.subr.bf16.mxu0 0
    %686 = vmatpush1.bf16.msra.mxu0 %v629
    %687 = vmatprep.subr.bf16.mxu0 0
    %688 = vmatpush1.bf16.msra.mxu0 %v630
    %689 = vmatprep.subr.bf16.mxu0 0
    %690 = vmatpush1.bf16.msra.mxu0 %v631
    %691 = vmatprep.subr.bf16.mxu0 0
    %692 = vmatpush1.bf16.msra.mxu0 %v632
    %693 = vmatprep.subr.bf16.mxu0 0
    %694 = vmatpush1.bf16.msra.mxu0 0
    %695 = vmatprep.subr.bf16.mxu0 0
    %696 = vmatpush1.bf16.msra.mxu0 0
    %697 = vmatprep.subr.bf16.mxu0 0
    %698 = vmatpush1.bf16.msra.mxu0 0
    %699 = vmatprep.subr.bf16.mxu0 0
    %700 = vmatpush1.bf16.msra.mxu0 0
    %701 = vmatprep.mubr.bf16.mxu0 %v658
    %702 = vmatmul.mubr.bf16.gmra.mrb[0].mxu0 %v641
    %v703 = vpop.f32.mrb[0].mxu0
    %v704 = vadd.f32 0.0, %v703
    %v705 = vpop.f32.mrb[0].mxu0
    %v706 = vpop.f32.mrb[0].mxu0
    %v707 = vadd.f32 0.0, %v706
    %v708 = vpop.f32.mrb[0].mxu0
    %709 = vmatprep.mubr.bf16.mxu0 %v661
    %710 = vmatmul.mubr.bf16.gmra.mrb[0].mxu0 %v646
    %v711 = vpop.f32.mrb[0].mxu0
    %v712 = vadd.f32 0.0, %v711
    %v713 = vpop.f32.mrb[0].mxu0
    %v714 = vpop.f32.mrb[0].mxu0
    %v715 = vadd.f32 0.0, %v714
    %v716 = vpop.f32.mrb[0].mxu0
    %717 = vmatprep.mubr.bf16.mxu0 %v664
    %718 = vmatmul.mubr.bf16.gmra.mrb[0].mxu0 %v650
    %v719 = vpop.f32.mrb[0].mxu0
    %v720 = vadd.f32 0.0, %v719
    %v721 = vpop.f32.mrb[0].mxu0
    %v722 = vpop.f32.mrb[0].mxu0
    %v723 = vadd.f32 0.0, %v722
    %v724 = vpop.f32.mrb[0].mxu0
    %725 = vmatprep.mubr.bf16.mxu0 %v667
    %726 = vmatmul.mubr.bf16.gmra.mrb[0].mxu0 %v649
    %v727 = vpop.f32.mrb[0].mxu0
    %v728 = vadd.f32 0.0, %v727
    %v729 = vpop.f32.mrb[0].mxu0
    %v730 = vpop.f32.mrb[0].mxu0
    %v731 = vadd.f32 0.0, %v730
    %v732 = vpop.f32.mrb[0].mxu0
    %733 = vdwg.mxu0
    %v734 = vadd.f32 %v589, %v704
    %v735 = vadd.f32 %v592, %v707
    %v736 = vadd.f32 %v597, %v712
    %v737 = vadd.f32 %v600, %v715
    %v738 = vadd.f32 %v605, %v720
    %v739 = vadd.f32 %v608, %v723
    %v740 = vadd.f32 %v613, %v728
    %v741 = vadd.f32 %v616, %v731
    %v742 = vld [vmem:[#allocation12] sm:$0x88]
    %v743 = vld [vmem:[#allocation12 + $0x8] sm:$0xff]
    %v744 = vld [vmem:[#allocation12 + $0x10] sm:$0xff]
    %v745 = vld [vmem:[#allocation12 + $0x18] sm:$0xff]
    %v746 = vld [vmem:[#allocation12 + $0x20] sm:$0xff]
    %v747 = vld [vmem:[#allocation12 + $0x28] sm:$0xff]
    %v748 = vld [vmem:[#allocation12 + $0x30] sm:$0xff]
    %v749 = vld [vmem:[#allocation12 + $0x38] sm:$0xff]
    %v750 = vld [vmem:[#allocation12 + $0x40] sm:$0x11]
    %s751 = scalar_lea.vmem [#allocation6], 288
    %v752 = vld [vmem:[%s751] sm:$0xff]
    %v753 = vld [vmem:[%s751 + $0x8] sm:$0xff]
    %v754 = vld [vmem:[%s751 + $0x10] sm:$0xff]
    %v755 = vld [vmem:[%s751 + $0x18] sm:$0xff]
    %v756 = vld [vmem:[%s751 + $0x20] sm:$0xff]
    %v757 = vld [vmem:[%s751 + $0x28] sm:$0xff]
    %v758 = vld [vmem:[%s751 + $0x30] sm:$0xff]
    %v759 = vld [vmem:[%s751 + $0x38] sm:$0xff]
    %v760 = vld [vmem:[%s751 + $0x40] sm:$0xff]
    %v761 = vld [vmem:[%s751 + $0x48] sm:$0xff]
    %v762 = vld [vmem:[%s751 + $0x50] sm:$0xff]
    %v763 = vld [vmem:[%s751 + $0x58] sm:$0xff]
    %v773 = vunpack.c.l.b16 %v742
    %v774 = vunpack.c.h.b16 %v742
    %v775 = vunpack.c.l.b16 %v743
    %v776 = vunpack.c.h.b16 %v743
    %v777 = vunpack.c.l.b16 %v744
    %v778 = vunpack.c.h.b16 %v744
    %v779 = vunpack.c.l.b16 %v745
    %v780 = vunpack.c.h.b16 %v745
    %v781 = vunpack.c.l.b16 %v746
    %v782 = vunpack.c.h.b16 %v746
    %v783 = vunpack.c.l.b16 %v747
    %v784 = vunpack.c.h.b16 %v747
    %v785 = vunpack.c.l.b16 %v748
    %v786 = vunpack.c.h.b16 %v748
    %v787 = vunpack.c.l.b16 %v749
    %v788 = vunpack.c.h.b16 %v749
    %v789 = vunpack.c.l.b16 %v750
    %v790 = vunpack.c.h.b16 %v750
    %v791 = vpack.c.b16 %v775, %v773
    %v792 = vpack.c.b16 %v776, %v774
    %v793 = vpack.c.b16 %v779, %v777
    %v794 = vpack.c.b16 %v780, %v778
    %v795 = vpack.c.b16 %v783, %v781
    %v796 = vpack.c.b16 %v784, %v782
    %v797 = vpack.c.b16 %v787, %v785
    %v798 = vpack.c.b16 %v788, %v786
    %v799 = vpack.c.b16 %v789, %v789
    %v800 = vpack.c.b16 %v790, %v790
    %vm801 = vcmask 1044480
    %v802 = vrot.slane %v791, 3
    %v803 = vrot.slane %v793, 3
    %v804 = vsel %vm801, %v802, %v803
    %v805 = vrot.slane %v792, 3
    %v806 = vrot.slane %v794, 3
    %v807 = vsel %vm801, %v805, %v806
    %v808 = vrot.slane %v795, 3
    %v809 = vsel %vm801, %v803, %v808
    %v810 = vrot.slane %v796, 3
    %v811 = vsel %vm801, %v806, %v810
    %v812 = vrot.slane %v797, 3
    %v813 = vsel %vm801, %v808, %v812
    %v814 = vrot.slane %v798, 3
    %v815 = vsel %vm801, %v810, %v814
    %v816 = vrot.slane %v799, 3
    %v817 = vsel %vm801, %v812, %v816
    %v818 = vrot.slane %v800, 3
    %v819 = vsel %vm801, %v814, %v818
    %v825 = vsel %vm289, %v807, 0
    %v828 = vsel %vm289, %v811, 0
    %v831 = vsel %vm289, %v815, 0
    %v834 = vsel %vm289, %v819, 0
    %836 = vmatprep.subr.bf16.mxu0 0
    %837 = vmatpush1.bf16.msra.mxu0 %v752
    %838 = vmatprep.subr.bf16.mxu0 0
    %839 = vmatpush1.bf16.msra.mxu0 %v753
    %840 = vmatprep.subr.bf16.mxu0 0
    %841 = vmatpush1.bf16.msra.mxu0 %v754
    %842 = vmatprep.subr.bf16.mxu0 0
    %843 = vmatpush1.bf16.msra.mxu0 %v755
    %844 = vmatprep.subr.bf16.mxu0 0
    %845 = vmatpush1.bf16.msra.mxu0 %v756
    %846 = vmatprep.subr.bf16.mxu0 0
    %847 = vmatpush1.bf16.msra.mxu0 %v757
    %848 = vmatprep.subr.bf16.mxu0 0
    %849 = vmatpush1.bf16.msra.mxu0 %v758
    %850 = vmatprep.subr.bf16.mxu0 0
    %851 = vmatpush1.bf16.msra.mxu0 %v759
    %852 = vmatprep.subr.bf16.mxu0 0
    %853 = vmatpush1.bf16.msra.mxu0 %v760
    %854 = vmatprep.subr.bf16.mxu0 0
    %855 = vmatpush1.bf16.msra.mxu0 %v761
    %856 = vmatprep.subr.bf16.mxu0 0
    %857 = vmatpush1.bf16.msra.mxu0 %v762
    %858 = vmatprep.subr.bf16.mxu0 0
    %859 = vmatpush1.bf16.msra.mxu0 %v763
    %860 = vmatprep.subr.bf16.mxu0 0
    %861 = vmatpush1.bf16.msra.mxu0 0
    %862 = vmatprep.subr.bf16.mxu0 0
    %863 = vmatpush1.bf16.msra.mxu0 0
    %864 = vmatprep.subr.bf16.mxu0 0
    %865 = vmatpush1.bf16.msra.mxu0 0
    %866 = vmatprep.subr.bf16.mxu0 0
    %867 = vmatpush1.bf16.msra.mxu0 0
    %868 = vmatprep.mubr.bf16.mxu0 %v825
    %869 = vmatmul.mubr.bf16.gmra.mrb[0].mxu0 %v804
    %v870 = vpop.f32.mrb[0].mxu0
    %v871 = vadd.f32 0.0, %v870
    %v872 = vpop.f32.mrb[0].mxu0
    %v873 = vpop.f32.mrb[0].mxu0
    %v874 = vadd.f32 0.0, %v873
    %v875 = vpop.f32.mrb[0].mxu0
    %876 = vmatprep.mubr.bf16.mxu0 %v828
    %877 = vmatmul.mubr.bf16.gmra.mrb[0].mxu0 %v809
    %v878 = vpop.f32.mrb[0].mxu0
    %v879 = vadd.f32 0.0, %v878
    %v880 = vpop.f32.mrb[0].mxu0
    %v881 = vpop.f32.mrb[0].mxu0
    %v882 = vadd.f32 0.0, %v881
    %v883 = vpop.f32.mrb[0].mxu0
    %884 = vmatprep.mubr.bf16.mxu0 %v831
    %885 = vmatmul.mubr.bf16.gmra.mrb[0].mxu0 %v813
    %v886 = vpop.f32.mrb[0].mxu0
    %v887 = vadd.f32 0.0, %v886
    %v888 = vpop.f32.mrb[0].mxu0
    %v889 = vpop.f32.mrb[0].mxu0
    %v890 = vadd.f32 0.0, %v889
    %v891 = vpop.f32.mrb[0].mxu0
    %892 = vmatprep.mubr.bf16.mxu0 %v834
    %893 = vmatmul.mubr.bf16.gmra.mrb[0].mxu0 %v817
    %v894 = vpop.f32.mrb[0].mxu0
    %v895 = vadd.f32 0.0, %v894
    %v896 = vpop.f32.mrb[0].mxu0
    %v897 = vpop.f32.mrb[0].mxu0
    %v898 = vadd.f32 0.0, %v897
    %v899 = vpop.f32.mrb[0].mxu0
    %900 = vdwg.mxu0
    %v901 = vadd.f32 %v734, %v871
    %v902 = vadd.f32 %v735, %v874
    %v903 = vadd.f32 %v736, %v879
    %v904 = vadd.f32 %v737, %v882
    %v905 = vadd.f32 %v738, %v887
    %v906 = vadd.f32 %v739, %v890
    %v907 = vadd.f32 %v740, %v895
    %v908 = vadd.f32 %v741, %v898
    %v909 = vld [vmem:[#allocation12 + $0x40] sm:$0x33]
    %s910 = scalar_lea.vmem [#allocation6], 384
    %v911 = vld [vmem:[%s910] sm:$0xff]
    %v912 = vld [vmem:[%s910 + $0x8] sm:$0xff]
    %v913 = vld [vmem:[%s910 + $0x10] sm:$0xff]
    %v914 = vld [vmem:[%s910 + $0x18] sm:$0xff]
    %v915 = vld [vmem:[%s910 + $0x20] sm:$0xff]
    %v916 = vld [vmem:[%s910 + $0x28] sm:$0xff]
    %v917 = vld [vmem:[%s910 + $0x30] sm:$0xff]
    %v918 = vld [vmem:[%s910 + $0x38] sm:$0xff]
    %v919 = vld [vmem:[%s910 + $0x40] sm:$0xff]
    %v920 = vld [vmem:[%s910 + $0x48] sm:$0xff]
    %v921 = vld [vmem:[%s910 + $0x50] sm:$0xff]
    %v922 = vld [vmem:[%s910 + $0x58] sm:$0xff]
    %v924 = vunpack.c.l.b16 %v909
    %v925 = vunpack.c.h.b16 %v909
    %v926 = vpack.c.b16 %v924, %v924
    %v927 = vpack.c.b16 %v925, %v925
    %vm928 = vsmask.f32 4352
    %v930 = vshrl.u32 %v791, 16
    %v932 = vrot.slane %v930, 3
    %v933 = vshll.u32 %v791, 16
    %v935 = vrot.slane %v933, 4
    %v936 = vor.u32 %v932, %v935
    %v938 = vshrl.u32 %v793, 16
    %v940 = vrot.slane %v938, 3
    %v941 = vshll.u32 %v793, 16
    %v943 = vrot.slane %v941, 4
    %v944 = vor.u32 %v940, %v943
    %v945 = vsel %vm928, %v936, %v944
    %v947 = vshrl.u32 %v792, 16
    %v949 = vrot.slane %v947, 3
    %v950 = vshll.u32 %v792, 16
    %v952 = vrot.slane %v950, 4
    %v953 = vor.u32 %v949, %v952
    %v955 = vshrl.u32 %v794, 16
    %v957 = vrot.slane %v955, 3
    %v958 = vshll.u32 %v794, 16
    %v960 = vrot.slane %v958, 4
    %v961 = vor.u32 %v957, %v960
    %v962 = vsel %vm928, %v953, %v961
    %v964 = vshrl.u32 %v795, 16
    %v966 = vrot.slane %v964, 3
    %v967 = vshll.u32 %v795, 16
    %v969 = vrot.slane %v967, 4
    %v970 = vor.u32 %v966, %v969
    %v971 = vsel %vm928, %v944, %v970
    %v973 = vshrl.u32 %v796, 16
    %v975 = vrot.slane %v973, 3
    %v976 = vshll.u32 %v796, 16
    %v978 = vrot.slane %v976, 4
    %v979 = vor.u32 %v975, %v978
    %v980 = vsel %vm928, %v961, %v979
    %v982 = vshrl.u32 %v797, 16
    %v984 = vrot.slane %v982, 3
    %v985 = vshll.u32 %v797, 16
    %v987 = vrot.slane %v985, 4
    %v988 = vor.u32 %v984, %v987
    %v989 = vsel %vm928, %v970, %v988
    %v991 = vshrl.u32 %v798, 16
    %v993 = vrot.slane %v991, 3
    %v994 = vshll.u32 %v798, 16
    %v996 = vrot.slane %v994, 4
    %v997 = vor.u32 %v993, %v996
    %v998 = vsel %vm928, %v979, %v997
    %v1000 = vshrl.u32 %v926, 16
    %v1002 = vrot.slane %v1000, 3
    %v1003 = vshll.u32 %v926, 16
    %v1005 = vrot.slane %v1003, 4
    %v1006 = vor.u32 %v1002, %v1005
    %v1007 = vsel %vm928, %v988, %v1006
    %v1009 = vshrl.u32 %v927, 16
    %v1011 = vrot.slane %v1009, 3
    %v1012 = vshll.u32 %v927, 16
    %v1014 = vrot.slane %v1012, 4
    %v1015 = vor.u32 %v1011, %v1014
    %v1016 = vsel %vm928, %v997, %v1015
    %v1022 = vsel %vm289, %v962, 0
    %v1025 = vsel %vm289, %v980, 0
    %v1028 = vsel %vm289, %v998, 0
    %v1031 = vsel %vm289, %v1016, 0
    %1033 = vmatprep.subr.bf16.mxu0 0
    %1034 = vmatpush1.bf16.msra.mxu0 %v911
    %1035 = vmatprep.subr.bf16.mxu0 0
    %1036 = vmatpush1.bf16.msra.mxu0 %v912
    %1037 = vmatprep.subr.bf16.mxu0 0
    %1038 = vmatpush1.bf16.msra.mxu0 %v913
    %1039 = vmatprep.subr.bf16.mxu0 0
    %1040 = vmatpush1.bf16.msra.mxu0 %v914
    %1041 = vmatprep.subr.bf16.mxu0 0
    %1042 = vmatpush1.bf16.msra.mxu0 %v915
    %1043 = vmatprep.subr.bf16.mxu0 0
    %1044 = vmatpush1.bf16.msra.mxu0 %v916
    %1045 = vmatprep.subr.bf16.mxu0 0
    %1046 = vmatpush1.bf16.msra.mxu0 %v917
    %1047 = vmatprep.subr.bf16.mxu0 0
    %1048 = vmatpush1.bf16.msra.mxu0 %v918
    %1049 = vmatprep.subr.bf16.mxu0 0
    %1050 = vmatpush1.bf16.msra.mxu0 %v919
    %1051 = vmatprep.subr.bf16.mxu0 0
    %1052 = vmatpush1.bf16.msra.mxu0 %v920
    %1053 = vmatprep.subr.bf16.mxu0 0
    %1054 = vmatpush1.bf16.msra.mxu0 %v921
    %1055 = vmatprep.subr.bf16.mxu0 0
    %1056 = vmatpush1.bf16.msra.mxu0 %v922
    %1057 = vmatprep.subr.bf16.mxu0 0
    %1058 = vmatpush1.bf16.msra.mxu0 0
    %1059 = vmatprep.subr.bf16.mxu0 0
    %1060 = vmatpush1.bf16.msra.mxu0 0
    %1061 = vmatprep.subr.bf16.mxu0 0
    %1062 = vmatpush1.bf16.msra.mxu0 0
    %1063 = vmatprep.subr.bf16.mxu0 0
    %1064 = vmatpush1.bf16.msra.mxu0 0
    %1065 = vmatprep.mubr.bf16.mxu0 %v1022
    %1066 = vmatmul.mubr.bf16.gmra.mrb[0].mxu0 %v945
    %v1067 = vpop.f32.mrb[0].mxu0
    %v1068 = vadd.f32 0.0, %v1067
    %v1069 = vpop.f32.mrb[0].mxu0
    %v1070 = vpop.f32.mrb[0].mxu0
    %v1071 = vadd.f32 0.0, %v1070
    %v1072 = vpop.f32.mrb[0].mxu0
    %1073 = vmatprep.mubr.bf16.mxu0 %v1025
    %1074 = vmatmul.mubr.bf16.gmra.mrb[0].mxu0 %v971
    %v1075 = vpop.f32.mrb[0].mxu0
    %v1076 = vadd.f32 0.0, %v1075
    %v1077 = vpop.f32.mrb[0].mxu0
    %v1078 = vpop.f32.mrb[0].mxu0
    %v1079 = vadd.f32 0.0, %v1078
    %v1080 = vpop.f32.mrb[0].mxu0
    %1081 = vmatprep.mubr.bf16.mxu0 %v1028
    %1082 = vmatmul.mubr.bf16.gmra.mrb[0].mxu0 %v989
    %v1083 = vpop.f32.mrb[0].mxu0
    %v1084 = vadd.f32 0.0, %v1083
    %v1085 = vpop.f32.mrb[0].mxu0
    %v1086 = vpop.f32.mrb[0].mxu0
    %v1087 = vadd.f32 0.0, %v1086
    %v1088 = vpop.f32.mrb[0].mxu0
    %1089 = vmatprep.mubr.bf16.mxu0 %v1031
    %1090 = vmatmul.mubr.bf16.gmra.mrb[0].mxu0 %v1007
    %v1091 = vpop.f32.mrb[0].mxu0
    %v1092 = vadd.f32 0.0, %v1091
    %v1093 = vpop.f32.mrb[0].mxu0
    %v1094 = vpop.f32.mrb[0].mxu0
    %v1095 = vadd.f32 0.0, %v1094
    %v1096 = vpop.f32.mrb[0].mxu0
    %1097 = vdwg.mxu0
    %v1098 = vadd.f32 %v901, %v1068
    %v1099 = vadd.f32 %v902, %v1071
    %v1100 = vadd.f32 %v903, %v1076
    %v1101 = vadd.f32 %v904, %v1079
    %v1102 = vadd.f32 %v905, %v1084
    %v1103 = vadd.f32 %v906, %v1087
    %v1104 = vadd.f32 %v907, %v1092
    %v1105 = vadd.f32 %v908, %v1095
    %s1106 = scalar_lea.vmem [#allocation6], 480
    %v1107 = vld [vmem:[%s1106] sm:$0xff]
    %v1108 = vld [vmem:[%s1106 + $0x8] sm:$0xff]
    %v1109 = vld [vmem:[%s1106 + $0x10] sm:$0xff]
    %v1110 = vld [vmem:[%s1106 + $0x18] sm:$0xff]
    %v1111 = vld [vmem:[%s1106 + $0x20] sm:$0xff]
    %v1112 = vld [vmem:[%s1106 + $0x28] sm:$0xff]
    %v1113 = vld [vmem:[%s1106 + $0x30] sm:$0xff]
    %v1114 = vld [vmem:[%s1106 + $0x38] sm:$0xff]
    %v1115 = vld [vmem:[%s1106 + $0x40] sm:$0xff]
    %v1116 = vld [vmem:[%s1106 + $0x48] sm:$0xff]
    %v1117 = vld [vmem:[%s1106 + $0x50] sm:$0xff]
    %v1118 = vld [vmem:[%s1106 + $0x58] sm:$0xff]
    %v1119 = vpack.c.b16 %v777, %v775
    %v1120 = vpack.c.b16 %v778, %v776
    %v1121 = vpack.c.b16 %v781, %v779
    %v1122 = vpack.c.b16 %v782, %v780
    %v1123 = vpack.c.b16 %v785, %v783
    %v1124 = vpack.c.b16 %v786, %v784
    %v1125 = vpack.c.b16 %v924, %v787
    %v1126 = vpack.c.b16 %v925, %v788
    %v1132 = vsel %vm289, %v1120, 0
    %v1135 = vsel %vm289, %v1122, 0
    %v1138 = vsel %vm289, %v1124, 0
    %v1141 = vsel %vm289, %v1126, 0
    %1143 = vmatprep.subr.bf16.mxu0 0
    %1144 = vmatpush1.bf16.msra.mxu0 %v1107
    %1145 = vmatprep.subr.bf16.mxu0 0
    %1146 = vmatpush1.bf16.msra.mxu0 %v1108
    %1147 = vmatprep.subr.bf16.mxu0 0
    %1148 = vmatpush1.bf16.msra.mxu0 %v1109
    %1149 = vmatprep.subr.bf16.mxu0 0
    %1150 = vmatpush1.bf16.msra.mxu0 %v1110
    %1151 = vmatprep.subr.bf16.mxu0 0
    %1152 = vmatpush1.bf16.msra.mxu0 %v1111
    %1153 = vmatprep.subr.bf16.mxu0 0
    %1154 = vmatpush1.bf16.msra.mxu0 %v1112
    %1155 = vmatprep.subr.bf16.mxu0 0
    %1156 = vmatpush1.bf16.msra.mxu0 %v1113
    %1157 = vmatprep.subr.bf16.mxu0 0
    %1158 = vmatpush1.bf16.msra.mxu0 %v1114
    %1159 = vmatprep.subr.bf16.mxu0 0
    %1160 = vmatpush1.bf16.msra.mxu0 %v1115
    %1161 = vmatprep.subr.bf16.mxu0 0
    %1162 = vmatpush1.bf16.msra.mxu0 %v1116
    %1163 = vmatprep.subr.bf16.mxu0 0
    %1164 = vmatpush1.bf16.msra.mxu0 %v1117
    %1165 = vmatprep.subr.bf16.mxu0 0
    %1166 = vmatpush1.bf16.msra.mxu0 %v1118
    %1167 = vmatprep.subr.bf16.mxu0 0
    %1168 = vmatpush1.bf16.msra.mxu0 0
    %1169 = vmatprep.subr.bf16.mxu0 0
    %1170 = vmatpush1.bf16.msra.mxu0 0
    %1171 = vmatprep.subr.bf16.mxu0 0
    %1172 = vmatpush1.bf16.msra.mxu0 0
    %1173 = vmatprep.subr.bf16.mxu0 0
    %1174 = vmatpush1.bf16.msra.mxu0 0
    %1175 = vmatprep.mubr.bf16.mxu0 %v1132
    %1176 = vmatmul.mubr.bf16.gmra.mrb[0].mxu0 %v1119
    %v1177 = vpop.f32.mrb[0].mxu0
    %v1178 = vadd.f32 0.0, %v1177
    %v1179 = vpop.f32.mrb[0].mxu0
    %v1180 = vpop.f32.mrb[0].mxu0
    %v1181 = vadd.f32 0.0, %v1180
    %v1182 = vpop.f32.mrb[0].mxu0
    %1183 = vmatprep.mubr.bf16.mxu0 %v1135
    %1184 = vmatmul.mubr.bf16.gmra.mrb[0].mxu0 %v1121
    %v1185 = vpop.f32.mrb[0].mxu0
    %v1186 = vadd.f32 0.0, %v1185
    %v1187 = vpop.f32.mrb[0].mxu0
    %v1188 = vpop.f32.mrb[0].mxu0
    %v1189 = vadd.f32 0.0, %v1188
    %v1190 = vpop.f32.mrb[0].mxu0
    %1191 = vmatprep.mubr.bf16.mxu0 %v1138
    %1192 = vmatmul.mubr.bf16.gmra.mrb[0].mxu0 %v1123
    %v1193 = vpop.f32.mrb[0].mxu0
    %v1194 = vadd.f32 0.0, %v1193
    %v1195 = vpop.f32.mrb[0].mxu0
    %v1196 = vpop.f32.mrb[0].mxu0
    %v1197 = vadd.f32 0.0, %v1196
    %v1198 = vpop.f32.mrb[0].mxu0
    %1199 = vmatprep.mubr.bf16.mxu0 %v1141
    %1200 = vmatmul.mubr.bf16.gmra.mrb[0].mxu0 %v1125
    %v1201 = vpop.f32.mrb[0].mxu0
    %v1202 = vadd.f32 0.0, %v1201
    %v1203 = vpop.f32.mrb[0].mxu0
    %v1204 = vpop.f32.mrb[0].mxu0
    %v1205 = vadd.f32 0.0, %v1204
    %v1206 = vpop.f32.mrb[0].mxu0
    %1207 = vdwg.mxu0
    %v1208 = vadd.f32 %v1098, %v1178
    %v1209 = vadd.f32 %v1099, %v1181
    %v1210 = vadd.f32 %v1100, %v1186
    %v1211 = vadd.f32 %v1101, %v1189
    %v1212 = vadd.f32 %v1102, %v1194
    %v1213 = vadd.f32 %v1103, %v1197
    %v1214 = vadd.f32 %v1104, %v1202
    %v1215 = vadd.f32 %v1105, %v1205
    %v1216 = vld [vmem:[#allocation12 + $0x8] sm:$0xcc]
    %v1217 = vld [vmem:[#allocation12 + $0x40] sm:$0xff]
    %s1218 = scalar_lea.vmem [#allocation6], 576
    %v1219 = vld [vmem:[%s1218] sm:$0xff]
    %v1220 = vld [vmem:[%s1218 + $0x8] sm:$0xff]
    %v1221 = vld [vmem:[%s1218 + $0x10] sm:$0xff]
    %v1222 = vld [vmem:[%s1218 + $0x18] sm:$0xff]
    %v1223 = vld [vmem:[%s1218 + $0x20] sm:$0xff]
    %v1224 = vld [vmem:[%s1218 + $0x28] sm:$0xff]
    %v1225 = vld [vmem:[%s1218 + $0x30] sm:$0xff]
    %v1226 = vld [vmem:[%s1218 + $0x38] sm:$0xff]
    %v1227 = vld [vmem:[%s1218 + $0x40] sm:$0xff]
    %v1228 = vld [vmem:[%s1218 + $0x48] sm:$0xff]
    %v1229 = vld [vmem:[%s1218 + $0x50] sm:$0xff]
    %v1230 = vld [vmem:[%s1218 + $0x58] sm:$0xff]
    %v1233 = vunpack.c.l.b16 %v1216
    %v1234 = vunpack.c.h.b16 %v1216
    %v1235 = vunpack.c.l.b16 %v1217
    %v1236 = vunpack.c.h.b16 %v1217
    %v1237 = vpack.c.b16 %v777, %v1233
    %v1238 = vpack.c.b16 %v778, %v1234
    %v1239 = vpack.c.b16 %v1235, %v787
    %v1240 = vpack.c.b16 %v1236, %v788
    %vm1241 = vcmask 1045504
    %v1242 = vrot.slane %v1237, 2
    %v1243 = vrot.slane %v1121, 2
    %v1244 = vsel %vm1241, %v1242, %v1243
    %v1245 = vrot.slane %v1238, 2
    %v1246 = vrot.slane %v1122, 2
    %v1247 = vsel %vm1241, %v1245, %v1246
    %v1248 = vrot.slane %v1123, 2
    %v1249 = vsel %vm1241, %v1243, %v1248
    %v1250 = vrot.slane %v1124, 2
    %v1251 = vsel %vm1241, %v1246, %v1250
    %v1252 = vrot.slane %v1239, 2
    %v1253 = vsel %vm1241, %v1248, %v1252
    %v1254 = vrot.slane %v1240, 2
    %v1255 = vsel %vm1241, %v1250, %v1254
    %v1261 = vsel %vm289, %v1247, 0
    %v1264 = vsel %vm289, %v1251, 0
    %v1267 = vsel %vm289, %v1255, 0
    %v1270 = vsel %vm289, %v1254, 0
    %1272 = vmatprep.subr.bf16.mxu0 0
    %1273 = vmatpush1.bf16.msra.mxu0 %v1219
    %1274 = vmatprep.subr.bf16.mxu0 0
    %1275 = vmatpush1.bf16.msra.mxu0 %v1220
    %1276 = vmatprep.subr.bf16.mxu0 0
    %1277 = vmatpush1.bf16.msra.mxu0 %v1221
    %1278 = vmatprep.subr.bf16.mxu0 0
    %1279 = vmatpush1.bf16.msra.mxu0 %v1222
    %1280 = vmatprep.subr.bf16.mxu0 0
    %1281 = vmatpush1.bf16.msra.mxu0 %v1223
    %1282 = vmatprep.subr.bf16.mxu0 0
    %1283 = vmatpush1.bf16.msra.mxu0 %v1224
    %1284 = vmatprep.subr.bf16.mxu0 0
    %1285 = vmatpush1.bf16.msra.mxu0 %v1225
    %1286 = vmatprep.subr.bf16.mxu0 0
    %1287 = vmatpush1.bf16.msra.mxu0 %v1226
    %1288 = vmatprep.subr.bf16.mxu0 0
    %1289 = vmatpush1.bf16.msra.mxu0 %v1227
    %1290 = vmatprep.subr.bf16.mxu0 0
    %1291 = vmatpush1.bf16.msra.mxu0 %v1228
    %1292 = vmatprep.subr.bf16.mxu0 0
    %1293 = vmatpush1.bf16.msra.mxu0 %v1229
    %1294 = vmatprep.subr.bf16.mxu0 0
    %1295 = vmatpush1.bf16.msra.mxu0 %v1230
    %1296 = vmatprep.subr.bf16.mxu0 0
    %1297 = vmatpush1.bf16.msra.mxu0 0
    %1298 = vmatprep.subr.bf16.mxu0 0
    %1299 = vmatpush1.bf16.msra.mxu0 0
    %1300 = vmatprep.subr.bf16.mxu0 0
    %1301 = vmatpush1.bf16.msra.mxu0 0
    %1302 = vmatprep.subr.bf16.mxu0 0
    %1303 = vmatpush1.bf16.msra.mxu0 0
    %1304 = vmatprep.mubr.bf16.mxu0 %v1261
    %1305 = vmatmul.mubr.bf16.gmra.mrb[0].mxu0 %v1244
    %v1306 = vpop.f32.mrb[0].mxu0
    %v1307 = vadd.f32 0.0, %v1306
    %v1308 = vpop.f32.mrb[0].mxu0
    %v1309 = vpop.f32.mrb[0].mxu0
    %v1310 = vadd.f32 0.0, %v1309
    %v1311 = vpop.f32.mrb[0].mxu0
    %1312 = vmatprep.mubr.bf16.mxu0 %v1264
    %1313 = vmatmul.mubr.bf16.gmra.mrb[0].mxu0 %v1249
    %v1314 = vpop.f32.mrb[0].mxu0
    %v1315 = vadd.f32 0.0, %v1314
    %v1316 = vpop.f32.mrb[0].mxu0
    %v1317 = vpop.f32.mrb[0].mxu0
    %v1318 = vadd.f32 0.0, %v1317
    %v1319 = vpop.f32.mrb[0].mxu0
    %1320 = vmatprep.mubr.bf16.mxu0 %v1267
    %1321 = vmatmul.mubr.bf16.gmra.mrb[0].mxu0 %v1253
    %v1322 = vpop.f32.mrb[0].mxu0
    %v1323 = vadd.f32 0.0, %v1322
    %v1324 = vpop.f32.mrb[0].mxu0
    %v1325 = vpop.f32.mrb[0].mxu0
    %v1326 = vadd.f32 0.0, %v1325
    %v1327 = vpop.f32.mrb[0].mxu0
    %1328 = vmatprep.mubr.bf16.mxu0 %v1270
    %1329 = vmatmul.mubr.bf16.gmra.mrb[0].mxu0 %v1252
    %v1330 = vpop.f32.mrb[0].mxu0
    %v1331 = vadd.f32 0.0, %v1330
    %v1332 = vpop.f32.mrb[0].mxu0
    %v1333 = vpop.f32.mrb[0].mxu0
    %v1334 = vadd.f32 0.0, %v1333
    %v1335 = vpop.f32.mrb[0].mxu0
    %1336 = vdwg.mxu0
    %v1337 = vadd.f32 %v1208, %v1307
    %v1338 = vadd.f32 %v1209, %v1310
    %v1339 = vadd.f32 %v1210, %v1315
    %v1340 = vadd.f32 %v1211, %v1318
    %v1341 = vadd.f32 %v1212, %v1323
    %v1342 = vadd.f32 %v1213, %v1326
    %v1343 = vadd.f32 %v1214, %v1331
    %v1344 = vadd.f32 %v1215, %v1334
    %v1345 = vld [vmem:[#allocation12 + $0x8] sm:$0xcc]
    %v1346 = vld [vmem:[#allocation12 + $0x10] sm:$0xff]
    %v1347 = vld [vmem:[#allocation12 + $0x18] sm:$0xff]
    %v1348 = vld [vmem:[#allocation12 + $0x20] sm:$0xff]
    %v1349 = vld [vmem:[#allocation12 + $0x28] sm:$0xff]
    %v1350 = vld [vmem:[#allocation12 + $0x30] sm:$0xff]
    %v1351 = vld [vmem:[#allocation12 + $0x38] sm:$0xff]
    %v1352 = vld [vmem:[#allocation12 + $0x40] sm:$0xff]
    %v1353 = vld [vmem:[#allocation12 + $0x48] sm:$0x11]
    %s1354 = scalar_lea.vmem [#allocation6], 672
    %v1355 = vld [vmem:[%s1354] sm:$0xff]
    %v1356 = vld [vmem:[%s1354 + $0x8] sm:$0xff]
    %v1357 = vld [vmem:[%s1354 + $0x10] sm:$0xff]
    %v1358 = vld [vmem:[%s1354 + $0x18] sm:$0xff]
    %v1359 = vld [vmem:[%s1354 + $0x20] sm:$0xff]
    %v1360 = vld [vmem:[%s1354 + $0x28] sm:$0xff]
    %v1361 = vld [vmem:[%s1354 + $0x30] sm:$0xff]
    %v1362 = vld [vmem:[%s1354 + $0x38] sm:$0xff]
    %v1363 = vld [vmem:[%s1354 + $0x40] sm:$0xff]
    %v1364 = vld [vmem:[%s1354 + $0x48] sm:$0xff]
    %v1365 = vld [vmem:[%s1354 + $0x50] sm:$0xff]
    %v1366 = vld [vmem:[%s1354 + $0x58] sm:$0xff]
    %v1376 = vunpack.c.l.b16 %v1345
    %v1377 = vunpack.c.h.b16 %v1345
    %v1378 = vunpack.c.l.b16 %v1346
    %v1379 = vunpack.c.h.b16 %v1346
    %v1380 = vunpack.c.l.b16 %v1347
    %v1381 = vunpack.c.h.b16 %v1347
    %v1382 = vunpack.c.l.b16 %v1348
    %v1383 = vunpack.c.h.b16 %v1348
    %v1384 = vunpack.c.l.b16 %v1349
    %v1385 = vunpack.c.h.b16 %v1349
    %v1386 = vunpack.c.l.b16 %v1350
    %v1387 = vunpack.c.h.b16 %v1350
    %v1388 = vunpack.c.l.b16 %v1351
    %v1389 = vunpack.c.h.b16 %v1351
    %v1390 = vunpack.c.l.b16 %v1352
    %v1391 = vunpack.c.h.b16 %v1352
    %v1392 = vunpack.c.l.b16 %v1353
    %v1393 = vunpack.c.h.b16 %v1353
    %v1394 = vpack.c.b16 %v1378, %v1376
    %v1395 = vpack.c.b16 %v1379, %v1377
    %v1396 = vpack.c.b16 %v1382, %v1380
    %v1397 = vpack.c.b16 %v1383, %v1381
    %v1398 = vpack.c.b16 %v1386, %v1384
    %v1399 = vpack.c.b16 %v1387, %v1385
    %v1400 = vpack.c.b16 %v1390, %v1388
    %v1401 = vpack.c.b16 %v1391, %v1389
    %v1402 = vpack.c.b16 %v1392, %v1392
    %v1403 = vpack.c.b16 %v1393, %v1393
    %vm1404 = vsmask.f32 5376
    %v1406 = vshrl.u32 %v1394, 16
    %v1408 = vrot.slane %v1406, 2
    %v1409 = vshll.u32 %v1394, 16
    %v1411 = vrot.slane %v1409, 3
    %v1412 = vor.u32 %v1408, %v1411
    %v1414 = vshrl.u32 %v1396, 16
    %v1416 = vrot.slane %v1414, 2
    %v1417 = vshll.u32 %v1396, 16
    %v1419 = vrot.slane %v1417, 3
    %v1420 = vor.u32 %v1416, %v1419
    %v1421 = vsel %vm1404, %v1412, %v1420
    %v1423 = vshrl.u32 %v1395, 16
    %v1425 = vrot.slane %v1423, 2
    %v1426 = vshll.u32 %v1395, 16
    %v1428 = vrot.slane %v1426, 3
    %v1429 = vor.u32 %v1425, %v1428
    %v1431 = vshrl.u32 %v1397, 16
    %v1433 = vrot.slane %v1431, 2
    %v1434 = vshll.u32 %v1397, 16
    %v1436 = vrot.slane %v1434, 3
    %v1437 = vor.u32 %v1433, %v1436
    %v1438 = vsel %vm1404, %v1429, %v1437
    %v1440 = vshrl.u32 %v1398, 16
    %v1442 = vrot.slane %v1440, 2
    %v1443 = vshll.u32 %v1398, 16
    %v1445 = vrot.slane %v1443, 3
    %v1446 = vor.u32 %v1442, %v1445
    %v1447 = vsel %vm1404, %v1420, %v1446
    %v1449 = vshrl.u32 %v1399, 16
    %v1451 = vrot.slane %v1449, 2
    %v1452 = vshll.u32 %v1399, 16
    %v1454 = vrot.slane %v1452, 3
    %v1455 = vor.u32 %v1451, %v1454
    %v1456 = vsel %vm1404, %v1437, %v1455
    %v1458 = vshrl.u32 %v1400, 16
    %v1460 = vrot.slane %v1458, 2
    %v1461 = vshll.u32 %v1400, 16
    %v1463 = vrot.slane %v1461, 3
    %v1464 = vor.u32 %v1460, %v1463
    %v1465 = vsel %vm1404, %v1446, %v1464
    %v1467 = vshrl.u32 %v1401, 16
    %v1469 = vrot.slane %v1467, 2
    %v1470 = vshll.u32 %v1401, 16
    %v1472 = vrot.slane %v1470, 3
    %v1473 = vor.u32 %v1469, %v1472
    %v1474 = vsel %vm1404, %v1455, %v1473
    %v1476 = vshll.u32 %v1402, 16
    %v1478 = vrot.slane %v1476, 3
    %v1479 = vsel %vm1404, %v1464, %v1478
    %v1481 = vshll.u32 %v1403, 16
    %v1483 = vrot.slane %v1481, 3
    %v1484 = vsel %vm1404, %v1473, %v1483
    %v1490 = vsel %vm289, %v1438, 0
    %v1493 = vsel %vm289, %v1456, 0
    %v1496 = vsel %vm289, %v1474, 0
    %v1499 = vsel %vm289, %v1484, 0
    %1501 = vmatprep.subr.bf16.mxu0 0
    %1502 = vmatpush1.bf16.msra.mxu0 %v1355
    %1503 = vmatprep.subr.bf16.mxu0 0
    %1504 = vmatpush1.bf16.msra.mxu0 %v1356
    %1505 = vmatprep.subr.bf16.mxu0 0
    %1506 = vmatpush1.bf16.msra.mxu0 %v1357
    %1507 = vmatprep.subr.bf16.mxu0 0
    %1508 = vmatpush1.bf16.msra.mxu0 %v1358
    %1509 = vmatprep.subr.bf16.mxu0 0
    %1510 = vmatpush1.bf16.msra.mxu0 %v1359
    %1511 = vmatprep.subr.bf16.mxu0 0
    %1512 = vmatpush1.bf16.msra.mxu0 %v1360
    %1513 = vmatprep.subr.bf16.mxu0 0
    %1514 = vmatpush1.bf16.msra.mxu0 %v1361
    %1515 = vmatprep.subr.bf16.mxu0 0
    %1516 = vmatpush1.bf16.msra.mxu0 %v1362
    %1517 = vmatprep.subr.bf16.mxu0 0
    %1518 = vmatpush1.bf16.msra.mxu0 %v1363
    %1519 = vmatprep.subr.bf16.mxu0 0
    %1520 = vmatpush1.bf16.msra.mxu0 %v1364
    %1521 = vmatprep.subr.bf16.mxu0 0
    %1522 = vmatpush1.bf16.msra.mxu0 %v1365
    %1523 = vmatprep.subr.bf16.mxu0 0
    %1524 = vmatpush1.bf16.msra.mxu0 %v1366
    %1525 = vmatprep.subr.bf16.mxu0 0
    %1526 = vmatpush1.bf16.msra.mxu0 0
    %1527 = vmatprep.subr.bf16.mxu0 0
    %1528 = vmatpush1.bf16.msra.mxu0 0
    %1529 = vmatprep.subr.bf16.mxu0 0
    %1530 = vmatpush1.bf16.msra.mxu0 0
    %1531 = vmatprep.subr.bf16.mxu0 0
    %1532 = vmatpush1.bf16.msra.mxu0 0
    %1533 = vmatprep.mubr.bf16.mxu0 %v1490
    %1534 = vmatmul.mubr.bf16.gmra.mrb[0].mxu0 %v1421
    %v1535 = vpop.f32.mrb[0].mxu0
    %v1536 = vadd.f32 0.0, %v1535
    %v1537 = vpop.f32.mrb[0].mxu0
    %v1538 = vpop.f32.mrb[0].mxu0
    %v1539 = vadd.f32 0.0, %v1538
    %v1540 = vpop.f32.mrb[0].mxu0
    %1541 = vmatprep.mubr.bf16.mxu0 %v1493
    %1542 = vmatmul.mubr.bf16.gmra.mrb[0].mxu0 %v1447
    %v1543 = vpop.f32.mrb[0].mxu0
    %v1544 = vadd.f32 0.0, %v1543
    %v1545 = vpop.f32.mrb[0].mxu0
    %v1546 = vpop.f32.mrb[0].mxu0
    %v1547 = vadd.f32 0.0, %v1546
    %v1548 = vpop.f32.mrb[0].mxu0
    %1549 = vmatprep.mubr.bf16.mxu0 %v1496
    %1550 = vmatmul.mubr.bf16.gmra.mrb[0].mxu0 %v1465
    %v1551 = vpop.f32.mrb[0].mxu0
    %v1552 = vadd.f32 0.0, %v1551
    %v1553 = vpop.f32.mrb[0].mxu0
    %v1554 = vpop.f32.mrb[0].mxu0
    %v1555 = vadd.f32 0.0, %v1554
    %v1556 = vpop.f32.mrb[0].mxu0
    %1557 = vmatprep.mubr.bf16.mxu0 %v1499
    %1558 = vmatmul.mubr.bf16.gmra.mrb[0].mxu0 %v1479
    %v1559 = vpop.f32.mrb[0].mxu0
    %v1560 = vadd.f32 0.0, %v1559
    %v1561 = vpop.f32.mrb[0].mxu0
    %v1562 = vpop.f32.mrb[0].mxu0
    %v1563 = vadd.f32 0.0, %v1562
    %v1564 = vpop.f32.mrb[0].mxu0
    %1565 = vdwg.mxu0
    %v1566 = vadd.f32 %v1337, %v1536
    %v1567 = vadd.f32 %v1338, %v1539
    %v1568 = vadd.f32 %v1339, %v1544
    %v1569 = vadd.f32 %v1340, %v1547
    %v1570 = vadd.f32 %v1341, %v1552
    %v1571 = vadd.f32 %v1342, %v1555
    %v1572 = vadd.f32 %v1343, %v1560
    %v1573 = vadd.f32 %v1344, %v1563
    %v1574 = vld [vmem:[#allocation12 + $0x8] sm:$0x88]
    %s1575 = scalar_lea.vmem [#allocation6], 768
    %v1576 = vld [vmem:[%s1575] sm:$0xff]
    %v1577 = vld [vmem:[%s1575 + $0x8] sm:$0xff]
    %v1578 = vld [vmem:[%s1575 + $0x10] sm:$0xff]
    %v1579 = vld [vmem:[%s1575 + $0x18] sm:$0xff]
    %v1580 = vld [vmem:[%s1575 + $0x20] sm:$0xff]
    %v1581 = vld [vmem:[%s1575 + $0x28] sm:$0xff]
    %v1582 = vld [vmem:[%s1575 + $0x30] sm:$0xff]
    %v1583 = vld [vmem:[%s1575 + $0x38] sm:$0xff]
    %v1584 = vld [vmem:[%s1575 + $0x40] sm:$0xff]
    %v1585 = vld [vmem:[%s1575 + $0x48] sm:$0xff]
    %v1586 = vld [vmem:[%s1575 + $0x50] sm:$0xff]
    %v1587 = vld [vmem:[%s1575 + $0x58] sm:$0xff]
    %v1589 = vunpack.c.l.b16 %v1574
    %v1590 = vunpack.c.h.b16 %v1574
    %v1591 = vpack.c.b16 %v1378, %v1589
    %v1592 = vpack.c.b16 %v1379, %v1590
    %v1593 = vrot.slane %v1591, 3
    %v1594 = vrot.slane %v1396, 3
    %v1595 = vsel %vm801, %v1593, %v1594
    %v1596 = vrot.slane %v1592, 3
    %v1597 = vrot.slane %v1397, 3
    %v1598 = vsel %vm801, %v1596, %v1597
    %v1599 = vrot.slane %v1398, 3
    %v1600 = vsel %vm801, %v1594, %v1599
    %v1601 = vrot.slane %v1399, 3
    %v1602 = vsel %vm801, %v1597, %v1601
    %v1603 = vrot.slane %v1400, 3
    %v1604 = vsel %vm801, %v1599, %v1603
    %v1605 = vrot.slane %v1401, 3
    %v1606 = vsel %vm801, %v1601, %v1605
    %v1607 = vrot.slane %v1402, 3
    %v1608 = vsel %vm801, %v1603, %v1607
    %v1609 = vrot.slane %v1403, 3
    %v1610 = vsel %vm801, %v1605, %v1609
    %v1616 = vsel %vm289, %v1598, 0
    %v1619 = vsel %vm289, %v1602, 0
    %v1622 = vsel %vm289, %v1606, 0
    %v1625 = vsel %vm289, %v1610, 0
    %1627 = vmatprep.subr.bf16.mxu0 0
    %1628 = vmatpush1.bf16.msra.mxu0 %v1576
    %1629 = vmatprep.subr.bf16.mxu0 0
    %1630 = vmatpush1.bf16.msra.mxu0 %v1577
    %1631 = vmatprep.subr.bf16.mxu0 0
    %1632 = vmatpush1.bf16.msra.mxu0 %v1578
    %1633 = vmatprep.subr.bf16.mxu0 0
    %1634 = vmatpush1.bf16.msra.mxu0 %v1579
    %1635 = vmatprep.subr.bf16.mxu0 0
    %1636 = vmatpush1.bf16.msra.mxu0 %v1580
    %1637 = vmatprep.subr.bf16.mxu0 0
    %1638 = vmatpush1.bf16.msra.mxu0 %v1581
    %1639 = vmatprep.subr.bf16.mxu0 0
    %1640 = vmatpush1.bf16.msra.mxu0 %v1582
    %1641 = vmatprep.subr.bf16.mxu0 0
    %1642 = vmatpush1.bf16.msra.mxu0 %v1583
    %1643 = vmatprep.subr.bf16.mxu0 0
    %1644 = vmatpush1.bf16.msra.mxu0 %v1584
    %1645 = vmatprep.subr.bf16.mxu0 0
    %1646 = vmatpush1.bf16.msra.mxu0 %v1585
    %1647 = vmatprep.subr.bf16.mxu0 0
    %1648 = vmatpush1.bf16.msra.mxu0 %v1586
    %1649 = vmatprep.subr.bf16.mxu0 0
    %1650 = vmatpush1.bf16.msra.mxu0 %v1587
    %1651 = vmatprep.subr.bf16.mxu0 0
    %1652 = vmatpush1.bf16.msra.mxu0 0
    %1653 = vmatprep.subr.bf16.mxu0 0
    %1654 = vmatpush1.bf16.msra.mxu0 0
    %1655 = vmatprep.subr.bf16.mxu0 0
    %1656 = vmatpush1.bf16.msra.mxu0 0
    %1657 = vmatprep.subr.bf16.mxu0 0
    %1658 = vmatpush1.bf16.msra.mxu0 0
    %1659 = vmatprep.mubr.bf16.mxu0 %v1616
    %1660 = vmatmul.mubr.bf16.gmra.mrb[0].mxu0 %v1595
    %v1661 = vpop.f32.mrb[0].mxu0
    %v1662 = vadd.f32 0.0, %v1661
    %v1663 = vpop.f32.mrb[0].mxu0
    %v1664 = vpop.f32.mrb[0].mxu0
    %v1665 = vadd.f32 0.0, %v1664
    %v1666 = vpop.f32.mrb[0].mxu0
    %1667 = vmatprep.mubr.bf16.mxu0 %v1619
    %1668 = vmatmul.mubr.bf16.gmra.mrb[0].mxu0 %v1600
    %v1669 = vpop.f32.mrb[0].mxu0
    %v1670 = vadd.f32 0.0, %v1669
    %v1671 = vpop.f32.mrb[0].mxu0
    %v1672 = vpop.f32.mrb[0].mxu0
    %v1673 = vadd.f32 0.0, %v1672
    %v1674 = vpop.f32.mrb[0].mxu0
    %1675 = vmatprep.mubr.bf16.mxu0 %v1622
    %1676 = vmatmul.mubr.bf16.gmra.mrb[0].mxu0 %v1604
    %v1677 = vpop.f32.mrb[0].mxu0
    %v1678 = vadd.f32 0.0, %v1677
    %v1679 = vpop.f32.mrb[0].mxu0
    %v1680 = vpop.f32.mrb[0].mxu0
    %v1681 = vadd.f32 0.0, %v1680
    %v1682 = vpop.f32.mrb[0].mxu0
    %1683 = vmatprep.mubr.bf16.mxu0 %v1625
    %1684 = vmatmul.mubr.bf16.gmra.mrb[0].mxu0 %v1608
    %v1685 = vpop.f32.mrb[0].mxu0
    %v1686 = vadd.f32 0.0, %v1685
    %v1687 = vpop.f32.mrb[0].mxu0
    %v1688 = vpop.f32.mrb[0].mxu0
    %v1689 = vadd.f32 0.0, %v1688
    %v1690 = vpop.f32.mrb[0].mxu0
    %1691 = vdwg.mxu0
    %v1692 = vadd.f32 %v1566, %v1662
    %v1693 = vadd.f32 %v1567, %v1665
    %v1694 = vadd.f32 %v1568, %v1670
    %v1695 = vadd.f32 %v1569, %v1673
    %v1696 = vadd.f32 %v1570, %v1678
    %v1697 = vadd.f32 %v1571, %v1681
    %v1698 = vadd.f32 %v1572, %v1686
    %v1699 = vadd.f32 %v1573, %v1689
    %v1700 = vld [vmem:[#allocation18] sm:$0x1]
    %v1702 = vlaneseq
    %v1703 = vshrl.u32 %v1702, 7
    %v1704 = vsub.s32 0, %v1703
    %v1705 = vrot.slane %v1700, %v1704
    %v1707 = vadd.f32 %v1692, %v1705
    %v1708 = vadd.f32 %v1693, %v1705
    %v1709 = vadd.f32 %v1694, %v1705
    %v1710 = vadd.f32 %v1695, %v1705
    %v1711 = vadd.f32 %v1696, %v1705
    %v1712 = vadd.f32 %v1697, %v1705
    %v1713 = vadd.f32 %v1698, %v1705
    %v1714 = vadd.f32 %v1699, %v1705
    %vm1715 = vcmp.ge.f32.partialorder %v1707, 0.0
    %vm1716 = vcmp.ge.f32.partialorder %v1708, 0.0
    %vm1717 = vcmp.ge.f32.partialorder %v1709, 0.0
    %vm1718 = vcmp.ge.f32.partialorder %v1710, 0.0
    %vm1719 = vcmp.ge.f32.partialorder %v1711, 0.0
    %vm1720 = vcmp.ge.f32.partialorder %v1712, 0.0
    %vm1721 = vcmp.ge.f32.partialorder %v1713, 0.0
    %vm1722 = vcmp.ge.f32.partialorder %v1714, 0.0
    %v1723 = vmul.f32 %v1707, 0.2
    %v1724 = vmul.f32 %v1708, 0.2
    %v1725 = vmul.f32 %v1709, 0.2
    %v1726 = vmul.f32 %v1710, 0.2
    %v1727 = vmul.f32 %v1711, 0.2
    %v1728 = vmul.f32 %v1712, 0.2
    %v1729 = vmul.f32 %v1713, 0.2
    %v1730 = vmul.f32 %v1714, 0.2
    %v1731 = vsel %vm1715, %v1707, %v1723
    %v1732 = vsel %vm1716, %v1708, %v1724
    %v1733 = vsel %vm1717, %v1709, %v1725
    %v1734 = vsel %vm1718, %v1710, %v1726
    %v1735 = vsel %vm1719, %v1711, %v1727
    %v1736 = vsel %vm1720, %v1712, %v1728
    %v1737 = vsel %vm1721, %v1713, %v1729
    %v1738 = vsel %vm1722, %v1714, %v1730
    %v1739 = vsel %vm299, 1, 0
    %v1740 = vsel %vm300, 1, 0
    %v1741 = vsel %vm301, 1, 0
    %v1742 = vsel %vm302, 1, 0
    %v1743 = vsel %vm303, 1, 0
    %v1744 = vsel %vm304, 1, 0
    %v1745 = vsel %vm305, 1, 0
    %v1746 = vsel %vm306, 1, 0
    %1747 = vset.pattern.permute.xlu0 0
    %1748 = vperm.xlu0 %1747, %v1739
    %v1749 = vpop.permute.xlu0 %1748
    %1750 = vset.pattern.permute.xlu0 0
    %1751 = vperm.xlu0 %1750, %v1740
    %v1752 = vpop.permute.xlu0 %1751
    %1753 = vset.pattern.permute.xlu0 0
    %1754 = vperm.xlu0 %1753, %v1741
    %v1755 = vpop.permute.xlu0 %1754
    %1756 = vset.pattern.permute.xlu0 0
    %1757 = vperm.xlu0 %1756, %v1742
    %v1758 = vpop.permute.xlu0 %1757
    %1759 = vset.pattern.permute.xlu0 0
    %1760 = vperm.xlu0 %1759, %v1743
    %v1761 = vpop.permute.xlu0 %1760
    %1762 = vset.pattern.permute.xlu0 0
    %1763 = vperm.xlu0 %1762, %v1744
    %v1764 = vpop.permute.xlu0 %1763
    %1765 = vset.pattern.permute.xlu0 0
    %1766 = vperm.xlu0 %1765, %v1745
    %v1767 = vpop.permute.xlu0 %1766
    %1768 = vset.pattern.permute.xlu0 0
    %1769 = vperm.xlu0 %1768, %v1746
    %v1770 = vpop.permute.xlu0 %1769
    %vm1771 = vcmp.eq.s32.totalorder %v1749, 1
    %vm1772 = vcmp.eq.s32.totalorder %v1752, 1
    %vm1773 = vcmp.eq.s32.totalorder %v1755, 1
    %vm1774 = vcmp.eq.s32.totalorder %v1758, 1
    %vm1775 = vcmp.eq.s32.totalorder %v1761, 1
    %vm1776 = vcmp.eq.s32.totalorder %v1764, 1
    %vm1777 = vcmp.eq.s32.totalorder %v1767, 1
    %vm1778 = vcmp.eq.s32.totalorder %v1770, 1
    %v1779 = vsel %vm1771, %v1731, 0.0
    %v1780 = vsel %vm1772, %v1732, 0.0
    %v1781 = vsel %vm1773, %v1733, 0.0
    %v1782 = vsel %vm1774, %v1734, 0.0
    %v1783 = vsel %vm1775, %v1735, 0.0
    %v1784 = vsel %vm1776, %v1736, 0.0
    %v1785 = vsel %vm1777, %v1737, 0.0
    %v1786 = vsel %vm1778, %v1738, 0.0
    %v1787 = vpack.c.bf16 %v1780, %v1779
    %v1788 = vpack.c.bf16 %v1782, %v1781
    %v1789 = vpack.c.bf16 %v1784, %v1783
    %v1790 = vpack.c.bf16 %v1786, %v1785
    %v1792 = vshrl.u32 %v1787, 16
    %v1794 = vrot.slane %v1792, 4
    %v1795 = vshll.u32 %v1787, 16
    %v1797 = vrot.slane %v1795, 5
    %v1798 = vor.u32 %v1794, %v1797
    %v1800 = vshrl.u32 %v1788, 16
    %v1802 = vrot.slane %v1800, 4
    %v1803 = vshll.u32 %v1788, 16
    %v1805 = vrot.slane %v1803, 5
    %v1806 = vor.u32 %v1802, %v1805
    %v1807 = vsel %vm249, %v1798, %v1806
    %v1809 = vshrl.u32 %v1789, 16
    %v1811 = vrot.slane %v1809, 4
    %v1812 = vshll.u32 %v1789, 16
    %v1814 = vrot.slane %v1812, 5
    %v1815 = vor.u32 %v1811, %v1814
    %v1816 = vsel %vm249, %v1806, %v1815
    %v1818 = vshrl.u32 %v1790, 16
    %v1820 = vrot.slane %v1818, 4
    %v1821 = vshll.u32 %v1790, 16
    %v1823 = vrot.slane %v1821, 5
    %v1824 = vor.u32 %v1820, %v1823
    %v1825 = vsel %vm249, %v1815, %v1824
    %vm1831 = vcmask 1047555
    %vm1832 = vsmask.f32 7950
    %vm1833 = vmand %vm1831, %vm1832
    %v1834 = vld [vmem:[#allocation2] sm:$0xf8]
    %v1835 = vsel %vm1833, %v1798, %v1834
    %1836 = vst [vmem:[#allocation2] sm:$0xf8] %v1835
    %1837 = vst [vmem:[#allocation2 + $0x8] sm:$0xff] %v1807
    %1838 = vst [vmem:[#allocation2 + $0x10] sm:$0xff] %v1816
    %1839 = vst [vmem:[#allocation2 + $0x18] sm:$0xff] %v1825
    %vm1840 = vcmask 1041408
    %vm1841 = vsmask.f32 1280
    %vm1842 = vmand %vm1840, %vm1841
    %v1843 = vld [vmem:[#allocation2 + $0x20] sm:$0x3]
    %v1844 = vsel %vm1842, %v1824, %v1843
    %1845 = vst [vmem:[#allocation2 + $0x20] sm:$0x3] %v1844
    %s1846 = smul.u32 %s321, 16
    %s1847 = smul.u32 %s1846, 1
    %s1848 = sshll.u32 %s1847, 4
    %1849 = dma.done %s212, %s1848
    %v1850 = vld [vmem:[#allocation2] sm:$0xff]
    %v1851 = vld [vmem:[#allocation2 + $0x8] sm:$0xff]
    %v1852 = vld [vmem:[#allocation2 + $0x10] sm:$0xff]
    %v1853 = vld [vmem:[#allocation2 + $0x18] sm:$0x3f]
    %v1854 = vld [vmem:[#allocation7] sm:$0xff]
    %v1855 = vld [vmem:[#allocation7 + $0x8] sm:$0xff]
    %v1856 = vld [vmem:[#allocation7 + $0x10] sm:$0xff]
    %v1857 = vld [vmem:[#allocation7 + $0x18] sm:$0xff]
    %v1858 = vld [vmem:[#allocation7 + $0x20] sm:$0xff]
    %v1859 = vld [vmem:[#allocation7 + $0x28] sm:$0xff]
    %v1860 = vld [vmem:[#allocation7 + $0x30] sm:$0xff]
    %v1861 = vld [vmem:[#allocation7 + $0x38] sm:$0xff]
    %v1862 = vld [vmem:[#allocation2 + $0x18] sm:$0x7f]
    %s1863 = scalar_lea.vmem [#allocation7], 64
    %v1864 = vld [vmem:[%s1863] sm:$0xff]
    %v1865 = vld [vmem:[%s1863 + $0x8] sm:$0xff]
    %v1866 = vld [vmem:[%s1863 + $0x10] sm:$0xff]
    %v1867 = vld [vmem:[%s1863 + $0x18] sm:$0xff]
    %v1868 = vld [vmem:[%s1863 + $0x20] sm:$0xff]
    %v1869 = vld [vmem:[%s1863 + $0x28] sm:$0xff]
    %v1870 = vld [vmem:[%s1863 + $0x30] sm:$0xff]
    %v1871 = vld [vmem:[%s1863 + $0x38] sm:$0xff]
    %v1873 = vshrl.u32 %v1850, 16
    %v1875 = vshll.u32 %v1850, 16
    %v1877 = vrot.slane %v1875, 1
    %v1878 = vor.u32 %v1873, %v1877
    %v1880 = vshll.u32 %v1851, 16
    %v1882 = vrot.slane %v1880, 1
    %v1883 = vsel %vm392, %v1878, %v1882
    %v1884 = vshrl.u32 %v1851, 16
    %v1886 = vor.u32 %v1884, %v1882
    %v1888 = vshll.u32 %v1852, 16
    %v1890 = vrot.slane %v1888, 1
    %v1891 = vsel %vm392, %v1886, %v1890
    %v1892 = vshrl.u32 %v1852, 16
    %v1894 = vor.u32 %v1892, %v1890
    %v1896 = vshll.u32 %v1862, 16
    %v1898 = vrot.slane %v1896, 1
    %v1899 = vsel %vm392, %v1894, %v1898
    %v1900 = vshrl.u32 %v1862, 16
    %v1902 = vor.u32 %v1900, %v1898
    %1907 = vmatprep.subr.bf16.mxu0 0
    %1908 = vmatpush1.bf16.msra.mxu0 %v1864
    %1909 = vmatprep.subr.bf16.mxu0 0
    %1910 = vmatpush1.bf16.msra.mxu0 %v1865
    %1911 = vmatprep.subr.bf16.mxu0 0
    %1912 = vmatpush1.bf16.msra.mxu0 %v1866
    %1913 = vmatprep.subr.bf16.mxu0 0
    %1914 = vmatpush1.bf16.msra.mxu0 %v1867
    %1915 = vmatprep.subr.bf16.mxu0 0
    %1916 = vmatpush1.bf16.msra.mxu0 %v1868
    %1917 = vmatprep.subr.bf16.mxu0 0
    %1918 = vmatpush1.bf16.msra.mxu0 %v1869
    %1919 = vmatprep.subr.bf16.mxu0 0
    %1920 = vmatpush1.bf16.msra.mxu0 %v1870
    %1921 = vmatprep.subr.bf16.mxu0 0
    %1922 = vmatpush1.bf16.msra.mxu0 %v1871
    %1923 = vmatprep.subr.bf16.mxu0 0
    %1924 = vmatpush1.bf16.msra.mxu0 0
    %1925 = vmatprep.subr.bf16.mxu0 0
    %1926 = vmatpush1.bf16.msra.mxu0 0
    %1927 = vmatprep.subr.bf16.mxu0 0
    %1928 = vmatpush1.bf16.msra.mxu0 0
    %1929 = vmatprep.subr.bf16.mxu0 0
    %1930 = vmatpush1.bf16.msra.mxu0 0
    %1931 = vmatprep.subr.bf16.mxu0 0
    %1932 = vmatpush1.bf16.msra.mxu0 0
    %1933 = vmatprep.subr.bf16.mxu0 0
    %1934 = vmatpush1.bf16.msra.mxu0 0
    %1935 = vmatprep.subr.bf16.mxu0 0
    %1936 = vmatpush1.bf16.msra.mxu0 0
    %1937 = vmatprep.subr.bf16.mxu0 0
    %1938 = vmatpush1.bf16.msra.mxu0 0
    %1939 = vmatprep.mubr.bf16.mxu0 0
    %1940 = vmatmul.mubr.bf16.gmra.mrb[0].mxu0 %v1883
    %v1941 = vpop.f32.mrb[0].mxu0
    %v1942 = vadd.f32 0.0, %v1941
    %v1943 = vpop.f32.mrb[0].mxu0
    %v1944 = vpop.f32.mrb[0].mxu0
    %v1945 = vadd.f32 0.0, %v1944
    %v1946 = vpop.f32.mrb[0].mxu0
    %1947 = vmatprep.mubr.bf16.mxu0 0
    %1948 = vmatmul.mubr.bf16.gmra.mrb[0].mxu0 %v1891
    %v1949 = vpop.f32.mrb[0].mxu0
    %v1950 = vadd.f32 0.0, %v1949
    %v1951 = vpop.f32.mrb[0].mxu0
    %v1952 = vpop.f32.mrb[0].mxu0
    %v1953 = vadd.f32 0.0, %v1952
    %v1954 = vpop.f32.mrb[0].mxu0
    %1955 = vmatprep.mubr.bf16.mxu0 0
    %1956 = vmatmul.mubr.bf16.gmra.mrb[0].mxu0 %v1899
    %v1957 = vpop.f32.mrb[0].mxu0
    %v1958 = vadd.f32 0.0, %v1957
    %v1959 = vpop.f32.mrb[0].mxu0
    %v1960 = vpop.f32.mrb[0].mxu0
    %v1961 = vadd.f32 0.0, %v1960
    %v1962 = vpop.f32.mrb[0].mxu0
    %1963 = vmatprep.mubr.bf16.mxu0 0
    %1964 = vmatmul.mubr.bf16.gmra.mrb[0].mxu0 %v1902
    %v1965 = vpop.f32.mrb[0].mxu0
    %v1966 = vadd.f32 0.0, %v1965
    %v1967 = vpop.f32.mrb[0].mxu0
    %v1968 = vpop.f32.mrb[0].mxu0
    %v1969 = vadd.f32 0.0, %v1968
    %v1970 = vpop.f32.mrb[0].mxu0
    %1971 = vdwg.mxu0
    %1972 = vmatprep.subr.bf16.mxu0 0
    %1973 = vmatpush1.bf16.msra.mxu0 %v1854
    %1974 = vmatprep.subr.bf16.mxu0 0
    %1975 = vmatpush1.bf16.msra.mxu0 %v1855
    %1976 = vmatprep.subr.bf16.mxu0 0
    %1977 = vmatpush1.bf16.msra.mxu0 %v1856
    %1978 = vmatprep.subr.bf16.mxu0 0
    %1979 = vmatpush1.bf16.msra.mxu0 %v1857
    %1980 = vmatprep.subr.bf16.mxu0 0
    %1981 = vmatpush1.bf16.msra.mxu0 %v1858
    %1982 = vmatprep.subr.bf16.mxu0 0
    %1983 = vmatpush1.bf16.msra.mxu0 %v1859
    %1984 = vmatprep.subr.bf16.mxu0 0
    %1985 = vmatpush1.bf16.msra.mxu0 %v1860
    %1986 = vmatprep.subr.bf16.mxu0 0
    %1987 = vmatpush1.bf16.msra.mxu0 %v1861
    %1988 = vmatprep.subr.bf16.mxu0 0
    %1989 = vmatpush1.bf16.msra.mxu0 0
    %1990 = vmatprep.subr.bf16.mxu0 0
    %1991 = vmatpush1.bf16.msra.mxu0 0
    %1992 = vmatprep.subr.bf16.mxu0 0
    %1993 = vmatpush1.bf16.msra.mxu0 0
    %1994 = vmatprep.subr.bf16.mxu0 0
    %1995 = vmatpush1.bf16.msra.mxu0 0
    %1996 = vmatprep.subr.bf16.mxu0 0
    %1997 = vmatpush1.bf16.msra.mxu0 0
    %1998 = vmatprep.subr.bf16.mxu0 0
    %1999 = vmatpush1.bf16.msra.mxu0 0
    %2000 = vmatprep.subr.bf16.mxu0 0
    %2001 = vmatpush1.bf16.msra.mxu0 0
    %2002 = vmatprep.subr.bf16.mxu0 0
    %2003 = vmatpush1.bf16.msra.mxu0 0
    %2004 = vmatprep.mubr.bf16.mxu0 0
    %2005 = vmatmul.mubr.bf16.gmra.mrb[0].mxu0 %v1850
    %v2006 = vpop.f32.mrb[0].mxu0
    %v2007 = vadd.f32 %v1942, %v2006
    %v2008 = vpop.f32.mrb[0].mxu0
    %v2009 = vpop.f32.mrb[0].mxu0
    %v2010 = vadd.f32 %v1945, %v2009
    %v2011 = vpop.f32.mrb[0].mxu0
    %2012 = vmatprep.mubr.bf16.mxu0 0
    %2013 = vmatmul.mubr.bf16.gmra.mrb[0].mxu0 %v1851
    %v2014 = vpop.f32.mrb[0].mxu0
    %v2015 = vadd.f32 %v1950, %v2014
    %v2016 = vpop.f32.mrb[0].mxu0
    %v2017 = vpop.f32.mrb[0].mxu0
    %v2018 = vadd.f32 %v1953, %v2017
    %v2019 = vpop.f32.mrb[0].mxu0
    %2020 = vmatprep.mubr.bf16.mxu0 0
    %2021 = vmatmul.mubr.bf16.gmra.mrb[0].mxu0 %v1852
    %v2022 = vpop.f32.mrb[0].mxu0
    %v2023 = vadd.f32 %v1958, %v2022
    %v2024 = vpop.f32.mrb[0].mxu0
    %v2025 = vpop.f32.mrb[0].mxu0
    %v2026 = vadd.f32 %v1961, %v2025
    %v2027 = vpop.f32.mrb[0].mxu0
    %2028 = vmatprep.mubr.bf16.mxu0 0
    %2029 = vmatmul.mubr.bf16.gmra.mrb[0].mxu0 %v1853
    %v2030 = vpop.f32.mrb[0].mxu0
    %v2031 = vadd.f32 %v1966, %v2030
    %v2032 = vpop.f32.mrb[0].mxu0
    %v2033 = vpop.f32.mrb[0].mxu0
    %v2034 = vadd.f32 %v1969, %v2033
    %v2035 = vpop.f32.mrb[0].mxu0
    %2036 = vdwg.mxu0
    %v2037 = vld [vmem:[#allocation2] sm:$0xfe]
    %s2038 = scalar_lea.vmem [#allocation7], 128
    %v2039 = vld [vmem:[%s2038] sm:$0xff]
    %v2040 = vld [vmem:[%s2038 + $0x8] sm:$0xff]
    %v2041 = vld [vmem:[%s2038 + $0x10] sm:$0xff]
    %v2042 = vld [vmem:[%s2038 + $0x18] sm:$0xff]
    %v2043 = vld [vmem:[%s2038 + $0x20] sm:$0xff]
    %v2044 = vld [vmem:[%s2038 + $0x28] sm:$0xff]
    %v2045 = vld [vmem:[%s2038 + $0x30] sm:$0xff]
    %v2046 = vld [vmem:[%s2038 + $0x38] sm:$0xff]
    %v2051 = vrot.slane %v2037, 1
    %v2052 = vrot.slane %v1851, 1
    %v2053 = vsel %vm638, %v2051, %v2052
    %v2054 = vrot.slane %v1852, 1
    %v2055 = vsel %vm638, %v2052, %v2054
    %v2056 = vrot.slane %v1862, 1
    %v2057 = vsel %vm638, %v2054, %v2056
    %2062 = vmatprep.subr.bf16.mxu0 0
    %2063 = vmatpush1.bf16.msra.mxu0 %v2039
    %2064 = vmatprep.subr.bf16.mxu0 0
    %2065 = vmatpush1.bf16.msra.mxu0 %v2040
    %2066 = vmatprep.subr.bf16.mxu0 0
    %2067 = vmatpush1.bf16.msra.mxu0 %v2041
    %2068 = vmatprep.subr.bf16.mxu0 0
    %2069 = vmatpush1.bf16.msra.mxu0 %v2042
    %2070 = vmatprep.subr.bf16.mxu0 0
    %2071 = vmatpush1.bf16.msra.mxu0 %v2043
    %2072 = vmatprep.subr.bf16.mxu0 0
    %2073 = vmatpush1.bf16.msra.mxu0 %v2044
    %2074 = vmatprep.subr.bf16.mxu0 0
    %2075 = vmatpush1.bf16.msra.mxu0 %v2045
    %2076 = vmatprep.subr.bf16.mxu0 0
    %2077 = vmatpush1.bf16.msra.mxu0 %v2046
    %2078 = vmatprep.subr.bf16.mxu0 0
    %2079 = vmatpush1.bf16.msra.mxu0 0
    %2080 = vmatprep.subr.bf16.mxu0 0
    %2081 = vmatpush1.bf16.msra.mxu0 0
    %2082 = vmatprep.subr.bf16.mxu0 0
    %2083 = vmatpush1.bf16.msra.mxu0 0
    %2084 = vmatprep.subr.bf16.mxu0 0
    %2085 = vmatpush1.bf16.msra.mxu0 0
    %2086 = vmatprep.subr.bf16.mxu0 0
    %2087 = vmatpush1.bf16.msra.mxu0 0
    %2088 = vmatprep.subr.bf16.mxu0 0
    %2089 = vmatpush1.bf16.msra.mxu0 0
    %2090 = vmatprep.subr.bf16.mxu0 0
    %2091 = vmatpush1.bf16.msra.mxu0 0
    %2092 = vmatprep.subr.bf16.mxu0 0
    %2093 = vmatpush1.bf16.msra.mxu0 0
    %2094 = vmatprep.mubr.bf16.mxu0 0
    %2095 = vmatmul.mubr.bf16.gmra.mrb[0].mxu0 %v2053
    %v2096 = vpop.f32.mrb[0].mxu0
    %v2097 = vadd.f32 0.0, %v2096
    %v2098 = vpop.f32.mrb[0].mxu0
    %v2099 = vpop.f32.mrb[0].mxu0
    %v2100 = vadd.f32 0.0, %v2099
    %v2101 = vpop.f32.mrb[0].mxu0
    %2102 = vmatprep.mubr.bf16.mxu0 0
    %2103 = vmatmul.mubr.bf16.gmra.mrb[0].mxu0 %v2055
    %v2104 = vpop.f32.mrb[0].mxu0
    %v2105 = vadd.f32 0.0, %v2104
    %v2106 = vpop.f32.mrb[0].mxu0
    %v2107 = vpop.f32.mrb[0].mxu0
    %v2108 = vadd.f32 0.0, %v2107
    %v2109 = vpop.f32.mrb[0].mxu0
    %2110 = vmatprep.mubr.bf16.mxu0 0
    %2111 = vmatmul.mubr.bf16.gmra.mrb[0].mxu0 %v2057
    %v2112 = vpop.f32.mrb[0].mxu0
    %v2113 = vadd.f32 0.0, %v2112
    %v2114 = vpop.f32.mrb[0].mxu0
    %v2115 = vpop.f32.mrb[0].mxu0
    %v2116 = vadd.f32 0.0, %v2115
    %v2117 = vpop.f32.mrb[0].mxu0
    %2118 = vmatprep.mubr.bf16.mxu0 0
    %2119 = vmatmul.mubr.bf16.gmra.mrb[0].mxu0 %v2056
    %v2120 = vpop.f32.mrb[0].mxu0
    %v2121 = vadd.f32 0.0, %v2120
    %v2122 = vpop.f32.mrb[0].mxu0
    %v2123 = vpop.f32.mrb[0].mxu0
    %v2124 = vadd.f32 0.0, %v2123
    %v2125 = vpop.f32.mrb[0].mxu0
    %2126 = vdwg.mxu0
    %v2127 = vadd.f32 %v2007, %v2097
    %v2128 = vadd.f32 %v2010, %v2100
    %v2129 = vadd.f32 %v2015, %v2105
    %v2130 = vadd.f32 %v2018, %v2108
    %v2131 = vadd.f32 %v2023, %v2113
    %v2132 = vadd.f32 %v2026, %v2116
    %v2133 = vadd.f32 %v2031, %v2121
    %v2134 = vadd.f32 %v2034, %v2124
    %v2135 = vld [vmem:[#allocation2] sm:$0xf8]
    %v2136 = vld [vmem:[#allocation2 + $0x8] sm:$0xff]
    %v2137 = vld [vmem:[#allocation2 + $0x10] sm:$0xff]
    %v2138 = vld [vmem:[#allocation2 + $0x18] sm:$0xff]
    %v2139 = vld [vmem:[#allocation2 + $0x20] sm:$0x1]
    %s2140 = scalar_lea.vmem [#allocation7], 192
    %v2141 = vld [vmem:[%s2140] sm:$0xff]
    %v2142 = vld [vmem:[%s2140 + $0x8] sm:$0xff]
    %v2143 = vld [vmem:[%s2140 + $0x10] sm:$0xff]
    %v2144 = vld [vmem:[%s2140 + $0x18] sm:$0xff]
    %v2145 = vld [vmem:[%s2140 + $0x20] sm:$0xff]
    %v2146 = vld [vmem:[%s2140 + $0x28] sm:$0xff]
    %v2147 = vld [vmem:[%s2140 + $0x30] sm:$0xff]
    %v2148 = vld [vmem:[%s2140 + $0x38] sm:$0xff]
    %v2154 = vrot.slane %v2135, 3
    %v2155 = vrot.slane %v2136, 3
    %v2156 = vsel %vm801, %v2154, %v2155
    %v2157 = vrot.slane %v2137, 3
    %v2158 = vsel %vm801, %v2155, %v2157
    %v2159 = vrot.slane %v2138, 3
    %v2160 = vsel %vm801, %v2157, %v2159
    %v2161 = vrot.slane %v2139, 3
    %v2162 = vsel %vm801, %v2159, %v2161
    %2167 = vmatprep.subr.bf16.mxu0 0
    %2168 = vmatpush1.bf16.msra.mxu0 %v2141
    %2169 = vmatprep.subr.bf16.mxu0 0
    %2170 = vmatpush1.bf16.msra.mxu0 %v2142
    %2171 = vmatprep.subr.bf16.mxu0 0
    %2172 = vmatpush1.bf16.msra.mxu0 %v2143
    %2173 = vmatprep.subr.bf16.mxu0 0
    %2174 = vmatpush1.bf16.msra.mxu0 %v2144
    %2175 = vmatprep.subr.bf16.mxu0 0
    %2176 = vmatpush1.bf16.msra.mxu0 %v2145
    %2177 = vmatprep.subr.bf16.mxu0 0
    %2178 = vmatpush1.bf16.msra.mxu0 %v2146
    %2179 = vmatprep.subr.bf16.mxu0 0
    %2180 = vmatpush1.bf16.msra.mxu0 %v2147
    %2181 = vmatprep.subr.bf16.mxu0 0
    %2182 = vmatpush1.bf16.msra.mxu0 %v2148
    %2183 = vmatprep.subr.bf16.mxu0 0
    %2184 = vmatpush1.bf16.msra.mxu0 0
    %2185 = vmatprep.subr.bf16.mxu0 0
    %2186 = vmatpush1.bf16.msra.mxu0 0
    %2187 = vmatprep.subr.bf16.mxu0 0
    %2188 = vmatpush1.bf16.msra.mxu0 0
    %2189 = vmatprep.subr.bf16.mxu0 0
    %2190 = vmatpush1.bf16.msra.mxu0 0
    %2191 = vmatprep.subr.bf16.mxu0 0
    %2192 = vmatpush1.bf16.msra.mxu0 0
    %2193 = vmatprep.subr.bf16.mxu0 0
    %2194 = vmatpush1.bf16.msra.mxu0 0
    %2195 = vmatprep.subr.bf16.mxu0 0
    %2196 = vmatpush1.bf16.msra.mxu0 0
    %2197 = vmatprep.subr.bf16.mxu0 0
    %2198 = vmatpush1.bf16.msra.mxu0 0
    %2199 = vmatprep.mubr.bf16.mxu0 0
    %2200 = vmatmul.mubr.bf16.gmra.mrb[0].mxu0 %v2156
    %v2201 = vpop.f32.mrb[0].mxu0
    %v2202 = vadd.f32 0.0, %v2201
    %v2203 = vpop.f32.mrb[0].mxu0
    %v2204 = vpop.f32.mrb[0].mxu0
    %v2205 = vadd.f32 0.0, %v2204
    %v2206 = vpop.f32.mrb[0].mxu0
    %2207 = vmatprep.mubr.bf16.mxu0 0
    %2208 = vmatmul.mubr.bf16.gmra.mrb[0].mxu0 %v2158
    %v2209 = vpop.f32.mrb[0].mxu0
    %v2210 = vadd.f32 0.0, %v2209
    %v2211 = vpop.f32.mrb[0].mxu0
    %v2212 = vpop.f32.mrb[0].mxu0
    %v2213 = vadd.f32 0.0, %v2212
    %v2214 = vpop.f32.mrb[0].mxu0
    %2215 = vmatprep.mubr.bf16.mxu0 0
    %2216 = vmatmul.mubr.bf16.gmra.mrb[0].mxu0 %v2160
    %v2217 = vpop.f32.mrb[0].mxu0
    %v2218 = vadd.f32 0.0, %v2217
    %v2219 = vpop.f32.mrb[0].mxu0
    %v2220 = vpop.f32.mrb[0].mxu0
    %v2221 = vadd.f32 0.0, %v2220
    %v2222 = vpop.f32.mrb[0].mxu0
    %2223 = vmatprep.mubr.bf16.mxu0 0
    %2224 = vmatmul.mubr.bf16.gmra.mrb[0].mxu0 %v2162
    %v2225 = vpop.f32.mrb[0].mxu0
    %v2226 = vadd.f32 0.0, %v2225
    %v2227 = vpop.f32.mrb[0].mxu0
    %v2228 = vpop.f32.mrb[0].mxu0
    %v2229 = vadd.f32 0.0, %v2228
    %v2230 = vpop.f32.mrb[0].mxu0
    %2231 = vdwg.mxu0
    %v2232 = vadd.f32 %v2127, %v2202
    %v2233 = vadd.f32 %v2128, %v2205
    %v2234 = vadd.f32 %v2129, %v2210
    %v2235 = vadd.f32 %v2130, %v2213
    %v2236 = vadd.f32 %v2131, %v2218
    %v2237 = vadd.f32 %v2132, %v2221
    %v2238 = vadd.f32 %v2133, %v2226
    %v2239 = vadd.f32 %v2134, %v2229
    %v2240 = vld [vmem:[#allocation2 + $0x20] sm:$0x3]
    %s2241 = scalar_lea.vmem [#allocation7], 256
    %v2242 = vld [vmem:[%s2241] sm:$0xff]
    %v2243 = vld [vmem:[%s2241 + $0x8] sm:$0xff]
    %v2244 = vld [vmem:[%s2241 + $0x10] sm:$0xff]
    %v2245 = vld [vmem:[%s2241 + $0x18] sm:$0xff]
    %v2246 = vld [vmem:[%s2241 + $0x20] sm:$0xff]
    %v2247 = vld [vmem:[%s2241 + $0x28] sm:$0xff]
    %v2248 = vld [vmem:[%s2241 + $0x30] sm:$0xff]
    %v2249 = vld [vmem:[%s2241 + $0x38] sm:$0xff]
    %v2251 = vshrl.u32 %v2135, 16
    %v2253 = vrot.slane %v2251, 3
    %v2254 = vshll.u32 %v2135, 16
    %v2256 = vrot.slane %v2254, 4
    %v2257 = vor.u32 %v2253, %v2256
    %v2259 = vshrl.u32 %v2136, 16
    %v2261 = vrot.slane %v2259, 3
    %v2262 = vshll.u32 %v2136, 16
    %v2264 = vrot.slane %v2262, 4
    %v2265 = vor.u32 %v2261, %v2264
    %v2266 = vsel %vm928, %v2257, %v2265
    %v2268 = vshrl.u32 %v2137, 16
    %v2270 = vrot.slane %v2268, 3
    %v2271 = vshll.u32 %v2137, 16
    %v2273 = vrot.slane %v2271, 4
    %v2274 = vor.u32 %v2270, %v2273
    %v2275 = vsel %vm928, %v2265, %v2274
    %v2277 = vshrl.u32 %v2138, 16
    %v2279 = vrot.slane %v2277, 3
    %v2280 = vshll.u32 %v2138, 16
    %v2282 = vrot.slane %v2280, 4
    %v2283 = vor.u32 %v2279, %v2282
    %v2284 = vsel %vm928, %v2274, %v2283
    %v2286 = vshrl.u32 %v2240, 16
    %v2288 = vrot.slane %v2286, 3
    %v2289 = vshll.u32 %v2240, 16
    %v2291 = vrot.slane %v2289, 4
    %v2292 = vor.u32 %v2288, %v2291
    %v2293 = vsel %vm928, %v2283, %v2292
    %2298 = vmatprep.subr.bf16.mxu0 0
    %2299 = vmatpush1.bf16.msra.mxu0 %v2242
    %2300 = vmatprep.subr.bf16.mxu0 0
    %2301 = vmatpush1.bf16.msra.mxu0 %v2243
    %2302 = vmatprep.subr.bf16.mxu0 0
    %2303 = vmatpush1.bf16.msra.mxu0 %v2244
    %2304 = vmatprep.subr.bf16.mxu0 0
    %2305 = vmatpush1.bf16.msra.mxu0 %v2245
    %2306 = vmatprep.subr.bf16.mxu0 0
    %2307 = vmatpush1.bf16.msra.mxu0 %v2246
    %2308 = vmatprep.subr.bf16.mxu0 0
    %2309 = vmatpush1.bf16.msra.mxu0 %v2247
    %2310 = vmatprep.subr.bf16.mxu0 0
    %2311 = vmatpush1.bf16.msra.mxu0 %v2248
    %2312 = vmatprep.subr.bf16.mxu0 0
    %2313 = vmatpush1.bf16.msra.mxu0 %v2249
    %2314 = vmatprep.subr.bf16.mxu0 0
    %2315 = vmatpush1.bf16.msra.mxu0 0
    %2316 = vmatprep.subr.bf16.mxu0 0
    %2317 = vmatpush1.bf16.msra.mxu0 0
    %2318 = vmatprep.subr.bf16.mxu0 0
    %2319 = vmatpush1.bf16.msra.mxu0 0
    %2320 = vmatprep.subr.bf16.mxu0 0
    %2321 = vmatpush1.bf16.msra.mxu0 0
    %2322 = vmatprep.subr.bf16.mxu0 0
    %2323 = vmatpush1.bf16.msra.mxu0 0
    %2324 = vmatprep.subr.bf16.mxu0 0
    %2325 = vmatpush1.bf16.msra.mxu0 0
    %2326 = vmatprep.subr.bf16.mxu0 0
    %2327 = vmatpush1.bf16.msra.mxu0 0
    %2328 = vmatprep.subr.bf16.mxu0 0
    %2329 = vmatpush1.bf16.msra.mxu0 0
    %2330 = vmatprep.mubr.bf16.mxu0 0
    %2331 = vmatmul.mubr.bf16.gmra.mrb[0].mxu0 %v2266
    %v2332 = vpop.f32.mrb[0].mxu0
    %v2333 = vadd.f32 0.0, %v2332
    %v2334 = vpop.f32.mrb[0].mxu0
    %v2335 = vpop.f32.mrb[0].mxu0
    %v2336 = vadd.f32 0.0, %v2335
    %v2337 = vpop.f32.mrb[0].mxu0
    %2338 = vmatprep.mubr.bf16.mxu0 0
    %2339 = vmatmul.mubr.bf16.gmra.mrb[0].mxu0 %v2275
    %v2340 = vpop.f32.mrb[0].mxu0
    %v2341 = vadd.f32 0.0, %v2340
    %v2342 = vpop.f32.mrb[0].mxu0
    %v2343 = vpop.f32.mrb[0].mxu0
    %v2344 = vadd.f32 0.0, %v2343
    %v2345 = vpop.f32.mrb[0].mxu0
    %2346 = vmatprep.mubr.bf16.mxu0 0
    %2347 = vmatmul.mubr.bf16.gmra.mrb[0].mxu0 %v2284
    %v2348 = vpop.f32.mrb[0].mxu0
    %v2349 = vadd.f32 0.0, %v2348
    %v2350 = vpop.f32.mrb[0].mxu0
    %v2351 = vpop.f32.mrb[0].mxu0
    %v2352 = vadd.f32 0.0, %v2351
    %v2353 = vpop.f32.mrb[0].mxu0
    %2354 = vmatprep.mubr.bf16.mxu0 0
    %2355 = vmatmul.mubr.bf16.gmra.mrb[0].mxu0 %v2293
    %v2356 = vpop.f32.mrb[0].mxu0
    %v2357 = vadd.f32 0.0, %v2356
    %v2358 = vpop.f32.mrb[0].mxu0
    %v2359 = vpop.f32.mrb[0].mxu0
    %v2360 = vadd.f32 0.0, %v2359
    %v2361 = vpop.f32.mrb[0].mxu0
    %2362 = vdwg.mxu0
    %v2363 = vadd.f32 %v2232, %v2333
    %v2364 = vadd.f32 %v2233, %v2336
    %v2365 = vadd.f32 %v2234, %v2341
    %v2366 = vadd.f32 %v2235, %v2344
    %v2367 = vadd.f32 %v2236, %v2349
    %v2368 = vadd.f32 %v2237, %v2352
    %v2369 = vadd.f32 %v2238, %v2357
    %v2370 = vadd.f32 %v2239, %v2360
    %v2371 = vld [vmem:[#allocation2] sm:$0xf0]
    %s2372 = scalar_lea.vmem [#allocation7], 320
    %v2373 = vld [vmem:[%s2372] sm:$0xff]
    %v2374 = vld [vmem:[%s2372 + $0x8] sm:$0xff]
    %v2375 = vld [vmem:[%s2372 + $0x10] sm:$0xff]
    %v2376 = vld [vmem:[%s2372 + $0x18] sm:$0xff]
    %v2377 = vld [vmem:[%s2372 + $0x20] sm:$0xff]
    %v2378 = vld [vmem:[%s2372 + $0x28] sm:$0xff]
    %v2379 = vld [vmem:[%s2372 + $0x30] sm:$0xff]
    %v2380 = vld [vmem:[%s2372 + $0x38] sm:$0xff]
    %v2383 = vrot.slane %v2371, 4
    %v2384 = vrot.slane %v2136, 4
    %v2385 = vsel %vm248, %v2383, %v2384
    %v2386 = vrot.slane %v2137, 4
    %v2387 = vsel %vm248, %v2384, %v2386
    %v2388 = vrot.slane %v2138, 4
    %v2389 = vsel %vm248, %v2386, %v2388
    %v2390 = vrot.slane %v2240, 4
    %v2391 = vsel %vm248, %v2388, %v2390
    %2396 = vmatprep.subr.bf16.mxu0 0
    %2397 = vmatpush1.bf16.msra.mxu0 %v2373
    %2398 = vmatprep.subr.bf16.mxu0 0
    %2399 = vmatpush1.bf16.msra.mxu0 %v2374
    %2400 = vmatprep.subr.bf16.mxu0 0
    %2401 = vmatpush1.bf16.msra.mxu0 %v2375
    %2402 = vmatprep.subr.bf16.mxu0 0
    %2403 = vmatpush1.bf16.msra.mxu0 %v2376
    %2404 = vmatprep.subr.bf16.mxu0 0
    %2405 = vmatpush1.bf16.msra.mxu0 %v2377
    %2406 = vmatprep.subr.bf16.mxu0 0
    %2407 = vmatpush1.bf16.msra.mxu0 %v2378
    %2408 = vmatprep.subr.bf16.mxu0 0
    %2409 = vmatpush1.bf16.msra.mxu0 %v2379
    %2410 = vmatprep.subr.bf16.mxu0 0
    %2411 = vmatpush1.bf16.msra.mxu0 %v2380
    %2412 = vmatprep.subr.bf16.mxu0 0
    %2413 = vmatpush1.bf16.msra.mxu0 0
    %2414 = vmatprep.subr.bf16.mxu0 0
    %2415 = vmatpush1.bf16.msra.mxu0 0
    %2416 = vmatprep.subr.bf16.mxu0 0
    %2417 = vmatpush1.bf16.msra.mxu0 0
    %2418 = vmatprep.subr.bf16.mxu0 0
    %2419 = vmatpush1.bf16.msra.mxu0 0
    %2420 = vmatprep.subr.bf16.mxu0 0
    %2421 = vmatpush1.bf16.msra.mxu0 0
    %2422 = vmatprep.subr.bf16.mxu0 0
    %2423 = vmatpush1.bf16.msra.mxu0 0
    %2424 = vmatprep.subr.bf16.mxu0 0
    %2425 = vmatpush1.bf16.msra.mxu0 0
    %2426 = vmatprep.subr.bf16.mxu0 0
    %2427 = vmatpush1.bf16.msra.mxu0 0
    %2428 = vmatprep.mubr.bf16.mxu0 0
    %2429 = vmatmul.mubr.bf16.gmra.mrb[0].mxu0 %v2385
    %v2430 = vpop.f32.mrb[0].mxu0
    %v2431 = vadd.f32 0.0, %v2430
    %v2432 = vpop.f32.mrb[0].mxu0
    %v2433 = vpop.f32.mrb[0].mxu0
    %v2434 = vadd.f32 0.0, %v2433
    %v2435 = vpop.f32.mrb[0].mxu0
    %2436 = vmatprep.mubr.bf16.mxu0 0
    %2437 = vmatmul.mubr.bf16.gmra.mrb[0].mxu0 %v2387
    %v2438 = vpop.f32.mrb[0].mxu0
    %v2439 = vadd.f32 0.0, %v2438
    %v2440 = vpop.f32.mrb[0].mxu0
    %v2441 = vpop.f32.mrb[0].mxu0
    %v2442 = vadd.f32 0.0, %v2441
    %v2443 = vpop.f32.mrb[0].mxu0
    %2444 = vmatprep.mubr.bf16.mxu0 0
    %2445 = vmatmul.mubr.bf16.gmra.mrb[0].mxu0 %v2389
    %v2446 = vpop.f32.mrb[0].mxu0
    %v2447 = vadd.f32 0.0, %v2446
    %v2448 = vpop.f32.mrb[0].mxu0
    %v2449 = vpop.f32.mrb[0].mxu0
    %v2450 = vadd.f32 0.0, %v2449
    %v2451 = vpop.f32.mrb[0].mxu0
    %2452 = vmatprep.mubr.bf16.mxu0 0
    %2453 = vmatmul.mubr.bf16.gmra.mrb[0].mxu0 %v2391
    %v2454 = vpop.f32.mrb[0].mxu0
    %v2455 = vadd.f32 0.0, %v2454
    %v2456 = vpop.f32.mrb[0].mxu0
    %v2457 = vpop.f32.mrb[0].mxu0
    %v2458 = vadd.f32 0.0, %v2457
    %v2459 = vpop.f32.mrb[0].mxu0
    %2460 = vdwg.mxu0
    %v2461 = vadd.f32 %v2363, %v2431
    %v2462 = vadd.f32 %v2364, %v2434
    %v2463 = vadd.f32 %v2365, %v2439
    %v2464 = vadd.f32 %v2366, %v2442
    %v2465 = vadd.f32 %v2367, %v2447
    %v2466 = vadd.f32 %v2368, %v2450
    %v2467 = vadd.f32 %v2369, %v2455
    %v2468 = vadd.f32 %v2370, %v2458
    %v2469 = vld [vmem:[#allocation2] sm:$0xc0]
    %v2470 = vld [vmem:[#allocation2 + $0x20] sm:$0xf]
    %s2471 = scalar_lea.vmem [#allocation7], 384
    %v2472 = vld [vmem:[%s2471] sm:$0xff]
    %v2473 = vld [vmem:[%s2471 + $0x8] sm:$0xff]
    %v2474 = vld [vmem:[%s2471 + $0x10] sm:$0xff]
    %v2475 = vld [vmem:[%s2471 + $0x18] sm:$0xff]
    %v2476 = vld [vmem:[%s2471 + $0x20] sm:$0xff]
    %v2477 = vld [vmem:[%s2471 + $0x28] sm:$0xff]
    %v2478 = vld [vmem:[%s2471 + $0x30] sm:$0xff]
    %v2479 = vld [vmem:[%s2471 + $0x38] sm:$0xff]
    %v2482 = vrot.slane %v2469, 6
    %v2483 = vrot.slane %v2136, 6
    %v2484 = vsel %vm1840, %v2482, %v2483
    %v2485 = vrot.slane %v2137, 6
    %v2486 = vsel %vm1840, %v2483, %v2485
    %v2487 = vrot.slane %v2138, 6
    %v2488 = vsel %vm1840, %v2485, %v2487
    %v2489 = vrot.slane %v2470, 6
    %v2490 = vsel %vm1840, %v2487, %v2489
    %2495 = vmatprep.subr.bf16.mxu0 0
    %2496 = vmatpush1.bf16.msra.mxu0 %v2472
    %2497 = vmatprep.subr.bf16.mxu0 0
    %2498 = vmatpush1.bf16.msra.mxu0 %v2473
    %2499 = vmatprep.subr.bf16.mxu0 0
    %2500 = vmatpush1.bf16.msra.mxu0 %v2474
    %2501 = vmatprep.subr.bf16.mxu0 0
    %2502 = vmatpush1.bf16.msra.mxu0 %v2475
    %2503 = vmatprep.subr.bf16.mxu0 0
    %2504 = vmatpush1.bf16.msra.mxu0 %v2476
    %2505 = vmatprep.subr.bf16.mxu0 0
    %2506 = vmatpush1.bf16.msra.mxu0 %v2477
    %2507 = vmatprep.subr.bf16.mxu0 0
    %2508 = vmatpush1.bf16.msra.mxu0 %v2478
    %2509 = vmatprep.subr.bf16.mxu0 0
    %2510 = vmatpush1.bf16.msra.mxu0 %v2479
    %2511 = vmatprep.subr.bf16.mxu0 0
    %2512 = vmatpush1.bf16.msra.mxu0 0
    %2513 = vmatprep.subr.bf16.mxu0 0
    %2514 = vmatpush1.bf16.msra.mxu0 0
    %2515 = vmatprep.subr.bf16.mxu0 0
    %2516 = vmatpush1.bf16.msra.mxu0 0
    %2517 = vmatprep.subr.bf16.mxu0 0
    %2518 = vmatpush1.bf16.msra.mxu0 0
    %2519 = vmatprep.subr.bf16.mxu0 0
    %2520 = vmatpush1.bf16.msra.mxu0 0
    %2521 = vmatprep.subr.bf16.mxu0 0
    %2522 = vmatpush1.bf16.msra.mxu0 0
    %2523 = vmatprep.subr.bf16.mxu0 0
    %2524 = vmatpush1.bf16.msra.mxu0 0
    %2525 = vmatprep.subr.bf16.mxu0 0
    %2526 = vmatpush1.bf16.msra.mxu0 0
    %2527 = vmatprep.mubr.bf16.mxu0 0
    %2528 = vmatmul.mubr.bf16.gmra.mrb[0].mxu0 %v2484
    %v2529 = vpop.f32.mrb[0].mxu0
    %v2530 = vadd.f32 0.0, %v2529
    %v2531 = vpop.f32.mrb[0].mxu0
    %v2532 = vpop.f32.mrb[0].mxu0
    %v2533 = vadd.f32 0.0, %v2532
    %v2534 = vpop.f32.mrb[0].mxu0
    %2535 = vmatprep.mubr.bf16.mxu0 0
    %2536 = vmatmul.mubr.bf16.gmra.mrb[0].mxu0 %v2486
    %v2537 = vpop.f32.mrb[0].mxu0
    %v2538 = vadd.f32 0.0, %v2537
    %v2539 = vpop.f32.mrb[0].mxu0
    %v2540 = vpop.f32.mrb[0].mxu0
    %v2541 = vadd.f32 0.0, %v2540
    %v2542 = vpop.f32.mrb[0].mxu0
    %2543 = vmatprep.mubr.bf16.mxu0 0
    %2544 = vmatmul.mubr.bf16.gmra.mrb[0].mxu0 %v2488
    %v2545 = vpop.f32.mrb[0].mxu0
    %v2546 = vadd.f32 0.0, %v2545
    %v2547 = vpop.f32.mrb[0].mxu0
    %v2548 = vpop.f32.mrb[0].mxu0
    %v2549 = vadd.f32 0.0, %v2548
    %v2550 = vpop.f32.mrb[0].mxu0
    %2551 = vmatprep.mubr.bf16.mxu0 0
    %2552 = vmatmul.mubr.bf16.gmra.mrb[0].mxu0 %v2490
    %v2553 = vpop.f32.mrb[0].mxu0
    %v2554 = vadd.f32 0.0, %v2553
    %v2555 = vpop.f32.mrb[0].mxu0
    %v2556 = vpop.f32.mrb[0].mxu0
    %v2557 = vadd.f32 0.0, %v2556
    %v2558 = vpop.f32.mrb[0].mxu0
    %2559 = vdwg.mxu0
    %v2560 = vadd.f32 %v2461, %v2530
    %v2561 = vadd.f32 %v2462, %v2533
    %v2562 = vadd.f32 %v2463, %v2538
    %v2563 = vadd.f32 %v2464, %v2541
    %v2564 = vadd.f32 %v2465, %v2546
    %v2565 = vadd.f32 %v2466, %v2549
    %v2566 = vadd.f32 %v2467, %v2554
    %v2567 = vadd.f32 %v2468, %v2557
    %v2568 = vld [vmem:[#allocation2 + $0x20] sm:$0x1f]
    %s2569 = scalar_lea.vmem [#allocation7], 448
    %v2570 = vld [vmem:[%s2569] sm:$0xff]
    %v2571 = vld [vmem:[%s2569 + $0x8] sm:$0xff]
    %v2572 = vld [vmem:[%s2569 + $0x10] sm:$0xff]
    %v2573 = vld [vmem:[%s2569 + $0x18] sm:$0xff]
    %v2574 = vld [vmem:[%s2569 + $0x20] sm:$0xff]
    %v2575 = vld [vmem:[%s2569 + $0x28] sm:$0xff]
    %v2576 = vld [vmem:[%s2569 + $0x30] sm:$0xff]
    %v2577 = vld [vmem:[%s2569 + $0x38] sm:$0xff]
    %v2579 = vshrl.u32 %v2469, 16
    %v2581 = vrot.slane %v2579, 6
    %v2582 = vshll.u32 %v2469, 16
    %v2584 = vrot.slane %v2582, 7
    %v2585 = vor.u32 %v2581, %v2584
    %v2586 = vrot.slane %v2259, 6
    %v2587 = vrot.slane %v2262, 7
    %v2588 = vor.u32 %v2586, %v2587
    %v2589 = vsel %vm1841, %v2585, %v2588
    %v2590 = vrot.slane %v2268, 6
    %v2591 = vrot.slane %v2271, 7
    %v2592 = vor.u32 %v2590, %v2591
    %v2593 = vsel %vm1841, %v2588, %v2592
    %v2594 = vrot.slane %v2277, 6
    %v2595 = vrot.slane %v2280, 7
    %v2596 = vor.u32 %v2594, %v2595
    %v2597 = vsel %vm1841, %v2592, %v2596
    %v2599 = vshrl.u32 %v2568, 16
    %v2601 = vrot.slane %v2599, 6
    %v2602 = vshll.u32 %v2568, 16
    %v2604 = vrot.slane %v2602, 7
    %v2605 = vor.u32 %v2601, %v2604
    %v2606 = vsel %vm1841, %v2596, %v2605
    %2611 = vmatprep.subr.bf16.mxu0 0
    %2612 = vmatpush1.bf16.msra.mxu0 %v2570
    %2613 = vmatprep.subr.bf16.mxu0 0
    %2614 = vmatpush1.bf16.msra.mxu0 %v2571
    %2615 = vmatprep.subr.bf16.mxu0 0
    %2616 = vmatpush1.bf16.msra.mxu0 %v2572
    %2617 = vmatprep.subr.bf16.mxu0 0
    %2618 = vmatpush1.bf16.msra.mxu0 %v2573
    %2619 = vmatprep.subr.bf16.mxu0 0
    %2620 = vmatpush1.bf16.msra.mxu0 %v2574
    %2621 = vmatprep.subr.bf16.mxu0 0
    %2622 = vmatpush1.bf16.msra.mxu0 %v2575
    %2623 = vmatprep.subr.bf16.mxu0 0
    %2624 = vmatpush1.bf16.msra.mxu0 %v2576
    %2625 = vmatprep.subr.bf16.mxu0 0
    %2626 = vmatpush1.bf16.msra.mxu0 %v2577
    %2627 = vmatprep.subr.bf16.mxu0 0
    %2628 = vmatpush1.bf16.msra.mxu0 0
    %2629 = vmatprep.subr.bf16.mxu0 0
    %2630 = vmatpush1.bf16.msra.mxu0 0
    %2631 = vmatprep.subr.bf16.mxu0 0
    %2632 = vmatpush1.bf16.msra.mxu0 0
    %2633 = vmatprep.subr.bf16.mxu0 0
    %2634 = vmatpush1.bf16.msra.mxu0 0
    %2635 = vmatprep.subr.bf16.mxu0 0
    %2636 = vmatpush1.bf16.msra.mxu0 0
    %2637 = vmatprep.subr.bf16.mxu0 0
    %2638 = vmatpush1.bf16.msra.mxu0 0
    %2639 = vmatprep.subr.bf16.mxu0 0
    %2640 = vmatpush1.bf16.msra.mxu0 0
    %2641 = vmatprep.subr.bf16.mxu0 0
    %2642 = vmatpush1.bf16.msra.mxu0 0
    %2643 = vmatprep.mubr.bf16.mxu0 0
    %2644 = vmatmul.mubr.bf16.gmra.mrb[0].mxu0 %v2589
    %v2645 = vpop.f32.mrb[0].mxu0
    %v2646 = vadd.f32 0.0, %v2645
    %v2647 = vpop.f32.mrb[0].mxu0
    %v2648 = vpop.f32.mrb[0].mxu0
    %v2649 = vadd.f32 0.0, %v2648
    %v2650 = vpop.f32.mrb[0].mxu0
    %2651 = vmatprep.mubr.bf16.mxu0 0
    %2652 = vmatmul.mubr.bf16.gmra.mrb[0].mxu0 %v2593
    %v2653 = vpop.f32.mrb[0].mxu0
    %v2654 = vadd.f32 0.0, %v2653
    %v2655 = vpop.f32.mrb[0].mxu0
    %v2656 = vpop.f32.mrb[0].mxu0
    %v2657 = vadd.f32 0.0, %v2656
    %v2658 = vpop.f32.mrb[0].mxu0
    %2659 = vmatprep.mubr.bf16.mxu0 0
    %2660 = vmatmul.mubr.bf16.gmra.mrb[0].mxu0 %v2597
    %v2661 = vpop.f32.mrb[0].mxu0
    %v2662 = vadd.f32 0.0, %v2661
    %v2663 = vpop.f32.mrb[0].mxu0
    %v2664 = vpop.f32.mrb[0].mxu0
    %v2665 = vadd.f32 0.0, %v2664
    %v2666 = vpop.f32.mrb[0].mxu0
    %2667 = vmatprep.mubr.bf16.mxu0 0
    %2668 = vmatmul.mubr.bf16.gmra.mrb[0].mxu0 %v2606
    %v2669 = vpop.f32.mrb[0].mxu0
    %v2670 = vadd.f32 0.0, %v2669
    %v2671 = vpop.f32.mrb[0].mxu0
    %v2672 = vpop.f32.mrb[0].mxu0
    %v2673 = vadd.f32 0.0, %v2672
    %v2674 = vpop.f32.mrb[0].mxu0
    %2675 = vdwg.mxu0
    %v2676 = vadd.f32 %v2560, %v2646
    %v2677 = vadd.f32 %v2561, %v2649
    %v2678 = vadd.f32 %v2562, %v2654
    %v2679 = vadd.f32 %v2563, %v2657
    %v2680 = vadd.f32 %v2564, %v2662
    %v2681 = vadd.f32 %v2565, %v2665
    %v2682 = vadd.f32 %v2566, %v2670
    %v2683 = vadd.f32 %v2567, %v2673
    %v2684 = vld [vmem:[#allocation2] sm:$0x80]
    %s2685 = scalar_lea.vmem [#allocation7], 512
    %v2686 = vld [vmem:[%s2685] sm:$0xff]
    %v2687 = vld [vmem:[%s2685 + $0x8] sm:$0xff]
    %v2688 = vld [vmem:[%s2685 + $0x10] sm:$0xff]
    %v2689 = vld [vmem:[%s2685 + $0x18] sm:$0xff]
    %v2690 = vld [vmem:[%s2685 + $0x20] sm:$0xff]
    %v2691 = vld [vmem:[%s2685 + $0x28] sm:$0xff]
    %v2692 = vld [vmem:[%s2685 + $0x30] sm:$0xff]
    %v2693 = vld [vmem:[%s2685 + $0x38] sm:$0xff]
    %vm2696 = vcmask 1040384
    %v2697 = vrot.slane %v2684, 7
    %v2698 = vrot.slane %v2136, 7
    %v2699 = vsel %vm2696, %v2697, %v2698
    %v2700 = vrot.slane %v2137, 7
    %v2701 = vsel %vm2696, %v2698, %v2700
    %v2702 = vrot.slane %v2138, 7
    %v2703 = vsel %vm2696, %v2700, %v2702
    %v2704 = vrot.slane %v2568, 7
    %v2705 = vsel %vm2696, %v2702, %v2704
    %2710 = vmatprep.subr.bf16.mxu0 0
    %2711 = vmatpush1.bf16.msra.mxu0 %v2686
    %2712 = vmatprep.subr.bf16.mxu0 0
    %2713 = vmatpush1.bf16.msra.mxu0 %v2687
    %2714 = vmatprep.subr.bf16.mxu0 0
    %2715 = vmatpush1.bf16.msra.mxu0 %v2688
    %2716 = vmatprep.subr.bf16.mxu0 0
    %2717 = vmatpush1.bf16.msra.mxu0 %v2689
    %2718 = vmatprep.subr.bf16.mxu0 0
    %2719 = vmatpush1.bf16.msra.mxu0 %v2690
    %2720 = vmatprep.subr.bf16.mxu0 0
    %2721 = vmatpush1.bf16.msra.mxu0 %v2691
    %2722 = vmatprep.subr.bf16.mxu0 0
    %2723 = vmatpush1.bf16.msra.mxu0 %v2692
    %2724 = vmatprep.subr.bf16.mxu0 0
    %2725 = vmatpush1.bf16.msra.mxu0 %v2693
    %2726 = vmatprep.subr.bf16.mxu0 0
    %2727 = vmatpush1.bf16.msra.mxu0 0
    %2728 = vmatprep.subr.bf16.mxu0 0
    %2729 = vmatpush1.bf16.msra.mxu0 0
    %2730 = vmatprep.subr.bf16.mxu0 0
    %2731 = vmatpush1.bf16.msra.mxu0 0
    %2732 = vmatprep.subr.bf16.mxu0 0
    %2733 = vmatpush1.bf16.msra.mxu0 0
    %2734 = vmatprep.subr.bf16.mxu0 0
    %2735 = vmatpush1.bf16.msra.mxu0 0
    %2736 = vmatprep.subr.bf16.mxu0 0
    %2737 = vmatpush1.bf16.msra.mxu0 0
    %2738 = vmatprep.subr.bf16.mxu0 0
    %2739 = vmatpush1.bf16.msra.mxu0 0
    %2740 = vmatprep.subr.bf16.mxu0 0
    %2741 = vmatpush1.bf16.msra.mxu0 0
    %2742 = vmatprep.mubr.bf16.mxu0 0
    %2743 = vmatmul.mubr.bf16.gmra.mrb[0].mxu0 %v2699
    %v2744 = vpop.f32.mrb[0].mxu0
    %v2745 = vadd.f32 0.0, %v2744
    %v2746 = vpop.f32.mrb[0].mxu0
    %v2747 = vpop.f32.mrb[0].mxu0
    %v2748 = vadd.f32 0.0, %v2747
    %v2749 = vpop.f32.mrb[0].mxu0
    %2750 = vmatprep.mubr.bf16.mxu0 0
    %2751 = vmatmul.mubr.bf16.gmra.mrb[0].mxu0 %v2701
    %v2752 = vpop.f32.mrb[0].mxu0
    %v2753 = vadd.f32 0.0, %v2752
    %v2754 = vpop.f32.mrb[0].mxu0
    %v2755 = vpop.f32.mrb[0].mxu0
    %v2756 = vadd.f32 0.0, %v2755
    %v2757 = vpop.f32.mrb[0].mxu0
    %2758 = vmatprep.mubr.bf16.mxu0 0
    %2759 = vmatmul.mubr.bf16.gmra.mrb[0].mxu0 %v2703
    %v2760 = vpop.f32.mrb[0].mxu0
    %v2761 = vadd.f32 0.0, %v2760
    %v2762 = vpop.f32.mrb[0].mxu0
    %v2763 = vpop.f32.mrb[0].mxu0
    %v2764 = vadd.f32 0.0, %v2763
    %v2765 = vpop.f32.mrb[0].mxu0
    %2766 = vmatprep.mubr.bf16.mxu0 0
    %2767 = vmatmul.mubr.bf16.gmra.mrb[0].mxu0 %v2705
    %v2768 = vpop.f32.mrb[0].mxu0
    %v2769 = vadd.f32 0.0, %v2768
    %v2770 = vpop.f32.mrb[0].mxu0
    %v2771 = vpop.f32.mrb[0].mxu0
    %v2772 = vadd.f32 0.0, %v2771
    %v2773 = vpop.f32.mrb[0].mxu0
    %2774 = vdwg.mxu0
    %v2775 = vadd.f32 %v2676, %v2745
    %v2776 = vadd.f32 %v2677, %v2748
    %v2777 = vadd.f32 %v2678, %v2753
    %v2778 = vadd.f32 %v2679, %v2756
    %v2779 = vadd.f32 %v2680, %v2761
    %v2780 = vadd.f32 %v2681, %v2764
    %v2781 = vadd.f32 %v2682, %v2769
    %v2782 = vadd.f32 %v2683, %v2772
    %v2783 = vsel %vm1771, %v2775, 0.0
    %v2784 = vsel %vm1772, %v2776, 0.0
    %v2785 = vsel %vm1773, %v2777, 0.0
    %v2786 = vsel %vm1774, %v2778, 0.0
    %v2787 = vsel %vm1775, %v2779, 0.0
    %v2788 = vsel %vm1776, %v2780, 0.0
    %v2789 = vsel %vm1777, %v2781, 0.0
    %v2790 = vsel %vm1778, %v2782, 0.0
    %v2791 = vld [vmem:[#allocation20] sm:$0x1]
    %v2792 = vld [vmem:[#allocation21] sm:$0x1]
    %v2793 = vld [vmem:[#allocation23] sm:$0xff]
    %v2794 = vld [vmem:[#allocation23 + $0x8] sm:$0xff]
    %v2795 = vld [vmem:[#allocation23 + $0x10] sm:$0xff]
    %v2796 = vld [vmem:[#allocation23 + $0x18] sm:$0xff]
    %v2797 = vld [vmem:[#allocation23 + $0x20] sm:$0xff]
    %v2798 = vld [vmem:[#allocation23 + $0x28] sm:$0xff]
    %v2799 = vld [vmem:[#allocation23 + $0x30] sm:$0xff]
    %v2800 = vld [vmem:[#allocation23 + $0x38] sm:$0xff]
    %v2801 = vsel %vm289, %v2783, 0.0
    %v2802 = vsel %vm289, %v2784, 0.0
    %v2803 = vadd.f32 %v2801, %v2802
    %v2804 = vsel %vm289, %v2785, 0.0
    %v2805 = vadd.f32 %v2803, %v2804
    %v2806 = vsel %vm289, %v2786, 0.0
    %v2807 = vadd.f32 %v2805, %v2806
    %v2808 = vsel %vm289, %v2787, 0.0
    %v2809 = vadd.f32 %v2807, %v2808
    %v2810 = vsel %vm289, %v2788, 0.0
    %v2811 = vadd.f32 %v2809, %v2810
    %v2812 = vsel %vm289, %v2789, 0.0
    %v2813 = vadd.f32 %v2811, %v2812
    %vm2814 = vcmask 519168
    %v2815 = vsel %vm2814, %v2790, 0.0
    %v2816 = vadd.f32 %v2813, %v2815
    %v2817 = vrot.slane %v2816, 4
    %v2818 = vadd.f32 %v2816, %v2817
    %v2819 = vrot.slane %v2818, 2
    %v2820 = vadd.f32 %v2818, %v2819
    %v2821 = vrot.slane %v2820, 1
    %v2822 = vadd.f32 %v2820, %v2821
    %v2823 = vmul.f32 %v2783, %v2783
    %v2824 = vmul.f32 %v2784, %v2784
    %v2825 = vmul.f32 %v2785, %v2785
    %v2826 = vmul.f32 %v2786, %v2786
    %v2827 = vmul.f32 %v2787, %v2787
    %v2828 = vmul.f32 %v2788, %v2788
    %v2829 = vmul.f32 %v2789, %v2789
    %v2830 = vmul.f32 %v2790, %v2790
    %v2831 = vsel %vm289, %v2823, 0.0
    %v2832 = vsel %vm289, %v2824, 0.0
    %v2833 = vadd.f32 %v2831, %v2832
    %v2834 = vsel %vm289, %v2825, 0.0
    %v2835 = vadd.f32 %v2833, %v2834
    %v2836 = vsel %vm289, %v2826, 0.0
    %v2837 = vadd.f32 %v2835, %v2836
    %v2838 = vsel %vm289, %v2827, 0.0
    %v2839 = vadd.f32 %v2837, %v2838
    %v2840 = vsel %vm289, %v2828, 0.0
    %v2841 = vadd.f32 %v2839, %v2840
    %v2842 = vsel %vm289, %v2829, 0.0
    %v2843 = vadd.f32 %v2841, %v2842
    %v2844 = vsel %vm2814, %v2830, 0.0
    %v2845 = vadd.f32 %v2843, %v2844
    %v2846 = vrot.slane %v2845, 4
    %v2847 = vadd.f32 %v2845, %v2846
    %v2848 = vrot.slane %v2847, 2
    %v2849 = vadd.f32 %v2847, %v2848
    %v2850 = vrot.slane %v2849, 1
    %v2851 = vadd.f32 %v2849, %v2850
    %v2853 = vsel %vm289, %v2822, 0
    %2855 = vmatprep.subr.mxu0 0.0
    %2856 = vmatpush1.msra.mxu0 %v2793
    %2857 = vmatprep.subr.mxu0 0.0
    %2858 = vmatpush1.msra.mxu0 %v2794
    %2859 = vmatprep.subr.mxu0 0.0
    %2860 = vmatpush1.msra.mxu0 %v2795
    %2861 = vmatprep.subr.mxu0 0.0
    %2862 = vmatpush1.msra.mxu0 %v2796
    %2863 = vmatprep.subr.mxu0 0.0
    %2864 = vmatpush1.msra.mxu0 %v2797
    %2865 = vmatprep.subr.mxu0 0.0
    %2866 = vmatpush1.msra.mxu0 %v2798
    %2867 = vmatprep.subr.mxu0 0.0
    %2868 = vmatpush1.msra.mxu0 %v2799
    %2869 = vmatprep.subr.mxu0 0.0
    %2870 = vmatpush1.msra.mxu0 %v2800
    %2871 = vmatprep.subr.mxu0 0.0
    %2872 = vmatpush1.msra.mxu0 0.0
    %2873 = vmatprep.subr.mxu0 0.0
    %2874 = vmatpush1.msra.mxu0 0.0
    %2875 = vmatprep.subr.mxu0 0.0
    %2876 = vmatpush1.msra.mxu0 0.0
    %2877 = vmatprep.subr.mxu0 0.0
    %2878 = vmatpush1.msra.mxu0 0.0
    %2879 = vmatprep.subr.mxu0 0.0
    %2880 = vmatpush1.msra.mxu0 0.0
    %2881 = vmatprep.subr.mxu0 0.0
    %2882 = vmatpush1.msra.mxu0 0.0
    %2883 = vmatprep.subr.mxu0 0.0
    %2884 = vmatpush1.msra.mxu0 0.0
    %2885 = vmatprep.subr.mxu0 0.0
    %2886 = vmatpush1.msra.mxu0 0.0
    %2887 = vmatprep.subr.mxu0 0.0
    %2888 = vmatpush1.msra.mxu0 0.0
    %2889 = vmatprep.subr.mxu0 0.0
    %2890 = vmatpush1.msra.mxu0 0.0
    %2891 = vmatprep.subr.mxu0 0.0
    %2892 = vmatpush1.msra.mxu0 0.0
    %2893 = vmatprep.subr.mxu0 0.0
    %2894 = vmatpush1.msra.mxu0 0.0
    %2895 = vmatprep.subr.mxu0 0.0
    %2896 = vmatpush1.msra.mxu0 0.0
    %2897 = vmatprep.subr.mxu0 0.0
    %2898 = vmatpush1.msra.mxu0 0.0
    %2899 = vmatprep.subr.mxu0 0.0
    %2900 = vmatpush1.msra.mxu0 0.0
    %2901 = vmatprep.subr.mxu0 0.0
    %2902 = vmatpush1.msra.mxu0 0.0
    %2903 = vmatprep.subr.mxu0 0.0
    %2904 = vmatpush1.msra.mxu0 0.0
    %2905 = vmatprep.subr.mxu0 0.0
    %2906 = vmatpush1.msra.mxu0 0.0
    %2907 = vmatprep.subr.mxu0 0.0
    %2908 = vmatpush1.msra.mxu0 0.0
    %2909 = vmatprep.subr.mxu0 0.0
    %2910 = vmatpush1.msra.mxu0 0.0
    %2911 = vmatprep.subr.mxu0 0.0
    %2912 = vmatpush1.msra.mxu0 0.0
    %2913 = vmatprep.subr.mxu0 0.0
    %2914 = vmatpush1.msra.mxu0 0.0
    %2915 = vmatprep.subr.mxu0 0.0
    %2916 = vmatpush1.msra.mxu0 0.0
    %2917 = vmatprep.subr.mxu0 0.0
    %2918 = vmatpush1.msra.mxu0 0.0
    %2919 = vmatprep.mubr.f32.mxu0 0.0
    %2920 = vmatmul.mubr.f32.gmra.mrb[0].mxu0 %v2853
    %v2921 = vpop.f32.mrb[0].mxu0
    %v2922 = vadd.f32 0.0, %v2921
    %v2923 = vpop.f32.mrb[0].mxu0
    %2924 = vdwg.mxu0
    %v2926 = vsel %vm289, %v2851, 0
    %2928 = vmatprep.subr.mxu0 0.0
    %2929 = vmatpush1.msra.mxu0 %v2793
    %2930 = vmatprep.subr.mxu0 0.0
    %2931 = vmatpush1.msra.mxu0 %v2794
    %2932 = vmatprep.subr.mxu0 0.0
    %2933 = vmatpush1.msra.mxu0 %v2795
    %2934 = vmatprep.subr.mxu0 0.0
    %2935 = vmatpush1.msra.mxu0 %v2796
    %2936 = vmatprep.subr.mxu0 0.0
    %2937 = vmatpush1.msra.mxu0 %v2797
    %2938 = vmatprep.subr.mxu0 0.0
    %2939 = vmatpush1.msra.mxu0 %v2798
    %2940 = vmatprep.subr.mxu0 0.0
    %2941 = vmatpush1.msra.mxu0 %v2799
    %2942 = vmatprep.subr.mxu0 0.0
    %2943 = vmatpush1.msra.mxu0 %v2800
    %2944 = vmatprep.subr.mxu0 0.0
    %2945 = vmatpush1.msra.mxu0 0.0
    %2946 = vmatprep.subr.mxu0 0.0
    %2947 = vmatpush1.msra.mxu0 0.0
    %2948 = vmatprep.subr.mxu0 0.0
    %2949 = vmatpush1.msra.mxu0 0.0
    %2950 = vmatprep.subr.mxu0 0.0
    %2951 = vmatpush1.msra.mxu0 0.0
    %2952 = vmatprep.subr.mxu0 0.0
    %2953 = vmatpush1.msra.mxu0 0.0
    %2954 = vmatprep.subr.mxu0 0.0
    %2955 = vmatpush1.msra.mxu0 0.0
    %2956 = vmatprep.subr.mxu0 0.0
    %2957 = vmatpush1.msra.mxu0 0.0
    %2958 = vmatprep.subr.mxu0 0.0
    %2959 = vmatpush1.msra.mxu0 0.0
    %2960 = vmatprep.subr.mxu0 0.0
    %2961 = vmatpush1.msra.mxu0 0.0
    %2962 = vmatprep.subr.mxu0 0.0
    %2963 = vmatpush1.msra.mxu0 0.0
    %2964 = vmatprep.subr.mxu0 0.0
    %2965 = vmatpush1.msra.mxu0 0.0
    %2966 = vmatprep.subr.mxu0 0.0
    %2967 = vmatpush1.msra.mxu0 0.0
    %2968 = vmatprep.subr.mxu0 0.0
    %2969 = vmatpush1.msra.mxu0 0.0
    %2970 = vmatprep.subr.mxu0 0.0
    %2971 = vmatpush1.msra.mxu0 0.0
    %2972 = vmatprep.subr.mxu0 0.0
    %2973 = vmatpush1.msra.mxu0 0.0
    %2974 = vmatprep.subr.mxu0 0.0
    %2975 = vmatpush1.msra.mxu0 0.0
    %2976 = vmatprep.subr.mxu0 0.0
    %2977 = vmatpush1.msra.mxu0 0.0
    %2978 = vmatprep.subr.mxu0 0.0
    %2979 = vmatpush1.msra.mxu0 0.0
    %2980 = vmatprep.subr.mxu0 0.0
    %2981 = vmatpush1.msra.mxu0 0.0
    %2982 = vmatprep.subr.mxu0 0.0
    %2983 = vmatpush1.msra.mxu0 0.0
    %2984 = vmatprep.subr.mxu0 0.0
    %2985 = vmatpush1.msra.mxu0 0.0
    %2986 = vmatprep.subr.mxu0 0.0
    %2987 = vmatpush1.msra.mxu0 0.0
    %2988 = vmatprep.subr.mxu0 0.0
    %2989 = vmatpush1.msra.mxu0 0.0
    %2990 = vmatprep.subr.mxu0 0.0
    %2991 = vmatpush1.msra.mxu0 0.0
    %2992 = vmatprep.mubr.f32.mxu0 0.0
    %2993 = vmatmul.mubr.f32.gmra.mrb[0].mxu0 %v2926
    %v2994 = vpop.f32.mrb[0].mxu0
    %v2995 = vadd.f32 0.0, %v2994
    %v2996 = vpop.f32.mrb[0].mxu0
    %2997 = vdwg.mxu0
    %v2998 = vmul.f32 %v2922, 0.0078125
    %v2999 = vmul.f32 %v2995, 0.0078125
    %v3000 = vmul.f32 %v2998, %v2998
    %v3001 = vsub.f32 %v2999, %v3000
    %v3002 = vadd.f32 %v3001, 1e-05
    %v3003 = vrsqrt.pop %v3002
    %v3004 = vmul.f32 %v2791, %v3003
    %v3005 = vmul.f32 %v2998, %v3004
    %v3006 = vsub.f32 %v2792, %v3005
    %v3008 = vlaneseq
    %v3009 = vshrl.u32 %v3008, 7
    %v3010 = vsub.s32 0, %v3009
    %v3011 = vrot.slane %v3004, %v3010
    %v3013 = vmul.f32 %v2783, %v3011
    %v3014 = vmul.f32 %v2784, %v3011
    %v3015 = vmul.f32 %v2785, %v3011
    %v3016 = vmul.f32 %v2786, %v3011
    %v3017 = vmul.f32 %v2787, %v3011
    %v3018 = vmul.f32 %v2788, %v3011
    %v3019 = vmul.f32 %v2789, %v3011
    %v3020 = vmul.f32 %v2790, %v3011
    %v3022 = vlaneseq
    %v3023 = vshrl.u32 %v3022, 7
    %v3024 = vsub.s32 0, %v3023
    %v3025 = vrot.slane %v3006, %v3024
    %v3027 = vadd.f32 %v3013, %v3025
    %v3028 = vadd.f32 %v3014, %v3025
    %v3029 = vadd.f32 %v3015, %v3025
    %v3030 = vadd.f32 %v3016, %v3025
    %v3031 = vadd.f32 %v3017, %v3025
    %v3032 = vadd.f32 %v3018, %v3025
    %v3033 = vadd.f32 %v3019, %v3025
    %v3034 = vadd.f32 %v3020, %v3025
    %vm3035 = vcmp.ge.f32.partialorder %v3027, 0.0
    %vm3036 = vcmp.ge.f32.partialorder %v3028, 0.0
    %vm3037 = vcmp.ge.f32.partialorder %v3029, 0.0
    %vm3038 = vcmp.ge.f32.partialorder %v3030, 0.0
    %vm3039 = vcmp.ge.f32.partialorder %v3031, 0.0
    %vm3040 = vcmp.ge.f32.partialorder %v3032, 0.0
    %vm3041 = vcmp.ge.f32.partialorder %v3033, 0.0
    %vm3042 = vcmp.ge.f32.partialorder %v3034, 0.0
    %v3043 = vmul.f32 %v3027, 0.2
    %v3044 = vmul.f32 %v3028, 0.2
    %v3045 = vmul.f32 %v3029, 0.2
    %v3046 = vmul.f32 %v3030, 0.2
    %v3047 = vmul.f32 %v3031, 0.2
    %v3048 = vmul.f32 %v3032, 0.2
    %v3049 = vmul.f32 %v3033, 0.2
    %v3050 = vmul.f32 %v3034, 0.2
    %v3051 = vsel %vm3035, %v3027, %v3043
    %v3052 = vsel %vm3036, %v3028, %v3044
    %v3053 = vsel %vm3037, %v3029, %v3045
    %v3054 = vsel %vm3038, %v3030, %v3046
    %v3055 = vsel %vm3039, %v3031, %v3047
    %v3056 = vsel %vm3040, %v3032, %v3048
    %v3057 = vsel %vm3041, %v3033, %v3049
    %v3058 = vsel %vm3042, %v3034, %v3050
    %v3059 = vsel %vm1771, %v3051, 0.0
    %v3060 = vsel %vm1772, %v3052, 0.0
    %v3061 = vsel %vm1773, %v3053, 0.0
    %v3062 = vsel %vm1774, %v3054, 0.0
    %v3063 = vsel %vm1775, %v3055, 0.0
    %v3064 = vsel %vm1776, %v3056, 0.0
    %v3065 = vsel %vm1777, %v3057, 0.0
    %v3066 = vsel %vm1778, %v3058, 0.0
    %v3067 = vpack.c.bf16 %v3060, %v3059
    %v3068 = vpack.c.bf16 %v3062, %v3061
    %v3069 = vpack.c.bf16 %v3064, %v3063
    %v3070 = vpack.c.bf16 %v3066, %v3065
    %v3072 = vshrl.u32 %v3067, 16
    %v3074 = vrot.slane %v3072, 4
    %v3075 = vshll.u32 %v3067, 16
    %v3077 = vrot.slane %v3075, 5
    %v3078 = vor.u32 %v3074, %v3077
    %v3080 = vshrl.u32 %v3068, 16
    %v3082 = vrot.slane %v3080, 4
    %v3083 = vshll.u32 %v3068, 16
    %v3085 = vrot.slane %v3083, 5
    %v3086 = vor.u32 %v3082, %v3085
    %v3087 = vsel %vm249, %v3078, %v3086
    %v3089 = vshrl.u32 %v3069, 16
    %v3091 = vrot.slane %v3089, 4
    %v3092 = vshll.u32 %v3069, 16
    %v3094 = vrot.slane %v3092, 5
    %v3095 = vor.u32 %v3091, %v3094
    %v3096 = vsel %vm249, %v3086, %v3095
    %v3098 = vshrl.u32 %v3070, 16
    %v3100 = vrot.slane %v3098, 4
    %v3101 = vshll.u32 %v3070, 16
    %v3103 = vrot.slane %v3101, 5
    %v3104 = vor.u32 %v3100, %v3103
    %v3105 = vsel %vm249, %v3095, %v3104
    %vm3111 = vcmask 523267
    %vm3112 = vmand %vm3111, %vm1832
    %v3113 = vld [vmem:[#allocation3] sm:$0xf8]
    %v3114 = vsel %vm3112, %v3078, %v3113
    %3115 = vst [vmem:[#allocation3] sm:$0xf8] %v3114
    %3116 = vst.msk [vmem:[#allocation3 + $0x8] sm:$0xff] %vm289, %v3087
    %3117 = vst.msk [vmem:[#allocation3 + $0x10] sm:$0xff] %vm289, %v3096
    %3118 = vst.msk [vmem:[#allocation3 + $0x18] sm:$0xff] %vm289, %v3105
    %vm3119 = vcmask 517120
    %vm3120 = vmand %vm3119, %vm1841
    %v3121 = vld [vmem:[#allocation3 + $0x20] sm:$0x3]
    %v3122 = vsel %vm3120, %v3104, %v3121
    %3123 = vst [vmem:[#allocation3 + $0x20] sm:$0x3] %v3122
    %s3124 = smul.u32 %s321, 8
    %s3125 = smul.u32 %s3124, 1
    %s3126 = sshll.u32 %s3125, 4
    %3127 = dma.done %s224, %s3126
    %v3128 = vld [vmem:[#allocation3] sm:$0xff]
    %v3129 = vld [vmem:[#allocation3 + $0x8] sm:$0xff]
    %v3130 = vld [vmem:[#allocation3 + $0x10] sm:$0xff]
    %v3131 = vld [vmem:[#allocation3 + $0x18] sm:$0x3f]
    %v3132 = vld [vmem:[#allocation8] sm:$0xff]
    %v3133 = vld [vmem:[#allocation8 + $0x8] sm:$0xff]
    %v3134 = vld [vmem:[#allocation8 + $0x10] sm:$0xff]
    %v3135 = vld [vmem:[#allocation8 + $0x18] sm:$0xff]
    %v3136 = vld [vmem:[#allocation3 + $0x18] sm:$0x7f]
    %s3137 = scalar_lea.vmem [#allocation8], 32
    %v3138 = vld [vmem:[%s3137] sm:$0xff]
    %v3139 = vld [vmem:[%s3137 + $0x8] sm:$0xff]
    %v3140 = vld [vmem:[%s3137 + $0x10] sm:$0xff]
    %v3141 = vld [vmem:[%s3137 + $0x18] sm:$0xff]
    %v3143 = vshrl.u32 %v3128, 16
    %v3145 = vshll.u32 %v3128, 16
    %v3147 = vrot.slane %v3145, 1
    %v3148 = vor.u32 %v3143, %v3147
    %v3150 = vshll.u32 %v3129, 16
    %v3152 = vrot.slane %v3150, 1
    %v3153 = vsel %vm392, %v3148, %v3152
    %v3154 = vshrl.u32 %v3129, 16
    %v3156 = vor.u32 %v3154, %v3152
    %v3158 = vshll.u32 %v3130, 16
    %v3160 = vrot.slane %v3158, 1
    %v3161 = vsel %vm392, %v3156, %v3160
    %v3162 = vshrl.u32 %v3130, 16
    %v3164 = vor.u32 %v3162, %v3160
    %v3166 = vshll.u32 %v3136, 16
    %v3168 = vrot.slane %v3166, 1
    %v3169 = vsel %vm392, %v3164, %v3168
    %v3170 = vshrl.u32 %v3136, 16
    %v3172 = vor.u32 %v3170, %v3168
    %v3174 = vsel %vm289, %v3153, 0
    %v3177 = vsel %vm289, %v3161, 0
    %v3180 = vsel %vm289, %v3169, 0
    %v3183 = vsel %vm289, %v3172, 0
    %3185 = vmatprep.subr.bf16.mxu0 0
    %3186 = vmatpush1.bf16.msra.mxu0 %v3138
    %3187 = vmatprep.subr.bf16.mxu0 0
    %3188 = vmatpush1.bf16.msra.mxu0 %v3139
    %3189 = vmatprep.subr.bf16.mxu0 0
    %3190 = vmatpush1.bf16.msra.mxu0 %v3140
    %3191 = vmatprep.subr.bf16.mxu0 0
    %3192 = vmatpush1.bf16.msra.mxu0 %v3141
    %3193 = vmatprep.subr.bf16.mxu0 0
    %3194 = vmatpush1.bf16.msra.mxu0 0
    %3195 = vmatprep.subr.bf16.mxu0 0
    %3196 = vmatpush1.bf16.msra.mxu0 0
    %3197 = vmatprep.subr.bf16.mxu0 0
    %3198 = vmatpush1.bf16.msra.mxu0 0
    %3199 = vmatprep.subr.bf16.mxu0 0
    %3200 = vmatpush1.bf16.msra.mxu0 0
    %3201 = vmatprep.subr.bf16.mxu0 0
    %3202 = vmatpush1.bf16.msra.mxu0 0
    %3203 = vmatprep.subr.bf16.mxu0 0
    %3204 = vmatpush1.bf16.msra.mxu0 0
    %3205 = vmatprep.subr.bf16.mxu0 0
    %3206 = vmatpush1.bf16.msra.mxu0 0
    %3207 = vmatprep.subr.bf16.mxu0 0
    %3208 = vmatpush1.bf16.msra.mxu0 0
    %3209 = vmatprep.subr.bf16.mxu0 0
    %3210 = vmatpush1.bf16.msra.mxu0 0
    %3211 = vmatprep.subr.bf16.mxu0 0
    %3212 = vmatpush1.bf16.msra.mxu0 0
    %3213 = vmatprep.subr.bf16.mxu0 0
    %3214 = vmatpush1.bf16.msra.mxu0 0
    %3215 = vmatprep.subr.bf16.mxu0 0
    %3216 = vmatpush1.bf16.msra.mxu0 0
    %3217 = vmatprep.mubr.bf16.mxu0 0
    %3218 = vmatmul.mubr.bf16.gmra.mrb[0].mxu0 %v3174
    %v3219 = vpop.f32.mrb[0].mxu0
    %v3220 = vadd.f32 0.0, %v3219
    %v3221 = vpop.f32.mrb[0].mxu0
    %v3222 = vpop.f32.mrb[0].mxu0
    %v3223 = vadd.f32 0.0, %v3222
    %v3224 = vpop.f32.mrb[0].mxu0
    %3225 = vmatprep.mubr.bf16.mxu0 0
    %3226 = vmatmul.mubr.bf16.gmra.mrb[0].mxu0 %v3177
    %v3227 = vpop.f32.mrb[0].mxu0
    %v3228 = vadd.f32 0.0, %v3227
    %v3229 = vpop.f32.mrb[0].mxu0
    %v3230 = vpop.f32.mrb[0].mxu0
    %v3231 = vadd.f32 0.0, %v3230
    %v3232 = vpop.f32.mrb[0].mxu0
    %3233 = vmatprep.mubr.bf16.mxu0 0
    %3234 = vmatmul.mubr.bf16.gmra.mrb[0].mxu0 %v3180
    %v3235 = vpop.f32.mrb[0].mxu0
    %v3236 = vadd.f32 0.0, %v3235
    %v3237 = vpop.f32.mrb[0].mxu0
    %v3238 = vpop.f32.mrb[0].mxu0
    %v3239 = vadd.f32 0.0, %v3238
    %v3240 = vpop.f32.mrb[0].mxu0
    %3241 = vmatprep.mubr.bf16.mxu0 0
    %3242 = vmatmul.mubr.bf16.gmra.mrb[0].mxu0 %v3183
    %v3243 = vpop.f32.mrb[0].mxu0
    %v3244 = vadd.f32 0.0, %v3243
    %v3245 = vpop.f32.mrb[0].mxu0
    %v3246 = vpop.f32.mrb[0].mxu0
    %v3247 = vadd.f32 0.0, %v3246
    %v3248 = vpop.f32.mrb[0].mxu0
    %3249 = vdwg.mxu0
    %v3250 = vsel %vm289, %v3128, 0
    %v3252 = vsel %vm289, %v3129, 0
    %v3254 = vsel %vm289, %v3130, 0
    %v3257 = vsel %vm289, %v3131, 0
    %3259 = vmatprep.subr.bf16.mxu0 0
    %3260 = vmatpush1.bf16.msra.mxu0 %v3132
    %3261 = vmatprep.subr.bf16.mxu0 0
    %3262 = vmatpush1.bf16.msra.mxu0 %v3133
    %3263 = vmatprep.subr.bf16.mxu0 0
    %3264 = vmatpush1.bf16.msra.mxu0 %v3134
    %3265 = vmatprep.subr.bf16.mxu0 0
    %3266 = vmatpush1.bf16.msra.mxu0 %v3135
    %3267 = vmatprep.subr.bf16.mxu0 0
    %3268 = vmatpush1.bf16.msra.mxu0 0
    %3269 = vmatprep.subr.bf16.mxu0 0
    %3270 = vmatpush1.bf16.msra.mxu0 0
    %3271 = vmatprep.subr.bf16.mxu0 0
    %3272 = vmatpush1.bf16.msra.mxu0 0
    %3273 = vmatprep.subr.bf16.mxu0 0
    %3274 = vmatpush1.bf16.msra.mxu0 0
    %3275 = vmatprep.subr.bf16.mxu0 0
    %3276 = vmatpush1.bf16.msra.mxu0 0
    %3277 = vmatprep.subr.bf16.mxu0 0
    %3278 = vmatpush1.bf16.msra.mxu0 0
    %3279 = vmatprep.subr.bf16.mxu0 0
    %3280 = vmatpush1.bf16.msra.mxu0 0
    %3281 = vmatprep.subr.bf16.mxu0 0
    %3282 = vmatpush1.bf16.msra.mxu0 0
    %3283 = vmatprep.subr.bf16.mxu0 0
    %3284 = vmatpush1.bf16.msra.mxu0 0
    %3285 = vmatprep.subr.bf16.mxu0 0
    %3286 = vmatpush1.bf16.msra.mxu0 0
    %3287 = vmatprep.subr.bf16.mxu0 0
    %3288 = vmatpush1.bf16.msra.mxu0 0
    %3289 = vmatprep.subr.bf16.mxu0 0
    %3290 = vmatpush1.bf16.msra.mxu0 0
    %3291 = vmatprep.mubr.bf16.mxu0 0
    %3292 = vmatmul.mubr.bf16.gmra.mrb[0].mxu0 %v3250
    %v3293 = vpop.f32.mrb[0].mxu0
    %v3294 = vadd.f32 %v3220, %v3293
    %v3295 = vpop.f32.mrb[0].mxu0
    %v3296 = vpop.f32.mrb[0].mxu0
    %v3297 = vadd.f32 %v3223, %v3296
    %v3298 = vpop.f32.mrb[0].mxu0
    %3299 = vmatprep.mubr.bf16.mxu0 0
    %3300 = vmatmul.mubr.bf16.gmra.mrb[0].mxu0 %v3252
    %v3301 = vpop.f32.mrb[0].mxu0
    %v3302 = vadd.f32 %v3228, %v3301
    %v3303 = vpop.f32.mrb[0].mxu0
    %v3304 = vpop.f32.mrb[0].mxu0
    %v3305 = vadd.f32 %v3231, %v3304
    %v3306 = vpop.f32.mrb[0].mxu0
    %3307 = vmatprep.mubr.bf16.mxu0 0
    %3308 = vmatmul.mubr.bf16.gmra.mrb[0].mxu0 %v3254
    %v3309 = vpop.f32.mrb[0].mxu0
    %v3310 = vadd.f32 %v3236, %v3309
    %v3311 = vpop.f32.mrb[0].mxu0
    %v3312 = vpop.f32.mrb[0].mxu0
    %v3313 = vadd.f32 %v3239, %v3312
    %v3314 = vpop.f32.mrb[0].mxu0
    %3315 = vmatprep.mubr.bf16.mxu0 0
    %3316 = vmatmul.mubr.bf16.gmra.mrb[0].mxu0 %v3257
    %v3317 = vpop.f32.mrb[0].mxu0
    %v3318 = vadd.f32 %v3244, %v3317
    %v3319 = vpop.f32.mrb[0].mxu0
    %v3320 = vpop.f32.mrb[0].mxu0
    %v3321 = vadd.f32 %v3247, %v3320
    %v3322 = vpop.f32.mrb[0].mxu0
    %3323 = vdwg.mxu0
    %v3324 = vld [vmem:[#allocation3] sm:$0xfe]
    %s3325 = scalar_lea.vmem [#allocation8], 64
    %v3326 = vld [vmem:[%s3325] sm:$0xff]
    %v3327 = vld [vmem:[%s3325 + $0x8] sm:$0xff]
    %v3328 = vld [vmem:[%s3325 + $0x10] sm:$0xff]
    %v3329 = vld [vmem:[%s3325 + $0x18] sm:$0xff]
    %v3334 = vrot.slane %v3324, 1
    %v3335 = vrot.slane %v3129, 1
    %v3336 = vsel %vm638, %v3334, %v3335
    %v3337 = vrot.slane %v3130, 1
    %v3338 = vsel %vm638, %v3335, %v3337
    %v3339 = vrot.slane %v3136, 1
    %v3340 = vsel %vm638, %v3337, %v3339
    %v3342 = vsel %vm289, %v3336, 0
    %v3345 = vsel %vm289, %v3338, 0
    %v3348 = vsel %vm289, %v3340, 0
    %v3351 = vsel %vm289, %v3339, 0
    %3353 = vmatprep.subr.bf16.mxu0 0
    %3354 = vmatpush1.bf16.msra.mxu0 %v3326
    %3355 = vmatprep.subr.bf16.mxu0 0
    %3356 = vmatpush1.bf16.msra.mxu0 %v3327
    %3357 = vmatprep.subr.bf16.mxu0 0
    %3358 = vmatpush1.bf16.msra.mxu0 %v3328
    %3359 = vmatprep.subr.bf16.mxu0 0
    %3360 = vmatpush1.bf16.msra.mxu0 %v3329
    %3361 = vmatprep.subr.bf16.mxu0 0
    %3362 = vmatpush1.bf16.msra.mxu0 0
    %3363 = vmatprep.subr.bf16.mxu0 0
    %3364 = vmatpush1.bf16.msra.mxu0 0
    %3365 = vmatprep.subr.bf16.mxu0 0
    %3366 = vmatpush1.bf16.msra.mxu0 0
    %3367 = vmatprep.subr.bf16.mxu0 0
    %3368 = vmatpush1.bf16.msra.mxu0 0
    %3369 = vmatprep.subr.bf16.mxu0 0
    %3370 = vmatpush1.bf16.msra.mxu0 0
    %3371 = vmatprep.subr.bf16.mxu0 0
    %3372 = vmatpush1.bf16.msra.mxu0 0
    %3373 = vmatprep.subr.bf16.mxu0 0
    %3374 = vmatpush1.bf16.msra.mxu0 0
    %3375 = vmatprep.subr.bf16.mxu0 0
    %3376 = vmatpush1.bf16.msra.mxu0 0
    %3377 = vmatprep.subr.bf16.mxu0 0
    %3378 = vmatpush1.bf16.msra.mxu0 0
    %3379 = vmatprep.subr.bf16.mxu0 0
    %3380 = vmatpush1.bf16.msra.mxu0 0
    %3381 = vmatprep.subr.bf16.mxu0 0
    %3382 = vmatpush1.bf16.msra.mxu0 0
    %3383 = vmatprep.subr.bf16.mxu0 0
    %3384 = vmatpush1.bf16.msra.mxu0 0
    %3385 = vmatprep.mubr.bf16.mxu0 0
    %3386 = vmatmul.mubr.bf16.gmra.mrb[0].mxu0 %v3342
    %v3387 = vpop.f32.mrb[0].mxu0
    %v3388 = vadd.f32 0.0, %v3387
    %v3389 = vpop.f32.mrb[0].mxu0
    %v3390 = vpop.f32.mrb[0].mxu0
    %v3391 = vadd.f32 0.0, %v3390
    %v3392 = vpop.f32.mrb[0].mxu0
    %3393 = vmatprep.mubr.bf16.mxu0 0
    %3394 = vmatmul.mubr.bf16.gmra.mrb[0].mxu0 %v3345
    %v3395 = vpop.f32.mrb[0].mxu0
    %v3396 = vadd.f32 0.0, %v3395
    %v3397 = vpop.f32.mrb[0].mxu0
    %v3398 = vpop.f32.mrb[0].mxu0
    %v3399 = vadd.f32 0.0, %v3398
    %v3400 = vpop.f32.mrb[0].mxu0
    %3401 = vmatprep.mubr.bf16.mxu0 0
    %3402 = vmatmul.mubr.bf16.gmra.mrb[0].mxu0 %v3348
    %v3403 = vpop.f32.mrb[0].mxu0
    %v3404 = vadd.f32 0.0, %v3403
    %v3405 = vpop.f32.mrb[0].mxu0
    %v3406 = vpop.f32.mrb[0].mxu0
    %v3407 = vadd.f32 0.0, %v3406
    %v3408 = vpop.f32.mrb[0].mxu0
    %3409 = vmatprep.mubr.bf16.mxu0 0
    %3410 = vmatmul.mubr.bf16.gmra.mrb[0].mxu0 %v3351
    %v3411 = vpop.f32.mrb[0].mxu0
    %v3412 = vadd.f32 0.0, %v3411
    %v3413 = vpop.f32.mrb[0].mxu0
    %v3414 = vpop.f32.mrb[0].mxu0
    %v3415 = vadd.f32 0.0, %v3414
    %v3416 = vpop.f32.mrb[0].mxu0
    %3417 = vdwg.mxu0
    %v3418 = vadd.f32 %v3294, %v3388
    %v3419 = vadd.f32 %v3297, %v3391
    %v3420 = vadd.f32 %v3302, %v3396
    %v3421 = vadd.f32 %v3305, %v3399
    %v3422 = vadd.f32 %v3310, %v3404
    %v3423 = vadd.f32 %v3313, %v3407
    %v3424 = vadd.f32 %v3318, %v3412
    %v3425 = vadd.f32 %v3321, %v3415
    %v3426 = vld [vmem:[#allocation3] sm:$0xf8]
    %v3427 = vld [vmem:[#allocation3 + $0x8] sm:$0xff]
    %v3428 = vld [vmem:[#allocation3 + $0x10] sm:$0xff]
    %v3429 = vld [vmem:[#allocation3 + $0x18] sm:$0xff]
    %v3430 = vld [vmem:[#allocation3 + $0x20] sm:$0x1]
    %s3431 = scalar_lea.vmem [#allocation8], 96
    %v3432 = vld [vmem:[%s3431] sm:$0xff]
    %v3433 = vld [vmem:[%s3431 + $0x8] sm:$0xff]
    %v3434 = vld [vmem:[%s3431 + $0x10] sm:$0xff]
    %v3435 = vld [vmem:[%s3431 + $0x18] sm:$0xff]
    %v3441 = vrot.slane %v3426, 3
    %v3442 = vrot.slane %v3427, 3
    %v3443 = vsel %vm801, %v3441, %v3442
    %v3444 = vrot.slane %v3428, 3
    %v3445 = vsel %vm801, %v3442, %v3444
    %v3446 = vrot.slane %v3429, 3
    %v3447 = vsel %vm801, %v3444, %v3446
    %v3448 = vrot.slane %v3430, 3
    %v3449 = vsel %vm801, %v3446, %v3448
    %v3451 = vsel %vm289, %v3443, 0
    %v3454 = vsel %vm289, %v3445, 0
    %v3457 = vsel %vm289, %v3447, 0
    %v3460 = vsel %vm289, %v3449, 0
    %3462 = vmatprep.subr.bf16.mxu0 0
    %3463 = vmatpush1.bf16.msra.mxu0 %v3432
    %3464 = vmatprep.subr.bf16.mxu0 0
    %3465 = vmatpush1.bf16.msra.mxu0 %v3433
    %3466 = vmatprep.subr.bf16.mxu0 0
    %3467 = vmatpush1.bf16.msra.mxu0 %v3434
    %3468 = vmatprep.subr.bf16.mxu0 0
    %3469 = vmatpush1.bf16.msra.mxu0 %v3435
    %3470 = vmatprep.subr.bf16.mxu0 0
    %3471 = vmatpush1.bf16.msra.mxu0 0
    %3472 = vmatprep.subr.bf16.mxu0 0
    %3473 = vmatpush1.bf16.msra.mxu0 0
    %3474 = vmatprep.subr.bf16.mxu0 0
    %3475 = vmatpush1.bf16.msra.mxu0 0
    %3476 = vmatprep.subr.bf16.mxu0 0
    %3477 = vmatpush1.bf16.msra.mxu0 0
    %3478 = vmatprep.subr.bf16.mxu0 0
    %3479 = vmatpush1.bf16.msra.mxu0 0
    %3480 = vmatprep.subr.bf16.mxu0 0
    %3481 = vmatpush1.bf16.msra.mxu0 0
    %3482 = vmatprep.subr.bf16.mxu0 0
    %3483 = vmatpush1.bf16.msra.mxu0 0
    %3484 = vmatprep.subr.bf16.mxu0 0
    %3485 = vmatpush1.bf16.msra.mxu0 0
    %3486 = vmatprep.subr.bf16.mxu0 0
    %3487 = vmatpush1.bf16.msra.mxu0 0
    %3488 = vmatprep.subr.bf16.mxu0 0
    %3489 = vmatpush1.bf16.msra.mxu0 0
    %3490 = vmatprep.subr.bf16.mxu0 0
    %3491 = vmatpush1.bf16.msra.mxu0 0
    %3492 = vmatprep.subr.bf16.mxu0 0
    %3493 = vmatpush1.bf16.msra.mxu0 0
    %3494 = vmatprep.mubr.bf16.mxu0 0
    %3495 = vmatmul.mubr.bf16.gmra.mrb[0].mxu0 %v3451
    %v3496 = vpop.f32.mrb[0].mxu0
    %v3497 = vadd.f32 0.0, %v3496
    %v3498 = vpop.f32.mrb[0].mxu0
    %v3499 = vpop.f32.mrb[0].mxu0
    %v3500 = vadd.f32 0.0, %v3499
    %v3501 = vpop.f32.mrb[0].mxu0
    %3502 = vmatprep.mubr.bf16.mxu0 0
    %3503 = vmatmul.mubr.bf16.gmra.mrb[0].mxu0 %v3454
    %v3504 = vpop.f32.mrb[0].mxu0
    %v3505 = vadd.f32 0.0, %v3504
    %v3506 = vpop.f32.mrb[0].mxu0
    %v3507 = vpop.f32.mrb[0].mxu0
    %v3508 = vadd.f32 0.0, %v3507
    %v3509 = vpop.f32.mrb[0].mxu0
    %3510 = vmatprep.mubr.bf16.mxu0 0
    %3511 = vmatmul.mubr.bf16.gmra.mrb[0].mxu0 %v3457
    %v3512 = vpop.f32.mrb[0].mxu0
    %v3513 = vadd.f32 0.0, %v3512
    %v3514 = vpop.f32.mrb[0].mxu0
    %v3515 = vpop.f32.mrb[0].mxu0
    %v3516 = vadd.f32 0.0, %v3515
    %v3517 = vpop.f32.mrb[0].mxu0
    %3518 = vmatprep.mubr.bf16.mxu0 0
    %3519 = vmatmul.mubr.bf16.gmra.mrb[0].mxu0 %v3460
    %v3520 = vpop.f32.mrb[0].mxu0
    %v3521 = vadd.f32 0.0, %v3520
    %v3522 = vpop.f32.mrb[0].mxu0
    %v3523 = vpop.f32.mrb[0].mxu0
    %v3524 = vadd.f32 0.0, %v3523
    %v3525 = vpop.f32.mrb[0].mxu0
    %3526 = vdwg.mxu0
    %v3527 = vadd.f32 %v3418, %v3497
    %v3528 = vadd.f32 %v3419, %v3500
    %v3529 = vadd.f32 %v3420, %v3505
    %v3530 = vadd.f32 %v3421, %v3508
    %v3531 = vadd.f32 %v3422, %v3513
    %v3532 = vadd.f32 %v3423, %v3516
    %v3533 = vadd.f32 %v3424, %v3521
    %v3534 = vadd.f32 %v3425, %v3524
    %v3535 = vld [vmem:[#allocation3 + $0x20] sm:$0x3]
    %s3536 = scalar_lea.vmem [#allocation8], 128
    %v3537 = vld [vmem:[%s3536] sm:$0xff]
    %v3538 = vld [vmem:[%s3536 + $0x8] sm:$0xff]
    %v3539 = vld [vmem:[%s3536 + $0x10] sm:$0xff]
    %v3540 = vld [vmem:[%s3536 + $0x18] sm:$0xff]
    %v3542 = vshrl.u32 %v3426, 16
    %v3544 = vrot.slane %v3542, 3
    %v3545 = vshll.u32 %v3426, 16
    %v3547 = vrot.slane %v3545, 4
    %v3548 = vor.u32 %v3544, %v3547
    %v3550 = vshrl.u32 %v3427, 16
    %v3552 = vrot.slane %v3550, 3
    %v3553 = vshll.u32 %v3427, 16
    %v3555 = vrot.slane %v3553, 4
    %v3556 = vor.u32 %v3552, %v3555
    %v3557 = vsel %vm928, %v3548, %v3556
    %v3559 = vshrl.u32 %v3428, 16
    %v3561 = vrot.slane %v3559, 3
    %v3562 = vshll.u32 %v3428, 16
    %v3564 = vrot.slane %v3562, 4
    %v3565 = vor.u32 %v3561, %v3564
    %v3566 = vsel %vm928, %v3556, %v3565
    %v3568 = vshrl.u32 %v3429, 16
    %v3570 = vrot.slane %v3568, 3
    %v3571 = vshll.u32 %v3429, 16
    %v3573 = vrot.slane %v3571, 4
    %v3574 = vor.u32 %v3570, %v3573
    %v3575 = vsel %vm928, %v3565, %v3574
    %v3577 = vshrl.u32 %v3535, 16
    %v3579 = vrot.slane %v3577, 3
    %v3580 = vshll.u32 %v3535, 16
    %v3582 = vrot.slane %v3580, 4
    %v3583 = vor.u32 %v3579, %v3582
    %v3584 = vsel %vm928, %v3574, %v3583
    %v3586 = vsel %vm289, %v3557, 0
    %v3589 = vsel %vm289, %v3566, 0
    %v3592 = vsel %vm289, %v3575, 0
    %v3595 = vsel %vm289, %v3584, 0
    %3597 = vmatprep.subr.bf16.mxu0 0
    %3598 = vmatpush1.bf16.msra.mxu0 %v3537
    %3599 = vmatprep.subr.bf16.mxu0 0
    %3600 = vmatpush1.bf16.msra.mxu0 %v3538
    %3601 = vmatprep.subr.bf16.mxu0 0
    %3602 = vmatpush1.bf16.msra.mxu0 %v3539
    %3603 = vmatprep.subr.bf16.mxu0 0
    %3604 = vmatpush1.bf16.msra.mxu0 %v3540
    %3605 = vmatprep.subr.bf16.mxu0 0
    %3606 = vmatpush1.bf16.msra.mxu0 0
    %3607 = vmatprep.subr.bf16.mxu0 0
    %3608 = vmatpush1.bf16.msra.mxu0 0
    %3609 = vmatprep.subr.bf16.mxu0 0
    %3610 = vmatpush1.bf16.msra.mxu0 0
    %3611 = vmatprep.subr.bf16.mxu0 0
    %3612 = vmatpush1.bf16.msra.mxu0 0
    %3613 = vmatprep.subr.bf16.mxu0 0
    %3614 = vmatpush1.bf16.msra.mxu0 0
    %3615 = vmatprep.subr.bf16.mxu0 0
    %3616 = vmatpush1.bf16.msra.mxu0 0
    %3617 = vmatprep.subr.bf16.mxu0 0
    %3618 = vmatpush1.bf16.msra.mxu0 0
    %3619 = vmatprep.subr.bf16.mxu0 0
    %3620 = vmatpush1.bf16.msra.mxu0 0
    %3621 = vmatprep.subr.bf16.mxu0 0
    %3622 = vmatpush1.bf16.msra.mxu0 0
    %3623 = vmatprep.subr.bf16.mxu0 0
    %3624 = vmatpush1.bf16.msra.mxu0 0
    %3625 = vmatprep.subr.bf16.mxu0 0
    %3626 = vmatpush1.bf16.msra.mxu0 0
    %3627 = vmatprep.subr.bf16.mxu0 0
    %3628 = vmatpush1.bf16.msra.mxu0 0
    %3629 = vmatprep.mubr.bf16.mxu0 0
    %3630 = vmatmul.mubr.bf16.gmra.mrb[0].mxu0 %v3586
    %v3631 = vpop.f32.mrb[0].mxu0
    %v3632 = vadd.f32 0.0, %v3631
    %v3633 = vpop.f32.mrb[0].mxu0
    %v3634 = vpop.f32.mrb[0].mxu0
    %v3635 = vadd.f32 0.0, %v3634
    %v3636 = vpop.f32.mrb[0].mxu0
    %3637 = vmatprep.mubr.bf16.mxu0 0
    %3638 = vmatmul.mubr.bf16.gmra.mrb[0].mxu0 %v3589
    %v3639 = vpop.f32.mrb[0].mxu0
    %v3640 = vadd.f32 0.0, %v3639
    %v3641 = vpop.f32.mrb[0].mxu0
    %v3642 = vpop.f32.mrb[0].mxu0
    %v3643 = vadd.f32 0.0, %v3642
    %v3644 = vpop.f32.mrb[0].mxu0
    %3645 = vmatprep.mubr.bf16.mxu0 0
    %3646 = vmatmul.mubr.bf16.gmra.mrb[0].mxu0 %v3592
    %v3647 = vpop.f32.mrb[0].mxu0
    %v3648 = vadd.f32 0.0, %v3647
    %v3649 = vpop.f32.mrb[0].mxu0
    %v3650 = vpop.f32.mrb[0].mxu0
    %v3651 = vadd.f32 0.0, %v3650
    %v3652 = vpop.f32.mrb[0].mxu0
    %3653 = vmatprep.mubr.bf16.mxu0 0
    %3654 = vmatmul.mubr.bf16.gmra.mrb[0].mxu0 %v3595
    %v3655 = vpop.f32.mrb[0].mxu0
    %v3656 = vadd.f32 0.0, %v3655
    %v3657 = vpop.f32.mrb[0].mxu0
    %v3658 = vpop.f32.mrb[0].mxu0
    %v3659 = vadd.f32 0.0, %v3658
    %v3660 = vpop.f32.mrb[0].mxu0
    %3661 = vdwg.mxu0
    %v3662 = vadd.f32 %v3527, %v3632
    %v3663 = vadd.f32 %v3528, %v3635
    %v3664 = vadd.f32 %v3529, %v3640
    %v3665 = vadd.f32 %v3530, %v3643
    %v3666 = vadd.f32 %v3531, %v3648
    %v3667 = vadd.f32 %v3532, %v3651
    %v3668 = vadd.f32 %v3533, %v3656
    %v3669 = vadd.f32 %v3534, %v3659
    %v3670 = vld [vmem:[#allocation3] sm:$0xf0]
    %s3671 = scalar_lea.vmem [#allocation8], 160
    %v3672 = vld [vmem:[%s3671] sm:$0xff]
    %v3673 = vld [vmem:[%s3671 + $0x8] sm:$0xff]
    %v3674 = vld [vmem:[%s3671 + $0x10] sm:$0xff]
    %v3675 = vld [vmem:[%s3671 + $0x18] sm:$0xff]
    %v3678 = vrot.slane %v3670, 4
    %v3679 = vrot.slane %v3427, 4
    %v3680 = vsel %vm248, %v3678, %v3679
    %v3681 = vrot.slane %v3428, 4
    %v3682 = vsel %vm248, %v3679, %v3681
    %v3683 = vrot.slane %v3429, 4
    %v3684 = vsel %vm248, %v3681, %v3683
    %v3685 = vrot.slane %v3535, 4
    %v3686 = vsel %vm248, %v3683, %v3685
    %v3688 = vsel %vm289, %v3680, 0
    %v3691 = vsel %vm289, %v3682, 0
    %v3694 = vsel %vm289, %v3684, 0
    %v3697 = vsel %vm289, %v3686, 0
    %3699 = vmatprep.subr.bf16.mxu0 0
    %3700 = vmatpush1.bf16.msra.mxu0 %v3672
    %3701 = vmatprep.subr.bf16.mxu0 0
    %3702 = vmatpush1.bf16.msra.mxu0 %v3673
    %3703 = vmatprep.subr.bf16.mxu0 0
    %3704 = vmatpush1.bf16.msra.mxu0 %v3674
    %3705 = vmatprep.subr.bf16.mxu0 0
    %3706 = vmatpush1.bf16.msra.mxu0 %v3675
    %3707 = vmatprep.subr.bf16.mxu0 0
    %3708 = vmatpush1.bf16.msra.mxu0 0
    %3709 = vmatprep.subr.bf16.mxu0 0
    %3710 = vmatpush1.bf16.msra.mxu0 0
    %3711 = vmatprep.subr.bf16.mxu0 0
    %3712 = vmatpush1.bf16.msra.mxu0 0
    %3713 = vmatprep.subr.bf16.mxu0 0
    %3714 = vmatpush1.bf16.msra.mxu0 0
    %3715 = vmatprep.subr.bf16.mxu0 0
    %3716 = vmatpush1.bf16.msra.mxu0 0
    %3717 = vmatprep.subr.bf16.mxu0 0
    %3718 = vmatpush1.bf16.msra.mxu0 0
    %3719 = vmatprep.subr.bf16.mxu0 0
    %3720 = vmatpush1.bf16.msra.mxu0 0
    %3721 = vmatprep.subr.bf16.mxu0 0
    %3722 = vmatpush1.bf16.msra.mxu0 0
    %3723 = vmatprep.subr.bf16.mxu0 0
    %3724 = vmatpush1.bf16.msra.mxu0 0
    %3725 = vmatprep.subr.bf16.mxu0 0
    %3726 = vmatpush1.bf16.msra.mxu0 0
    %3727 = vmatprep.subr.bf16.mxu0 0
    %3728 = vmatpush1.bf16.msra.mxu0 0
    %3729 = vmatprep.subr.bf16.mxu0 0
    %3730 = vmatpush1.bf16.msra.mxu0 0
    %3731 = vmatprep.mubr.bf16.mxu0 0
    %3732 = vmatmul.mubr.bf16.gmra.mrb[0].mxu0 %v3688
    %v3733 = vpop.f32.mrb[0].mxu0
    %v3734 = vadd.f32 0.0, %v3733
    %v3735 = vpop.f32.mrb[0].mxu0
    %v3736 = vpop.f32.mrb[0].mxu0
    %v3737 = vadd.f32 0.0, %v3736
    %v3738 = vpop.f32.mrb[0].mxu0
    %3739 = vmatprep.mubr.bf16.mxu0 0
    %3740 = vmatmul.mubr.bf16.gmra.mrb[0].mxu0 %v3691
    %v3741 = vpop.f32.mrb[0].mxu0
    %v3742 = vadd.f32 0.0, %v3741
    %v3743 = vpop.f32.mrb[0].mxu0
    %v3744 = vpop.f32.mrb[0].mxu0
    %v3745 = vadd.f32 0.0, %v3744
    %v3746 = vpop.f32.mrb[0].mxu0
    %3747 = vmatprep.mubr.bf16.mxu0 0
    %3748 = vmatmul.mubr.bf16.gmra.mrb[0].mxu0 %v3694
    %v3749 = vpop.f32.mrb[0].mxu0
    %v3750 = vadd.f32 0.0, %v3749
    %v3751 = vpop.f32.mrb[0].mxu0
    %v3752 = vpop.f32.mrb[0].mxu0
    %v3753 = vadd.f32 0.0, %v3752
    %v3754 = vpop.f32.mrb[0].mxu0
    %3755 = vmatprep.mubr.bf16.mxu0 0
    %3756 = vmatmul.mubr.bf16.gmra.mrb[0].mxu0 %v3697
    %v3757 = vpop.f32.mrb[0].mxu0
    %v3758 = vadd.f32 0.0, %v3757
    %v3759 = vpop.f32.mrb[0].mxu0
    %v3760 = vpop.f32.mrb[0].mxu0
    %v3761 = vadd.f32 0.0, %v3760
    %v3762 = vpop.f32.mrb[0].mxu0
    %3763 = vdwg.mxu0
    %v3764 = vadd.f32 %v3662, %v3734
    %v3765 = vadd.f32 %v3663, %v3737
    %v3766 = vadd.f32 %v3664, %v3742
    %v3767 = vadd.f32 %v3665, %v3745
    %v3768 = vadd.f32 %v3666, %v3750
    %v3769 = vadd.f32 %v3667, %v3753
    %v3770 = vadd.f32 %v3668, %v3758
    %v3771 = vadd.f32 %v3669, %v3761
    %v3772 = vld [vmem:[#allocation3] sm:$0xc0]
    %v3773 = vld [vmem:[#allocation3 + $0x20] sm:$0xf]
    %s3774 = scalar_lea.vmem [#allocation8], 192
    %v3775 = vld [vmem:[%s3774] sm:$0xff]
    %v3776 = vld [vmem:[%s3774 + $0x8] sm:$0xff]
    %v3777 = vld [vmem:[%s3774 + $0x10] sm:$0xff]
    %v3778 = vld [vmem:[%s3774 + $0x18] sm:$0xff]
    %v3781 = vrot.slane %v3772, 6
    %v3782 = vrot.slane %v3427, 6
    %v3783 = vsel %vm1840, %v3781, %v3782
    %v3784 = vrot.slane %v3428, 6
    %v3785 = vsel %vm1840, %v3782, %v3784
    %v3786 = vrot.slane %v3429, 6
    %v3787 = vsel %vm1840, %v3784, %v3786
    %v3788 = vrot.slane %v3773, 6
    %v3789 = vsel %vm1840, %v3786, %v3788
    %v3791 = vsel %vm289, %v3783, 0
    %v3794 = vsel %vm289, %v3785, 0
    %v3797 = vsel %vm289, %v3787, 0
    %v3800 = vsel %vm289, %v3789, 0
    %3802 = vmatprep.subr.bf16.mxu0 0
    %3803 = vmatpush1.bf16.msra.mxu0 %v3775
    %3804 = vmatprep.subr.bf16.mxu0 0
    %3805 = vmatpush1.bf16.msra.mxu0 %v3776
    %3806 = vmatprep.subr.bf16.mxu0 0
    %3807 = vmatpush1.bf16.msra.mxu0 %v3777
    %3808 = vmatprep.subr.bf16.mxu0 0
    %3809 = vmatpush1.bf16.msra.mxu0 %v3778
    %3810 = vmatprep.subr.bf16.mxu0 0
    %3811 = vmatpush1.bf16.msra.mxu0 0
    %3812 = vmatprep.subr.bf16.mxu0 0
    %3813 = vmatpush1.bf16.msra.mxu0 0
    %3814 = vmatprep.subr.bf16.mxu0 0
    %3815 = vmatpush1.bf16.msra.mxu0 0
    %3816 = vmatprep.subr.bf16.mxu0 0
    %3817 = vmatpush1.bf16.msra.mxu0 0
    %3818 = vmatprep.subr.bf16.mxu0 0
    %3819 = vmatpush1.bf16.msra.mxu0 0
    %3820 = vmatprep.subr.bf16.mxu0 0
    %3821 = vmatpush1.bf16.msra.mxu0 0
    %3822 = vmatprep.subr.bf16.mxu0 0
    %3823 = vmatpush1.bf16.msra.mxu0 0
    %3824 = vmatprep.subr.bf16.mxu0 0
    %3825 = vmatpush1.bf16.msra.mxu0 0
    %3826 = vmatprep.subr.bf16.mxu0 0
    %3827 = vmatpush1.bf16.msra.mxu0 0
    %3828 = vmatprep.subr.bf16.mxu0 0
    %3829 = vmatpush1.bf16.msra.mxu0 0
    %3830 = vmatprep.subr.bf16.mxu0 0
    %3831 = vmatpush1.bf16.msra.mxu0 0
    %3832 = vmatprep.subr.bf16.mxu0 0
    %3833 = vmatpush1.bf16.msra.mxu0 0
    %3834 = vmatprep.mubr.bf16.mxu0 0
    %3835 = vmatmul.mubr.bf16.gmra.mrb[0].mxu0 %v3791
    %v3836 = vpop.f32.mrb[0].mxu0
    %v3837 = vadd.f32 0.0, %v3836
    %v3838 = vpop.f32.mrb[0].mxu0
    %v3839 = vpop.f32.mrb[0].mxu0
    %v3840 = vadd.f32 0.0, %v3839
    %v3841 = vpop.f32.mrb[0].mxu0
    %3842 = vmatprep.mubr.bf16.mxu0 0
    %3843 = vmatmul.mubr.bf16.gmra.mrb[0].mxu0 %v3794
    %v3844 = vpop.f32.mrb[0].mxu0
    %v3845 = vadd.f32 0.0, %v3844
    %v3846 = vpop.f32.mrb[0].mxu0
    %v3847 = vpop.f32.mrb[0].mxu0
    %v3848 = vadd.f32 0.0, %v3847
    %v3849 = vpop.f32.mrb[0].mxu0
    %3850 = vmatprep.mubr.bf16.mxu0 0
    %3851 = vmatmul.mubr.bf16.gmra.mrb[0].mxu0 %v3797
    %v3852 = vpop.f32.mrb[0].mxu0
    %v3853 = vadd.f32 0.0, %v3852
    %v3854 = vpop.f32.mrb[0].mxu0
    %v3855 = vpop.f32.mrb[0].mxu0
    %v3856 = vadd.f32 0.0, %v3855
    %v3857 = vpop.f32.mrb[0].mxu0
    %3858 = vmatprep.mubr.bf16.mxu0 0
    %3859 = vmatmul.mubr.bf16.gmra.mrb[0].mxu0 %v3800
    %v3860 = vpop.f32.mrb[0].mxu0
    %v3861 = vadd.f32 0.0, %v3860
    %v3862 = vpop.f32.mrb[0].mxu0
    %v3863 = vpop.f32.mrb[0].mxu0
    %v3864 = vadd.f32 0.0, %v3863
    %v3865 = vpop.f32.mrb[0].mxu0
    %3866 = vdwg.mxu0
    %v3867 = vadd.f32 %v3764, %v3837
    %v3868 = vadd.f32 %v3765, %v3840
    %v3869 = vadd.f32 %v3766, %v3845
    %v3870 = vadd.f32 %v3767, %v3848
    %v3871 = vadd.f32 %v3768, %v3853
    %v3872 = vadd.f32 %v3769, %v3856
    %v3873 = vadd.f32 %v3770, %v3861
    %v3874 = vadd.f32 %v3771, %v3864
    %v3875 = vld [vmem:[#allocation3 + $0x20] sm:$0x1f]
    %s3876 = scalar_lea.vmem [#allocation8], 224
    %v3877 = vld [vmem:[%s3876] sm:$0xff]
    %v3878 = vld [vmem:[%s3876 + $0x8] sm:$0xff]
    %v3879 = vld [vmem:[%s3876 + $0x10] sm:$0xff]
    %v3880 = vld [vmem:[%s3876 + $0x18] sm:$0xff]
    %v3882 = vshrl.u32 %v3772, 16
    %v3884 = vrot.slane %v3882, 6
    %v3885 = vshll.u32 %v3772, 16
    %v3887 = vrot.slane %v3885, 7
    %v3888 = vor.u32 %v3884, %v3887
    %v3889 = vrot.slane %v3550, 6
    %v3890 = vrot.slane %v3553, 7
    %v3891 = vor.u32 %v3889, %v3890
    %v3892 = vsel %vm1841, %v3888, %v3891
    %v3893 = vrot.slane %v3559, 6
    %v3894 = vrot.slane %v3562, 7
    %v3895 = vor.u32 %v3893, %v3894
    %v3896 = vsel %vm1841, %v3891, %v3895
    %v3897 = vrot.slane %v3568, 6
    %v3898 = vrot.slane %v3571, 7
    %v3899 = vor.u32 %v3897, %v3898
    %v3900 = vsel %vm1841, %v3895, %v3899
    %v3902 = vshrl.u32 %v3875, 16
    %v3904 = vrot.slane %v3902, 6
    %v3905 = vshll.u32 %v3875, 16
    %v3907 = vrot.slane %v3905, 7
    %v3908 = vor.u32 %v3904, %v3907
    %v3909 = vsel %vm1841, %v3899, %v3908
    %v3911 = vsel %vm289, %v3892, 0
    %v3914 = vsel %vm289, %v3896, 0
    %v3917 = vsel %vm289, %v3900, 0
    %v3920 = vsel %vm289, %v3909, 0
    %3922 = vmatprep.subr.bf16.mxu0 0
    %3923 = vmatpush1.bf16.msra.mxu0 %v3877
    %3924 = vmatprep.subr.bf16.mxu0 0
    %3925 = vmatpush1.bf16.msra.mxu0 %v3878
    %3926 = vmatprep.subr.bf16.mxu0 0
    %3927 = vmatpush1.bf16.msra.mxu0 %v3879
    %3928 = vmatprep.subr.bf16.mxu0 0
    %3929 = vmatpush1.bf16.msra.mxu0 %v3880
    %3930 = vmatprep.subr.bf16.mxu0 0
    %3931 = vmatpush1.bf16.msra.mxu0 0
    %3932 = vmatprep.subr.bf16.mxu0 0
    %3933 = vmatpush1.bf16.msra.mxu0 0
    %3934 = vmatprep.subr.bf16.mxu0 0
    %3935 = vmatpush1.bf16.msra.mxu0 0
    %3936 = vmatprep.subr.bf16.mxu0 0
    %3937 = vmatpush1.bf16.msra.mxu0 0
    %3938 = vmatprep.subr.bf16.mxu0 0
    %3939 = vmatpush1.bf16.msra.mxu0 0
    %3940 = vmatprep.subr.bf16.mxu0 0
    %3941 = vmatpush1.bf16.msra.mxu0 0
    %3942 = vmatprep.subr.bf16.mxu0 0
    %3943 = vmatpush1.bf16.msra.mxu0 0
    %3944 = vmatprep.subr.bf16.mxu0 0
    %3945 = vmatpush1.bf16.msra.mxu0 0
    %3946 = vmatprep.subr.bf16.mxu0 0
    %3947 = vmatpush1.bf16.msra.mxu0 0
    %3948 = vmatprep.subr.bf16.mxu0 0
    %3949 = vmatpush1.bf16.msra.mxu0 0
    %3950 = vmatprep.subr.bf16.mxu0 0
    %3951 = vmatpush1.bf16.msra.mxu0 0
    %3952 = vmatprep.subr.bf16.mxu0 0
    %3953 = vmatpush1.bf16.msra.mxu0 0
    %3954 = vmatprep.mubr.bf16.mxu0 0
    %3955 = vmatmul.mubr.bf16.gmra.mrb[0].mxu0 %v3911
    %v3956 = vpop.f32.mrb[0].mxu0
    %v3957 = vadd.f32 0.0, %v3956
    %v3958 = vpop.f32.mrb[0].mxu0
    %v3959 = vpop.f32.mrb[0].mxu0
    %v3960 = vadd.f32 0.0, %v3959
    %v3961 = vpop.f32.mrb[0].mxu0
    %3962 = vmatprep.mubr.bf16.mxu0 0
    %3963 = vmatmul.mubr.bf16.gmra.mrb[0].mxu0 %v3914
    %v3964 = vpop.f32.mrb[0].mxu0
    %v3965 = vadd.f32 0.0, %v3964
    %v3966 = vpop.f32.mrb[0].mxu0
    %v3967 = vpop.f32.mrb[0].mxu0
    %v3968 = vadd.f32 0.0, %v3967
    %v3969 = vpop.f32.mrb[0].mxu0
    %3970 = vmatprep.mubr.bf16.mxu0 0
    %3971 = vmatmul.mubr.bf16.gmra.mrb[0].mxu0 %v3917
    %v3972 = vpop.f32.mrb[0].mxu0
    %v3973 = vadd.f32 0.0, %v3972
    %v3974 = vpop.f32.mrb[0].mxu0
    %v3975 = vpop.f32.mrb[0].mxu0
    %v3976 = vadd.f32 0.0, %v3975
    %v3977 = vpop.f32.mrb[0].mxu0
    %3978 = vmatprep.mubr.bf16.mxu0 0
    %3979 = vmatmul.mubr.bf16.gmra.mrb[0].mxu0 %v3920
    %v3980 = vpop.f32.mrb[0].mxu0
    %v3981 = vadd.f32 0.0, %v3980
    %v3982 = vpop.f32.mrb[0].mxu0
    %v3983 = vpop.f32.mrb[0].mxu0
    %v3984 = vadd.f32 0.0, %v3983
    %v3985 = vpop.f32.mrb[0].mxu0
    %3986 = vdwg.mxu0
    %v3987 = vadd.f32 %v3867, %v3957
    %v3988 = vadd.f32 %v3868, %v3960
    %v3989 = vadd.f32 %v3869, %v3965
    %v3990 = vadd.f32 %v3870, %v3968
    %v3991 = vadd.f32 %v3871, %v3973
    %v3992 = vadd.f32 %v3872, %v3976
    %v3993 = vadd.f32 %v3873, %v3981
    %v3994 = vadd.f32 %v3874, %v3984
    %v3995 = vld [vmem:[#allocation3] sm:$0x80]
    %s3996 = scalar_lea.vmem [#allocation8], 256
    %v3997 = vld [vmem:[%s3996] sm:$0xff]
    %v3998 = vld [vmem:[%s3996 + $0x8] sm:$0xff]
    %v3999 = vld [vmem:[%s3996 + $0x10] sm:$0xff]
    %v4000 = vld [vmem:[%s3996 + $0x18] sm:$0xff]
    %v4003 = vrot.slane %v3995, 7
    %v4004 = vrot.slane %v3427, 7
    %v4005 = vsel %vm2696, %v4003, %v4004
    %v4006 = vrot.slane %v3428, 7
    %v4007 = vsel %vm2696, %v4004, %v4006
    %v4008 = vrot.slane %v3429, 7
    %v4009 = vsel %vm2696, %v4006, %v4008
    %v4010 = vrot.slane %v3875, 7
    %v4011 = vsel %vm2696, %v4008, %v4010
    %v4013 = vsel %vm289, %v4005, 0
    %v4016 = vsel %vm289, %v4007, 0
    %v4019 = vsel %vm289, %v4009, 0
    %v4022 = vsel %vm289, %v4011, 0
    %4024 = vmatprep.subr.bf16.mxu0 0
    %4025 = vmatpush1.bf16.msra.mxu0 %v3997
    %4026 = vmatprep.subr.bf16.mxu0 0
    %4027 = vmatpush1.bf16.msra.mxu0 %v3998
    %4028 = vmatprep.subr.bf16.mxu0 0
    %4029 = vmatpush1.bf16.msra.mxu0 %v3999
    %4030 = vmatprep.subr.bf16.mxu0 0
    %4031 = vmatpush1.bf16.msra.mxu0 %v4000
    %4032 = vmatprep.subr.bf16.mxu0 0
    %4033 = vmatpush1.bf16.msra.mxu0 0
    %4034 = vmatprep.subr.bf16.mxu0 0
    %4035 = vmatpush1.bf16.msra.mxu0 0
    %4036 = vmatprep.subr.bf16.mxu0 0
    %4037 = vmatpush1.bf16.msra.mxu0 0
    %4038 = vmatprep.subr.bf16.mxu0 0
    %4039 = vmatpush1.bf16.msra.mxu0 0
    %4040 = vmatprep.subr.bf16.mxu0 0
    %4041 = vmatpush1.bf16.msra.mxu0 0
    %4042 = vmatprep.subr.bf16.mxu0 0
    %4043 = vmatpush1.bf16.msra.mxu0 0
    %4044 = vmatprep.subr.bf16.mxu0 0
    %4045 = vmatpush1.bf16.msra.mxu0 0
    %4046 = vmatprep.subr.bf16.mxu0 0
    %4047 = vmatpush1.bf16.msra.mxu0 0
    %4048 = vmatprep.subr.bf16.mxu0 0
    %4049 = vmatpush1.bf16.msra.mxu0 0
    %4050 = vmatprep.subr.bf16.mxu0 0
    %4051 = vmatpush1.bf16.msra.mxu0 0
    %4052 = vmatprep.subr.bf16.mxu0 0
    %4053 = vmatpush1.bf16.msra.mxu0 0
    %4054 = vmatprep.subr.bf16.mxu0 0
    %4055 = vmatpush1.bf16.msra.mxu0 0
    %4056 = vmatprep.mubr.bf16.mxu0 0
    %4057 = vmatmul.mubr.bf16.gmra.mrb[0].mxu0 %v4013
    %v4058 = vpop.f32.mrb[0].mxu0
    %v4059 = vadd.f32 0.0, %v4058
    %v4060 = vpop.f32.mrb[0].mxu0
    %v4061 = vpop.f32.mrb[0].mxu0
    %v4062 = vadd.f32 0.0, %v4061
    %v4063 = vpop.f32.mrb[0].mxu0
    %4064 = vmatprep.mubr.bf16.mxu0 0
    %4065 = vmatmul.mubr.bf16.gmra.mrb[0].mxu0 %v4016
    %v4066 = vpop.f32.mrb[0].mxu0
    %v4067 = vadd.f32 0.0, %v4066
    %v4068 = vpop.f32.mrb[0].mxu0
    %v4069 = vpop.f32.mrb[0].mxu0
    %v4070 = vadd.f32 0.0, %v4069
    %v4071 = vpop.f32.mrb[0].mxu0
    %4072 = vmatprep.mubr.bf16.mxu0 0
    %4073 = vmatmul.mubr.bf16.gmra.mrb[0].mxu0 %v4019
    %v4074 = vpop.f32.mrb[0].mxu0
    %v4075 = vadd.f32 0.0, %v4074
    %v4076 = vpop.f32.mrb[0].mxu0
    %v4077 = vpop.f32.mrb[0].mxu0
    %v4078 = vadd.f32 0.0, %v4077
    %v4079 = vpop.f32.mrb[0].mxu0
    %4080 = vmatprep.mubr.bf16.mxu0 0
    %4081 = vmatmul.mubr.bf16.gmra.mrb[0].mxu0 %v4022
    %v4082 = vpop.f32.mrb[0].mxu0
    %v4083 = vadd.f32 0.0, %v4082
    %v4084 = vpop.f32.mrb[0].mxu0
    %v4085 = vpop.f32.mrb[0].mxu0
    %v4086 = vadd.f32 0.0, %v4085
    %v4087 = vpop.f32.mrb[0].mxu0
    %4088 = vdwg.mxu0
    %v4089 = vadd.f32 %v3987, %v4059
    %v4090 = vadd.f32 %v3988, %v4062
    %v4091 = vadd.f32 %v3989, %v4067
    %v4092 = vadd.f32 %v3990, %v4070
    %v4093 = vadd.f32 %v3991, %v4075
    %v4094 = vadd.f32 %v3992, %v4078
    %v4095 = vadd.f32 %v3993, %v4083
    %v4096 = vadd.f32 %v3994, %v4086
    %v4097 = vsel %vm1771, %v4089, 0.0
    %v4098 = vsel %vm1772, %v4090, 0.0
    %v4099 = vsel %vm1773, %v4091, 0.0
    %v4100 = vsel %vm1774, %v4092, 0.0
    %v4101 = vsel %vm1775, %v4093, 0.0
    %v4102 = vsel %vm1776, %v4094, 0.0
    %v4103 = vsel %vm1777, %v4095, 0.0
    %v4104 = vsel %vm1778, %v4096, 0.0
    %v4105 = vld [vmem:[#allocation24] sm:$0x1]
    %v4106 = vld [vmem:[#allocation26] sm:$0x1]
    %vm4107 = vcmask 261120
    %v4108 = vsel %vm4107, %v4097, 0.0
    %v4109 = vsel %vm4107, %v4098, 0.0
    %v4110 = vadd.f32 %v4108, %v4109
    %v4111 = vsel %vm4107, %v4099, 0.0
    %v4112 = vadd.f32 %v4110, %v4111
    %v4113 = vsel %vm4107, %v4100, 0.0
    %v4114 = vadd.f32 %v4112, %v4113
    %v4115 = vsel %vm4107, %v4101, 0.0
    %v4116 = vadd.f32 %v4114, %v4115
    %v4117 = vsel %vm4107, %v4102, 0.0
    %v4118 = vadd.f32 %v4116, %v4117
    %v4119 = vsel %vm4107, %v4103, 0.0
    %v4120 = vadd.f32 %v4118, %v4119
    %vm4121 = vcmask 257024
    %v4122 = vsel %vm4121, %v4104, 0.0
    %v4123 = vadd.f32 %v4120, %v4122
    %v4124 = vrot.slane %v4123, 4
    %v4125 = vadd.f32 %v4123, %v4124
    %v4126 = vrot.slane %v4125, 2
    %v4127 = vadd.f32 %v4125, %v4126
    %v4128 = vrot.slane %v4127, 1
    %v4129 = vadd.f32 %v4127, %v4128
    %v4130 = vmul.f32 %v4097, %v4097
    %v4131 = vmul.f32 %v4098, %v4098
    %v4132 = vmul.f32 %v4099, %v4099
    %v4133 = vmul.f32 %v4100, %v4100
    %v4134 = vmul.f32 %v4101, %v4101
    %v4135 = vmul.f32 %v4102, %v4102
    %v4136 = vmul.f32 %v4103, %v4103
    %v4137 = vmul.f32 %v4104, %v4104
    %v4138 = vsel %vm4107, %v4130, 0.0
    %v4139 = vsel %vm4107, %v4131, 0.0
    %v4140 = vadd.f32 %v4138, %v4139
    %v4141 = vsel %vm4107, %v4132, 0.0
    %v4142 = vadd.f32 %v4140, %v4141
    %v4143 = vsel %vm4107, %v4133, 0.0
    %v4144 = vadd.f32 %v4142, %v4143
    %v4145 = vsel %vm4107, %v4134, 0.0
    %v4146 = vadd.f32 %v4144, %v4145
    %v4147 = vsel %vm4107, %v4135, 0.0
    %v4148 = vadd.f32 %v4146, %v4147
    %v4149 = vsel %vm4107, %v4136, 0.0
    %v4150 = vadd.f32 %v4148, %v4149
    %v4151 = vsel %vm4121, %v4137, 0.0
    %v4152 = vadd.f32 %v4150, %v4151
    %v4153 = vrot.slane %v4152, 4
    %v4154 = vadd.f32 %v4152, %v4153
    %v4155 = vrot.slane %v4154, 2
    %v4156 = vadd.f32 %v4154, %v4155
    %v4157 = vrot.slane %v4156, 1
    %v4158 = vadd.f32 %v4156, %v4157
    %v4159 = vmul.f32 %v4129, 0.03125
    %v4160 = vmul.f32 %v4158, 0.03125
    %v4161 = vmul.f32 %v4159, %v4159
    %v4162 = vsub.f32 %v4160, %v4161
    %v4163 = vadd.f32 %v4162, 1e-05
    %v4164 = vrsqrt.pop %v4163
    %v4165 = vmul.f32 %v4105, %v4164
    %v4166 = vmul.f32 %v4159, %v4165
    %v4167 = vsub.f32 %v4106, %v4166
    %v4169 = vlaneseq
    %v4170 = vshrl.u32 %v4169, 7
    %v4171 = vsub.s32 0, %v4170
    %v4172 = vrot.slane %v4165, %v4171
    %v4174 = vmul.f32 %v4097, %v4172
    %v4175 = vmul.f32 %v4098, %v4172
    %v4176 = vmul.f32 %v4099, %v4172
    %v4177 = vmul.f32 %v4100, %v4172
    %v4178 = vmul.f32 %v4101, %v4172
    %v4179 = vmul.f32 %v4102, %v4172
    %v4180 = vmul.f32 %v4103, %v4172
    %v4181 = vmul.f32 %v4104, %v4172
    %v4183 = vlaneseq
    %v4184 = vshrl.u32 %v4183, 7
    %v4185 = vsub.s32 0, %v4184
    %v4186 = vrot.slane %v4167, %v4185
    %v4188 = vadd.f32 %v4174, %v4186
    %v4189 = vadd.f32 %v4175, %v4186
    %v4190 = vadd.f32 %v4176, %v4186
    %v4191 = vadd.f32 %v4177, %v4186
    %v4192 = vadd.f32 %v4178, %v4186
    %v4193 = vadd.f32 %v4179, %v4186
    %v4194 = vadd.f32 %v4180, %v4186
    %v4195 = vadd.f32 %v4181, %v4186
    %vm4196 = vcmp.ge.f32.partialorder %v4188, 0.0
    %vm4197 = vcmp.ge.f32.partialorder %v4189, 0.0
    %vm4198 = vcmp.ge.f32.partialorder %v4190, 0.0
    %vm4199 = vcmp.ge.f32.partialorder %v4191, 0.0
    %vm4200 = vcmp.ge.f32.partialorder %v4192, 0.0
    %vm4201 = vcmp.ge.f32.partialorder %v4193, 0.0
    %vm4202 = vcmp.ge.f32.partialorder %v4194, 0.0
    %vm4203 = vcmp.ge.f32.partialorder %v4195, 0.0
    %v4204 = vmul.f32 %v4188, 0.2
    %v4205 = vmul.f32 %v4189, 0.2
    %v4206 = vmul.f32 %v4190, 0.2
    %v4207 = vmul.f32 %v4191, 0.2
    %v4208 = vmul.f32 %v4192, 0.2
    %v4209 = vmul.f32 %v4193, 0.2
    %v4210 = vmul.f32 %v4194, 0.2
    %v4211 = vmul.f32 %v4195, 0.2
    %v4212 = vsel %vm4196, %v4188, %v4204
    %v4213 = vsel %vm4197, %v4189, %v4205
    %v4214 = vsel %vm4198, %v4190, %v4206
    %v4215 = vsel %vm4199, %v4191, %v4207
    %v4216 = vsel %vm4200, %v4192, %v4208
    %v4217 = vsel %vm4201, %v4193, %v4209
    %v4218 = vsel %vm4202, %v4194, %v4210
    %v4219 = vsel %vm4203, %v4195, %v4211
    %v4220 = vsel %vm1771, %v4212, 0.0
    %v4221 = vsel %vm1772, %v4213, 0.0
    %v4222 = vsel %vm1773, %v4214, 0.0
    %v4223 = vsel %vm1774, %v4215, 0.0
    %v4224 = vsel %vm1775, %v4216, 0.0
    %v4225 = vsel %vm1776, %v4217, 0.0
    %v4226 = vsel %vm1777, %v4218, 0.0
    %v4227 = vsel %vm1778, %v4219, 0.0
    %v4228 = vpack.c.bf16 %v4221, %v4220
    %v4229 = vpack.c.bf16 %v4223, %v4222
    %v4230 = vpack.c.bf16 %v4225, %v4224
    %v4231 = vpack.c.bf16 %v4227, %v4226
    %v4233 = vshrl.u32 %v4228, 16
    %v4235 = vrot.slane %v4233, 4
    %v4236 = vshll.u32 %v4228, 16
    %v4238 = vrot.slane %v4236, 5
    %v4239 = vor.u32 %v4235, %v4238
    %v4241 = vshrl.u32 %v4229, 16
    %v4243 = vrot.slane %v4241, 4
    %v4244 = vshll.u32 %v4229, 16
    %v4246 = vrot.slane %v4244, 5
    %v4247 = vor.u32 %v4243, %v4246
    %v4248 = vsel %vm249, %v4239, %v4247
    %v4250 = vshrl.u32 %v4230, 16
    %v4252 = vrot.slane %v4250, 4
    %v4253 = vshll.u32 %v4230, 16
    %v4255 = vrot.slane %v4253, 5
    %v4256 = vor.u32 %v4252, %v4255
    %v4257 = vsel %vm249, %v4247, %v4256
    %v4259 = vshrl.u32 %v4231, 16
    %v4261 = vrot.slane %v4259, 4
    %v4262 = vshll.u32 %v4231, 16
    %v4264 = vrot.slane %v4262, 5
    %v4265 = vor.u32 %v4261, %v4264
    %v4266 = vsel %vm249, %v4256, %v4265
    %vm4272 = vcmask 261123
    %vm4273 = vmand %vm4272, %vm1832
    %v4274 = vld [vmem:[#allocation4] sm:$0xf8]
    %v4275 = vsel %vm4273, %v4239, %v4274
    %4276 = vst [vmem:[#allocation4] sm:$0xf8] %v4275
    %4277 = vst.msk [vmem:[#allocation4 + $0x8] sm:$0xff] %vm4107, %v4248
    %4278 = vst.msk [vmem:[#allocation4 + $0x10] sm:$0xff] %vm4107, %v4257
    %4279 = vst.msk [vmem:[#allocation4 + $0x18] sm:$0xff] %vm4107, %v4266
    %vm4280 = vcmask 254976
    %vm4281 = vmand %vm4280, %vm1841
    %v4282 = vld [vmem:[#allocation4 + $0x20] sm:$0x3]
    %v4283 = vsel %vm4281, %v4265, %v4282
    %4284 = vst [vmem:[#allocation4 + $0x20] sm:$0x3] %v4283
    %s4285 = smul.u32 4, 16
    %s4286 = smul.u32 %s4285, 4
    %s4287 = smul.u32 %s4286, 1
    %s4288 = sshll.u32 %s4287, 4
    %4289 = dma.done %s236, %s4288
    %v4290 = vld [vmem:[#allocation4] sm:$0xff]
    %v4291 = vld [vmem:[#allocation4 + $0x8] sm:$0xff]
    %v4292 = vld [vmem:[#allocation4 + $0x10] sm:$0xff]
    %v4293 = vld [vmem:[#allocation4 + $0x18] sm:$0x7]
    %v4294 = vld [vmem:[#allocation9] sm:$0xff]
    %v4295 = vld [vmem:[#allocation9 + $0x8] sm:$0xff]
    %v4296 = vld [vmem:[#allocation4 + $0x18] sm:$0xf]
    %s4297 = scalar_lea.vmem [#allocation9], 16
    %v4298 = vld [vmem:[%s4297] sm:$0xff]
    %v4299 = vld [vmem:[%s4297 + $0x8] sm:$0xff]
    %v4301 = vshrl.u32 %v4290, 16
    %v4303 = vshll.u32 %v4290, 16
    %v4305 = vrot.slane %v4303, 1
    %v4306 = vor.u32 %v4301, %v4305
    %v4308 = vshll.u32 %v4291, 16
    %v4310 = vrot.slane %v4308, 1
    %v4311 = vsel %vm392, %v4306, %v4310
    %v4312 = vshrl.u32 %v4291, 16
    %v4314 = vor.u32 %v4312, %v4310
    %v4316 = vshll.u32 %v4292, 16
    %v4318 = vrot.slane %v4316, 1
    %v4319 = vsel %vm392, %v4314, %v4318
    %v4320 = vshrl.u32 %v4292, 16
    %v4322 = vor.u32 %v4320, %v4318
    %v4324 = vshll.u32 %v4296, 16
    %v4326 = vrot.slane %v4324, 1
    %v4327 = vsel %vm392, %v4322, %v4326
    %v4328 = vshrl.u32 %v4296, 16
    %v4330 = vor.u32 %v4328, %v4326
    %v4332 = vsel %vm4107, %v4311, 0
    %v4335 = vsel %vm4107, %v4319, 0
    %v4338 = vsel %vm4107, %v4327, 0
    %v4341 = vsel %vm4107, %v4330, 0
    %4343 = vmatprep.subr.bf16.mxu0 0
    %4344 = vmatpush1.bf16.msra.mxu0 %v4298
    %4345 = vmatprep.subr.bf16.mxu0 0
    %4346 = vmatpush1.bf16.msra.mxu0 %v4299
    %4347 = vmatprep.subr.bf16.mxu0 0
    %4348 = vmatpush1.bf16.msra.mxu0 0
    %4349 = vmatprep.subr.bf16.mxu0 0
    %4350 = vmatpush1.bf16.msra.mxu0 0
    %4351 = vmatprep.subr.bf16.mxu0 0
    %4352 = vmatpush1.bf16.msra.mxu0 0
    %4353 = vmatprep.subr.bf16.mxu0 0
    %4354 = vmatpush1.bf16.msra.mxu0 0
    %4355 = vmatprep.subr.bf16.mxu0 0
    %4356 = vmatpush1.bf16.msra.mxu0 0
    %4357 = vmatprep.subr.bf16.mxu0 0
    %4358 = vmatpush1.bf16.msra.mxu0 0
    %4359 = vmatprep.subr.bf16.mxu0 0
    %4360 = vmatpush1.bf16.msra.mxu0 0
    %4361 = vmatprep.subr.bf16.mxu0 0
    %4362 = vmatpush1.bf16.msra.mxu0 0
    %4363 = vmatprep.subr.bf16.mxu0 0
    %4364 = vmatpush1.bf16.msra.mxu0 0
    %4365 = vmatprep.subr.bf16.mxu0 0
    %4366 = vmatpush1.bf16.msra.mxu0 0
    %4367 = vmatprep.subr.bf16.mxu0 0
    %4368 = vmatpush1.bf16.msra.mxu0 0
    %4369 = vmatprep.subr.bf16.mxu0 0
    %4370 = vmatpush1.bf16.msra.mxu0 0
    %4371 = vmatprep.subr.bf16.mxu0 0
    %4372 = vmatpush1.bf16.msra.mxu0 0
    %4373 = vmatprep.subr.bf16.mxu0 0
    %4374 = vmatpush1.bf16.msra.mxu0 0
    %4375 = vmatprep.mubr.bf16.mxu0 0
    %4376 = vmatmul.mubr.bf16.gmra.mrb[0].mxu0 %v4332
    %v4377 = vpop.f32.mrb[0].mxu0
    %v4378 = vadd.f32 0.0, %v4377
    %v4379 = vpop.f32.mrb[0].mxu0
    %v4380 = vpop.f32.mrb[0].mxu0
    %v4381 = vadd.f32 0.0, %v4380
    %v4382 = vpop.f32.mrb[0].mxu0
    %4383 = vmatprep.mubr.bf16.mxu0 0
    %4384 = vmatmul.mubr.bf16.gmra.mrb[0].mxu0 %v4335
    %v4385 = vpop.f32.mrb[0].mxu0
    %v4386 = vadd.f32 0.0, %v4385
    %v4387 = vpop.f32.mrb[0].mxu0
    %v4388 = vpop.f32.mrb[0].mxu0
    %v4389 = vadd.f32 0.0, %v4388
    %v4390 = vpop.f32.mrb[0].mxu0
    %4391 = vmatprep.mubr.bf16.mxu0 0
    %4392 = vmatmul.mubr.bf16.gmra.mrb[0].mxu0 %v4338
    %v4393 = vpop.f32.mrb[0].mxu0
    %v4394 = vadd.f32 0.0, %v4393
    %v4395 = vpop.f32.mrb[0].mxu0
    %v4396 = vpop.f32.mrb[0].mxu0
    %v4397 = vadd.f32 0.0, %v4396
    %v4398 = vpop.f32.mrb[0].mxu0
    %4399 = vmatprep.mubr.bf16.mxu0 0
    %4400 = vmatmul.mubr.bf16.gmra.mrb[0].mxu0 %v4341
    %v4401 = vpop.f32.mrb[0].mxu0
    %v4402 = vadd.f32 0.0, %v4401
    %v4403 = vpop.f32.mrb[0].mxu0
    %v4404 = vpop.f32.mrb[0].mxu0
    %v4405 = vpop.f32.mrb[0].mxu0
    %4406 = vdwg.mxu0
    %v4407 = vsel %vm4107, %v4290, 0
    %v4409 = vsel %vm4107, %v4291, 0
    %v4411 = vsel %vm4107, %v4292, 0
    %v4414 = vsel %vm4107, %v4293, 0
    %4416 = vmatprep.subr.bf16.mxu0 0
    %4417 = vmatpush1.bf16.msra.mxu0 %v4294
    %4418 = vmatprep.subr.bf16.mxu0 0
    %4419 = vmatpush1.bf16.msra.mxu0 %v4295
    %4420 = vmatprep.subr.bf16.mxu0 0
    %4421 = vmatpush1.bf16.msra.mxu0 0
    %4422 = vmatprep.subr.bf16.mxu0 0
    %4423 = vmatpush1.bf16.msra.mxu0 0
    %4424 = vmatprep.subr.bf16.mxu0 0
    %4425 = vmatpush1.bf16.msra.mxu0 0
    %4426 = vmatprep.subr.bf16.mxu0 0
    %4427 = vmatpush1.bf16.msra.mxu0 0
    %4428 = vmatprep.subr.bf16.mxu0 0
    %4429 = vmatpush1.bf16.msra.mxu0 0
    %4430 = vmatprep.subr.bf16.mxu0 0
    %4431 = vmatpush1.bf16.msra.mxu0 0
    %4432 = vmatprep.subr.bf16.mxu0 0
    %4433 = vmatpush1.bf16.msra.mxu0 0
    %4434 = vmatprep.subr.bf16.mxu0 0
    %4435 = vmatpush1.bf16.msra.mxu0 0
    %4436 = vmatprep.subr.bf16.mxu0 0
    %4437 = vmatpush1.bf16.msra.mxu0 0
    %4438 = vmatprep.subr.bf16.mxu0 0
    %4439 = vmatpush1.bf16.msra.mxu0 0
    %4440 = vmatprep.subr.bf16.mxu0 0
    %4441 = vmatpush1.bf16.msra.mxu0 0
    %4442 = vmatprep.subr.bf16.mxu0 0
    %4443 = vmatpush1.bf16.msra.mxu0 0
    %4444 = vmatprep.subr.bf16.mxu0 0
    %4445 = vmatpush1.bf16.msra.mxu0 0
    %4446 = vmatprep.subr.bf16.mxu0 0
    %4447 = vmatpush1.bf16.msra.mxu0 0
    %4448 = vmatprep.mubr.bf16.mxu0 0
    %4449 = vmatmul.mubr.bf16.gmra.mrb[0].mxu0 %v4407
    %v4450 = vpop.f32.mrb[0].mxu0
    %v4451 = vadd.f32 %v4378, %v4450
    %v4452 = vpop.f32.mrb[0].mxu0
    %v4453 = vpop.f32.mrb[0].mxu0
    %v4454 = vadd.f32 %v4381, %v4453
    %v4455 = vpop.f32.mrb[0].mxu0
    %4456 = vmatprep.mubr.bf16.mxu0 0
    %4457 = vmatmul.mubr.bf16.gmra.mrb[0].mxu0 %v4409
    %v4458 = vpop.f32.mrb[0].mxu0
    %v4459 = vadd.f32 %v4386, %v4458
    %v4460 = vpop.f32.mrb[0].mxu0
    %v4461 = vpop.f32.mrb[0].mxu0
    %v4462 = vadd.f32 %v4389, %v4461
    %v4463 = vpop.f32.mrb[0].mxu0
    %4464 = vmatprep.mubr.bf16.mxu0 0
    %4465 = vmatmul.mubr.bf16.gmra.mrb[0].mxu0 %v4411
    %v4466 = vpop.f32.mrb[0].mxu0
    %v4467 = vadd.f32 %v4394, %v4466
    %v4468 = vpop.f32.mrb[0].mxu0
    %v4469 = vpop.f32.mrb[0].mxu0
    %v4470 = vadd.f32 %v4397, %v4469
    %v4471 = vpop.f32.mrb[0].mxu0
    %4472 = vmatprep.mubr.bf16.mxu0 0
    %4473 = vmatmul.mubr.bf16.gmra.mrb[0].mxu0 %v4414
    %v4474 = vpop.f32.mrb[0].mxu0
    %v4475 = vadd.f32 %v4402, %v4474
    %v4476 = vpop.f32.mrb[0].mxu0
    %v4477 = vpop.f32.mrb[0].mxu0
    %v4478 = vpop.f32.mrb[0].mxu0
    %4479 = vdwg.mxu0
    %v4480 = vld [vmem:[#allocation4] sm:$0xfe]
    %s4481 = scalar_lea.vmem [#allocation9], 32
    %v4482 = vld [vmem:[%s4481] sm:$0xff]
    %v4483 = vld [vmem:[%s4481 + $0x8] sm:$0xff]
    %v4488 = vrot.slane %v4480, 1
    %v4489 = vrot.slane %v4291, 1
    %v4490 = vsel %vm638, %v4488, %v4489
    %v4491 = vrot.slane %v4292, 1
    %v4492 = vsel %vm638, %v4489, %v4491
    %v4493 = vrot.slane %v4296, 1
    %v4494 = vsel %vm638, %v4491, %v4493
    %v4496 = vsel %vm4107, %v4490, 0
    %v4499 = vsel %vm4107, %v4492, 0
    %v4502 = vsel %vm4107, %v4494, 0
    %v4505 = vsel %vm4107, %v4493, 0
    %4507 = vmatprep.subr.bf16.mxu0 0
    %4508 = vmatpush1.bf16.msra.mxu0 %v4482
    %4509 = vmatprep.subr.bf16.mxu0 0
    %4510 = vmatpush1.bf16.msra.mxu0 %v4483
    %4511 = vmatprep.subr.bf16.mxu0 0
    %4512 = vmatpush1.bf16.msra.mxu0 0
    %4513 = vmatprep.subr.bf16.mxu0 0
    %4514 = vmatpush1.bf16.msra.mxu0 0
    %4515 = vmatprep.subr.bf16.mxu0 0
    %4516 = vmatpush1.bf16.msra.mxu0 0
    %4517 = vmatprep.subr.bf16.mxu0 0
    %4518 = vmatpush1.bf16.msra.mxu0 0
    %4519 = vmatprep.subr.bf16.mxu0 0
    %4520 = vmatpush1.bf16.msra.mxu0 0
    %4521 = vmatprep.subr.bf16.mxu0 0
    %4522 = vmatpush1.bf16.msra.mxu0 0
    %4523 = vmatprep.subr.bf16.mxu0 0
    %4524 = vmatpush1.bf16.msra.mxu0 0
    %4525 = vmatprep.subr.bf16.mxu0 0
    %4526 = vmatpush1.bf16.msra.mxu0 0
    %4527 = vmatprep.subr.bf16.mxu0 0
    %4528 = vmatpush1.bf16.msra.mxu0 0
    %4529 = vmatprep.subr.bf16.mxu0 0
    %4530 = vmatpush1.bf16.msra.mxu0 0
    %4531 = vmatprep.subr.bf16.mxu0 0
    %4532 = vmatpush1.bf16.msra.mxu0 0
    %4533 = vmatprep.subr.bf16.mxu0 0
    %4534 = vmatpush1.bf16.msra.mxu0 0
    %4535 = vmatprep.subr.bf16.mxu0 0
    %4536 = vmatpush1.bf16.msra.mxu0 0
    %4537 = vmatprep.subr.bf16.mxu0 0
    %4538 = vmatpush1.bf16.msra.mxu0 0
    %4539 = vmatprep.mubr.bf16.mxu0 0
    %4540 = vmatmul.mubr.bf16.gmra.mrb[0].mxu0 %v4496
    %v4541 = vpop.f32.mrb[0].mxu0
    %v4542 = vadd.f32 0.0, %v4541
    %v4543 = vpop.f32.mrb[0].mxu0
    %v4544 = vpop.f32.mrb[0].mxu0
    %v4545 = vadd.f32 0.0, %v4544
    %v4546 = vpop.f32.mrb[0].mxu0
    %4547 = vmatprep.mubr.bf16.mxu0 0
    %4548 = vmatmul.mubr.bf16.gmra.mrb[0].mxu0 %v4499
    %v4549 = vpop.f32.mrb[0].mxu0
    %v4550 = vadd.f32 0.0, %v4549
    %v4551 = vpop.f32.mrb[0].mxu0
    %v4552 = vpop.f32.mrb[0].mxu0
    %v4553 = vadd.f32 0.0, %v4552
    %v4554 = vpop.f32.mrb[0].mxu0
    %4555 = vmatprep.mubr.bf16.mxu0 0
    %4556 = vmatmul.mubr.bf16.gmra.mrb[0].mxu0 %v4502
    %v4557 = vpop.f32.mrb[0].mxu0
    %v4558 = vadd.f32 0.0, %v4557
    %v4559 = vpop.f32.mrb[0].mxu0
    %v4560 = vpop.f32.mrb[0].mxu0
    %v4561 = vadd.f32 0.0, %v4560
    %v4562 = vpop.f32.mrb[0].mxu0
    %4563 = vmatprep.mubr.bf16.mxu0 0
    %4564 = vmatmul.mubr.bf16.gmra.mrb[0].mxu0 %v4505
    %v4565 = vpop.f32.mrb[0].mxu0
    %v4566 = vadd.f32 0.0, %v4565
    %v4567 = vpop.f32.mrb[0].mxu0
    %v4568 = vpop.f32.mrb[0].mxu0
    %v4569 = vpop.f32.mrb[0].mxu0
    %4570 = vdwg.mxu0
    %v4571 = vadd.f32 %v4451, %v4542
    %v4572 = vadd.f32 %v4454, %v4545
    %v4573 = vadd.f32 %v4459, %v4550
    %v4574 = vadd.f32 %v4462, %v4553
    %v4575 = vadd.f32 %v4467, %v4558
    %v4576 = vadd.f32 %v4470, %v4561
    %v4577 = vadd.f32 %v4475, %v4566
    %v4578 = vld [vmem:[#allocation4 + $0x18] sm:$0x1f]
    %s4579 = scalar_lea.vmem [#allocation9], 48
    %v4580 = vld [vmem:[%s4579] sm:$0xff]
    %v4581 = vld [vmem:[%s4579 + $0x8] sm:$0xff]
    %vm4582 = vsmask.f32 6400
    %v4584 = vshrl.u32 %v4480, 16
    %v4586 = vrot.slane %v4584, 1
    %v4587 = vshll.u32 %v4480, 16
    %v4589 = vrot.slane %v4587, 2
    %v4590 = vor.u32 %v4586, %v4589
    %v4591 = vrot.slane %v4312, 1
    %v4592 = vrot.slane %v4308, 2
    %v4593 = vor.u32 %v4591, %v4592
    %v4594 = vsel %vm4582, %v4590, %v4593
    %v4595 = vrot.slane %v4320, 1
    %v4596 = vrot.slane %v4316, 2
    %v4597 = vor.u32 %v4595, %v4596
    %v4598 = vsel %vm4582, %v4593, %v4597
    %v4600 = vshrl.u32 %v4578, 16
    %v4602 = vrot.slane %v4600, 1
    %v4603 = vshll.u32 %v4578, 16
    %v4605 = vrot.slane %v4603, 2
    %v4606 = vor.u32 %v4602, %v4605
    %v4607 = vsel %vm4582, %v4597, %v4606
    %v4609 = vsel %vm4107, %v4594, 0
    %v4612 = vsel %vm4107, %v4598, 0
    %v4615 = vsel %vm4107, %v4607, 0
    %v4618 = vsel %vm4107, %v4606, 0
    %4620 = vmatprep.subr.bf16.mxu0 0
    %4621 = vmatpush1.bf16.msra.mxu0 %v4580
    %4622 = vmatprep.subr.bf16.mxu0 0
    %4623 = vmatpush1.bf16.msra.mxu0 %v4581
    %4624 = vmatprep.subr.bf16.mxu0 0
    %4625 = vmatpush1.bf16.msra.mxu0 0
    %4626 = vmatprep.subr.bf16.mxu0 0
    %4627 = vmatpush1.bf16.msra.mxu0 0
    %4628 = vmatprep.subr.bf16.mxu0 0
    %4629 = vmatpush1.bf16.msra.mxu0 0
    %4630 = vmatprep.subr.bf16.mxu0 0
    %4631 = vmatpush1.bf16.msra.mxu0 0
    %4632 = vmatprep.subr.bf16.mxu0 0
    %4633 = vmatpush1.bf16.msra.mxu0 0
    %4634 = vmatprep.subr.bf16.mxu0 0
    %4635 = vmatpush1.bf16.msra.mxu0 0
    %4636 = vmatprep.subr.bf16.mxu0 0
    %4637 = vmatpush1.bf16.msra.mxu0 0
    %4638 = vmatprep.subr.bf16.mxu0 0
    %4639 = vmatpush1.bf16.msra.mxu0 0
    %4640 = vmatprep.subr.bf16.mxu0 0
    %4641 = vmatpush1.bf16.msra.mxu0 0
    %4642 = vmatprep.subr.bf16.mxu0 0
    %4643 = vmatpush1.bf16.msra.mxu0 0
    %4644 = vmatprep.subr.bf16.mxu0 0
    %4645 = vmatpush1.bf16.msra.mxu0 0
    %4646 = vmatprep.subr.bf16.mxu0 0
    %4647 = vmatpush1.bf16.msra.mxu0 0
    %4648 = vmatprep.subr.bf16.mxu0 0
    %4649 = vmatpush1.bf16.msra.mxu0 0
    %4650 = vmatprep.subr.bf16.mxu0 0
    %4651 = vmatpush1.bf16.msra.mxu0 0
    %4652 = vmatprep.mubr.bf16.mxu0 0
    %4653 = vmatmul.mubr.bf16.gmra.mrb[0].mxu0 %v4609
    %v4654 = vpop.f32.mrb[0].mxu0
    %v4655 = vadd.f32 0.0, %v4654
    %v4656 = vpop.f32.mrb[0].mxu0
    %v4657 = vpop.f32.mrb[0].mxu0
    %v4658 = vadd.f32 0.0, %v4657
    %v4659 = vpop.f32.mrb[0].mxu0
    %4660 = vmatprep.mubr.bf16.mxu0 0
    %4661 = vmatmul.mubr.bf16.gmra.mrb[0].mxu0 %v4612
    %v4662 = vpop.f32.mrb[0].mxu0
    %v4663 = vadd.f32 0.0, %v4662
    %v4664 = vpop.f32.mrb[0].mxu0
    %v4665 = vpop.f32.mrb[0].mxu0
    %v4666 = vadd.f32 0.0, %v4665
    %v4667 = vpop.f32.mrb[0].mxu0
    %4668 = vmatprep.mubr.bf16.mxu0 0
    %4669 = vmatmul.mubr.bf16.gmra.mrb[0].mxu0 %v4615
    %v4670 = vpop.f32.mrb[0].mxu0
    %v4671 = vadd.f32 0.0, %v4670
    %v4672 = vpop.f32.mrb[0].mxu0
    %v4673 = vpop.f32.mrb[0].mxu0
    %v4674 = vadd.f32 0.0, %v4673
    %v4675 = vpop.f32.mrb[0].mxu0
    %4676 = vmatprep.mubr.bf16.mxu0 0
    %4677 = vmatmul.mubr.bf16.gmra.mrb[0].mxu0 %v4618
    %v4678 = vpop.f32.mrb[0].mxu0
    %v4679 = vadd.f32 0.0, %v4678
    %v4680 = vpop.f32.mrb[0].mxu0
    %v4681 = vpop.f32.mrb[0].mxu0
    %v4682 = vpop.f32.mrb[0].mxu0
    %4683 = vdwg.mxu0
    %v4684 = vadd.f32 %v4571, %v4655
    %v4685 = vadd.f32 %v4572, %v4658
    %v4686 = vadd.f32 %v4573, %v4663
    %v4687 = vadd.f32 %v4574, %v4666
    %v4688 = vadd.f32 %v4575, %v4671
    %v4689 = vadd.f32 %v4576, %v4674
    %v4690 = vadd.f32 %v4577, %v4679
    %v4691 = vld [vmem:[#allocation4] sm:$0xf8]
    %v4692 = vld [vmem:[#allocation4 + $0x18] sm:$0x3f]
    %s4693 = scalar_lea.vmem [#allocation9], 64
    %v4694 = vld [vmem:[%s4693] sm:$0xff]
    %v4695 = vld [vmem:[%s4693 + $0x8] sm:$0xff]
    %v4698 = vrot.slane %v4691, 3
    %v4699 = vrot.slane %v4291, 3
    %v4700 = vsel %vm801, %v4698, %v4699
    %v4701 = vrot.slane %v4292, 3
    %v4702 = vsel %vm801, %v4699, %v4701
    %v4703 = vrot.slane %v4692, 3
    %v4704 = vsel %vm801, %v4701, %v4703
    %v4706 = vsel %vm4107, %v4700, 0
    %v4709 = vsel %vm4107, %v4702, 0
    %v4712 = vsel %vm4107, %v4704, 0
    %v4715 = vsel %vm4107, %v4703, 0
    %4717 = vmatprep.subr.bf16.mxu0 0
    %4718 = vmatpush1.bf16.msra.mxu0 %v4694
    %4719 = vmatprep.subr.bf16.mxu0 0
    %4720 = vmatpush1.bf16.msra.mxu0 %v4695
    %4721 = vmatprep.subr.bf16.mxu0 0
    %4722 = vmatpush1.bf16.msra.mxu0 0
    %4723 = vmatprep.subr.bf16.mxu0 0
    %4724 = vmatpush1.bf16.msra.mxu0 0
    %4725 = vmatprep.subr.bf16.mxu0 0
    %4726 = vmatpush1.bf16.msra.mxu0 0
    %4727 = vmatprep.subr.bf16.mxu0 0
    %4728 = vmatpush1.bf16.msra.mxu0 0
    %4729 = vmatprep.subr.bf16.mxu0 0
    %4730 = vmatpush1.bf16.msra.mxu0 0
    %4731 = vmatprep.subr.bf16.mxu0 0
    %4732 = vmatpush1.bf16.msra.mxu0 0
    %4733 = vmatprep.subr.bf16.mxu0 0
    %4734 = vmatpush1.bf16.msra.mxu0 0
    %4735 = vmatprep.subr.bf16.mxu0 0
    %4736 = vmatpush1.bf16.msra.mxu0 0
    %4737 = vmatprep.subr.bf16.mxu0 0
    %4738 = vmatpush1.bf16.msra.mxu0 0
    %4739 = vmatprep.subr.bf16.mxu0 0
    %4740 = vmatpush1.bf16.msra.mxu0 0
    %4741 = vmatprep.subr.bf16.mxu0 0
    %4742 = vmatpush1.bf16.msra.mxu0 0
    %4743 = vmatprep.subr.bf16.mxu0 0
    %4744 = vmatpush1.bf16.msra.mxu0 0
    %4745 = vmatprep.subr.bf16.mxu0 0
    %4746 = vmatpush1.bf16.msra.mxu0 0
    %4747 = vmatprep.subr.bf16.mxu0 0
    %4748 = vmatpush1.bf16.msra.mxu0 0
    %4749 = vmatprep.mubr.bf16.mxu0 0
    %4750 = vmatmul.mubr.bf16.gmra.mrb[0].mxu0 %v4706
    %v4751 = vpop.f32.mrb[0].mxu0
    %v4752 = vadd.f32 0.0, %v4751
    %v4753 = vpop.f32.mrb[0].mxu0
    %v4754 = vpop.f32.mrb[0].mxu0
    %v4755 = vadd.f32 0.0, %v4754
    %v4756 = vpop.f32.mrb[0].mxu0
    %4757 = vmatprep.mubr.bf16.mxu0 0
    %4758 = vmatmul.mubr.bf16.gmra.mrb[0].mxu0 %v4709
    %v4759 = vpop.f32.mrb[0].mxu0
    %v4760 = vadd.f32 0.0, %v4759
    %v4761 = vpop.f32.mrb[0].mxu0
    %v4762 = vpop.f32.mrb[0].mxu0
    %v4763 = vadd.f32 0.0, %v4762
    %v4764 = vpop.f32.mrb[0].mxu0
    %4765 = vmatprep.mubr.bf16.mxu0 0
    %4766 = vmatmul.mubr.bf16.gmra.mrb[0].mxu0 %v4712
    %v4767 = vpop.f32.mrb[0].mxu0
    %v4768 = vadd.f32 0.0, %v4767
    %v4769 = vpop.f32.mrb[0].mxu0
    %v4770 = vpop.f32.mrb[0].mxu0
    %v4771 = vadd.f32 0.0, %v4770
    %v4772 = vpop.f32.mrb[0].mxu0
    %4773 = vmatprep.mubr.bf16.mxu0 0
    %4774 = vmatmul.mubr.bf16.gmra.mrb[0].mxu0 %v4715
    %v4775 = vpop.f32.mrb[0].mxu0
    %v4776 = vadd.f32 0.0, %v4775
    %v4777 = vpop.f32.mrb[0].mxu0
    %v4778 = vpop.f32.mrb[0].mxu0
    %v4779 = vpop.f32.mrb[0].mxu0
    %4780 = vdwg.mxu0
    %v4781 = vadd.f32 %v4684, %v4752
    %v4782 = vadd.f32 %v4685, %v4755
    %v4783 = vadd.f32 %v4686, %v4760
    %v4784 = vadd.f32 %v4687, %v4763
    %v4785 = vadd.f32 %v4688, %v4768
    %v4786 = vadd.f32 %v4689, %v4771
    %v4787 = vadd.f32 %v4690, %v4776
    %v4788 = vld [vmem:[#allocation4 + $0x18] sm:$0x7f]
    %s4789 = scalar_lea.vmem [#allocation9], 80
    %v4790 = vld [vmem:[%s4789] sm:$0xff]
    %v4791 = vld [vmem:[%s4789 + $0x8] sm:$0xff]
    %v4793 = vshrl.u32 %v4691, 16
    %v4795 = vrot.slane %v4793, 3
    %v4796 = vshll.u32 %v4691, 16
    %v4798 = vrot.slane %v4796, 4
    %v4799 = vor.u32 %v4795, %v4798
    %v4800 = vrot.slane %v4312, 3
    %v4801 = vrot.slane %v4308, 4
    %v4802 = vor.u32 %v4800, %v4801
    %v4803 = vsel %vm928, %v4799, %v4802
    %v4804 = vrot.slane %v4320, 3
    %v4805 = vrot.slane %v4316, 4
    %v4806 = vor.u32 %v4804, %v4805
    %v4807 = vsel %vm928, %v4802, %v4806
    %v4809 = vshrl.u32 %v4788, 16
    %v4811 = vrot.slane %v4809, 3
    %v4812 = vshll.u32 %v4788, 16
    %v4814 = vrot.slane %v4812, 4
    %v4815 = vor.u32 %v4811, %v4814
    %v4816 = vsel %vm928, %v4806, %v4815
    %v4818 = vsel %vm4107, %v4803, 0
    %v4821 = vsel %vm4107, %v4807, 0
    %v4824 = vsel %vm4107, %v4816, 0
    %v4827 = vsel %vm4107, %v4815, 0
    %4829 = vmatprep.subr.bf16.mxu0 0
    %4830 = vmatpush1.bf16.msra.mxu0 %v4790
    %4831 = vmatprep.subr.bf16.mxu0 0
    %4832 = vmatpush1.bf16.msra.mxu0 %v4791
    %4833 = vmatprep.subr.bf16.mxu0 0
    %4834 = vmatpush1.bf16.msra.mxu0 0
    %4835 = vmatprep.subr.bf16.mxu0 0
    %4836 = vmatpush1.bf16.msra.mxu0 0
    %4837 = vmatprep.subr.bf16.mxu0 0
    %4838 = vmatpush1.bf16.msra.mxu0 0
    %4839 = vmatprep.subr.bf16.mxu0 0
    %4840 = vmatpush1.bf16.msra.mxu0 0
    %4841 = vmatprep.subr.bf16.mxu0 0
    %4842 = vmatpush1.bf16.msra.mxu0 0
    %4843 = vmatprep.subr.bf16.mxu0 0
    %4844 = vmatpush1.bf16.msra.mxu0 0
    %4845 = vmatprep.subr.bf16.mxu0 0
    %4846 = vmatpush1.bf16.msra.mxu0 0
    %4847 = vmatprep.subr.bf16.mxu0 0
    %4848 = vmatpush1.bf16.msra.mxu0 0
    %4849 = vmatprep.subr.bf16.mxu0 0
    %4850 = vmatpush1.bf16.msra.mxu0 0
    %4851 = vmatprep.subr.bf16.mxu0 0
    %4852 = vmatpush1.bf16.msra.mxu0 0
    %4853 = vmatprep.subr.bf16.mxu0 0
    %4854 = vmatpush1.bf16.msra.mxu0 0
    %4855 = vmatprep.subr.bf16.mxu0 0
    %4856 = vmatpush1.bf16.msra.mxu0 0
    %4857 = vmatprep.subr.bf16.mxu0 0
    %4858 = vmatpush1.bf16.msra.mxu0 0
    %4859 = vmatprep.subr.bf16.mxu0 0
    %4860 = vmatpush1.bf16.msra.mxu0 0
    %4861 = vmatprep.mubr.bf16.mxu0 0
    %4862 = vmatmul.mubr.bf16.gmra.mrb[0].mxu0 %v4818
    %v4863 = vpop.f32.mrb[0].mxu0
    %v4864 = vadd.f32 0.0, %v4863
    %v4865 = vpop.f32.mrb[0].mxu0
    %v4866 = vpop.f32.mrb[0].mxu0
    %v4867 = vadd.f32 0.0, %v4866
    %v4868 = vpop.f32.mrb[0].mxu0
    %4869 = vmatprep.mubr.bf16.mxu0 0
    %4870 = vmatmul.mubr.bf16.gmra.mrb[0].mxu0 %v4821
    %v4871 = vpop.f32.mrb[0].mxu0
    %v4872 = vadd.f32 0.0, %v4871
    %v4873 = vpop.f32.mrb[0].mxu0
    %v4874 = vpop.f32.mrb[0].mxu0
    %v4875 = vadd.f32 0.0, %v4874
    %v4876 = vpop.f32.mrb[0].mxu0
    %4877 = vmatprep.mubr.bf16.mxu0 0
    %4878 = vmatmul.mubr.bf16.gmra.mrb[0].mxu0 %v4824
    %v4879 = vpop.f32.mrb[0].mxu0
    %v4880 = vadd.f32 0.0, %v4879
    %v4881 = vpop.f32.mrb[0].mxu0
    %v4882 = vpop.f32.mrb[0].mxu0
    %v4883 = vadd.f32 0.0, %v4882
    %v4884 = vpop.f32.mrb[0].mxu0
    %4885 = vmatprep.mubr.bf16.mxu0 0
    %4886 = vmatmul.mubr.bf16.gmra.mrb[0].mxu0 %v4827
    %v4887 = vpop.f32.mrb[0].mxu0
    %v4888 = vadd.f32 0.0, %v4887
    %v4889 = vpop.f32.mrb[0].mxu0
    %v4890 = vpop.f32.mrb[0].mxu0
    %v4891 = vpop.f32.mrb[0].mxu0
    %4892 = vdwg.mxu0
    %v4893 = vadd.f32 %v4781, %v4864
    %v4894 = vadd.f32 %v4782, %v4867
    %v4895 = vadd.f32 %v4783, %v4872
    %v4896 = vadd.f32 %v4784, %v4875
    %v4897 = vadd.f32 %v4785, %v4880
    %v4898 = vadd.f32 %v4786, %v4883
    %v4899 = vadd.f32 %v4787, %v4888
    %v4900 = vld [vmem:[#allocation4] sm:$0xf0]
    %s4901 = scalar_lea.vmem [#allocation9], 96
    %v4902 = vld [vmem:[%s4901] sm:$0xff]
    %v4903 = vld [vmem:[%s4901 + $0x8] sm:$0xff]
    %v4906 = vrot.slane %v4900, 4
    %v4907 = vrot.slane %v4291, 4
    %v4908 = vsel %vm248, %v4906, %v4907
    %v4909 = vrot.slane %v4292, 4
    %v4910 = vsel %vm248, %v4907, %v4909
    %v4911 = vrot.slane %v4788, 4
    %v4912 = vsel %vm248, %v4909, %v4911
    %v4914 = vsel %vm4107, %v4908, 0
    %v4917 = vsel %vm4107, %v4910, 0
    %v4920 = vsel %vm4107, %v4912, 0
    %v4923 = vsel %vm4107, %v4911, 0
    %4925 = vmatprep.subr.bf16.mxu0 0
    %4926 = vmatpush1.bf16.msra.mxu0 %v4902
    %4927 = vmatprep.subr.bf16.mxu0 0
    %4928 = vmatpush1.bf16.msra.mxu0 %v4903
    %4929 = vmatprep.subr.bf16.mxu0 0
    %4930 = vmatpush1.bf16.msra.mxu0 0
    %4931 = vmatprep.subr.bf16.mxu0 0
    %4932 = vmatpush1.bf16.msra.mxu0 0
    %4933 = vmatprep.subr.bf16.mxu0 0
    %4934 = vmatpush1.bf16.msra.mxu0 0
    %4935 = vmatprep.subr.bf16.mxu0 0
    %4936 = vmatpush1.bf16.msra.mxu0 0
    %4937 = vmatprep.subr.bf16.mxu0 0
    %4938 = vmatpush1.bf16.msra.mxu0 0
    %4939 = vmatprep.subr.bf16.mxu0 0
    %4940 = vmatpush1.bf16.msra.mxu0 0
    %4941 = vmatprep.subr.bf16.mxu0 0
    %4942 = vmatpush1.bf16.msra.mxu0 0
    %4943 = vmatprep.subr.bf16.mxu0 0
    %4944 = vmatpush1.bf16.msra.mxu0 0
    %4945 = vmatprep.subr.bf16.mxu0 0
    %4946 = vmatpush1.bf16.msra.mxu0 0
    %4947 = vmatprep.subr.bf16.mxu0 0
    %4948 = vmatpush1.bf16.msra.mxu0 0
    %4949 = vmatprep.subr.bf16.mxu0 0
    %4950 = vmatpush1.bf16.msra.mxu0 0
    %4951 = vmatprep.subr.bf16.mxu0 0
    %4952 = vmatpush1.bf16.msra.mxu0 0
    %4953 = vmatprep.subr.bf16.mxu0 0
    %4954 = vmatpush1.bf16.msra.mxu0 0
    %4955 = vmatprep.subr.bf16.mxu0 0
    %4956 = vmatpush1.bf16.msra.mxu0 0
    %4957 = vmatprep.mubr.bf16.mxu0 0
    %4958 = vmatmul.mubr.bf16.gmra.mrb[0].mxu0 %v4914
    %v4959 = vpop.f32.mrb[0].mxu0
    %v4960 = vadd.f32 0.0, %v4959
    %v4961 = vpop.f32.mrb[0].mxu0
    %v4962 = vpop.f32.mrb[0].mxu0
    %v4963 = vadd.f32 0.0, %v4962
    %v4964 = vpop.f32.mrb[0].mxu0
    %4965 = vmatprep.mubr.bf16.mxu0 0
    %4966 = vmatmul.mubr.bf16.gmra.mrb[0].mxu0 %v4917
    %v4967 = vpop.f32.mrb[0].mxu0
    %v4968 = vadd.f32 0.0, %v4967
    %v4969 = vpop.f32.mrb[0].mxu0
    %v4970 = vpop.f32.mrb[0].mxu0
    %v4971 = vadd.f32 0.0, %v4970
    %v4972 = vpop.f32.mrb[0].mxu0
    %4973 = vmatprep.mubr.bf16.mxu0 0
    %4974 = vmatmul.mubr.bf16.gmra.mrb[0].mxu0 %v4920
    %v4975 = vpop.f32.mrb[0].mxu0
    %v4976 = vadd.f32 0.0, %v4975
    %v4977 = vpop.f32.mrb[0].mxu0
    %v4978 = vpop.f32.mrb[0].mxu0
    %v4979 = vadd.f32 0.0, %v4978
    %v4980 = vpop.f32.mrb[0].mxu0
    %4981 = vmatprep.mubr.bf16.mxu0 0
    %4982 = vmatmul.mubr.bf16.gmra.mrb[0].mxu0 %v4923
    %v4983 = vpop.f32.mrb[0].mxu0
    %v4984 = vadd.f32 0.0, %v4983
    %v4985 = vpop.f32.mrb[0].mxu0
    %v4986 = vpop.f32.mrb[0].mxu0
    %v4987 = vpop.f32.mrb[0].mxu0
    %4988 = vdwg.mxu0
    %v4989 = vadd.f32 %v4893, %v4960
    %v4990 = vadd.f32 %v4894, %v4963
    %v4991 = vadd.f32 %v4895, %v4968
    %v4992 = vadd.f32 %v4896, %v4971
    %v4993 = vadd.f32 %v4897, %v4976
    %v4994 = vadd.f32 %v4898, %v4979
    %v4995 = vadd.f32 %v4899, %v4984
    %v4996 = vld [vmem:[#allocation4 + $0x18] sm:$0xff]
    %s4997 = scalar_lea.vmem [#allocation9], 112
    %v4998 = vld [vmem:[%s4997] sm:$0xff]
    %v4999 = vld [vmem:[%s4997 + $0x8] sm:$0xff]
    %v5001 = vshrl.u32 %v4900, 16
    %v5003 = vrot.slane %v5001, 4
    %v5004 = vshll.u32 %v4900, 16
    %v5006 = vrot.slane %v5004, 5
    %v5007 = vor.u32 %v5003, %v5006
    %v5008 = vrot.slane %v4312, 4
    %v5009 = vrot.slane %v4308, 5
    %v5010 = vor.u32 %v5008, %v5009
    %v5011 = vsel %vm249, %v5007, %v5010
    %v5012 = vrot.slane %v4320, 4
    %v5013 = vrot.slane %v4316, 5
    %v5014 = vor.u32 %v5012, %v5013
    %v5015 = vsel %vm249, %v5010, %v5014
    %v5017 = vshrl.u32 %v4996, 16
    %v5019 = vrot.slane %v5017, 4
    %v5020 = vshll.u32 %v4996, 16
    %v5022 = vrot.slane %v5020, 5
    %v5023 = vor.u32 %v5019, %v5022
    %v5024 = vsel %vm249, %v5014, %v5023
    %v5026 = vsel %vm4107, %v5011, 0
    %v5029 = vsel %vm4107, %v5015, 0
    %v5032 = vsel %vm4107, %v5024, 0
    %v5035 = vsel %vm4107, %v5023, 0
    %5037 = vmatprep.subr.bf16.mxu0 0
    %5038 = vmatpush1.bf16.msra.mxu0 %v4998
    %5039 = vmatprep.subr.bf16.mxu0 0
    %5040 = vmatpush1.bf16.msra.mxu0 %v4999
    %5041 = vmatprep.subr.bf16.mxu0 0
    %5042 = vmatpush1.bf16.msra.mxu0 0
    %5043 = vmatprep.subr.bf16.mxu0 0
    %5044 = vmatpush1.bf16.msra.mxu0 0
    %5045 = vmatprep.subr.bf16.mxu0 0
    %5046 = vmatpush1.bf16.msra.mxu0 0
    %5047 = vmatprep.subr.bf16.mxu0 0
    %5048 = vmatpush1.bf16.msra.mxu0 0
    %5049 = vmatprep.subr.bf16.mxu0 0
    %5050 = vmatpush1.bf16.msra.mxu0 0
    %5051 = vmatprep.subr.bf16.mxu0 0
    %5052 = vmatpush1.bf16.msra.mxu0 0
    %5053 = vmatprep.subr.bf16.mxu0 0
    %5054 = vmatpush1.bf16.msra.mxu0 0
    %5055 = vmatprep.subr.bf16.mxu0 0
    %5056 = vmatpush1.bf16.msra.mxu0 0
    %5057 = vmatprep.subr.bf16.mxu0 0
    %5058 = vmatpush1.bf16.msra.mxu0 0
    %5059 = vmatprep.subr.bf16.mxu0 0
    %5060 = vmatpush1.bf16.msra.mxu0 0
    %5061 = vmatprep.subr.bf16.mxu0 0
    %5062 = vmatpush1.bf16.msra.mxu0 0
    %5063 = vmatprep.subr.bf16.mxu0 0
    %5064 = vmatpush1.bf16.msra.mxu0 0
    %5065 = vmatprep.subr.bf16.mxu0 0
    %5066 = vmatpush1.bf16.msra.mxu0 0
    %5067 = vmatprep.subr.bf16.mxu0 0
    %5068 = vmatpush1.bf16.msra.mxu0 0
    %5069 = vmatprep.mubr.bf16.mxu0 0
    %5070 = vmatmul.mubr.bf16.gmra.mrb[0].mxu0 %v5026
    %v5071 = vpop.f32.mrb[0].mxu0
    %v5072 = vadd.f32 0.0, %v5071
    %v5073 = vpop.f32.mrb[0].mxu0
    %v5074 = vpop.f32.mrb[0].mxu0
    %v5075 = vadd.f32 0.0, %v5074
    %v5076 = vpop.f32.mrb[0].mxu0
    %5077 = vmatprep.mubr.bf16.mxu0 0
    %5078 = vmatmul.mubr.bf16.gmra.mrb[0].mxu0 %v5029
    %v5079 = vpop.f32.mrb[0].mxu0
    %v5080 = vadd.f32 0.0, %v5079
    %v5081 = vpop.f32.mrb[0].mxu0
    %v5082 = vpop.f32.mrb[0].mxu0
    %v5083 = vadd.f32 0.0, %v5082
    %v5084 = vpop.f32.mrb[0].mxu0
    %5085 = vmatprep.mubr.bf16.mxu0 0
    %5086 = vmatmul.mubr.bf16.gmra.mrb[0].mxu0 %v5032
    %v5087 = vpop.f32.mrb[0].mxu0
    %v5088 = vadd.f32 0.0, %v5087
    %v5089 = vpop.f32.mrb[0].mxu0
    %v5090 = vpop.f32.mrb[0].mxu0
    %v5091 = vadd.f32 0.0, %v5090
    %v5092 = vpop.f32.mrb[0].mxu0
    %5093 = vmatprep.mubr.bf16.mxu0 0
    %5094 = vmatmul.mubr.bf16.gmra.mrb[0].mxu0 %v5035
    %v5095 = vpop.f32.mrb[0].mxu0
    %v5096 = vadd.f32 0.0, %v5095
    %v5097 = vpop.f32.mrb[0].mxu0
    %v5098 = vpop.f32.mrb[0].mxu0
    %v5099 = vpop.f32.mrb[0].mxu0
    %5100 = vdwg.mxu0
    %v5101 = vadd.f32 %v4989, %v5072
    %v5102 = vadd.f32 %v4990, %v5075
    %v5103 = vadd.f32 %v4991, %v5080
    %v5104 = vadd.f32 %v4992, %v5083
    %v5105 = vadd.f32 %v4993, %v5088
    %v5106 = vadd.f32 %v4994, %v5091
    %v5107 = vadd.f32 %v4995, %v5096
    %v5108 = vld [vmem:[#allocation4] sm:$0xc0]
    %v5109 = vld [vmem:[#allocation4 + $0x8] sm:$0xff]
    %v5110 = vld [vmem:[#allocation4 + $0x10] sm:$0xff]
    %v5111 = vld [vmem:[#allocation4 + $0x18] sm:$0xff]
    %v5112 = vld [vmem:[#allocation4 + $0x20] sm:$0x1]
    %s5113 = scalar_lea.vmem [#allocation9], 128
    %v5114 = vld [vmem:[%s5113] sm:$0xff]
    %v5115 = vld [vmem:[%s5113 + $0x8] sm:$0xff]
    %v5121 = vrot.slane %v5108, 6
    %v5122 = vrot.slane %v5109, 6
    %v5123 = vsel %vm1840, %v5121, %v5122
    %v5124 = vrot.slane %v5110, 6
    %v5125 = vsel %vm1840, %v5122, %v5124
    %v5126 = vrot.slane %v5111, 6
    %v5127 = vsel %vm1840, %v5124, %v5126
    %v5128 = vrot.slane %v5112, 6
    %v5129 = vsel %vm1840, %v5126, %v5128
    %v5131 = vsel %vm4107, %v5123, 0
    %v5134 = vsel %vm4107, %v5125, 0
    %v5137 = vsel %vm4107, %v5127, 0
    %v5140 = vsel %vm4107, %v5129, 0
    %5142 = vmatprep.subr.bf16.mxu0 0
    %5143 = vmatpush1.bf16.msra.mxu0 %v5114
    %5144 = vmatprep.subr.bf16.mxu0 0
    %5145 = vmatpush1.bf16.msra.mxu0 %v5115
    %5146 = vmatprep.subr.bf16.mxu0 0
    %5147 = vmatpush1.bf16.msra.mxu0 0
    %5148 = vmatprep.subr.bf16.mxu0 0
    %5149 = vmatpush1.bf16.msra.mxu0 0
    %5150 = vmatprep.subr.bf16.mxu0 0
    %5151 = vmatpush1.bf16.msra.mxu0 0
    %5152 = vmatprep.subr.bf16.mxu0 0
    %5153 = vmatpush1.bf16.msra.mxu0 0
    %5154 = vmatprep.subr.bf16.mxu0 0
    %5155 = vmatpush1.bf16.msra.mxu0 0
    %5156 = vmatprep.subr.bf16.mxu0 0
    %5157 = vmatpush1.bf16.msra.mxu0 0
    %5158 = vmatprep.subr.bf16.mxu0 0
    %5159 = vmatpush1.bf16.msra.mxu0 0
    %5160 = vmatprep.subr.bf16.mxu0 0
    %5161 = vmatpush1.bf16.msra.mxu0 0
    %5162 = vmatprep.subr.bf16.mxu0 0
    %5163 = vmatpush1.bf16.msra.mxu0 0
    %5164 = vmatprep.subr.bf16.mxu0 0
    %5165 = vmatpush1.bf16.msra.mxu0 0
    %5166 = vmatprep.subr.bf16.mxu0 0
    %5167 = vmatpush1.bf16.msra.mxu0 0
    %5168 = vmatprep.subr.bf16.mxu0 0
    %5169 = vmatpush1.bf16.msra.mxu0 0
    %5170 = vmatprep.subr.bf16.mxu0 0
    %5171 = vmatpush1.bf16.msra.mxu0 0
    %5172 = vmatprep.subr.bf16.mxu0 0
    %5173 = vmatpush1.bf16.msra.mxu0 0
    %5174 = vmatprep.mubr.bf16.mxu0 0
    %5175 = vmatmul.mubr.bf16.gmra.mrb[0].mxu0 %v5131
    %v5176 = vpop.f32.mrb[0].mxu0
    %v5177 = vadd.f32 0.0, %v5176
    %v5178 = vpop.f32.mrb[0].mxu0
    %v5179 = vpop.f32.mrb[0].mxu0
    %v5180 = vadd.f32 0.0, %v5179
    %v5181 = vpop.f32.mrb[0].mxu0
    %5182 = vmatprep.mubr.bf16.mxu0 0
    %5183 = vmatmul.mubr.bf16.gmra.mrb[0].mxu0 %v5134
    %v5184 = vpop.f32.mrb[0].mxu0
    %v5185 = vadd.f32 0.0, %v5184
    %v5186 = vpop.f32.mrb[0].mxu0
    %v5187 = vpop.f32.mrb[0].mxu0
    %v5188 = vadd.f32 0.0, %v5187
    %v5189 = vpop.f32.mrb[0].mxu0
    %5190 = vmatprep.mubr.bf16.mxu0 0
    %5191 = vmatmul.mubr.bf16.gmra.mrb[0].mxu0 %v5137
    %v5192 = vpop.f32.mrb[0].mxu0
    %v5193 = vadd.f32 0.0, %v5192
    %v5194 = vpop.f32.mrb[0].mxu0
    %v5195 = vpop.f32.mrb[0].mxu0
    %v5196 = vadd.f32 0.0, %v5195
    %v5197 = vpop.f32.mrb[0].mxu0
    %5198 = vmatprep.mubr.bf16.mxu0 0
    %5199 = vmatmul.mubr.bf16.gmra.mrb[0].mxu0 %v5140
    %v5200 = vpop.f32.mrb[0].mxu0
    %v5201 = vadd.f32 0.0, %v5200
    %v5202 = vpop.f32.mrb[0].mxu0
    %v5203 = vpop.f32.mrb[0].mxu0
    %v5204 = vpop.f32.mrb[0].mxu0
    %5205 = vdwg.mxu0
    %v5206 = vadd.f32 %v5101, %v5177
    %v5207 = vadd.f32 %v5102, %v5180
    %v5208 = vadd.f32 %v5103, %v5185
    %v5209 = vadd.f32 %v5104, %v5188
    %v5210 = vadd.f32 %v5105, %v5193
    %v5211 = vadd.f32 %v5106, %v5196
    %v5212 = vadd.f32 %v5107, %v5201
    %v5213 = vld [vmem:[#allocation4 + $0x20] sm:$0x3]
    %s5214 = scalar_lea.vmem [#allocation9], 144
    %v5215 = vld [vmem:[%s5214] sm:$0xff]
    %v5216 = vld [vmem:[%s5214 + $0x8] sm:$0xff]
    %v5218 = vshrl.u32 %v5108, 16
    %v5220 = vrot.slane %v5218, 6
    %v5221 = vshll.u32 %v5108, 16
    %v5223 = vrot.slane %v5221, 7
    %v5224 = vor.u32 %v5220, %v5223
    %v5226 = vshrl.u32 %v5109, 16
    %v5228 = vrot.slane %v5226, 6
    %v5229 = vshll.u32 %v5109, 16
    %v5231 = vrot.slane %v5229, 7
    %v5232 = vor.u32 %v5228, %v5231
    %v5233 = vsel %vm1841, %v5224, %v5232
    %v5235 = vshrl.u32 %v5110, 16
    %v5237 = vrot.slane %v5235, 6
    %v5238 = vshll.u32 %v5110, 16
    %v5240 = vrot.slane %v5238, 7
    %v5241 = vor.u32 %v5237, %v5240
    %v5242 = vsel %vm1841, %v5232, %v5241
    %v5244 = vshrl.u32 %v5111, 16
    %v5246 = vrot.slane %v5244, 6
    %v5247 = vshll.u32 %v5111, 16
    %v5249 = vrot.slane %v5247, 7
    %v5250 = vor.u32 %v5246, %v5249
    %v5251 = vsel %vm1841, %v5241, %v5250
    %v5253 = vshrl.u32 %v5213, 16
    %v5255 = vrot.slane %v5253, 6
    %v5256 = vshll.u32 %v5213, 16
    %v5258 = vrot.slane %v5256, 7
    %v5259 = vor.u32 %v5255, %v5258
    %v5260 = vsel %vm1841, %v5250, %v5259
    %v5262 = vsel %vm4107, %v5233, 0
    %v5265 = vsel %vm4107, %v5242, 0
    %v5268 = vsel %vm4107, %v5251, 0
    %v5271 = vsel %vm4107, %v5260, 0
    %5273 = vmatprep.subr.bf16.mxu0 0
    %5274 = vmatpush1.bf16.msra.mxu0 %v5215
    %5275 = vmatprep.subr.bf16.mxu0 0
    %5276 = vmatpush1.bf16.msra.mxu0 %v5216
    %5277 = vmatprep.subr.bf16.mxu0 0
    %5278 = vmatpush1.bf16.msra.mxu0 0
    %5279 = vmatprep.subr.bf16.mxu0 0
    %5280 = vmatpush1.bf16.msra.mxu0 0
    %5281 = vmatprep.subr.bf16.mxu0 0
    %5282 = vmatpush1.bf16.msra.mxu0 0
    %5283 = vmatprep.subr.bf16.mxu0 0
    %5284 = vmatpush1.bf16.msra.mxu0 0
    %5285 = vmatprep.subr.bf16.mxu0 0
    %5286 = vmatpush1.bf16.msra.mxu0 0
    %5287 = vmatprep.subr.bf16.mxu0 0
    %5288 = vmatpush1.bf16.msra.mxu0 0
    %5289 = vmatprep.subr.bf16.mxu0 0
    %5290 = vmatpush1.bf16.msra.mxu0 0
    %5291 = vmatprep.subr.bf16.mxu0 0
    %5292 = vmatpush1.bf16.msra.mxu0 0
    %5293 = vmatprep.subr.bf16.mxu0 0
    %5294 = vmatpush1.bf16.msra.mxu0 0
    %5295 = vmatprep.subr.bf16.mxu0 0
    %5296 = vmatpush1.bf16.msra.mxu0 0
    %5297 = vmatprep.subr.bf16.mxu0 0
    %5298 = vmatpush1.bf16.msra.mxu0 0
    %5299 = vmatprep.subr.bf16.mxu0 0
    %5300 = vmatpush1.bf16.msra.mxu0 0
    %5301 = vmatprep.subr.bf16.mxu0 0
    %5302 = vmatpush1.bf16.msra.mxu0 0
    %5303 = vmatprep.subr.bf16.mxu0 0
    %5304 = vmatpush1.bf16.msra.mxu0 0
    %5305 = vmatprep.mubr.bf16.mxu0 0
    %5306 = vmatmul.mubr.bf16.gmra.mrb[0].mxu0 %v5262
    %v5307 = vpop.f32.mrb[0].mxu0
    %v5308 = vadd.f32 0.0, %v5307
    %v5309 = vpop.f32.mrb[0].mxu0
    %v5310 = vpop.f32.mrb[0].mxu0
    %v5311 = vadd.f32 0.0, %v5310
    %v5312 = vpop.f32.mrb[0].mxu0
    %5313 = vmatprep.mubr.bf16.mxu0 0
    %5314 = vmatmul.mubr.bf16.gmra.mrb[0].mxu0 %v5265
    %v5315 = vpop.f32.mrb[0].mxu0
    %v5316 = vadd.f32 0.0, %v5315
    %v5317 = vpop.f32.mrb[0].mxu0
    %v5318 = vpop.f32.mrb[0].mxu0
    %v5319 = vadd.f32 0.0, %v5318
    %v5320 = vpop.f32.mrb[0].mxu0
    %5321 = vmatprep.mubr.bf16.mxu0 0
    %5322 = vmatmul.mubr.bf16.gmra.mrb[0].mxu0 %v5268
    %v5323 = vpop.f32.mrb[0].mxu0
    %v5324 = vadd.f32 0.0, %v5323
    %v5325 = vpop.f32.mrb[0].mxu0
    %v5326 = vpop.f32.mrb[0].mxu0
    %v5327 = vadd.f32 0.0, %v5326
    %v5328 = vpop.f32.mrb[0].mxu0
    %5329 = vmatprep.mubr.bf16.mxu0 0
    %5330 = vmatmul.mubr.bf16.gmra.mrb[0].mxu0 %v5271
    %v5331 = vpop.f32.mrb[0].mxu0
    %v5332 = vadd.f32 0.0, %v5331
    %v5333 = vpop.f32.mrb[0].mxu0
    %v5334 = vpop.f32.mrb[0].mxu0
    %v5335 = vpop.f32.mrb[0].mxu0
    %5336 = vdwg.mxu0
    %v5337 = vadd.f32 %v5206, %v5308
    %v5338 = vadd.f32 %v5207, %v5311
    %v5339 = vadd.f32 %v5208, %v5316
    %v5340 = vadd.f32 %v5209, %v5319
    %v5341 = vadd.f32 %v5210, %v5324
    %v5342 = vadd.f32 %v5211, %v5327
    %v5343 = vadd.f32 %v5212, %v5332
    %v5344 = vld [vmem:[#allocation4] sm:$0x80]
    %s5345 = scalar_lea.vmem [#allocation9], 160
    %v5346 = vld [vmem:[%s5345] sm:$0xff]
    %v5347 = vld [vmem:[%s5345 + $0x8] sm:$0xff]
    %v5350 = vrot.slane %v5344, 7
    %v5351 = vrot.slane %v5109, 7
    %v5352 = vsel %vm2696, %v5350, %v5351
    %v5353 = vrot.slane %v5110, 7
    %v5354 = vsel %vm2696, %v5351, %v5353
    %v5355 = vrot.slane %v5111, 7
    %v5356 = vsel %vm2696, %v5353, %v5355
    %v5357 = vrot.slane %v5213, 7
    %v5358 = vsel %vm2696, %v5355, %v5357
    %v5360 = vsel %vm4107, %v5352, 0
    %v5363 = vsel %vm4107, %v5354, 0
    %v5366 = vsel %vm4107, %v5356, 0
    %v5369 = vsel %vm4107, %v5358, 0
    %5371 = vmatprep.subr.bf16.mxu0 0
    %5372 = vmatpush1.bf16.msra.mxu0 %v5346
    %5373 = vmatprep.subr.bf16.mxu0 0
    %5374 = vmatpush1.bf16.msra.mxu0 %v5347
    %5375 = vmatprep.subr.bf16.mxu0 0
    %5376 = vmatpush1.bf16.msra.mxu0 0
    %5377 = vmatprep.subr.bf16.mxu0 0
    %5378 = vmatpush1.bf16.msra.mxu0 0
    %5379 = vmatprep.subr.bf16.mxu0 0
    %5380 = vmatpush1.bf16.msra.mxu0 0
    %5381 = vmatprep.subr.bf16.mxu0 0
    %5382 = vmatpush1.bf16.msra.mxu0 0
    %5383 = vmatprep.subr.bf16.mxu0 0
    %5384 = vmatpush1.bf16.msra.mxu0 0
    %5385 = vmatprep.subr.bf16.mxu0 0
    %5386 = vmatpush1.bf16.msra.mxu0 0
    %5387 = vmatprep.subr.bf16.mxu0 0
    %5388 = vmatpush1.bf16.msra.mxu0 0
    %5389 = vmatprep.subr.bf16.mxu0 0
    %5390 = vmatpush1.bf16.msra.mxu0 0
    %5391 = vmatprep.subr.bf16.mxu0 0
    %5392 = vmatpush1.bf16.msra.mxu0 0
    %5393 = vmatprep.subr.bf16.mxu0 0
    %5394 = vmatpush1.bf16.msra.mxu0 0
    %5395 = vmatprep.subr.bf16.mxu0 0
    %5396 = vmatpush1.bf16.msra.mxu0 0
    %5397 = vmatprep.subr.bf16.mxu0 0
    %5398 = vmatpush1.bf16.msra.mxu0 0
    %5399 = vmatprep.subr.bf16.mxu0 0
    %5400 = vmatpush1.bf16.msra.mxu0 0
    %5401 = vmatprep.subr.bf16.mxu0 0
    %5402 = vmatpush1.bf16.msra.mxu0 0
    %5403 = vmatprep.mubr.bf16.mxu0 0
    %5404 = vmatmul.mubr.bf16.gmra.mrb[0].mxu0 %v5360
    %v5405 = vpop.f32.mrb[0].mxu0
    %v5406 = vadd.f32 0.0, %v5405
    %v5407 = vpop.f32.mrb[0].mxu0
    %v5408 = vpop.f32.mrb[0].mxu0
    %v5409 = vadd.f32 0.0, %v5408
    %v5410 = vpop.f32.mrb[0].mxu0
    %5411 = vmatprep.mubr.bf16.mxu0 0
    %5412 = vmatmul.mubr.bf16.gmra.mrb[0].mxu0 %v5363
    %v5413 = vpop.f32.mrb[0].mxu0
    %v5414 = vadd.f32 0.0, %v5413
    %v5415 = vpop.f32.mrb[0].mxu0
    %v5416 = vpop.f32.mrb[0].mxu0
    %v5417 = vadd.f32 0.0, %v5416
    %v5418 = vpop.f32.mrb[0].mxu0
    %5419 = vmatprep.mubr.bf16.mxu0 0
    %5420 = vmatmul.mubr.bf16.gmra.mrb[0].mxu0 %v5366
    %v5421 = vpop.f32.mrb[0].mxu0
    %v5422 = vadd.f32 0.0, %v5421
    %v5423 = vpop.f32.mrb[0].mxu0
    %v5424 = vpop.f32.mrb[0].mxu0
    %v5425 = vadd.f32 0.0, %v5424
    %v5426 = vpop.f32.mrb[0].mxu0
    %5427 = vmatprep.mubr.bf16.mxu0 0
    %5428 = vmatmul.mubr.bf16.gmra.mrb[0].mxu0 %v5369
    %v5429 = vpop.f32.mrb[0].mxu0
    %v5430 = vadd.f32 0.0, %v5429
    %v5431 = vpop.f32.mrb[0].mxu0
    %v5432 = vpop.f32.mrb[0].mxu0
    %v5433 = vpop.f32.mrb[0].mxu0
    %5434 = vdwg.mxu0
    %v5435 = vadd.f32 %v5337, %v5406
    %v5436 = vadd.f32 %v5338, %v5409
    %v5437 = vadd.f32 %v5339, %v5414
    %v5438 = vadd.f32 %v5340, %v5417
    %v5439 = vadd.f32 %v5341, %v5422
    %v5440 = vadd.f32 %v5342, %v5425
    %v5441 = vadd.f32 %v5343, %v5430
    %v5442 = vld [vmem:[#allocation4 + $0x20] sm:$0x7]
    %s5443 = scalar_lea.vmem [#allocation9], 176
    %v5444 = vld [vmem:[%s5443] sm:$0xff]
    %v5445 = vld [vmem:[%s5443 + $0x8] sm:$0xff]
    %vm5446 = vsmask.f32 256
    %v5448 = vshrl.u32 %v5344, 16
    %v5450 = vrot.slane %v5448, 7
    %v5451 = vrot.slane %v5226, 7
    %v5452 = vor.u32 %v5451, %v5229
    %v5453 = vsel %vm5446, %v5450, %v5452
    %v5454 = vrot.slane %v5235, 7
    %v5455 = vor.u32 %v5454, %v5238
    %v5456 = vsel %vm5446, %v5451, %v5455
    %v5457 = vrot.slane %v5244, 7
    %v5458 = vor.u32 %v5457, %v5247
    %v5459 = vsel %vm5446, %v5454, %v5458
    %v5461 = vshrl.u32 %v5442, 16
    %v5463 = vrot.slane %v5461, 7
    %v5464 = vshll.u32 %v5442, 16
    %v5466 = vor.u32 %v5463, %v5464
    %v5467 = vsel %vm5446, %v5457, %v5466
    %v5469 = vsel %vm4107, %v5453, 0
    %v5472 = vsel %vm4107, %v5456, 0
    %v5475 = vsel %vm4107, %v5459, 0
    %v5478 = vsel %vm4107, %v5467, 0
    %5480 = vmatprep.subr.bf16.mxu0 0
    %5481 = vmatpush1.bf16.msra.mxu0 %v5444
    %5482 = vmatprep.subr.bf16.mxu0 0
    %5483 = vmatpush1.bf16.msra.mxu0 %v5445
    %5484 = vmatprep.subr.bf16.mxu0 0
    %5485 = vmatpush1.bf16.msra.mxu0 0
    %5486 = vmatprep.subr.bf16.mxu0 0
    %5487 = vmatpush1.bf16.msra.mxu0 0
    %5488 = vmatprep.subr.bf16.mxu0 0
    %5489 = vmatpush1.bf16.msra.mxu0 0
    %5490 = vmatprep.subr.bf16.mxu0 0
    %5491 = vmatpush1.bf16.msra.mxu0 0
    %5492 = vmatprep.subr.bf16.mxu0 0
    %5493 = vmatpush1.bf16.msra.mxu0 0
    %5494 = vmatprep.subr.bf16.mxu0 0
    %5495 = vmatpush1.bf16.msra.mxu0 0
    %5496 = vmatprep.subr.bf16.mxu0 0
    %5497 = vmatpush1.bf16.msra.mxu0 0
    %5498 = vmatprep.subr.bf16.mxu0 0
    %5499 = vmatpush1.bf16.msra.mxu0 0
    %5500 = vmatprep.subr.bf16.mxu0 0
    %5501 = vmatpush1.bf16.msra.mxu0 0
    %5502 = vmatprep.subr.bf16.mxu0 0
    %5503 = vmatpush1.bf16.msra.mxu0 0
    %5504 = vmatprep.subr.bf16.mxu0 0
    %5505 = vmatpush1.bf16.msra.mxu0 0
    %5506 = vmatprep.subr.bf16.mxu0 0
    %5507 = vmatpush1.bf16.msra.mxu0 0
    %5508 = vmatprep.subr.bf16.mxu0 0
    %5509 = vmatpush1.bf16.msra.mxu0 0
    %5510 = vmatprep.subr.bf16.mxu0 0
    %5511 = vmatpush1.bf16.msra.mxu0 0
    %5512 = vmatprep.mubr.bf16.mxu0 0
    %5513 = vmatmul.mubr.bf16.gmra.mrb[0].mxu0 %v5469
    %v5514 = vpop.f32.mrb[0].mxu0
    %v5515 = vadd.f32 0.0, %v5514
    %v5516 = vpop.f32.mrb[0].mxu0
    %v5517 = vpop.f32.mrb[0].mxu0
    %v5518 = vadd.f32 0.0, %v5517
    %v5519 = vpop.f32.mrb[0].mxu0
    %5520 = vmatprep.mubr.bf16.mxu0 0
    %5521 = vmatmul.mubr.bf16.gmra.mrb[0].mxu0 %v5472
    %v5522 = vpop.f32.mrb[0].mxu0
    %v5523 = vadd.f32 0.0, %v5522
    %v5524 = vpop.f32.mrb[0].mxu0
    %v5525 = vpop.f32.mrb[0].mxu0
    %v5526 = vadd.f32 0.0, %v5525
    %v5527 = vpop.f32.mrb[0].mxu0
    %5528 = vmatprep.mubr.bf16.mxu0 0
    %5529 = vmatmul.mubr.bf16.gmra.mrb[0].mxu0 %v5475
    %v5530 = vpop.f32.mrb[0].mxu0
    %v5531 = vadd.f32 0.0, %v5530
    %v5532 = vpop.f32.mrb[0].mxu0
    %v5533 = vpop.f32.mrb[0].mxu0
    %v5534 = vadd.f32 0.0, %v5533
    %v5535 = vpop.f32.mrb[0].mxu0
    %5536 = vmatprep.mubr.bf16.mxu0 0
    %5537 = vmatmul.mubr.bf16.gmra.mrb[0].mxu0 %v5478
    %v5538 = vpop.f32.mrb[0].mxu0
    %v5539 = vadd.f32 0.0, %v5538
    %v5540 = vpop.f32.mrb[0].mxu0
    %v5541 = vpop.f32.mrb[0].mxu0
    %v5542 = vpop.f32.mrb[0].mxu0
    %5543 = vdwg.mxu0
    %v5544 = vadd.f32 %v5435, %v5515
    %v5545 = vadd.f32 %v5436, %v5518
    %v5546 = vadd.f32 %v5437, %v5523
    %v5547 = vadd.f32 %v5438, %v5526
    %v5548 = vadd.f32 %v5439, %v5531
    %v5549 = vadd.f32 %v5440, %v5534
    %v5550 = vadd.f32 %v5441, %v5539
    %v5551 = vld [vmem:[#allocation4 + $0x8] sm:$0xfe]
    %v5552 = vld [vmem:[#allocation4 + $0x20] sm:$0xf]
    %s5553 = scalar_lea.vmem [#allocation9], 192
    %v5554 = vld [vmem:[%s5553] sm:$0xff]
    %v5555 = vld [vmem:[%s5553 + $0x8] sm:$0xff]
    %v5558 = vrot.slane %v5551, 1
    %v5559 = vrot.slane %v5110, 1
    %v5560 = vsel %vm638, %v5558, %v5559
    %v5561 = vrot.slane %v5111, 1
    %v5562 = vsel %vm638, %v5559, %v5561
    %v5563 = vrot.slane %v5552, 1
    %v5564 = vsel %vm638, %v5561, %v5563
    %v5566 = vsel %vm4107, %v5560, 0
    %v5569 = vsel %vm4107, %v5562, 0
    %v5572 = vsel %vm4107, %v5564, 0
    %v5575 = vsel %vm4107, %v5563, 0
    %5577 = vmatprep.subr.bf16.mxu0 0
    %5578 = vmatpush1.bf16.msra.mxu0 %v5554
    %5579 = vmatprep.subr.bf16.mxu0 0
    %5580 = vmatpush1.bf16.msra.mxu0 %v5555
    %5581 = vmatprep.subr.bf16.mxu0 0
    %5582 = vmatpush1.bf16.msra.mxu0 0
    %5583 = vmatprep.subr.bf16.mxu0 0
    %5584 = vmatpush1.bf16.msra.mxu0 0
    %5585 = vmatprep.subr.bf16.mxu0 0
    %5586 = vmatpush1.bf16.msra.mxu0 0
    %5587 = vmatprep.subr.bf16.mxu0 0
    %5588 = vmatpush1.bf16.msra.mxu0 0
    %5589 = vmatprep.subr.bf16.mxu0 0
    %5590 = vmatpush1.bf16.msra.mxu0 0
    %5591 = vmatprep.subr.bf16.mxu0 0
    %5592 = vmatpush1.bf16.msra.mxu0 0
    %5593 = vmatprep.subr.bf16.mxu0 0
    %5594 = vmatpush1.bf16.msra.mxu0 0
    %5595 = vmatprep.subr.bf16.mxu0 0
    %5596 = vmatpush1.bf16.msra.mxu0 0
    %5597 = vmatprep.subr.bf16.mxu0 0
    %5598 = vmatpush1.bf16.msra.mxu0 0
    %5599 = vmatprep.subr.bf16.mxu0 0
    %5600 = vmatpush1.bf16.msra.mxu0 0
    %5601 = vmatprep.subr.bf16.mxu0 0
    %5602 = vmatpush1.bf16.msra.mxu0 0
    %5603 = vmatprep.subr.bf16.mxu0 0
    %5604 = vmatpush1.bf16.msra.mxu0 0
    %5605 = vmatprep.subr.bf16.mxu0 0
    %5606 = vmatpush1.bf16.msra.mxu0 0
    %5607 = vmatprep.subr.bf16.mxu0 0
    %5608 = vmatpush1.bf16.msra.mxu0 0
    %5609 = vmatprep.mubr.bf16.mxu0 0
    %5610 = vmatmul.mubr.bf16.gmra.mrb[0].mxu0 %v5566
    %v5611 = vpop.f32.mrb[0].mxu0
    %v5612 = vadd.f32 0.0, %v5611
    %v5613 = vpop.f32.mrb[0].mxu0
    %v5614 = vpop.f32.mrb[0].mxu0
    %v5615 = vadd.f32 0.0, %v5614
    %v5616 = vpop.f32.mrb[0].mxu0
    %5617 = vmatprep.mubr.bf16.mxu0 0
    %5618 = vmatmul.mubr.bf16.gmra.mrb[0].mxu0 %v5569
    %v5619 = vpop.f32.mrb[0].mxu0
    %v5620 = vadd.f32 0.0, %v5619
    %v5621 = vpop.f32.mrb[0].mxu0
    %v5622 = vpop.f32.mrb[0].mxu0
    %v5623 = vadd.f32 0.0, %v5622
    %v5624 = vpop.f32.mrb[0].mxu0
    %5625 = vmatprep.mubr.bf16.mxu0 0
    %5626 = vmatmul.mubr.bf16.gmra.mrb[0].mxu0 %v5572
    %v5627 = vpop.f32.mrb[0].mxu0
    %v5628 = vadd.f32 0.0, %v5627
    %v5629 = vpop.f32.mrb[0].mxu0
    %v5630 = vpop.f32.mrb[0].mxu0
    %v5631 = vadd.f32 0.0, %v5630
    %v5632 = vpop.f32.mrb[0].mxu0
    %5633 = vmatprep.mubr.bf16.mxu0 0
    %5634 = vmatmul.mubr.bf16.gmra.mrb[0].mxu0 %v5575
    %v5635 = vpop.f32.mrb[0].mxu0
    %v5636 = vadd.f32 0.0, %v5635
    %v5637 = vpop.f32.mrb[0].mxu0
    %v5638 = vpop.f32.mrb[0].mxu0
    %v5639 = vpop.f32.mrb[0].mxu0
    %5640 = vdwg.mxu0
    %v5641 = vadd.f32 %v5544, %v5612
    %v5642 = vadd.f32 %v5545, %v5615
    %v5643 = vadd.f32 %v5546, %v5620
    %v5644 = vadd.f32 %v5547, %v5623
    %v5645 = vadd.f32 %v5548, %v5628
    %v5646 = vadd.f32 %v5549, %v5631
    %v5647 = vadd.f32 %v5550, %v5636
    %v5648 = vld [vmem:[#allocation4 + $0x20] sm:$0x1f]
    %s5649 = scalar_lea.vmem [#allocation9], 208
    %v5650 = vld [vmem:[%s5649] sm:$0xff]
    %v5651 = vld [vmem:[%s5649 + $0x8] sm:$0xff]
    %v5653 = vshrl.u32 %v5551, 16
    %v5655 = vrot.slane %v5653, 1
    %v5656 = vshll.u32 %v5551, 16
    %v5658 = vrot.slane %v5656, 2
    %v5659 = vor.u32 %v5655, %v5658
    %v5660 = vrot.slane %v5235, 1
    %v5661 = vrot.slane %v5238, 2
    %v5662 = vor.u32 %v5660, %v5661
    %v5663 = vsel %vm4582, %v5659, %v5662
    %v5664 = vrot.slane %v5244, 1
    %v5665 = vrot.slane %v5247, 2
    %v5666 = vor.u32 %v5664, %v5665
    %v5667 = vsel %vm4582, %v5662, %v5666
    %v5669 = vshrl.u32 %v5648, 16
    %v5671 = vrot.slane %v5669, 1
    %v5672 = vshll.u32 %v5648, 16
    %v5674 = vrot.slane %v5672, 2
    %v5675 = vor.u32 %v5671, %v5674
    %v5676 = vsel %vm4582, %v5666, %v5675
    %v5678 = vsel %vm4107, %v5663, 0
    %v5681 = vsel %vm4107, %v5667, 0
    %v5684 = vsel %vm4107, %v5676, 0
    %v5687 = vsel %vm4107, %v5675, 0
    %5689 = vmatprep.subr.bf16.mxu0 0
    %5690 = vmatpush1.bf16.msra.mxu0 %v5650
    %5691 = vmatprep.subr.bf16.mxu0 0
    %5692 = vmatpush1.bf16.msra.mxu0 %v5651
    %5693 = vmatprep.subr.bf16.mxu0 0
    %5694 = vmatpush1.bf16.msra.mxu0 0
    %5695 = vmatprep.subr.bf16.mxu0 0
    %5696 = vmatpush1.bf16.msra.mxu0 0
    %5697 = vmatprep.subr.bf16.mxu0 0
    %5698 = vmatpush1.bf16.msra.mxu0 0
    %5699 = vmatprep.subr.bf16.mxu0 0
    %5700 = vmatpush1.bf16.msra.mxu0 0
    %5701 = vmatprep.subr.bf16.mxu0 0
    %5702 = vmatpush1.bf16.msra.mxu0 0
    %5703 = vmatprep.subr.bf16.mxu0 0
    %5704 = vmatpush1.bf16.msra.mxu0 0
    %5705 = vmatprep.subr.bf16.mxu0 0
    %5706 = vmatpush1.bf16.msra.mxu0 0
    %5707 = vmatprep.subr.bf16.mxu0 0
    %5708 = vmatpush1.bf16.msra.mxu0 0
    %5709 = vmatprep.subr.bf16.mxu0 0
    %5710 = vmatpush1.bf16.msra.mxu0 0
    %5711 = vmatprep.subr.bf16.mxu0 0
    %5712 = vmatpush1.bf16.msra.mxu0 0
    %5713 = vmatprep.subr.bf16.mxu0 0
    %5714 = vmatpush1.bf16.msra.mxu0 0
    %5715 = vmatprep.subr.bf16.mxu0 0
    %5716 = vmatpush1.bf16.msra.mxu0 0
    %5717 = vmatprep.subr.bf16.mxu0 0
    %5718 = vmatpush1.bf16.msra.mxu0 0
    %5719 = vmatprep.subr.bf16.mxu0 0
    %5720 = vmatpush1.bf16.msra.mxu0 0
    %5721 = vmatprep.mubr.bf16.mxu0 0
    %5722 = vmatmul.mubr.bf16.gmra.mrb[0].mxu0 %v5678
    %v5723 = vpop.f32.mrb[0].mxu0
    %v5724 = vadd.f32 0.0, %v5723
    %v5725 = vpop.f32.mrb[0].mxu0
    %v5726 = vpop.f32.mrb[0].mxu0
    %v5727 = vadd.f32 0.0, %v5726
    %v5728 = vpop.f32.mrb[0].mxu0
    %5729 = vmatprep.mubr.bf16.mxu0 0
    %5730 = vmatmul.mubr.bf16.gmra.mrb[0].mxu0 %v5681
    %v5731 = vpop.f32.mrb[0].mxu0
    %v5732 = vadd.f32 0.0, %v5731
    %v5733 = vpop.f32.mrb[0].mxu0
    %v5734 = vpop.f32.mrb[0].mxu0
    %v5735 = vadd.f32 0.0, %v5734
    %v5736 = vpop.f32.mrb[0].mxu0
    %5737 = vmatprep.mubr.bf16.mxu0 0
    %5738 = vmatmul.mubr.bf16.gmra.mrb[0].mxu0 %v5684
    %v5739 = vpop.f32.mrb[0].mxu0
    %v5740 = vadd.f32 0.0, %v5739
    %v5741 = vpop.f32.mrb[0].mxu0
    %v5742 = vpop.f32.mrb[0].mxu0
    %v5743 = vadd.f32 0.0, %v5742
    %v5744 = vpop.f32.mrb[0].mxu0
    %5745 = vmatprep.mubr.bf16.mxu0 0
    %5746 = vmatmul.mubr.bf16.gmra.mrb[0].mxu0 %v5687
    %v5747 = vpop.f32.mrb[0].mxu0
    %v5748 = vadd.f32 0.0, %v5747
    %v5749 = vpop.f32.mrb[0].mxu0
    %v5750 = vpop.f32.mrb[0].mxu0
    %v5751 = vpop.f32.mrb[0].mxu0
    %5752 = vdwg.mxu0
    %v5753 = vadd.f32 %v5641, %v5724
    %v5754 = vadd.f32 %v5642, %v5727
    %v5755 = vadd.f32 %v5643, %v5732
    %v5756 = vadd.f32 %v5644, %v5735
    %v5757 = vadd.f32 %v5645, %v5740
    %v5758 = vadd.f32 %v5646, %v5743
    %v5759 = vadd.f32 %v5647, %v5748
    %v5760 = vld [vmem:[#allocation4 + $0x8] sm:$0xfc]
    %s5761 = scalar_lea.vmem [#allocation9], 224
    %v5762 = vld [vmem:[%s5761] sm:$0xff]
    %v5763 = vld [vmem:[%s5761 + $0x8] sm:$0xff]
    %v5766 = vrot.slane %v5760, 2
    %v5767 = vrot.slane %v5110, 2
    %v5768 = vsel %vm1241, %v5766, %v5767
    %v5769 = vrot.slane %v5111, 2
    %v5770 = vsel %vm1241, %v5767, %v5769
    %v5771 = vrot.slane %v5648, 2
    %v5772 = vsel %vm1241, %v5769, %v5771
    %v5774 = vsel %vm4107, %v5768, 0
    %v5777 = vsel %vm4107, %v5770, 0
    %v5780 = vsel %vm4107, %v5772, 0
    %v5783 = vsel %vm4107, %v5771, 0
    %5785 = vmatprep.subr.bf16.mxu0 0
    %5786 = vmatpush1.bf16.msra.mxu0 %v5762
    %5787 = vmatprep.subr.bf16.mxu0 0
    %5788 = vmatpush1.bf16.msra.mxu0 %v5763
    %5789 = vmatprep.subr.bf16.mxu0 0
    %5790 = vmatpush1.bf16.msra.mxu0 0
    %5791 = vmatprep.subr.bf16.mxu0 0
    %5792 = vmatpush1.bf16.msra.mxu0 0
    %5793 = vmatprep.subr.bf16.mxu0 0
    %5794 = vmatpush1.bf16.msra.mxu0 0
    %5795 = vmatprep.subr.bf16.mxu0 0
    %5796 = vmatpush1.bf16.msra.mxu0 0
    %5797 = vmatprep.subr.bf16.mxu0 0
    %5798 = vmatpush1.bf16.msra.mxu0 0
    %5799 = vmatprep.subr.bf16.mxu0 0
    %5800 = vmatpush1.bf16.msra.mxu0 0
    %5801 = vmatprep.subr.bf16.mxu0 0
    %5802 = vmatpush1.bf16.msra.mxu0 0
    %5803 = vmatprep.subr.bf16.mxu0 0
    %5804 = vmatpush1.bf16.msra.mxu0 0
    %5805 = vmatprep.subr.bf16.mxu0 0
    %5806 = vmatpush1.bf16.msra.mxu0 0
    %5807 = vmatprep.subr.bf16.mxu0 0
    %5808 = vmatpush1.bf16.msra.mxu0 0
    %5809 = vmatprep.subr.bf16.mxu0 0
    %5810 = vmatpush1.bf16.msra.mxu0 0
    %5811 = vmatprep.subr.bf16.mxu0 0
    %5812 = vmatpush1.bf16.msra.mxu0 0
    %5813 = vmatprep.subr.bf16.mxu0 0
    %5814 = vmatpush1.bf16.msra.mxu0 0
    %5815 = vmatprep.subr.bf16.mxu0 0
    %5816 = vmatpush1.bf16.msra.mxu0 0
    %5817 = vmatprep.mubr.bf16.mxu0 0
    %5818 = vmatmul.mubr.bf16.gmra.mrb[0].mxu0 %v5774
    %v5819 = vpop.f32.mrb[0].mxu0
    %v5820 = vadd.f32 0.0, %v5819
    %v5821 = vpop.f32.mrb[0].mxu0
    %v5822 = vpop.f32.mrb[0].mxu0
    %v5823 = vadd.f32 0.0, %v5822
    %v5824 = vpop.f32.mrb[0].mxu0
    %5825 = vmatprep.mubr.bf16.mxu0 0
    %5826 = vmatmul.mubr.bf16.gmra.mrb[0].mxu0 %v5777
    %v5827 = vpop.f32.mrb[0].mxu0
    %v5828 = vadd.f32 0.0, %v5827
    %v5829 = vpop.f32.mrb[0].mxu0
    %v5830 = vpop.f32.mrb[0].mxu0
    %v5831 = vadd.f32 0.0, %v5830
    %v5832 = vpop.f32.mrb[0].mxu0
    %5833 = vmatprep.mubr.bf16.mxu0 0
    %5834 = vmatmul.mubr.bf16.gmra.mrb[0].mxu0 %v5780
    %v5835 = vpop.f32.mrb[0].mxu0
    %v5836 = vadd.f32 0.0, %v5835
    %v5837 = vpop.f32.mrb[0].mxu0
    %v5838 = vpop.f32.mrb[0].mxu0
    %v5839 = vadd.f32 0.0, %v5838
    %v5840 = vpop.f32.mrb[0].mxu0
    %5841 = vmatprep.mubr.bf16.mxu0 0
    %5842 = vmatmul.mubr.bf16.gmra.mrb[0].mxu0 %v5783
    %v5843 = vpop.f32.mrb[0].mxu0
    %v5844 = vadd.f32 0.0, %v5843
    %v5845 = vpop.f32.mrb[0].mxu0
    %v5846 = vpop.f32.mrb[0].mxu0
    %v5847 = vpop.f32.mrb[0].mxu0
    %5848 = vdwg.mxu0
    %v5849 = vadd.f32 %v5753, %v5820
    %v5850 = vadd.f32 %v5754, %v5823
    %v5851 = vadd.f32 %v5755, %v5828
    %v5852 = vadd.f32 %v5756, %v5831
    %v5853 = vadd.f32 %v5757, %v5836
    %v5854 = vadd.f32 %v5758, %v5839
    %v5855 = vadd.f32 %v5759, %v5844
    %v5856 = vld [vmem:[#allocation4 + $0x20] sm:$0x3f]
    %s5857 = scalar_lea.vmem [#allocation9], 240
    %v5858 = vld [vmem:[%s5857] sm:$0xff]
    %v5859 = vld [vmem:[%s5857 + $0x8] sm:$0xff]
    %v5861 = vshrl.u32 %v5760, 16
    %v5863 = vrot.slane %v5861, 2
    %v5864 = vshll.u32 %v5760, 16
    %v5866 = vrot.slane %v5864, 3
    %v5867 = vor.u32 %v5863, %v5866
    %v5868 = vrot.slane %v5235, 2
    %v5869 = vrot.slane %v5238, 3
    %v5870 = vor.u32 %v5868, %v5869
    %v5871 = vsel %vm1404, %v5867, %v5870
    %v5872 = vrot.slane %v5244, 2
    %v5873 = vrot.slane %v5247, 3
    %v5874 = vor.u32 %v5872, %v5873
    %v5875 = vsel %vm1404, %v5870, %v5874
    %v5877 = vshrl.u32 %v5856, 16
    %v5879 = vrot.slane %v5877, 2
    %v5880 = vshll.u32 %v5856, 16
    %v5882 = vrot.slane %v5880, 3
    %v5883 = vor.u32 %v5879, %v5882
    %v5884 = vsel %vm1404, %v5874, %v5883
    %v5886 = vsel %vm4107, %v5871, 0
    %v5889 = vsel %vm4107, %v5875, 0
    %v5892 = vsel %vm4107, %v5884, 0
    %v5895 = vsel %vm4107, %v5883, 0
    %5897 = vmatprep.subr.bf16.mxu0 0
    %5898 = vmatpush1.bf16.msra.mxu0 %v5858
    %5899 = vmatprep.subr.bf16.mxu0 0
    %5900 = vmatpush1.bf16.msra.mxu0 %v5859
    %5901 = vmatprep.subr.bf16.mxu0 0
    %5902 = vmatpush1.bf16.msra.mxu0 0
    %5903 = vmatprep.subr.bf16.mxu0 0
    %5904 = vmatpush1.bf16.msra.mxu0 0
    %5905 = vmatprep.subr.bf16.mxu0 0
    %5906 = vmatpush1.bf16.msra.mxu0 0
    %5907 = vmatprep.subr.bf16.mxu0 0
    %5908 = vmatpush1.bf16.msra.mxu0 0
    %5909 = vmatprep.subr.bf16.mxu0 0
    %5910 = vmatpush1.bf16.msra.mxu0 0
    %5911 = vmatprep.subr.bf16.mxu0 0
    %5912 = vmatpush1.bf16.msra.mxu0 0
    %5913 = vmatprep.subr.bf16.mxu0 0
    %5914 = vmatpush1.bf16.msra.mxu0 0
    %5915 = vmatprep.subr.bf16.mxu0 0
    %5916 = vmatpush1.bf16.msra.mxu0 0
    %5917 = vmatprep.subr.bf16.mxu0 0
    %5918 = vmatpush1.bf16.msra.mxu0 0
    %5919 = vmatprep.subr.bf16.mxu0 0
    %5920 = vmatpush1.bf16.msra.mxu0 0
    %5921 = vmatprep.subr.bf16.mxu0 0
    %5922 = vmatpush1.bf16.msra.mxu0 0
    %5923 = vmatprep.subr.bf16.mxu0 0
    %5924 = vmatpush1.bf16.msra.mxu0 0
    %5925 = vmatprep.subr.bf16.mxu0 0
    %5926 = vmatpush1.bf16.msra.mxu0 0
    %5927 = vmatprep.subr.bf16.mxu0 0
    %5928 = vmatpush1.bf16.msra.mxu0 0
    %5929 = vmatprep.mubr.bf16.mxu0 0
    %5930 = vmatmul.mubr.bf16.gmra.mrb[0].mxu0 %v5886
    %v5931 = vpop.f32.mrb[0].mxu0
    %v5932 = vadd.f32 0.0, %v5931
    %v5933 = vpop.f32.mrb[0].mxu0
    %v5934 = vpop.f32.mrb[0].mxu0
    %v5935 = vadd.f32 0.0, %v5934
    %v5936 = vpop.f32.mrb[0].mxu0
    %5937 = vmatprep.mubr.bf16.mxu0 0
    %5938 = vmatmul.mubr.bf16.gmra.mrb[0].mxu0 %v5889
    %v5939 = vpop.f32.mrb[0].mxu0
    %v5940 = vadd.f32 0.0, %v5939
    %v5941 = vpop.f32.mrb[0].mxu0
    %v5942 = vpop.f32.mrb[0].mxu0
    %v5943 = vadd.f32 0.0, %v5942
    %v5944 = vpop.f32.mrb[0].mxu0
    %5945 = vmatprep.mubr.bf16.mxu0 0
    %5946 = vmatmul.mubr.bf16.gmra.mrb[0].mxu0 %v5892
    %v5947 = vpop.f32.mrb[0].mxu0
    %v5948 = vadd.f32 0.0, %v5947
    %v5949 = vpop.f32.mrb[0].mxu0
    %v5950 = vpop.f32.mrb[0].mxu0
    %v5951 = vadd.f32 0.0, %v5950
    %v5952 = vpop.f32.mrb[0].mxu0
    %5953 = vmatprep.mubr.bf16.mxu0 0
    %5954 = vmatmul.mubr.bf16.gmra.mrb[0].mxu0 %v5895
    %v5955 = vpop.f32.mrb[0].mxu0
    %v5956 = vadd.f32 0.0, %v5955
    %v5957 = vpop.f32.mrb[0].mxu0
    %v5958 = vpop.f32.mrb[0].mxu0
    %v5959 = vpop.f32.mrb[0].mxu0
    %5960 = vdwg.mxu0
    %v5961 = vadd.f32 %v5849, %v5932
    %v5962 = vadd.f32 %v5850, %v5935
    %v5963 = vadd.f32 %v5851, %v5940
    %v5964 = vadd.f32 %v5852, %v5943
    %v5965 = vadd.f32 %v5853, %v5948
    %v5966 = vadd.f32 %v5854, %v5951
    %v5967 = vadd.f32 %v5855, %v5956
    %v5968 = vsel %vm314, 1, 0
    %v5969 = vsel %vm315, 1, 0
    %v5970 = vsel %vm316, 1, 0
    %v5971 = vsel %vm317, 1, 0
    %v5972 = vsel %vm318, 1, 0
    %v5973 = vsel %vm319, 1, 0
    %v5974 = vsel %vm320, 1, 0
    %5975 = vset.pattern.permute.xlu0 0
    %5976 = vperm.xlu0 %5975, %v5968
    %v5977 = vpop.permute.xlu0 %5976
    %5978 = vset.pattern.permute.xlu0 0
    %5979 = vperm.xlu0 %5978, %v5969
    %v5980 = vpop.permute.xlu0 %5979
    %5981 = vset.pattern.permute.xlu0 0
    %5982 = vperm.xlu0 %5981, %v5970
    %v5983 = vpop.permute.xlu0 %5982
    %5984 = vset.pattern.permute.xlu0 0
    %5985 = vperm.xlu0 %5984, %v5971
    %v5986 = vpop.permute.xlu0 %5985
    %5987 = vset.pattern.permute.xlu0 0
    %5988 = vperm.xlu0 %5987, %v5972
    %v5989 = vpop.permute.xlu0 %5988
    %5990 = vset.pattern.permute.xlu0 0
    %5991 = vperm.xlu0 %5990, %v5973
    %v5992 = vpop.permute.xlu0 %5991
    %5993 = vset.pattern.permute.xlu0 0
    %5994 = vperm.xlu0 %5993, %v5974
    %v5995 = vpop.permute.xlu0 %5994
    %vm5996 = vcmp.eq.s32.totalorder %v5977, 1
    %vm5997 = vcmp.eq.s32.totalorder %v5980, 1
    %vm5998 = vcmp.eq.s32.totalorder %v5983, 1
    %vm5999 = vcmp.eq.s32.totalorder %v5986, 1
    %vm6000 = vcmp.eq.s32.totalorder %v5989, 1
    %vm6001 = vcmp.eq.s32.totalorder %v5992, 1
    %vm6002 = vcmp.eq.s32.totalorder %v5995, 1
    %v6003 = vsel %vm5996, %v5961, 0.0
    %v6004 = vsel %vm5997, %v5962, 0.0
    %v6005 = vsel %vm5998, %v5963, 0.0
    %v6006 = vsel %vm5999, %v5964, 0.0
    %v6007 = vsel %vm6000, %v5965, 0.0
    %v6008 = vsel %vm6001, %v5966, 0.0
    %v6009 = vsel %vm6002, %v5967, 0.0
    %v6010 = vld [vmem:[#allocation27] sm:$0x1]
    %v6011 = vld [vmem:[#allocation29] sm:$0x1]
    %v6012 = vsel %vm289, %v6003, 0.0
    %v6013 = vsel %vm289, %v6004, 0.0
    %v6014 = vadd.f32 %v6012, %v6013
    %v6015 = vsel %vm289, %v6005, 0.0
    %v6016 = vadd.f32 %v6014, %v6015
    %v6017 = vsel %vm289, %v6006, 0.0
    %v6018 = vadd.f32 %v6016, %v6017
    %v6019 = vsel %vm289, %v6007, 0.0
    %v6020 = vadd.f32 %v6018, %v6019
    %v6021 = vsel %vm289, %v6008, 0.0
    %v6022 = vadd.f32 %v6020, %v6021
    %vm6023 = vcmask 521216
    %v6024 = vsel %vm6023, %v6009, 0.0
    %v6025 = vadd.f32 %v6022, %v6024
    %v6026 = vrot.slane %v6025, 4
    %v6027 = vadd.f32 %v6025, %v6026
    %v6028 = vrot.slane %v6027, 2
    %v6029 = vadd.f32 %v6027, %v6028
    %v6030 = vrot.slane %v6029, 1
    %v6031 = vadd.f32 %v6029, %v6030
    %v6032 = vmul.f32 %v6003, %v6003
    %v6033 = vmul.f32 %v6004, %v6004
    %v6034 = vmul.f32 %v6005, %v6005
    %v6035 = vmul.f32 %v6006, %v6006
    %v6036 = vmul.f32 %v6007, %v6007
    %v6037 = vmul.f32 %v6008, %v6008
    %v6038 = vmul.f32 %v6009, %v6009
    %v6039 = vsel %vm289, %v6032, 0.0
    %v6040 = vsel %vm289, %v6033, 0.0
    %v6041 = vadd.f32 %v6039, %v6040
    %v6042 = vsel %vm289, %v6034, 0.0
    %v6043 = vadd.f32 %v6041, %v6042
    %v6044 = vsel %vm289, %v6035, 0.0
    %v6045 = vadd.f32 %v6043, %v6044
    %v6046 = vsel %vm289, %v6036, 0.0
    %v6047 = vadd.f32 %v6045, %v6046
    %v6048 = vsel %vm289, %v6037, 0.0
    %v6049 = vadd.f32 %v6047, %v6048
    %v6050 = vsel %vm6023, %v6038, 0.0
    %v6051 = vadd.f32 %v6049, %v6050
    %v6052 = vrot.slane %v6051, 4
    %v6053 = vadd.f32 %v6051, %v6052
    %v6054 = vrot.slane %v6053, 2
    %v6055 = vadd.f32 %v6053, %v6054
    %v6056 = vrot.slane %v6055, 1
    %v6057 = vadd.f32 %v6055, %v6056
    %v6058 = vmul.f32 %v6031, 0.055555556
    %v6059 = vmul.f32 %v6057, 0.055555556
    %v6060 = vmul.f32 %v6058, %v6058
    %v6061 = vsub.f32 %v6059, %v6060
    %v6062 = vadd.f32 %v6061, 1e-05
    %v6063 = vrsqrt.pop %v6062
    %v6064 = vmul.f32 %v6010, %v6063
    %v6065 = vmul.f32 %v6058, %v6064
    %v6066 = vsub.f32 %v6011, %v6065
    %v6068 = vlaneseq
    %v6069 = vshrl.u32 %v6068, 7
    %v6070 = vsub.s32 0, %v6069
    %v6071 = vrot.slane %v6064, %v6070
    %v6073 = vmul.f32 %v6003, %v6071
    %v6074 = vmul.f32 %v6004, %v6071
    %v6075 = vmul.f32 %v6005, %v6071
    %v6076 = vmul.f32 %v6006, %v6071
    %v6077 = vmul.f32 %v6007, %v6071
    %v6078 = vmul.f32 %v6008, %v6071
    %v6079 = vmul.f32 %v6009, %v6071
    %v6081 = vlaneseq
    %v6082 = vshrl.u32 %v6081, 7
    %v6083 = vsub.s32 0, %v6082
    %v6084 = vrot.slane %v6066, %v6083
    %v6086 = vadd.f32 %v6073, %v6084
    %v6087 = vadd.f32 %v6074, %v6084
    %v6088 = vadd.f32 %v6075, %v6084
    %v6089 = vadd.f32 %v6076, %v6084
    %v6090 = vadd.f32 %v6077, %v6084
    %v6091 = vadd.f32 %v6078, %v6084
    %v6092 = vadd.f32 %v6079, %v6084
    %vm6093 = vcmp.ge.f32.partialorder %v6086, 0.0
    %vm6094 = vcmp.ge.f32.partialorder %v6087, 0.0
    %vm6095 = vcmp.ge.f32.partialorder %v6088, 0.0
    %vm6096 = vcmp.ge.f32.partialorder %v6089, 0.0
    %vm6097 = vcmp.ge.f32.partialorder %v6090, 0.0
    %vm6098 = vcmp.ge.f32.partialorder %v6091, 0.0
    %vm6099 = vcmp.ge.f32.partialorder %v6092, 0.0
    %v6100 = vmul.f32 %v6086, 0.2
    %v6101 = vmul.f32 %v6087, 0.2
    %v6102 = vmul.f32 %v6088, 0.2
    %v6103 = vmul.f32 %v6089, 0.2
    %v6104 = vmul.f32 %v6090, 0.2
    %v6105 = vmul.f32 %v6091, 0.2
    %v6106 = vmul.f32 %v6092, 0.2
    %v6107 = vsel %vm6093, %v6086, %v6100
    %v6108 = vsel %vm6094, %v6087, %v6101
    %v6109 = vsel %vm6095, %v6088, %v6102
    %v6110 = vsel %vm6096, %v6089, %v6103
    %v6111 = vsel %vm6097, %v6090, %v6104
    %v6112 = vsel %vm6098, %v6091, %v6105
    %v6113 = vsel %vm6099, %v6092, %v6106
    %v6114 = vsel %vm5996, %v6107, 0.0
    %v6115 = vsel %vm5997, %v6108, 0.0
    %v6116 = vsel %vm5998, %v6109, 0.0
    %v6117 = vsel %vm5999, %v6110, 0.0
    %v6118 = vsel %vm6000, %v6111, 0.0
    %v6119 = vsel %vm6001, %v6112, 0.0
    %v6120 = vsel %vm6002, %v6113, 0.0
    %v6121 = vpack.c.bf16 %v6115, %v6114
    %v6122 = vpack.c.bf16 %v6117, %v6116
    %v6123 = vpack.c.bf16 %v6119, %v6118
    %v6124 = vpack.c.bf16 %v6120, %v6120
    %v6126 = vshrl.u32 %v6121, 16
    %v6128 = vrot.slane %v6126, 4
    %v6129 = vshll.u32 %v6121, 16
    %v6131 = vrot.slane %v6129, 5
    %v6132 = vor.u32 %v6128, %v6131
    %v6134 = vshrl.u32 %v6122, 16
    %v6136 = vrot.slane %v6134, 4
    %v6137 = vshll.u32 %v6122, 16
    %v6139 = vrot.slane %v6137, 5
    %v6140 = vor.u32 %v6136, %v6139
    %v6141 = vsel %vm249, %v6132, %v6140
    %v6143 = vshrl.u32 %v6123, 16
    %v6145 = vrot.slane %v6143, 4
    %v6146 = vshll.u32 %v6123, 16
    %v6148 = vrot.slane %v6146, 5
    %v6149 = vor.u32 %v6145, %v6148
    %v6150 = vsel %vm249, %v6140, %v6149
    %v6152 = vshrl.u32 %v6124, 16
    %v6154 = vrot.slane %v6152, 4
    %v6155 = vshll.u32 %v6124, 16
    %v6157 = vrot.slane %v6155, 5
    %v6158 = vor.u32 %v6154, %v6157
    %v6159 = vsel %vm249, %v6149, %v6158
    %v6164 = vld [vmem:[#allocation5] sm:$0xf8]
    %v6165 = vsel %vm3112, %v6132, %v6164
    %6166 = vst [vmem:[#allocation5] sm:$0xf8] %v6165
    %6167 = vst.msk [vmem:[#allocation5 + $0x8] sm:$0xff] %vm289, %v6141
    %6168 = vst.msk [vmem:[#allocation5 + $0x10] sm:$0xff] %vm289, %v6150
    %vm6169 = vcmask 522240
    %vm6170 = vmand %vm6169, %vm4582
    %v6171 = vld [vmem:[#allocation5 + $0x18] sm:$0x7f]
    %v6172 = vsel %vm6170, %v6159, %v6171
    %6173 = vst [vmem:[#allocation5 + $0x18] sm:$0x7f] %v6172
    %v6174 = vld [vmem:[#allocation5] sm:$0xff]
    %v6175 = vld [vmem:[#allocation5 + $0x8] sm:$0xff]
    %v6176 = vld [vmem:[#allocation5 + $0x10] sm:$0xff]
    %v6177 = vld [vmem:[#allocation5 + $0x18] sm:$0xff]
    %v6178 = vld [vmem:[#allocation5 + $0x20] sm:$0x7]
    %v6179 = vld [vmem:[#allocation30] sm:$0xf]
    %v6180 = vld [vmem:[#allocation30 + $0x4] sm:$0xf]
    %v6181 = vld [vmem:[#allocation30 + $0x8] sm:$0xf]
    %v6182 = vld [vmem:[#allocation30 + $0xc] sm:$0xf]
    %v6183 = vld [vmem:[#allocation30 + $0x10] sm:$0xf]
    %v6184 = vld [vmem:[#allocation30 + $0x14] sm:$0xf]
    %v6185 = vld [vmem:[#allocation30 + $0x18] sm:$0xf]
    %v6186 = vld [vmem:[#allocation30 + $0x1c] sm:$0xf]
    %v6195 = vunpack.c.l.b16 %v6179
    %v6196 = vunpack.c.l.b16 %v6180
    %v6197 = vunpack.c.l.b16 %v6181
    %v6198 = vunpack.c.l.b16 %v6182
    %v6199 = vunpack.c.l.b16 %v6183
    %v6200 = vunpack.c.l.b16 %v6184
    %v6201 = vunpack.c.l.b16 %v6185
    %v6202 = vunpack.c.l.b16 %v6186
    %v6203 = vpack.c.b16 %v6196, %v6195
    %v6204 = vpack.c.b16 %v6198, %v6197
    %v6205 = vpack.c.b16 %v6200, %v6199
    %v6206 = vpack.c.b16 %v6202, %v6201
    %v6212 = vsel %vm289, %v6174, 0
    %v6215 = vsel %vm289, %v6175, 0
    %v6218 = vsel %vm289, %v6176, 0
    %v6221 = vsel %vm289, %v6177, 0
    %v6224 = vsel %vm289, %v6178, 0
    %6226 = vmatprep.subr.bf16.mxu0 0
    %6227 = vmatpush1.bf16.msra.mxu0 %v6203
    %6228 = vmatprep.subr.bf16.mxu0 0
    %6229 = vmatpush1.bf16.msra.mxu0 %v6204
    %6230 = vmatprep.subr.bf16.mxu0 0
    %6231 = vmatpush1.bf16.msra.mxu0 %v6205
    %6232 = vmatprep.subr.bf16.mxu0 0
    %6233 = vmatpush1.bf16.msra.mxu0 %v6206
    %6234 = vmatprep.subr.bf16.mxu0 0
    %6235 = vmatpush1.bf16.msra.mxu0 0
    %6236 = vmatprep.subr.bf16.mxu0 0
    %6237 = vmatpush1.bf16.msra.mxu0 0
    %6238 = vmatprep.subr.bf16.mxu0 0
    %6239 = vmatpush1.bf16.msra.mxu0 0
    %6240 = vmatprep.subr.bf16.mxu0 0
    %6241 = vmatpush1.bf16.msra.mxu0 0
    %6242 = vmatprep.subr.bf16.mxu0 0
    %6243 = vmatpush1.bf16.msra.mxu0 0
    %6244 = vmatprep.subr.bf16.mxu0 0
    %6245 = vmatpush1.bf16.msra.mxu0 0
    %6246 = vmatprep.subr.bf16.mxu0 0
    %6247 = vmatpush1.bf16.msra.mxu0 0
    %6248 = vmatprep.subr.bf16.mxu0 0
    %6249 = vmatpush1.bf16.msra.mxu0 0
    %6250 = vmatprep.subr.bf16.mxu0 0
    %6251 = vmatpush1.bf16.msra.mxu0 0
    %6252 = vmatprep.subr.bf16.mxu0 0
    %6253 = vmatpush1.bf16.msra.mxu0 0
    %6254 = vmatprep.subr.bf16.mxu0 0
    %6255 = vmatpush1.bf16.msra.mxu0 0
    %6256 = vmatprep.subr.bf16.mxu0 0
    %6257 = vmatpush1.bf16.msra.mxu0 0
    %6258 = vmatprep.mubr.bf16.mxu0 0
    %6259 = vmatmul.mubr.bf16.gmra.mrb[0].mxu0 %v6212
    %v6260 = vpop.f32.mrb[0].mxu0
    %v6261 = vadd.f32 0.0, %v6260
    %v6262 = vpop.f32.mrb[0].mxu0
    %v6263 = vpop.f32.mrb[0].mxu0
    %v6264 = vadd.f32 0.0, %v6263
    %v6265 = vpop.f32.mrb[0].mxu0
    %6266 = vmatprep.mubr.bf16.mxu0 0
    %6267 = vmatmul.mubr.bf16.gmra.mrb[0].mxu0 %v6215
    %v6268 = vpop.f32.mrb[0].mxu0
    %v6269 = vadd.f32 0.0, %v6268
    %v6270 = vpop.f32.mrb[0].mxu0
    %v6271 = vpop.f32.mrb[0].mxu0
    %v6272 = vadd.f32 0.0, %v6271
    %v6273 = vpop.f32.mrb[0].mxu0
    %6274 = vmatprep.mubr.bf16.mxu0 0
    %6275 = vmatmul.mubr.bf16.gmra.mrb[0].mxu0 %v6218
    %v6276 = vpop.f32.mrb[0].mxu0
    %v6277 = vadd.f32 0.0, %v6276
    %v6278 = vpop.f32.mrb[0].mxu0
    %v6279 = vpop.f32.mrb[0].mxu0
    %v6280 = vadd.f32 0.0, %v6279
    %v6281 = vpop.f32.mrb[0].mxu0
    %6282 = vmatprep.mubr.bf16.mxu0 0
    %6283 = vmatmul.mubr.bf16.gmra.mrb[0].mxu0 %v6221
    %v6284 = vpop.f32.mrb[0].mxu0
    %v6285 = vadd.f32 0.0, %v6284
    %v6286 = vpop.f32.mrb[0].mxu0
    %v6287 = vpop.f32.mrb[0].mxu0
    %v6288 = vadd.f32 0.0, %v6287
    %v6289 = vpop.f32.mrb[0].mxu0
    %6290 = vmatprep.mubr.bf16.mxu0 0
    %6291 = vmatmul.mubr.bf16.gmra.mrb[0].mxu0 %v6224
    %v6292 = vpop.f32.mrb[0].mxu0
    %v6293 = vadd.f32 0.0, %v6292
    %v6294 = vpop.f32.mrb[0].mxu0
    %v6295 = vpop.f32.mrb[0].mxu0
    %v6296 = vpop.f32.mrb[0].mxu0
    %6297 = vdwg.mxu0
    %v6298 = vadd.f32 %v6261, 0.0
    %v6299 = vadd.f32 %v6264, 0.0
    %v6300 = vadd.f32 %v6269, 0.0
    %v6301 = vadd.f32 %v6272, 0.0
    %v6302 = vadd.f32 %v6277, 0.0
    %v6303 = vadd.f32 %v6280, 0.0
    %vm6311 = vcmask 1046528
    %v6312 = vrot.slane %v6261, 1
    %v6313 = vrot.slane %v6264, 1
    %v6314 = vsel %vm6311, %v6312, %v6313
    %v6315 = vrot.slane %v6269, 1
    %v6316 = vsel %vm6311, %v6313, %v6315
    %v6317 = vrot.slane %v6272, 1
    %v6318 = vsel %vm6311, %v6315, %v6317
    %v6319 = vrot.slane %v6277, 1
    %v6320 = vsel %vm6311, %v6317, %v6319
    %v6321 = vrot.slane %v6280, 1
    %v6322 = vsel %vm6311, %v6319, %v6321
    %v6323 = vrot.slane %v6285, 1
    %v6324 = vsel %vm6311, %v6321, %v6323
    %6325 = vrot.lane.b32.xlu0 %v6314, 127
    %v6326 = vpop.permute.xlu0 %6325
    %6327 = vrot.lane.b32.xlu0 %v6316, 127
    %v6328 = vpop.permute.xlu0 %6327
    %6329 = vrot.lane.b32.xlu0 %v6318, 127
    %v6330 = vpop.permute.xlu0 %6329
    %6331 = vrot.lane.b32.xlu0 %v6320, 127
    %v6332 = vpop.permute.xlu0 %6331
    %6333 = vrot.lane.b32.xlu0 %v6322, 127
    %v6334 = vpop.permute.xlu0 %6333
    %6335 = vrot.lane.b32.xlu0 %v6324, 127
    %v6336 = vpop.permute.xlu0 %6335
    %v6343 = vadd.f32 %v6298, %v6326
    %v6344 = vadd.f32 %v6299, %v6328
    %v6345 = vadd.f32 %v6300, %v6330
    %v6346 = vadd.f32 %v6301, %v6332
    %v6347 = vadd.f32 %v6302, %v6334
    %v6348 = vadd.f32 %v6303, %v6336
    %vm6349 = vcmask 1045504
    %v6350 = vrot.slane %v6261, 2
    %v6351 = vrot.slane %v6264, 2
    %v6352 = vsel %vm6349, %v6350, %v6351
    %v6353 = vrot.slane %v6269, 2
    %v6354 = vsel %vm6349, %v6351, %v6353
    %v6355 = vrot.slane %v6272, 2
    %v6356 = vsel %vm6349, %v6353, %v6355
    %v6357 = vrot.slane %v6277, 2
    %v6358 = vsel %vm6349, %v6355, %v6357
    %v6359 = vrot.slane %v6280, 2
    %v6360 = vsel %vm6349, %v6357, %v6359
    %v6361 = vrot.slane %v6285, 2
    %v6362 = vsel %vm6349, %v6359, %v6361
    %6363 = vrot.lane.b32.xlu0 %v6352, 126
    %v6364 = vpop.permute.xlu0 %6363
    %6365 = vrot.lane.b32.xlu0 %v6354, 126
    %v6366 = vpop.permute.xlu0 %6365
    %6367 = vrot.lane.b32.xlu0 %v6356, 126
    %v6368 = vpop.permute.xlu0 %6367
    %6369 = vrot.lane.b32.xlu0 %v6358, 126
    %v6370 = vpop.permute.xlu0 %6369
    %6371 = vrot.lane.b32.xlu0 %v6360, 126
    %v6372 = vpop.permute.xlu0 %6371
    %6373 = vrot.lane.b32.xlu0 %v6362, 126
    %v6374 = vpop.permute.xlu0 %6373
    %v6381 = vadd.f32 %v6343, %v6364
    %v6382 = vadd.f32 %v6344, %v6366
    %v6383 = vadd.f32 %v6345, %v6368
    %v6384 = vadd.f32 %v6346, %v6370
    %v6385 = vadd.f32 %v6347, %v6372
    %v6386 = vadd.f32 %v6348, %v6374
    %vm6387 = vcmask 1044480
    %v6388 = vrot.slane %v6261, 3
    %v6389 = vrot.slane %v6264, 3
    %v6390 = vsel %vm6387, %v6388, %v6389
    %v6391 = vrot.slane %v6269, 3
    %v6392 = vsel %vm6387, %v6389, %v6391
    %v6393 = vrot.slane %v6272, 3
    %v6394 = vsel %vm6387, %v6391, %v6393
    %v6395 = vrot.slane %v6277, 3
    %v6396 = vsel %vm6387, %v6393, %v6395
    %v6397 = vrot.slane %v6280, 3
    %v6398 = vsel %vm6387, %v6395, %v6397
    %v6399 = vrot.slane %v6285, 3
    %v6400 = vsel %vm6387, %v6397, %v6399
    %6401 = vrot.lane.b32.xlu0 %v6390, 125
    %v6402 = vpop.permute.xlu0 %6401
    %6403 = vrot.lane.b32.xlu0 %v6392, 125
    %v6404 = vpop.permute.xlu0 %6403
    %6405 = vrot.lane.b32.xlu0 %v6394, 125
    %v6406 = vpop.permute.xlu0 %6405
    %6407 = vrot.lane.b32.xlu0 %v6396, 125
    %v6408 = vpop.permute.xlu0 %6407
    %6409 = vrot.lane.b32.xlu0 %v6398, 125
    %v6410 = vpop.permute.xlu0 %6409
    %6411 = vrot.lane.b32.xlu0 %v6400, 125
    %v6412 = vpop.permute.xlu0 %6411
    %v6419 = vadd.f32 %v6381, %v6402
    %v6420 = vadd.f32 %v6382, %v6404
    %v6421 = vadd.f32 %v6383, %v6406
    %v6422 = vadd.f32 %v6384, %v6408
    %v6423 = vadd.f32 %v6385, %v6410
    %v6424 = vadd.f32 %v6386, %v6412
    %vm6425 = vcmask 1041408
    %v6426 = vrot.slane %v6261, 6
    %v6427 = vrot.slane %v6264, 6
    %v6428 = vsel %vm6425, %v6426, %v6427
    %v6429 = vrot.slane %v6269, 6
    %v6430 = vsel %vm6425, %v6427, %v6429
    %v6431 = vrot.slane %v6272, 6
    %v6432 = vsel %vm6425, %v6429, %v6431
    %v6433 = vrot.slane %v6277, 6
    %v6434 = vsel %vm6425, %v6431, %v6433
    %v6435 = vrot.slane %v6280, 6
    %v6436 = vsel %vm6425, %v6433, %v6435
    %v6437 = vrot.slane %v6285, 6
    %v6438 = vsel %vm6425, %v6435, %v6437
    %6439 = vrot.lane.b32.xlu0 %v6428, 124
    %v6440 = vpop.permute.xlu0 %6439
    %6441 = vrot.lane.b32.xlu0 %v6430, 124
    %v6442 = vpop.permute.xlu0 %6441
    %6443 = vrot.lane.b32.xlu0 %v6432, 124
    %v6444 = vpop.permute.xlu0 %6443
    %6445 = vrot.lane.b32.xlu0 %v6434, 124
    %v6446 = vpop.permute.xlu0 %6445
    %6447 = vrot.lane.b32.xlu0 %v6436, 124
    %v6448 = vpop.permute.xlu0 %6447
    %6449 = vrot.lane.b32.xlu0 %v6438, 124
    %v6450 = vpop.permute.xlu0 %6449
    %v6457 = vadd.f32 %v6419, %v6440
    %v6458 = vadd.f32 %v6420, %v6442
    %v6459 = vadd.f32 %v6421, %v6444
    %v6460 = vadd.f32 %v6422, %v6446
    %v6461 = vadd.f32 %v6423, %v6448
    %v6462 = vadd.f32 %v6424, %v6450
    %vm6463 = vcmask 1040384
    %v6464 = vrot.slane %v6261, 7
    %v6465 = vrot.slane %v6264, 7
    %v6466 = vsel %vm6463, %v6464, %v6465
    %v6467 = vrot.slane %v6269, 7
    %v6468 = vsel %vm6463, %v6465, %v6467
    %v6469 = vrot.slane %v6272, 7
    %v6470 = vsel %vm6463, %v6467, %v6469
    %v6471 = vrot.slane %v6277, 7
    %v6472 = vsel %vm6463, %v6469, %v6471
    %v6473 = vrot.slane %v6280, 7
    %v6474 = vsel %vm6463, %v6471, %v6473
    %v6475 = vrot.slane %v6285, 7
    %v6476 = vsel %vm6463, %v6473, %v6475
    %6477 = vrot.lane.b32.xlu0 %v6466, 123
    %v6478 = vpop.permute.xlu0 %6477
    %6479 = vrot.lane.b32.xlu0 %v6468, 123
    %v6480 = vpop.permute.xlu0 %6479
    %6481 = vrot.lane.b32.xlu0 %v6470, 123
    %v6482 = vpop.permute.xlu0 %6481
    %6483 = vrot.lane.b32.xlu0 %v6472, 123
    %v6484 = vpop.permute.xlu0 %6483
    %6485 = vrot.lane.b32.xlu0 %v6474, 123
    %v6486 = vpop.permute.xlu0 %6485
    %6487 = vrot.lane.b32.xlu0 %v6476, 123
    %v6488 = vpop.permute.xlu0 %6487
    %v6495 = vadd.f32 %v6457, %v6478
    %v6496 = vadd.f32 %v6458, %v6480
    %v6497 = vadd.f32 %v6459, %v6482
    %v6498 = vadd.f32 %v6460, %v6484
    %v6499 = vadd.f32 %v6461, %v6486
    %v6500 = vadd.f32 %v6462, %v6488
    %6501 = vrot.lane.b32.xlu0 %v6264, 122
    %v6502 = vpop.permute.xlu0 %6501
    %6503 = vrot.lane.b32.xlu0 %v6269, 122
    %v6504 = vpop.permute.xlu0 %6503
    %6505 = vrot.lane.b32.xlu0 %v6272, 122
    %v6506 = vpop.permute.xlu0 %6505
    %6507 = vrot.lane.b32.xlu0 %v6277, 122
    %v6508 = vpop.permute.xlu0 %6507
    %6509 = vrot.lane.b32.xlu0 %v6280, 122
    %v6510 = vpop.permute.xlu0 %6509
    %6511 = vrot.lane.b32.xlu0 %v6285, 122
    %v6512 = vpop.permute.xlu0 %6511
    %v6519 = vadd.f32 %v6495, %v6502
    %v6520 = vadd.f32 %v6496, %v6504
    %v6521 = vadd.f32 %v6497, %v6506
    %v6522 = vadd.f32 %v6498, %v6508
    %v6523 = vadd.f32 %v6499, %v6510
    %v6524 = vadd.f32 %v6500, %v6512
    %v6526 = vrot.slane %v6288, 1
    %v6527 = vsel %vm6311, %v6323, %v6526
    %6528 = vrot.lane.b32.xlu0 %v6316, 121
    %v6529 = vpop.permute.xlu0 %6528
    %6530 = vrot.lane.b32.xlu0 %v6318, 121
    %v6531 = vpop.permute.xlu0 %6530
    %6532 = vrot.lane.b32.xlu0 %v6320, 121
    %v6533 = vpop.permute.xlu0 %6532
    %6534 = vrot.lane.b32.xlu0 %v6322, 121
    %v6535 = vpop.permute.xlu0 %6534
    %6536 = vrot.lane.b32.xlu0 %v6324, 121
    %v6537 = vpop.permute.xlu0 %6536
    %6538 = vrot.lane.b32.xlu0 %v6527, 121
    %v6539 = vpop.permute.xlu0 %6538
    %v6546 = vadd.f32 %v6519, %v6529
    %v6547 = vadd.f32 %v6520, %v6531
    %v6548 = vadd.f32 %v6521, %v6533
    %v6549 = vadd.f32 %v6522, %v6535
    %v6550 = vadd.f32 %v6523, %v6537
    %v6551 = vadd.f32 %v6524, %v6539
    %vm6552 = vcmask 1043456
    %v6553 = vrot.slane %v6264, 4
    %v6554 = vrot.slane %v6269, 4
    %v6555 = vsel %vm6552, %v6553, %v6554
    %v6556 = vrot.slane %v6272, 4
    %v6557 = vsel %vm6552, %v6554, %v6556
    %v6558 = vrot.slane %v6277, 4
    %v6559 = vsel %vm6552, %v6556, %v6558
    %v6560 = vrot.slane %v6280, 4
    %v6561 = vsel %vm6552, %v6558, %v6560
    %v6562 = vrot.slane %v6285, 4
    %v6563 = vsel %vm6552, %v6560, %v6562
    %v6564 = vrot.slane %v6288, 4
    %v6565 = vsel %vm6552, %v6562, %v6564
    %6566 = vrot.lane.b32.xlu0 %v6555, 120
    %v6567 = vpop.permute.xlu0 %6566
    %6568 = vrot.lane.b32.xlu0 %v6557, 120
    %v6569 = vpop.permute.xlu0 %6568
    %6570 = vrot.lane.b32.xlu0 %v6559, 120
    %v6571 = vpop.permute.xlu0 %6570
    %6572 = vrot.lane.b32.xlu0 %v6561, 120
    %v6573 = vpop.permute.xlu0 %6572
    %6574 = vrot.lane.b32.xlu0 %v6563, 120
    %v6575 = vpop.permute.xlu0 %6574
    %6576 = vrot.lane.b32.xlu0 %v6565, 120
    %v6577 = vpop.permute.xlu0 %6576
    %v6584 = vadd.f32 %v6546, %v6567
    %v6585 = vadd.f32 %v6547, %v6569
    %v6586 = vadd.f32 %v6548, %v6571
    %v6587 = vadd.f32 %v6549, %v6573
    %v6588 = vadd.f32 %v6550, %v6575
    %v6589 = vadd.f32 %v6551, %v6577
    %vm6590 = vcmask 1042432
    %v6591 = vrot.slane %v6264, 5
    %v6592 = vrot.slane %v6269, 5
    %v6593 = vsel %vm6590, %v6591, %v6592
    %v6594 = vrot.slane %v6272, 5
    %v6595 = vsel %vm6590, %v6592, %v6594
    %v6596 = vrot.slane %v6277, 5
    %v6597 = vsel %vm6590, %v6594, %v6596
    %v6598 = vrot.slane %v6280, 5
    %v6599 = vsel %vm6590, %v6596, %v6598
    %v6600 = vrot.slane %v6285, 5
    %v6601 = vsel %vm6590, %v6598, %v6600
    %v6602 = vrot.slane %v6288, 5
    %v6603 = vsel %vm6590, %v6600, %v6602
    %6604 = vrot.lane.b32.xlu0 %v6593, 119
    %v6605 = vpop.permute.xlu0 %6604
    %6606 = vrot.lane.b32.xlu0 %v6595, 119
    %v6607 = vpop.permute.xlu0 %6606
    %6608 = vrot.lane.b32.xlu0 %v6597, 119
    %v6609 = vpop.permute.xlu0 %6608
    %6610 = vrot.lane.b32.xlu0 %v6599, 119
    %v6611 = vpop.permute.xlu0 %6610
    %6612 = vrot.lane.b32.xlu0 %v6601, 119
    %v6613 = vpop.permute.xlu0 %6612
    %6614 = vrot.lane.b32.xlu0 %v6603, 119
    %v6615 = vpop.permute.xlu0 %6614
    %v6622 = vadd.f32 %v6584, %v6605
    %v6623 = vadd.f32 %v6585, %v6607
    %v6624 = vadd.f32 %v6586, %v6609
    %v6625 = vadd.f32 %v6587, %v6611
    %v6626 = vadd.f32 %v6588, %v6613
    %v6627 = vadd.f32 %v6589, %v6615
    %v6628 = vrot.slane %v6288, 6
    %v6629 = vsel %vm6425, %v6437, %v6628
    %6630 = vrot.lane.b32.xlu0 %v6430, 118
    %v6631 = vpop.permute.xlu0 %6630
    %6632 = vrot.lane.b32.xlu0 %v6432, 118
    %v6633 = vpop.permute.xlu0 %6632
    %6634 = vrot.lane.b32.xlu0 %v6434, 118
    %v6635 = vpop.permute.xlu0 %6634
    %6636 = vrot.lane.b32.xlu0 %v6436, 118
    %v6637 = vpop.permute.xlu0 %6636
    %6638 = vrot.lane.b32.xlu0 %v6438, 118
    %v6639 = vpop.permute.xlu0 %6638
    %6640 = vrot.lane.b32.xlu0 %v6629, 118
    %v6641 = vpop.permute.xlu0 %6640
    %v6648 = vadd.f32 %v6622, %v6631
    %v6649 = vadd.f32 %v6623, %v6633
    %v6650 = vadd.f32 %v6624, %v6635
    %v6651 = vadd.f32 %v6625, %v6637
    %v6652 = vadd.f32 %v6626, %v6639
    %v6653 = vadd.f32 %v6627, %v6641
    %v6654 = vrot.slane %v6288, 7
    %v6655 = vsel %vm6463, %v6475, %v6654
    %6656 = vrot.lane.b32.xlu0 %v6468, 117
    %v6657 = vpop.permute.xlu0 %6656
    %6658 = vrot.lane.b32.xlu0 %v6470, 117
    %v6659 = vpop.permute.xlu0 %6658
    %6660 = vrot.lane.b32.xlu0 %v6472, 117
    %v6661 = vpop.permute.xlu0 %6660
    %6662 = vrot.lane.b32.xlu0 %v6474, 117
    %v6663 = vpop.permute.xlu0 %6662
    %6664 = vrot.lane.b32.xlu0 %v6476, 117
    %v6665 = vpop.permute.xlu0 %6664
    %6666 = vrot.lane.b32.xlu0 %v6655, 117
    %v6667 = vpop.permute.xlu0 %6666
    %v6674 = vadd.f32 %v6648, %v6657
    %v6675 = vadd.f32 %v6649, %v6659
    %v6676 = vadd.f32 %v6650, %v6661
    %v6677 = vadd.f32 %v6651, %v6663
    %v6678 = vadd.f32 %v6652, %v6665
    %v6679 = vadd.f32 %v6653, %v6667
    %v6681 = vrot.slane %v6288, 2
    %v6682 = vsel %vm6349, %v6361, %v6681
    %v6683 = vrot.slane %v6293, 2
    %v6684 = vsel %vm6349, %v6681, %v6683
    %6685 = vrot.lane.b32.xlu0 %v6356, 116
    %v6686 = vpop.permute.xlu0 %6685
    %6687 = vrot.lane.b32.xlu0 %v6358, 116
    %v6688 = vpop.permute.xlu0 %6687
    %6689 = vrot.lane.b32.xlu0 %v6360, 116
    %v6690 = vpop.permute.xlu0 %6689
    %6691 = vrot.lane.b32.xlu0 %v6362, 116
    %v6692 = vpop.permute.xlu0 %6691
    %6693 = vrot.lane.b32.xlu0 %v6682, 116
    %v6694 = vpop.permute.xlu0 %6693
    %6695 = vrot.lane.b32.xlu0 %v6684, 116
    %v6696 = vpop.permute.xlu0 %6695
    %v6703 = vadd.f32 %v6674, %v6686
    %v6704 = vadd.f32 %v6675, %v6688
    %v6705 = vadd.f32 %v6676, %v6690
    %v6706 = vadd.f32 %v6677, %v6692
    %v6707 = vadd.f32 %v6678, %v6694
    %v6708 = vadd.f32 %v6679, %v6696
    %v6709 = vrot.slane %v6288, 3
    %v6710 = vsel %vm6387, %v6399, %v6709
    %v6711 = vrot.slane %v6293, 3
    %v6712 = vsel %vm6387, %v6709, %v6711
    %6713 = vrot.lane.b32.xlu0 %v6394, 115
    %v6714 = vpop.permute.xlu0 %6713
    %6715 = vrot.lane.b32.xlu0 %v6396, 115
    %v6716 = vpop.permute.xlu0 %6715
    %6717 = vrot.lane.b32.xlu0 %v6398, 115
    %v6718 = vpop.permute.xlu0 %6717
    %6719 = vrot.lane.b32.xlu0 %v6400, 115
    %v6720 = vpop.permute.xlu0 %6719
    %6721 = vrot.lane.b32.xlu0 %v6710, 115
    %v6722 = vpop.permute.xlu0 %6721
    %6723 = vrot.lane.b32.xlu0 %v6712, 115
    %v6724 = vpop.permute.xlu0 %6723
    %v6731 = vadd.f32 %v6703, %v6714
    %v6732 = vadd.f32 %v6704, %v6716
    %v6733 = vadd.f32 %v6705, %v6718
    %v6734 = vadd.f32 %v6706, %v6720
    %v6735 = vadd.f32 %v6707, %v6722
    %v6736 = vadd.f32 %v6708, %v6724
    %v6737 = vrot.slane %v6293, 4
    %v6738 = vsel %vm6552, %v6564, %v6737
    %6739 = vrot.lane.b32.xlu0 %v6557, 114
    %v6740 = vpop.permute.xlu0 %6739
    %6741 = vrot.lane.b32.xlu0 %v6559, 114
    %v6742 = vpop.permute.xlu0 %6741
    %6743 = vrot.lane.b32.xlu0 %v6561, 114
    %v6744 = vpop.permute.xlu0 %6743
    %6745 = vrot.lane.b32.xlu0 %v6563, 114
    %v6746 = vpop.permute.xlu0 %6745
    %6747 = vrot.lane.b32.xlu0 %v6565, 114
    %v6748 = vpop.permute.xlu0 %6747
    %6749 = vrot.lane.b32.xlu0 %v6738, 114
    %v6750 = vpop.permute.xlu0 %6749
    %v6757 = vadd.f32 %v6731, %v6740
    %v6758 = vadd.f32 %v6732, %v6742
    %v6759 = vadd.f32 %v6733, %v6744
    %v6760 = vadd.f32 %v6734, %v6746
    %v6761 = vadd.f32 %v6735, %v6748
    %v6762 = vadd.f32 %v6736, %v6750
    %v6763 = vrot.slane %v6293, 5
    %v6764 = vsel %vm6590, %v6602, %v6763
    %6765 = vrot.lane.b32.xlu0 %v6595, 113
    %v6766 = vpop.permute.xlu0 %6765
    %6767 = vrot.lane.b32.xlu0 %v6597, 113
    %v6768 = vpop.permute.xlu0 %6767
    %6769 = vrot.lane.b32.xlu0 %v6599, 113
    %v6770 = vpop.permute.xlu0 %6769
    %6771 = vrot.lane.b32.xlu0 %v6601, 113
    %v6772 = vpop.permute.xlu0 %6771
    %6773 = vrot.lane.b32.xlu0 %v6603, 113
    %v6774 = vpop.permute.xlu0 %6773
    %6775 = vrot.lane.b32.xlu0 %v6764, 113
    %v6776 = vpop.permute.xlu0 %6775
    %v6783 = vadd.f32 %v6757, %v6766
    %v6784 = vadd.f32 %v6758, %v6768
    %v6785 = vadd.f32 %v6759, %v6770
    %v6786 = vadd.f32 %v6760, %v6772
    %v6787 = vadd.f32 %v6761, %v6774
    %v6788 = vadd.f32 %v6762, %v6776
    %v6789 = vld [vmem:[#allocation11] sm:$0x1]
    %v6791 = vlaneseq
    %v6792 = vshrl.u32 %v6791, 7
    %v6793 = vsub.s32 0, %v6792
    %v6794 = vrot.slane %v6789, %v6793
    %v6796 = vadd.f32 %v6783, %v6794
    %v6797 = vadd.f32 %v6784, %v6794
    %v6798 = vadd.f32 %v6785, %v6794
    %v6799 = vadd.f32 %v6786, %v6794
    %v6800 = vadd.f32 %v6787, %v6794
    %v6801 = vadd.f32 %v6788, %v6794
    %vm6802 = vcmask 7168
    %6803 = vst.msk [vmem:[#allocation32] sm:$0xff] %vm6802, %v6796
    %6804 = vst.msk [vmem:[#allocation32 + $0x8] sm:$0xff] %vm6802, %v6797
    %6805 = vst.msk [vmem:[#allocation32 + $0x10] sm:$0xff] %vm6802, %v6798
    %6806 = vst.msk [vmem:[#allocation32 + $0x18] sm:$0xff] %vm6802, %v6799
    %6807 = vst.msk [vmem:[#allocation32 + $0x20] sm:$0xff] %vm6802, %v6800
    %6808 = vst.msk [vmem:[#allocation32 + $0x28] sm:$0xff] %vm6802, %v6801
    %6809 = vst.msk [vmem:[#allocation32 + $0x30] sm:$0xff] %vm6802, 0.0
    %6810 = vst.msk [vmem:[#allocation32 + $0x38] sm:$0xff] %vm6802, 0.0
    %6811 = vst.msk [vmem:[#allocation32 + $0x40] sm:$0xff] %vm6802, 0.0
    // Predicated region
    $region118: #{nlayer_discriminator_forward.1} parent=1 // pred_check
      _
    $region119: #{nlayer_discriminator_forward.1} parent=1 // pred_check_branch
      %6813 = sbr.rel (0) target = $region121
    $region120: #{nlayer_discriminator_forward.1} parent=1 // pred_region
      %s6815 = ssub.s32 1152, 1152
      %6816 = vsyncadd [#allocation14], %s6815
      %s6817 = sshll.u32 [#allocation32], 4
      %s6818 = int_to_ptr.vmem [resolvable:$true] %s6817
      %6823 = dma.vmem_to_hbm [thread:$0]  %s6818, 1152, %s17, [#allocation14], 128, 128, 8
    $region121: #{nlayer_discriminator_forward.1} parent=1 // pred_fallthru
      _
    // Predicated region
    $region122: #{nlayer_discriminator_forward.1} parent=1 // pred_check
      _
    $region123: #{nlayer_discriminator_forward.1} parent=1 // pred_check_branch
      %6825 = sbr.rel (0) target = $region125
    $region124: #{nlayer_discriminator_forward.1} parent=1 // pred_region
      %6826 = dma.done [#allocation14], 1152
    $region125: #{nlayer_discriminator_forward.1} parent=1 // pred_fallthru
      _
    %6827 = vsyncpa [#allocation13], 1
    %6828 = vsyncpa [#allocation16], 1
    %6829 = vsyncpa [#allocation19], 1
    %6830 = vsyncpa [#allocation22], 1
    %6831 = vsyncpa [#allocation25], 1
    %6832 = vsyncpa [#allocation28], 1
    %6833 = vsyncpa [#allocation31], 1
    %6834 = vsyncpa [#allocation14], 1
  %6835 = vsyncmov [#allocation10]
  %s6836 = vpop.sfrf %6835
  %p6837 = scmp.eq.s32.totalorder %s6836, 0
  %p6838 = pneg %p6837
  %6840 = shalt.err (%p6838)
  %s6841 = scalar_lea.sflag [#allocation10], 1
  %6842 = vsyncmov %s6841
  %s6843 = vpop.sfrf %6842
  %p6844 = scmp.eq.s32.totalorder %s6843, 0
  %p6845 = pneg %p6844
  %6847 = shalt.err (%p6845)
  %s6848 = scalar_lea.sflag [#allocation10], 2
  %6849 = vsyncmov %s6848
  %s6850 = vpop.sfrf %6849
  %p6851 = scmp.eq.s32.totalorder %s6850, 0
  %p6852 = pneg %p6851
  %6854 = shalt.err (%p6852)
  %s6855 = scalar_lea.sflag [#allocation10], 3
  %6856 = vsyncmov %s6855
  %s6857 = vpop.sfrf %6856
  %p6858 = scmp.eq.s32.totalorder %s6857, 0
  %p6859 = pneg %p6858
  %6861 = shalt.err (%p6859)

</llo_original>
